<compile_context>
chip_gen: v5e
topology: v5e:2x2
jax: 0.10.0
libtpu: 0.0.40
codegen_flags: <defaults>
</compile_context>

<pallas_src>
import functools
import math

import jax
import jax.numpy as jnp
import numpy as np
from jax.experimental import pallas as pl
from jax.experimental.pallas import tpu as pltpu

LN_EPS = 1e-5  # PyTorch nn.LayerNorm default eps

PARAM_ORDER = ("g1", "b1", "wq1", "bq1", "wkv1", "bkv1", "wo1", "bo1",
               "g2", "b2", "wq2", "bq2", "wkv2", "bkv2", "wo2", "bo2",
               "wfc", "bfc", "wpj", "bpj")


# ---------------------------------------------------------------------------
# math helpers (pure jnp -> usable both inside the Pallas kernel and in the
# pure-JAX reference used for the correctness check)
# ---------------------------------------------------------------------------
def _layernorm(v, g, b):
    mu = jnp.mean(v, axis=-1, keepdims=True)
    var = jnp.mean(jnp.square(v - mu), axis=-1, keepdims=True)
    return (v - mu) * jax.lax.rsqrt(var + LN_EPS) * g + b


# ---------------------------------------------------------------------------
# Pallas kernel: one batch tile of `nb` sequences per grid step; whole decoder
# block fused (LN -> self-attn -> LN -> cross-attn -> LN -> MLP, residuals).
# ---------------------------------------------------------------------------
def _block_kernel(n_head,
                  x_ref, mem_ref, tril_ref, pad_ref,
                  g1_ref, b1_ref, wq1_ref, bq1_ref, wkv1_ref, bkv1_ref,
                  wo1_ref, bo1_ref,
                  g2_ref, b2_ref, wq2_ref, bq2_ref, wkv2_ref, bkv2_ref,
                  wo2_ref, bo2_ref,
                  wfc_ref, bfc_ref, wpj_ref, bpj_ref,
                  out_ref):
    L, nb, D = x_ref.shape
    S = mem_ref.shape[0]
    hd = D // n_head

    def mm(a, w_ref):
        # bf16 operands, f32 accumulation on the MXU (weights are already bf16).
        return jnp.dot(a.astype(jnp.bfloat16), w_ref[...],
                       preferred_element_type=jnp.float32)

    def attention(q_rows, kv_rows, mask, Lk):
        # q_rows: (L*nb, D) f32, 1/sqrt(hd) scale already folded into Q proj.
        # kv_rows: (Lk*nb, 2D) f32. mask: (L, Lk) additive f32.
        q3 = q_rows.reshape(L, nb, D)
        k3 = kv_rows[:, :D].reshape(Lk, nb, D)
        v3 = kv_rows[:, D:].reshape(Lk, nb, D)
        outs = []
        for b in range(nb):  # static, small batch tile
            qh = jnp.swapaxes(q3[:, b, :].reshape(L, n_head, hd), 0, 1)   # (H,L,hd)
            kh = jnp.swapaxes(k3[:, b, :].reshape(Lk, n_head, hd), 0, 1)  # (H,Lk,hd)
            vh = jnp.swapaxes(v3[:, b, :].reshape(Lk, n_head, hd), 0, 1)  # (H,Lk,hd)
            s = jnp.einsum('hqd,hkd->hqk',
                           qh.astype(jnp.bfloat16), kh.astype(jnp.bfloat16),
                           preferred_element_type=jnp.float32)
            s = s + mask[None, :, :]
            m = jnp.max(s, axis=-1, keepdims=True)
            p = jnp.exp(s - m)
            p = p * pl.reciprocal(jnp.sum(p, axis=-1, keepdims=True), approx=True)
            o = jnp.einsum('hqk,hkd->hqd',
                           p.astype(jnp.bfloat16), vh.astype(jnp.bfloat16),
                           preferred_element_type=jnp.float32)             # (H,L,hd)
            outs.append(jnp.swapaxes(o, 0, 1).reshape(L, D))
        return jnp.stack(outs, axis=1).reshape(L * nb, D)

    xf = x_ref[...].reshape(L * nb, D)       # rows ordered (l, b)
    memf = mem_ref[...].reshape(S * nb, D)   # rows ordered (s, b)
    tril = tril_ref[...]
    pad = pad_ref[...]
    g1, b1 = g1_ref[...], b1_ref[...]
    g2, b2 = g2_ref[...], b2_ref[...]

    # x = x + attn_1(ln_1(x), x, x, attn_mask=tril_mask)
    q1 = mm(_layernorm(xf, g1, b1), wq1_ref) + bq1_ref[...]
    kv1 = mm(xf, wkv1_ref) + bkv1_ref[...]
    xf = xf + mm(attention(q1, kv1, tril, L), wo1_ref) + bo1_ref[...]

    # x = x + attn_2(ln_2(x), memory, memory, attn_mask=pad_mask)
    q2 = mm(_layernorm(xf, g2, b2), wq2_ref) + bq2_ref[...]
    kv2 = mm(memf, wkv2_ref) + bkv2_ref[...]
    xf = xf + mm(attention(q2, kv2, pad, S), wo2_ref) + bo2_ref[...]

    # x = x + dropout(mlp(ln_2(x)))   (dropout p = 0 -> identity)
    h = mm(_layernorm(xf, g2, b2), wfc_ref) + bfc_ref[...]
    h = h * jax.nn.sigmoid(1.702 * h)  # QuickGELU
    xf = xf + mm(h, wpj_ref) + bpj_ref[...]

    out_ref[...] = xf.reshape(L, nb, D)


# ---------------------------------------------------------------------------
# wrapper
# ---------------------------------------------------------------------------
def _pick_batch_block(N, L, S, D, vmem_budget_bytes=4 << 20):
    """Largest batch tile whose activation working set stays modest and whose
    second-minor block dim is the full batch or a multiple of 8."""
    best = 1
    for nb in range(1, N + 1):
        if N % nb:
            continue
        if nb != N and nb % 8 != 0:
            continue
        rows = nb * max(L, S)
        if rows * 6 * D * 4 <= vmem_budget_bytes:
            best = nb
    return best


def pack_params(p, n_head):
    """Fold the 1/sqrt(hd) scale into Q, fuse K/V weights, cast weights to bf16."""
    D = p["wq1"].shape[0]
    scale = 1.0 / math.sqrt(D // n_head)
    bf = lambda a: a.astype(jnp.bfloat16)
    return {
        "g1": p["g1"], "b1": p["b1"],
        "wq1": bf(p["wq1"] * scale), "bq1": p["bq1"] * scale,
        "wkv1": bf(jnp.concatenate([p["wk1"], p["wv1"]], axis=1)),
        "bkv1": jnp.concatenate([p["bk1"], p["bv1"]], axis=1),
        "wo1": bf(p["wo1"]), "bo1": p["bo1"],
        "g2": p["g2"], "b2": p["b2"],
        "wq2": bf(p["wq2"] * scale), "bq2": p["bq2"] * scale,
        "wkv2": bf(jnp.concatenate([p["wk2"], p["wv2"]], axis=1)),
        "bkv2": jnp.concatenate([p["bk2"], p["bv2"]], axis=1),
        "wo2": bf(p["wo2"]), "bo2": p["bo2"],
        "wfc": bf(p["wfc"]), "bfc": p["bfc"],
        "wpj": bf(p["wpj"]), "bpj": p["bpj"],
    }


def decoder_residual_attention_block(x, memory, tril_mask, pad_mask, packed,
                                     n_head, nb=None):
    """x: (L, N, D), memory: (S, N, D) -> (L, N, D). Native layout, no transposes."""
    L, N, D = x.shape
    S = memory.shape[0]
    if nb is None:
        nb = _pick_batch_block(N, L, S, D)
    assert N % nb == 0, "batch tile must divide the batch"

    flat = [packed[k] for k in PARAM_ORDER]

    in_specs = [
        pl.BlockSpec((L, nb, D), lambda b: (0, b, 0)),
        pl.BlockSpec((S, nb, D), lambda b: (0, b, 0)),
        pl.BlockSpec((L, L), lambda b: (0, 0)),
        pl.BlockSpec((L, S), lambda b: (0, 0)),
    ] + [pl.BlockSpec(a.shape, lambda b: (0, 0)) for a in flat]

    # Rough cost hint for the XLA scheduler.
    flops = N * (2 * L * D * D + 4 * L * D * D + 4 * L * L * D + 2 * L * D * D
                 + 2 * L * D * D + 4 * S * D * D + 4 * L * S * D + 2 * L * D * D
                 + 16 * L * D * D)
    transc = N * (n_head * L * (L + S) + 4 * L * D)
    bytes_accessed = (2 * x.nbytes + memory.nbytes
                      + tril_mask.nbytes + pad_mask.nbytes
                      + sum(int(a.nbytes) for a in flat))

    out = pl.pallas_call(
        functools.partial(_block_kernel, n_head),
        out_shape=jax.ShapeDtypeStruct((L, N, D), jnp.float32),
        grid_spec=pltpu.PrefetchScalarGridSpec(
            num_scalar_prefetch=0,
            grid=(N // nb,),
            in_specs=in_specs,
            out_specs=pl.BlockSpec((L, nb, D), lambda b: (0, b, 0)),
        ),
        compiler_params=pltpu.CompilerParams(
            dimension_semantics=("parallel",),
            vmem_limit_bytes=48 * 1024 * 1024,
        ),
        cost_estimate=pl.CostEstimate(flops=int(flops),
                                      transcendentals=int(transc),
                                      bytes_accessed=int(bytes_accessed)),
    )(x, memory, tril_mask, pad_mask, *flat)
    return out


# ---------------------------------------------------------------------------
# pure-JAX reference (same math, same bf16 operand casts, no Pallas)
# ---------------------------------------------------------------------------
def _ref_forward(x, memory, tril, pad, pp, n_head):
    L, N, D = x.shape
    hd = D // n_head

    def mm(a, w):
        return jnp.dot(a.astype(jnp.bfloat16), w.astype(jnp.bfloat16),
                       preferred_element_type=jnp.float32)

    def attn(q, kv, mask):
        k, v = kv[:, :D], kv[:, D:]
        heads = []
        for h in range(n_head):
            sl = slice(h * hd, (h + 1) * hd)
            s = mm(q[:, sl], k[:, sl].T) + mask
            m = jnp.max(s, axis=-1, keepdims=True)
            p = jnp.exp(s - m)
            p = p / jnp.sum(p, axis=-1, keepdims=True)
            heads.append(mm(p, v[:, sl]))
        return jnp.concatenate(heads, axis=-1)

    outs = []
    for n in range(N):
        xb = x[:, n, :]
        mb = memory[:, n, :]

        q1 = mm(_layernorm(xb, pp["g1"], pp["b1"]), pp["wq1"]) + pp["bq1"]
        kv1 = mm(xb, pp["wkv1"]) + pp["bkv1"]
        xb = xb + mm(attn(q1, kv1, tril), pp["wo1"]) + pp["bo1"]

        q2 = mm(_layernorm(xb, pp["g2"], pp["b2"]), pp["wq2"]) + pp["bq2"]
        kv2 = mm(mb, pp["wkv2"]) + pp["bkv2"]
        xb = xb + mm(attn(q2, kv2, pad), pp["wo2"]) + pp["bo2"]

        h = mm(_layernorm(xb, pp["g2"], pp["b2"]), pp["wfc"]) + pp["bfc"]
        h = h * jax.nn.sigmoid(1.702 * h)
        xb = xb + mm(h, pp["wpj"]) + pp["bpj"]
        outs.append(xb)
    return jnp.stack(outs, axis=1)


# ---------------------------------------------------------------------------
# deterministic synthetic parameters (shapes follow the PyTorch __init__,
# weights pre-transposed so projections are `x @ W + b`)
# ---------------------------------------------------------------------------
def init_params(key, D):
    keys = iter(jax.random.split(key, 24))

    def w(shape, fan_in):
        return jax.random.normal(next(keys), shape, jnp.float32) / math.sqrt(fan_in)

    def bvec(n):
        return 0.02 * jax.random.normal(next(keys), (1, n), jnp.float32)

    def gamma():
        return 1.0 + 0.05 * jax.random.normal(next(keys), (1, D), jnp.float32)

    return {
        "g1": gamma(), "b1": bvec(D),
        "wq1": w((D, D), D), "wk1": w((D, D), D), "wv1": w((D, D), D),
        "bq1": bvec(D), "bk1": bvec(D), "bv1": bvec(D),
        "wo1": w((D, D), D), "bo1": bvec(D),
        "g2": gamma(), "b2": bvec(D),
        "wq2": w((D, D), D), "wk2": w((D, D), D), "wv2": w((D, D), D),
        "bq2": bvec(D), "bk2": bvec(D), "bv2": bvec(D),
        "wo2": w((D, D), D), "bo2": bvec(D),
        "wfc": w((D, 4 * D), D), "bfc": bvec(4 * D),
        "wpj": w((4 * D, D), 4 * D), "bpj": bvec(D),
    }


if __name__ == "__main__":
    key = jax.random.PRNGKey(0)
    D, n_head = 128, 4           # lane-dense d_model (multiple of 128)
    L, S, N = 8, 16, 2

    kx, km, kp = jax.random.split(key, 3)
    x = jax.random.normal(kx, (L, N, D), jnp.float32)        # (tgt_seq, batch, d_model)
    memory = jax.random.normal(km, (S, N, D), jnp.float32)   # (mem_seq, batch, d_model)

    neg = jnp.float32(-1e9)
    tril_mask = jnp.where(jnp.tril(jnp.ones((L, L), bool)), 0.0, neg).astype(jnp.float32)
    pad_mask = jnp.zeros((L, S), jnp.float32).at[:, S - 3:].set(neg)

    params = init_params(kp, D)
    packed = pack_params(params, n_head)

    out = decoder_residual_attention_block(x, memory, tril_mask, pad_mask,
                                           packed, n_head)
    out = jax.block_until_ready(out)

    ref = _ref_forward(x, memory, tril_mask, pad_mask, packed, n_head)
    np.testing.assert_allclose(np.asarray(out), np.asarray(ref),
                               rtol=2e-2, atol=2e-2)

    print("KERNEL_OK")
</pallas_src>

<mosaic_0001>
module attributes {stable_mosaic.version = 11 : i64} {
  func.func @_block_kernel(%arg0: i32, %arg1: memref<8x2x128xf32, #tpu.memory_space<vmem>>, %arg2: memref<16x2x128xf32, #tpu.memory_space<vmem>>, %arg3: memref<8x8xf32, #tpu.memory_space<vmem>>, %arg4: memref<8x16xf32, #tpu.memory_space<vmem>>, %arg5: memref<1x128xf32, #tpu.memory_space<vmem>>, %arg6: memref<1x128xf32, #tpu.memory_space<vmem>>, %arg7: memref<128x128xbf16, #tpu.memory_space<vmem>>, %arg8: memref<1x128xf32, #tpu.memory_space<vmem>>, %arg9: memref<128x256xbf16, #tpu.memory_space<vmem>>, %arg10: memref<1x256xf32, #tpu.memory_space<vmem>>, %arg11: memref<128x128xbf16, #tpu.memory_space<vmem>>, %arg12: memref<1x128xf32, #tpu.memory_space<vmem>>, %arg13: memref<1x128xf32, #tpu.memory_space<vmem>>, %arg14: memref<1x128xf32, #tpu.memory_space<vmem>>, %arg15: memref<128x128xbf16, #tpu.memory_space<vmem>>, %arg16: memref<1x128xf32, #tpu.memory_space<vmem>>, %arg17: memref<128x256xbf16, #tpu.memory_space<vmem>>, %arg18: memref<1x256xf32, #tpu.memory_space<vmem>>, %arg19: memref<128x128xbf16, #tpu.memory_space<vmem>>, %arg20: memref<1x128xf32, #tpu.memory_space<vmem>>, %arg21: memref<128x512xbf16, #tpu.memory_space<vmem>>, %arg22: memref<1x512xf32, #tpu.memory_space<vmem>>, %arg23: memref<512x128xbf16, #tpu.memory_space<vmem>>, %arg24: memref<1x128xf32, #tpu.memory_space<vmem>>, %arg25: memref<8x2x128xf32, #tpu.memory_space<vmem>>) attributes {dimension_semantics = [#tpu.dimension_semantics<parallel>], iteration_bounds = array<i64: 1>, scalar_prefetch = 0 : i64, scratch_operands = 0 : i64, tpu.core_type = #tpu.core_type<tc>, window_params = [{transform_indices = @transform_0, window_bounds = array<i64: 8, 2, 128>}, {transform_indices = @transform_1, window_bounds = array<i64: 16, 2, 128>}, {pipeline_mode = #tpu.pipeline_mode<synchronous>, transform_indices = @transform_2, window_bounds = array<i64: 8, 8>}, {pipeline_mode = #tpu.pipeline_mode<synchronous>, transform_indices = @transform_3, window_bounds = array<i64: 8, 16>}, {pipeline_mode = #tpu.pipeline_mode<synchronous>, transform_indices = @transform_4, window_bounds = array<i64: 1, 128>}, {pipeline_mode = #tpu.pipeline_mode<synchronous>, transform_indices = @transform_5, window_bounds = array<i64: 1, 128>}, {pipeline_mode = #tpu.pipeline_mode<synchronous>, transform_indices = @transform_6, window_bounds = array<i64: 128, 128>}, {pipeline_mode = #tpu.pipeline_mode<synchronous>, transform_indices = @transform_7, window_bounds = array<i64: 1, 128>}, {pipeline_mode = #tpu.pipeline_mode<synchronous>, transform_indices = @transform_8, window_bounds = array<i64: 128, 256>}, {pipeline_mode = #tpu.pipeline_mode<synchronous>, transform_indices = @transform_9, window_bounds = array<i64: 1, 256>}, {pipeline_mode = #tpu.pipeline_mode<synchronous>, transform_indices = @transform_10, window_bounds = array<i64: 128, 128>}, {pipeline_mode = #tpu.pipeline_mode<synchronous>, transform_indices = @transform_11, window_bounds = array<i64: 1, 128>}, {pipeline_mode = #tpu.pipeline_mode<synchronous>, transform_indices = @transform_12, window_bounds = array<i64: 1, 128>}, {pipeline_mode = #tpu.pipeline_mode<synchronous>, transform_indices = @transform_13, window_bounds = array<i64: 1, 128>}, {pipeline_mode = #tpu.pipeline_mode<synchronous>, transform_indices = @transform_14, window_bounds = array<i64: 128, 128>}, {pipeline_mode = #tpu.pipeline_mode<synchronous>, transform_indices = @transform_15, window_bounds = array<i64: 1, 128>}, {pipeline_mode = #tpu.pipeline_mode<synchronous>, transform_indices = @transform_16, window_bounds = array<i64: 128, 256>}, {pipeline_mode = #tpu.pipeline_mode<synchronous>, transform_indices = @transform_17, window_bounds = array<i64: 1, 256>}, {pipeline_mode = #tpu.pipeline_mode<synchronous>, transform_indices = @transform_18, window_bounds = array<i64: 128, 128>}, {pipeline_mode = #tpu.pipeline_mode<synchronous>, transform_indices = @transform_19, window_bounds = array<i64: 1, 128>}, {pipeline_mode = #tpu.pipeline_mode<synchronous>, transform_indices = @transform_20, window_bounds = array<i64: 128, 512>}, {pipeline_mode = #tpu.pipeline_mode<synchronous>, transform_indices = @transform_21, window_bounds = array<i64: 1, 512>}, {pipeline_mode = #tpu.pipeline_mode<synchronous>, transform_indices = @transform_22, window_bounds = array<i64: 512, 128>}, {pipeline_mode = #tpu.pipeline_mode<synchronous>, transform_indices = @transform_23, window_bounds = array<i64: 1, 128>}, {transform_indices = @transform_24, window_bounds = array<i64: 8, 2, 128>}]} {
    %c0 = arith.constant 0 : index
    %c0_0 = arith.constant 0 : index
    %c0_1 = arith.constant 0 : index
    %0 = vector.load %arg1[%c0, %c0_0, %c0_1] : memref<8x2x128xf32, #tpu.memory_space<vmem>>, vector<8x2x128xf32>
    %1 = vector.shape_cast %0 : vector<8x2x128xf32> to vector<16x128xf32>
    %c0_2 = arith.constant 0 : index
    %c0_3 = arith.constant 0 : index
    %c0_4 = arith.constant 0 : index
    %2 = vector.load %arg2[%c0_2, %c0_3, %c0_4] : memref<16x2x128xf32, #tpu.memory_space<vmem>>, vector<16x2x128xf32>
    %3 = vector.shape_cast %2 : vector<16x2x128xf32> to vector<32x128xf32>
    %c0_5 = arith.constant 0 : index
    %c0_6 = arith.constant 0 : index
    %4 = vector.load %arg3[%c0_5, %c0_6] : memref<8x8xf32, #tpu.memory_space<vmem>>, vector<8x8xf32>
    %c0_7 = arith.constant 0 : index
    %c0_8 = arith.constant 0 : index
    %5 = vector.load %arg4[%c0_7, %c0_8] : memref<8x16xf32, #tpu.memory_space<vmem>>, vector<8x16xf32>
    %c0_9 = arith.constant 0 : index
    %c0_10 = arith.constant 0 : index
    %6 = vector.load %arg5[%c0_9, %c0_10] : memref<1x128xf32, #tpu.memory_space<vmem>>, vector<1x128xf32>
    %c0_11 = arith.constant 0 : index
    %c0_12 = arith.constant 0 : index
    %7 = vector.load %arg6[%c0_11, %c0_12] : memref<1x128xf32, #tpu.memory_space<vmem>>, vector<1x128xf32>
    %c0_13 = arith.constant 0 : index
    %c0_14 = arith.constant 0 : index
    %8 = vector.load %arg13[%c0_13, %c0_14] : memref<1x128xf32, #tpu.memory_space<vmem>>, vector<1x128xf32>
    %c0_15 = arith.constant 0 : index
    %c0_16 = arith.constant 0 : index
    %9 = vector.load %arg14[%c0_15, %c0_16] : memref<1x128xf32, #tpu.memory_space<vmem>>, vector<1x128xf32>
    %cst = arith.constant dense<0.000000e+00> : vector<16xf32>
    %10 = vector.multi_reduction <add>, %1, %cst [1] : vector<16x128xf32> to vector<16xf32>
    %11 = vector.shape_cast %10 : vector<16xf32> to vector<16x1xf32>
    %cst_17 = arith.constant 1.280000e+02 : f32
    %12 = vector.broadcast %cst_17 : f32 to vector<16x1xf32>
    %13 = arith.divf %11, %12 : vector<16x1xf32>
    %14 = vector.broadcast %13 : vector<16x1xf32> to vector<16x128xf32>
    %15 = arith.subf %1, %14 : vector<16x128xf32>
    %16 = arith.mulf %15, %15 : vector<16x128xf32>
    %cst_18 = arith.constant dense<0.000000e+00> : vector<16xf32>
    %17 = vector.multi_reduction <add>, %16, %cst_18 [1] : vector<16x128xf32> to vector<16xf32>
    %18 = vector.shape_cast %17 : vector<16xf32> to vector<16x1xf32>
    %cst_19 = arith.constant 1.280000e+02 : f32
    %19 = vector.broadcast %cst_19 : f32 to vector<16x1xf32>
    %20 = arith.divf %18, %19 : vector<16x1xf32>
    %21 = vector.broadcast %13 : vector<16x1xf32> to vector<16x128xf32>
    %22 = arith.subf %1, %21 : vector<16x128xf32>
    %cst_20 = arith.constant 9.99999974E-6 : f32
    %23 = vector.broadcast %cst_20 : f32 to vector<16x1xf32>
    %24 = arith.addf %20, %23 : vector<16x1xf32>
    %25 = math.rsqrt %24 : vector<16x1xf32>
    %26 = vector.broadcast %25 : vector<16x1xf32> to vector<16x128xf32>
    %27 = arith.mulf %22, %26 : vector<16x128xf32>
    %28 = vector.broadcast %6 : vector<1x128xf32> to vector<16x128xf32>
    %29 = arith.mulf %27, %28 : vector<16x128xf32>
    %30 = vector.broadcast %7 : vector<1x128xf32> to vector<16x128xf32>
    %31 = arith.addf %29, %30 : vector<16x128xf32>
    %32 = arith.truncf %31 : vector<16x128xf32> to vector<16x128xbf16>
    %c0_21 = arith.constant 0 : index
    %c0_22 = arith.constant 0 : index
    %33 = vector.load %arg7[%c0_21, %c0_22] : memref<128x128xbf16, #tpu.memory_space<vmem>>, vector<128x128xbf16>
    %cst_23 = arith.constant dense<0.000000e+00> : vector<16x128xf32>
    %34 = tpu.matmul %32, %33, %cst_23 {dimension_numbers = #tpu.dot_dimension_numbers<[1], [0], [0], [1], [0, 0, 1, 1], [], []>} : vector<16x128xbf16>, vector<128x128xbf16>, vector<16x128xf32> -> vector<16x128xf32>
    %c0_24 = arith.constant 0 : index
    %c0_25 = arith.constant 0 : index
    %35 = vector.load %arg8[%c0_24, %c0_25] : memref<1x128xf32, #tpu.memory_space<vmem>>, vector<1x128xf32>
    %36 = vector.broadcast %35 : vector<1x128xf32> to vector<16x128xf32>
    %37 = arith.addf %34, %36 : vector<16x128xf32>
    %38 = arith.truncf %1 : vector<16x128xf32> to vector<16x128xbf16>
    %c0_26 = arith.constant 0 : index
    %c0_27 = arith.constant 0 : index
    %39 = vector.load %arg9[%c0_26, %c0_27] : memref<128x256xbf16, #tpu.memory_space<vmem>>, vector<128x256xbf16>
    %cst_28 = arith.constant dense<0.000000e+00> : vector<16x256xf32>
    %40 = tpu.matmul %38, %39, %cst_28 {dimension_numbers = #tpu.dot_dimension_numbers<[1], [0], [0], [1], [0, 0, 1, 1], [], []>} : vector<16x128xbf16>, vector<128x256xbf16>, vector<16x256xf32> -> vector<16x256xf32>
    %c0_29 = arith.constant 0 : index
    %c0_30 = arith.constant 0 : index
    %41 = vector.load %arg10[%c0_29, %c0_30] : memref<1x256xf32, #tpu.memory_space<vmem>>, vector<1x256xf32>
    %42 = vector.broadcast %41 : vector<1x256xf32> to vector<16x256xf32>
    %43 = arith.addf %40, %42 : vector<16x256xf32>
    %44 = vector.shape_cast %37 : vector<16x128xf32> to vector<8x2x128xf32>
    %45 = vector.extract_strided_slice %43 {offsets = [0, 0], sizes = [16, 128], strides = [1, 1]} : vector<16x256xf32> to vector<16x128xf32>
    %46 = vector.shape_cast %45 : vector<16x128xf32> to vector<8x2x128xf32>
    %47 = vector.extract_strided_slice %43 {offsets = [0, 128], sizes = [16, 128], strides = [1, 1]} : vector<16x256xf32> to vector<16x128xf32>
    %48 = vector.shape_cast %47 : vector<16x128xf32> to vector<8x2x128xf32>
    %49 = vector.extract_strided_slice %44 {offsets = [0, 0, 0], sizes = [8, 1, 128], strides = [1, 1, 1]} : vector<8x2x128xf32> to vector<8x1x128xf32>
    %50 = vector.shape_cast %49 : vector<8x1x128xf32> to vector<8x128xf32>
    %51 = vector.shape_cast %50 : vector<8x128xf32> to vector<8x4x32xf32>
    %52 = tpu.transpose %51, [1, 0, 2] : vector<8x4x32xf32> -> vector<4x8x32xf32>
    %53 = vector.extract_strided_slice %46 {offsets = [0, 0, 0], sizes = [8, 1, 128], strides = [1, 1, 1]} : vector<8x2x128xf32> to vector<8x1x128xf32>
    %54 = vector.shape_cast %53 : vector<8x1x128xf32> to vector<8x128xf32>
    %55 = vector.shape_cast %54 : vector<8x128xf32> to vector<8x4x32xf32>
    %56 = tpu.transpose %55, [1, 0, 2] : vector<8x4x32xf32> -> vector<4x8x32xf32>
    %57 = vector.extract_strided_slice %48 {offsets = [0, 0, 0], sizes = [8, 1, 128], strides = [1, 1, 1]} : vector<8x2x128xf32> to vector<8x1x128xf32>
    %58 = vector.shape_cast %57 : vector<8x1x128xf32> to vector<8x128xf32>
    %59 = vector.shape_cast %58 : vector<8x128xf32> to vector<8x4x32xf32>
    %60 = tpu.transpose %59, [1, 0, 2] : vector<8x4x32xf32> -> vector<4x8x32xf32>
    %61 = arith.truncf %52 : vector<4x8x32xf32> to vector<4x8x32xbf16>
    %62 = arith.truncf %56 : vector<4x8x32xf32> to vector<4x8x32xbf16>
    "tpu.trace_start"() <{level = 10 : i32, message = "hqd,hkd->hqk"}> : () -> ()
    %cst_31 = arith.constant dense<0.000000e+00> : vector<4x8x8xf32>
    %63 = tpu.matmul %61, %62, %cst_31 {dimension_numbers = #tpu.dot_dimension_numbers<[2], [2], [1], [1], [0, 0, 0, 1, 1, 1], [0], [0]>} : vector<4x8x32xbf16>, vector<4x8x32xbf16>, vector<4x8x8xf32> -> vector<4x8x8xf32>
    "tpu.trace_stop"() : () -> ()
    %64 = vector.shape_cast %4 : vector<8x8xf32> to vector<1x8x8xf32>
    %65 = vector.broadcast %64 : vector<1x8x8xf32> to vector<4x8x8xf32>
    %66 = arith.addf %63, %65 : vector<4x8x8xf32>
    %cst_32 = arith.constant dense<0xFF800000> : vector<4x8xf32>
    %67 = vector.multi_reduction <maximumf>, %66, %cst_32 [2] : vector<4x8x8xf32> to vector<4x8xf32>
    %68 = vector.shape_cast %67 : vector<4x8xf32> to vector<4x8x1xf32>
    %69 = vector.broadcast %68 : vector<4x8x1xf32> to vector<4x8x8xf32>
    %70 = arith.subf %66, %69 : vector<4x8x8xf32>
    %71 = math.exp %70 : vector<4x8x8xf32>
    %cst_33 = arith.constant dense<0.000000e+00> : vector<4x8xf32>
    %72 = vector.multi_reduction <add>, %71, %cst_33 [2] : vector<4x8x8xf32> to vector<4x8xf32>
    %73 = vector.shape_cast %72 : vector<4x8xf32> to vector<4x8x1xf32>
    %74 = tpu.reciprocal %73 {approx = true} : vector<4x8x1xf32> -> vector<4x8x1xf32>
    %75 = vector.broadcast %74 : vector<4x8x1xf32> to vector<4x8x8xf32>
    %76 = arith.mulf %71, %75 : vector<4x8x8xf32>
    %77 = arith.truncf %76 : vector<4x8x8xf32> to vector<4x8x8xbf16>
    %78 = arith.truncf %60 : vector<4x8x32xf32> to vector<4x8x32xbf16>
    "tpu.trace_start"() <{level = 10 : i32, message = "hqk,hkd->hqd"}> : () -> ()
    %cst_34 = arith.constant dense<0.000000e+00> : vector<4x8x32xf32>
    %79 = tpu.matmul %77, %78, %cst_34 {dimension_numbers = #tpu.dot_dimension_numbers<[2], [1], [1], [2], [0, 0, 0, 1, 1, 2], [0], [0]>} : vector<4x8x8xbf16>, vector<4x8x32xbf16>, vector<4x8x32xf32> -> vector<4x8x32xf32>
    "tpu.trace_stop"() : () -> ()
    %80 = tpu.transpose %79, [1, 0, 2] : vector<4x8x32xf32> -> vector<8x4x32xf32>
    %81 = vector.shape_cast %80 : vector<8x4x32xf32> to vector<8x128xf32>
    %82 = vector.extract_strided_slice %44 {offsets = [0, 1, 0], sizes = [8, 1, 128], strides = [1, 1, 1]} : vector<8x2x128xf32> to vector<8x1x128xf32>
    %83 = vector.shape_cast %82 : vector<8x1x128xf32> to vector<8x128xf32>
    %84 = vector.shape_cast %83 : vector<8x128xf32> to vector<8x4x32xf32>
    %85 = tpu.transpose %84, [1, 0, 2] : vector<8x4x32xf32> -> vector<4x8x32xf32>
    %86 = vector.extract_strided_slice %46 {offsets = [0, 1, 0], sizes = [8, 1, 128], strides = [1, 1, 1]} : vector<8x2x128xf32> to vector<8x1x128xf32>
    %87 = vector.shape_cast %86 : vector<8x1x128xf32> to vector<8x128xf32>
    %88 = vector.shape_cast %87 : vector<8x128xf32> to vector<8x4x32xf32>
    %89 = tpu.transpose %88, [1, 0, 2] : vector<8x4x32xf32> -> vector<4x8x32xf32>
    %90 = vector.extract_strided_slice %48 {offsets = [0, 1, 0], sizes = [8, 1, 128], strides = [1, 1, 1]} : vector<8x2x128xf32> to vector<8x1x128xf32>
    %91 = vector.shape_cast %90 : vector<8x1x128xf32> to vector<8x128xf32>
    %92 = vector.shape_cast %91 : vector<8x128xf32> to vector<8x4x32xf32>
    %93 = tpu.transpose %92, [1, 0, 2] : vector<8x4x32xf32> -> vector<4x8x32xf32>
    %94 = arith.truncf %85 : vector<4x8x32xf32> to vector<4x8x32xbf16>
    %95 = arith.truncf %89 : vector<4x8x32xf32> to vector<4x8x32xbf16>
    "tpu.trace_start"() <{level = 10 : i32, message = "hqd,hkd->hqk"}> : () -> ()
    %cst_35 = arith.constant dense<0.000000e+00> : vector<4x8x8xf32>
    %96 = tpu.matmul %94, %95, %cst_35 {dimension_numbers = #tpu.dot_dimension_numbers<[2], [2], [1], [1], [0, 0, 0, 1, 1, 1], [0], [0]>} : vector<4x8x32xbf16>, vector<4x8x32xbf16>, vector<4x8x8xf32> -> vector<4x8x8xf32>
    "tpu.trace_stop"() : () -> ()
    %97 = vector.shape_cast %4 : vector<8x8xf32> to vector<1x8x8xf32>
    %98 = vector.broadcast %97 : vector<1x8x8xf32> to vector<4x8x8xf32>
    %99 = arith.addf %96, %98 : vector<4x8x8xf32>
    %cst_36 = arith.constant dense<0xFF800000> : vector<4x8xf32>
    %100 = vector.multi_reduction <maximumf>, %99, %cst_36 [2] : vector<4x8x8xf32> to vector<4x8xf32>
    %101 = vector.shape_cast %100 : vector<4x8xf32> to vector<4x8x1xf32>
    %102 = vector.broadcast %101 : vector<4x8x1xf32> to vector<4x8x8xf32>
    %103 = arith.subf %99, %102 : vector<4x8x8xf32>
    %104 = math.exp %103 : vector<4x8x8xf32>
    %cst_37 = arith.constant dense<0.000000e+00> : vector<4x8xf32>
    %105 = vector.multi_reduction <add>, %104, %cst_37 [2] : vector<4x8x8xf32> to vector<4x8xf32>
    %106 = vector.shape_cast %105 : vector<4x8xf32> to vector<4x8x1xf32>
    %107 = tpu.reciprocal %106 {approx = true} : vector<4x8x1xf32> -> vector<4x8x1xf32>
    %108 = vector.broadcast %107 : vector<4x8x1xf32> to vector<4x8x8xf32>
    %109 = arith.mulf %104, %108 : vector<4x8x8xf32>
    %110 = arith.truncf %109 : vector<4x8x8xf32> to vector<4x8x8xbf16>
    %111 = arith.truncf %93 : vector<4x8x32xf32> to vector<4x8x32xbf16>
    "tpu.trace_start"() <{level = 10 : i32, message = "hqk,hkd->hqd"}> : () -> ()
    %cst_38 = arith.constant dense<0.000000e+00> : vector<4x8x32xf32>
    %112 = tpu.matmul %110, %111, %cst_38 {dimension_numbers = #tpu.dot_dimension_numbers<[2], [1], [1], [2], [0, 0, 0, 1, 1, 2], [0], [0]>} : vector<4x8x8xbf16>, vector<4x8x32xbf16>, vector<4x8x32xf32> -> vector<4x8x32xf32>
    "tpu.trace_stop"() : () -> ()
    %113 = tpu.transpose %112, [1, 0, 2] : vector<4x8x32xf32> -> vector<8x4x32xf32>
    %114 = vector.shape_cast %113 : vector<8x4x32xf32> to vector<8x128xf32>
    %115 = vector.shape_cast %81 : vector<8x128xf32> to vector<8x1x128xf32>
    %116 = vector.shape_cast %114 : vector<8x128xf32> to vector<8x1x128xf32>
    %117 = tpu.concatenate %115, %116 in 1 : vector<8x1x128xf32>, vector<8x1x128xf32> -> vector<8x2x128xf32>
    %118 = vector.shape_cast %117 : vector<8x2x128xf32> to vector<16x128xf32>
    %119 = arith.truncf %118 : vector<16x128xf32> to vector<16x128xbf16>
    %c0_39 = arith.constant 0 : index
    %c0_40 = arith.constant 0 : index
    %120 = vector.load %arg11[%c0_39, %c0_40] : memref<128x128xbf16, #tpu.memory_space<vmem>>, vector<128x128xbf16>
    %cst_41 = arith.constant dense<0.000000e+00> : vector<16x128xf32>
    %121 = tpu.matmul %119, %120, %cst_41 {dimension_numbers = #tpu.dot_dimension_numbers<[1], [0], [0], [1], [0, 0, 1, 1], [], []>} : vector<16x128xbf16>, vector<128x128xbf16>, vector<16x128xf32> -> vector<16x128xf32>
    %122 = arith.addf %1, %121 : vector<16x128xf32>
    %c0_42 = arith.constant 0 : index
    %c0_43 = arith.constant 0 : index
    %123 = vector.load %arg12[%c0_42, %c0_43] : memref<1x128xf32, #tpu.memory_space<vmem>>, vector<1x128xf32>
    %124 = vector.broadcast %123 : vector<1x128xf32> to vector<16x128xf32>
    %125 = arith.addf %122, %124 : vector<16x128xf32>
    %cst_44 = arith.constant dense<0.000000e+00> : vector<16xf32>
    %126 = vector.multi_reduction <add>, %125, %cst_44 [1] : vector<16x128xf32> to vector<16xf32>
    %127 = vector.shape_cast %126 : vector<16xf32> to vector<16x1xf32>
    %cst_45 = arith.constant 1.280000e+02 : f32
    %128 = vector.broadcast %cst_45 : f32 to vector<16x1xf32>
    %129 = arith.divf %127, %128 : vector<16x1xf32>
    %130 = vector.broadcast %129 : vector<16x1xf32> to vector<16x128xf32>
    %131 = arith.subf %125, %130 : vector<16x128xf32>
    %132 = arith.mulf %131, %131 : vector<16x128xf32>
    %cst_46 = arith.constant dense<0.000000e+00> : vector<16xf32>
    %133 = vector.multi_reduction <add>, %132, %cst_46 [1] : vector<16x128xf32> to vector<16xf32>
    %134 = vector.shape_cast %133 : vector<16xf32> to vector<16x1xf32>
    %cst_47 = arith.constant 1.280000e+02 : f32
    %135 = vector.broadcast %cst_47 : f32 to vector<16x1xf32>
    %136 = arith.divf %134, %135 : vector<16x1xf32>
    %137 = vector.broadcast %129 : vector<16x1xf32> to vector<16x128xf32>
    %138 = arith.subf %125, %137 : vector<16x128xf32>
    %cst_48 = arith.constant 9.99999974E-6 : f32
    %139 = vector.broadcast %cst_48 : f32 to vector<16x1xf32>
    %140 = arith.addf %136, %139 : vector<16x1xf32>
    %141 = math.rsqrt %140 : vector<16x1xf32>
    %142 = vector.broadcast %141 : vector<16x1xf32> to vector<16x128xf32>
    %143 = arith.mulf %138, %142 : vector<16x128xf32>
    %144 = vector.broadcast %8 : vector<1x128xf32> to vector<16x128xf32>
    %145 = arith.mulf %143, %144 : vector<16x128xf32>
    %146 = vector.broadcast %9 : vector<1x128xf32> to vector<16x128xf32>
    %147 = arith.addf %145, %146 : vector<16x128xf32>
    %148 = arith.truncf %147 : vector<16x128xf32> to vector<16x128xbf16>
    %c0_49 = arith.constant 0 : index
    %c0_50 = arith.constant 0 : index
    %149 = vector.load %arg15[%c0_49, %c0_50] : memref<128x128xbf16, #tpu.memory_space<vmem>>, vector<128x128xbf16>
    %cst_51 = arith.constant dense<0.000000e+00> : vector<16x128xf32>
    %150 = tpu.matmul %148, %149, %cst_51 {dimension_numbers = #tpu.dot_dimension_numbers<[1], [0], [0], [1], [0, 0, 1, 1], [], []>} : vector<16x128xbf16>, vector<128x128xbf16>, vector<16x128xf32> -> vector<16x128xf32>
    %c0_52 = arith.constant 0 : index
    %c0_53 = arith.constant 0 : index
    %151 = vector.load %arg16[%c0_52, %c0_53] : memref<1x128xf32, #tpu.memory_space<vmem>>, vector<1x128xf32>
    %152 = vector.broadcast %151 : vector<1x128xf32> to vector<16x128xf32>
    %153 = arith.addf %150, %152 : vector<16x128xf32>
    %154 = arith.truncf %3 : vector<32x128xf32> to vector<32x128xbf16>
    %c0_54 = arith.constant 0 : index
    %c0_55 = arith.constant 0 : index
    %155 = vector.load %arg17[%c0_54, %c0_55] : memref<128x256xbf16, #tpu.memory_space<vmem>>, vector<128x256xbf16>
    %cst_56 = arith.constant dense<0.000000e+00> : vector<32x256xf32>
    %156 = tpu.matmul %154, %155, %cst_56 {dimension_numbers = #tpu.dot_dimension_numbers<[1], [0], [0], [1], [0, 0, 1, 1], [], []>} : vector<32x128xbf16>, vector<128x256xbf16>, vector<32x256xf32> -> vector<32x256xf32>
    %c0_57 = arith.constant 0 : index
    %c0_58 = arith.constant 0 : index
    %157 = vector.load %arg18[%c0_57, %c0_58] : memref<1x256xf32, #tpu.memory_space<vmem>>, vector<1x256xf32>
    %158 = vector.broadcast %157 : vector<1x256xf32> to vector<32x256xf32>
    %159 = arith.addf %156, %158 : vector<32x256xf32>
    %160 = vector.shape_cast %153 : vector<16x128xf32> to vector<8x2x128xf32>
    %161 = vector.extract_strided_slice %159 {offsets = [0, 0], sizes = [32, 128], strides = [1, 1]} : vector<32x256xf32> to vector<32x128xf32>
    %162 = vector.shape_cast %161 : vector<32x128xf32> to vector<16x2x128xf32>
    %163 = vector.extract_strided_slice %159 {offsets = [0, 128], sizes = [32, 128], strides = [1, 1]} : vector<32x256xf32> to vector<32x128xf32>
    %164 = vector.shape_cast %163 : vector<32x128xf32> to vector<16x2x128xf32>
    %165 = vector.extract_strided_slice %160 {offsets = [0, 0, 0], sizes = [8, 1, 128], strides = [1, 1, 1]} : vector<8x2x128xf32> to vector<8x1x128xf32>
    %166 = vector.shape_cast %165 : vector<8x1x128xf32> to vector<8x128xf32>
    %167 = vector.shape_cast %166 : vector<8x128xf32> to vector<8x4x32xf32>
    %168 = tpu.transpose %167, [1, 0, 2] : vector<8x4x32xf32> -> vector<4x8x32xf32>
    %169 = vector.extract_strided_slice %162 {offsets = [0, 0, 0], sizes = [16, 1, 128], strides = [1, 1, 1]} : vector<16x2x128xf32> to vector<16x1x128xf32>
    %170 = vector.shape_cast %169 : vector<16x1x128xf32> to vector<16x128xf32>
    %171 = vector.shape_cast %170 : vector<16x128xf32> to vector<16x4x32xf32>
    %172 = tpu.transpose %171, [1, 0, 2] : vector<16x4x32xf32> -> vector<4x16x32xf32>
    %173 = vector.extract_strided_slice %164 {offsets = [0, 0, 0], sizes = [16, 1, 128], strides = [1, 1, 1]} : vector<16x2x128xf32> to vector<16x1x128xf32>
    %174 = vector.shape_cast %173 : vector<16x1x128xf32> to vector<16x128xf32>
    %175 = vector.shape_cast %174 : vector<16x128xf32> to vector<16x4x32xf32>
    %176 = tpu.transpose %175, [1, 0, 2] : vector<16x4x32xf32> -> vector<4x16x32xf32>
    %177 = arith.truncf %168 : vector<4x8x32xf32> to vector<4x8x32xbf16>
    %178 = arith.truncf %172 : vector<4x16x32xf32> to vector<4x16x32xbf16>
    "tpu.trace_start"() <{level = 10 : i32, message = "hqd,hkd->hqk"}> : () -> ()
    %cst_59 = arith.constant dense<0.000000e+00> : vector<4x8x16xf32>
    %179 = tpu.matmul %177, %178, %cst_59 {dimension_numbers = #tpu.dot_dimension_numbers<[2], [2], [1], [1], [0, 0, 0, 1, 1, 1], [0], [0]>} : vector<4x8x32xbf16>, vector<4x16x32xbf16>, vector<4x8x16xf32> -> vector<4x8x16xf32>
    "tpu.trace_stop"() : () -> ()
    %180 = vector.shape_cast %5 : vector<8x16xf32> to vector<1x8x16xf32>
    %181 = vector.broadcast %180 : vector<1x8x16xf32> to vector<4x8x16xf32>
    %182 = arith.addf %179, %181 : vector<4x8x16xf32>
    %cst_60 = arith.constant dense<0xFF800000> : vector<4x8xf32>
    %183 = vector.multi_reduction <maximumf>, %182, %cst_60 [2] : vector<4x8x16xf32> to vector<4x8xf32>
    %184 = vector.shape_cast %183 : vector<4x8xf32> to vector<4x8x1xf32>
    %185 = vector.broadcast %184 : vector<4x8x1xf32> to vector<4x8x16xf32>
    %186 = arith.subf %182, %185 : vector<4x8x16xf32>
    %187 = math.exp %186 : vector<4x8x16xf32>
    %cst_61 = arith.constant dense<0.000000e+00> : vector<4x8xf32>
    %188 = vector.multi_reduction <add>, %187, %cst_61 [2] : vector<4x8x16xf32> to vector<4x8xf32>
    %189 = vector.shape_cast %188 : vector<4x8xf32> to vector<4x8x1xf32>
    %190 = tpu.reciprocal %189 {approx = true} : vector<4x8x1xf32> -> vector<4x8x1xf32>
    %191 = vector.broadcast %190 : vector<4x8x1xf32> to vector<4x8x16xf32>
    %192 = arith.mulf %187, %191 : vector<4x8x16xf32>
    %193 = arith.truncf %192 : vector<4x8x16xf32> to vector<4x8x16xbf16>
    %194 = arith.truncf %176 : vector<4x16x32xf32> to vector<4x16x32xbf16>
    "tpu.trace_start"() <{level = 10 : i32, message = "hqk,hkd->hqd"}> : () -> ()
    %cst_62 = arith.constant dense<0.000000e+00> : vector<4x8x32xf32>
    %195 = tpu.matmul %193, %194, %cst_62 {dimension_numbers = #tpu.dot_dimension_numbers<[2], [1], [1], [2], [0, 0, 0, 1, 1, 2], [0], [0]>} : vector<4x8x16xbf16>, vector<4x16x32xbf16>, vector<4x8x32xf32> -> vector<4x8x32xf32>
    "tpu.trace_stop"() : () -> ()
    %196 = tpu.transpose %195, [1, 0, 2] : vector<4x8x32xf32> -> vector<8x4x32xf32>
    %197 = vector.shape_cast %196 : vector<8x4x32xf32> to vector<8x128xf32>
    %198 = vector.extract_strided_slice %160 {offsets = [0, 1, 0], sizes = [8, 1, 128], strides = [1, 1, 1]} : vector<8x2x128xf32> to vector<8x1x128xf32>
    %199 = vector.shape_cast %198 : vector<8x1x128xf32> to vector<8x128xf32>
    %200 = vector.shape_cast %199 : vector<8x128xf32> to vector<8x4x32xf32>
    %201 = tpu.transpose %200, [1, 0, 2] : vector<8x4x32xf32> -> vector<4x8x32xf32>
    %202 = vector.extract_strided_slice %162 {offsets = [0, 1, 0], sizes = [16, 1, 128], strides = [1, 1, 1]} : vector<16x2x128xf32> to vector<16x1x128xf32>
    %203 = vector.shape_cast %202 : vector<16x1x128xf32> to vector<16x128xf32>
    %204 = vector.shape_cast %203 : vector<16x128xf32> to vector<16x4x32xf32>
    %205 = tpu.transpose %204, [1, 0, 2] : vector<16x4x32xf32> -> vector<4x16x32xf32>
    %206 = vector.extract_strided_slice %164 {offsets = [0, 1, 0], sizes = [16, 1, 128], strides = [1, 1, 1]} : vector<16x2x128xf32> to vector<16x1x128xf32>
    %207 = vector.shape_cast %206 : vector<16x1x128xf32> to vector<16x128xf32>
    %208 = vector.shape_cast %207 : vector<16x128xf32> to vector<16x4x32xf32>
    %209 = tpu.transpose %208, [1, 0, 2] : vector<16x4x32xf32> -> vector<4x16x32xf32>
    %210 = arith.truncf %201 : vector<4x8x32xf32> to vector<4x8x32xbf16>
    %211 = arith.truncf %205 : vector<4x16x32xf32> to vector<4x16x32xbf16>
    "tpu.trace_start"() <{level = 10 : i32, message = "hqd,hkd->hqk"}> : () -> ()
    %cst_63 = arith.constant dense<0.000000e+00> : vector<4x8x16xf32>
    %212 = tpu.matmul %210, %211, %cst_63 {dimension_numbers = #tpu.dot_dimension_numbers<[2], [2], [1], [1], [0, 0, 0, 1, 1, 1], [0], [0]>} : vector<4x8x32xbf16>, vector<4x16x32xbf16>, vector<4x8x16xf32> -> vector<4x8x16xf32>
    "tpu.trace_stop"() : () -> ()
    %213 = vector.shape_cast %5 : vector<8x16xf32> to vector<1x8x16xf32>
    %214 = vector.broadcast %213 : vector<1x8x16xf32> to vector<4x8x16xf32>
    %215 = arith.addf %212, %214 : vector<4x8x16xf32>
    %cst_64 = arith.constant dense<0xFF800000> : vector<4x8xf32>
    %216 = vector.multi_reduction <maximumf>, %215, %cst_64 [2] : vector<4x8x16xf32> to vector<4x8xf32>
    %217 = vector.shape_cast %216 : vector<4x8xf32> to vector<4x8x1xf32>
    %218 = vector.broadcast %217 : vector<4x8x1xf32> to vector<4x8x16xf32>
    %219 = arith.subf %215, %218 : vector<4x8x16xf32>
    %220 = math.exp %219 : vector<4x8x16xf32>
    %cst_65 = arith.constant dense<0.000000e+00> : vector<4x8xf32>
    %221 = vector.multi_reduction <add>, %220, %cst_65 [2] : vector<4x8x16xf32> to vector<4x8xf32>
    %222 = vector.shape_cast %221 : vector<4x8xf32> to vector<4x8x1xf32>
    %223 = tpu.reciprocal %222 {approx = true} : vector<4x8x1xf32> -> vector<4x8x1xf32>
    %224 = vector.broadcast %223 : vector<4x8x1xf32> to vector<4x8x16xf32>
    %225 = arith.mulf %220, %224 : vector<4x8x16xf32>
    %226 = arith.truncf %225 : vector<4x8x16xf32> to vector<4x8x16xbf16>
    %227 = arith.truncf %209 : vector<4x16x32xf32> to vector<4x16x32xbf16>
    "tpu.trace_start"() <{level = 10 : i32, message = "hqk,hkd->hqd"}> : () -> ()
    %cst_66 = arith.constant dense<0.000000e+00> : vector<4x8x32xf32>
    %228 = tpu.matmul %226, %227, %cst_66 {dimension_numbers = #tpu.dot_dimension_numbers<[2], [1], [1], [2], [0, 0, 0, 1, 1, 2], [0], [0]>} : vector<4x8x16xbf16>, vector<4x16x32xbf16>, vector<4x8x32xf32> -> vector<4x8x32xf32>
    "tpu.trace_stop"() : () -> ()
    %229 = tpu.transpose %228, [1, 0, 2] : vector<4x8x32xf32> -> vector<8x4x32xf32>
    %230 = vector.shape_cast %229 : vector<8x4x32xf32> to vector<8x128xf32>
    %231 = vector.shape_cast %197 : vector<8x128xf32> to vector<8x1x128xf32>
    %232 = vector.shape_cast %230 : vector<8x128xf32> to vector<8x1x128xf32>
    %233 = tpu.concatenate %231, %232 in 1 : vector<8x1x128xf32>, vector<8x1x128xf32> -> vector<8x2x128xf32>
    %234 = vector.shape_cast %233 : vector<8x2x128xf32> to vector<16x128xf32>
    %235 = arith.truncf %234 : vector<16x128xf32> to vector<16x128xbf16>
    %c0_67 = arith.constant 0 : index
    %c0_68 = arith.constant 0 : index
    %236 = vector.load %arg19[%c0_67, %c0_68] : memref<128x128xbf16, #tpu.memory_space<vmem>>, vector<128x128xbf16>
    %cst_69 = arith.constant dense<0.000000e+00> : vector<16x128xf32>
    %237 = tpu.matmul %235, %236, %cst_69 {dimension_numbers = #tpu.dot_dimension_numbers<[1], [0], [0], [1], [0, 0, 1, 1], [], []>} : vector<16x128xbf16>, vector<128x128xbf16>, vector<16x128xf32> -> vector<16x128xf32>
    %238 = arith.addf %125, %237 : vector<16x128xf32>
    %c0_70 = arith.constant 0 : index
    %c0_71 = arith.constant 0 : index
    %239 = vector.load %arg20[%c0_70, %c0_71] : memref<1x128xf32, #tpu.memory_space<vmem>>, vector<1x128xf32>
    %240 = vector.broadcast %239 : vector<1x128xf32> to vector<16x128xf32>
    %241 = arith.addf %238, %240 : vector<16x128xf32>
    %cst_72 = arith.constant dense<0.000000e+00> : vector<16xf32>
    %242 = vector.multi_reduction <add>, %241, %cst_72 [1] : vector<16x128xf32> to vector<16xf32>
    %243 = vector.shape_cast %242 : vector<16xf32> to vector<16x1xf32>
    %cst_73 = arith.constant 1.280000e+02 : f32
    %244 = vector.broadcast %cst_73 : f32 to vector<16x1xf32>
    %245 = arith.divf %243, %244 : vector<16x1xf32>
    %246 = vector.broadcast %245 : vector<16x1xf32> to vector<16x128xf32>
    %247 = arith.subf %241, %246 : vector<16x128xf32>
    %248 = arith.mulf %247, %247 : vector<16x128xf32>
    %cst_74 = arith.constant dense<0.000000e+00> : vector<16xf32>
    %249 = vector.multi_reduction <add>, %248, %cst_74 [1] : vector<16x128xf32> to vector<16xf32>
    %250 = vector.shape_cast %249 : vector<16xf32> to vector<16x1xf32>
    %cst_75 = arith.constant 1.280000e+02 : f32
    %251 = vector.broadcast %cst_75 : f32 to vector<16x1xf32>
    %252 = arith.divf %250, %251 : vector<16x1xf32>
    %253 = vector.broadcast %245 : vector<16x1xf32> to vector<16x128xf32>
    %254 = arith.subf %241, %253 : vector<16x128xf32>
    %cst_76 = arith.constant 9.99999974E-6 : f32
    %255 = vector.broadcast %cst_76 : f32 to vector<16x1xf32>
    %256 = arith.addf %252, %255 : vector<16x1xf32>
    %257 = math.rsqrt %256 : vector<16x1xf32>
    %258 = vector.broadcast %257 : vector<16x1xf32> to vector<16x128xf32>
    %259 = arith.mulf %254, %258 : vector<16x128xf32>
    %260 = vector.broadcast %8 : vector<1x128xf32> to vector<16x128xf32>
    %261 = arith.mulf %259, %260 : vector<16x128xf32>
    %262 = vector.broadcast %9 : vector<1x128xf32> to vector<16x128xf32>
    %263 = arith.addf %261, %262 : vector<16x128xf32>
    %264 = arith.truncf %263 : vector<16x128xf32> to vector<16x128xbf16>
    %c0_77 = arith.constant 0 : index
    %c0_78 = arith.constant 0 : index
    %265 = vector.load %arg21[%c0_77, %c0_78] : memref<128x512xbf16, #tpu.memory_space<vmem>>, vector<128x512xbf16>
    %cst_79 = arith.constant dense<0.000000e+00> : vector<16x512xf32>
    %266 = tpu.matmul %264, %265, %cst_79 {dimension_numbers = #tpu.dot_dimension_numbers<[1], [0], [0], [1], [0, 0, 1, 1], [], []>} : vector<16x128xbf16>, vector<128x512xbf16>, vector<16x512xf32> -> vector<16x512xf32>
    %c0_80 = arith.constant 0 : index
    %c0_81 = arith.constant 0 : index
    %267 = vector.load %arg22[%c0_80, %c0_81] : memref<1x512xf32, #tpu.memory_space<vmem>>, vector<1x512xf32>
    %268 = vector.broadcast %267 : vector<1x512xf32> to vector<16x512xf32>
    %269 = arith.addf %266, %268 : vector<16x512xf32>
    %cst_82 = arith.constant 1.702000e+00 : f32
    %270 = vector.broadcast %cst_82 : f32 to vector<16x512xf32>
    %271 = arith.mulf %270, %269 : vector<16x512xf32>
    %272 = arith.negf %271 : vector<16x512xf32>
    %273 = math.exp %272 : vector<16x512xf32>
    %cst_83 = arith.constant 1.000000e+00 : f32
    %274 = vector.broadcast %cst_83 : f32 to vector<16x512xf32>
    %275 = arith.addf %274, %273 : vector<16x512xf32>
    %276 = arith.divf %274, %275 : vector<16x512xf32>
    %277 = arith.mulf %269, %276 : vector<16x512xf32>
    %278 = arith.truncf %277 : vector<16x512xf32> to vector<16x512xbf16>
    %c0_84 = arith.constant 0 : index
    %c0_85 = arith.constant 0 : index
    %279 = vector.load %arg23[%c0_84, %c0_85] : memref<512x128xbf16, #tpu.memory_space<vmem>>, vector<512x128xbf16>
    %cst_86 = arith.constant dense<0.000000e+00> : vector<16x128xf32>
    %280 = tpu.matmul %278, %279, %cst_86 {dimension_numbers = #tpu.dot_dimension_numbers<[1], [0], [0], [1], [0, 0, 1, 1], [], []>} : vector<16x512xbf16>, vector<512x128xbf16>, vector<16x128xf32> -> vector<16x128xf32>
    %281 = arith.addf %241, %280 : vector<16x128xf32>
    %c0_87 = arith.constant 0 : index
    %c0_88 = arith.constant 0 : index
    %282 = vector.load %arg24[%c0_87, %c0_88] : memref<1x128xf32, #tpu.memory_space<vmem>>, vector<1x128xf32>
    %283 = vector.broadcast %282 : vector<1x128xf32> to vector<16x128xf32>
    %284 = arith.addf %281, %283 : vector<16x128xf32>
    %285 = vector.shape_cast %284 : vector<16x128xf32> to vector<8x2x128xf32>
    %c0_89 = arith.constant 0 : index
    %c0_90 = arith.constant 0 : index
    %c0_91 = arith.constant 0 : index
    %286 = vector.load %arg25[%c0_89, %c0_90, %c0_91] : memref<8x2x128xf32, #tpu.memory_space<vmem>>, vector<8x2x128xf32>
    tpu.vector_store %arg25[%c0_89, %c0_90, %c0_91], %285 {strides = array<i32>} : memref<8x2x128xf32, #tpu.memory_space<vmem>>, vector<8x2x128xf32>,
    return
  }
  func.func @transform_0(%arg0: i32) -> (i32, i32, i32) {
    %c0_i32 = arith.constant 0 : i32
    %c0_i32_0 = arith.constant 0 : i32
    %c0_i32_1 = arith.constant 0 : i32
    return %c0_i32, %arg0, %c0_i32_0 : i32, i32, i32
  }
  func.func @transform_1(%arg0: i32) -> (i32, i32, i32) {
    %c0_i32 = arith.constant 0 : i32
    %c0_i32_0 = arith.constant 0 : i32
    %c0_i32_1 = arith.constant 0 : i32
    return %c0_i32, %arg0, %c0_i32_0 : i32, i32, i32
  }
  func.func @transform_2(%arg0: i32) -> (i32, i32) {
    %c0_i32 = arith.constant 0 : i32
    %c0_i32_0 = arith.constant 0 : i32
    %c0_i32_1 = arith.constant 0 : i32
    return %c0_i32, %c0_i32_0 : i32, i32
  }
  func.func @transform_3(%arg0: i32) -> (i32, i32) {
    %c0_i32 = arith.constant 0 : i32
    %c0_i32_0 = arith.constant 0 : i32
    %c0_i32_1 = arith.constant 0 : i32
    return %c0_i32, %c0_i32_0 : i32, i32
  }
  func.func @transform_4(%arg0: i32) -> (i32, i32) {
    %c0_i32 = arith.constant 0 : i32
    %c0_i32_0 = arith.constant 0 : i32
    %c0_i32_1 = arith.constant 0 : i32
    return %c0_i32, %c0_i32_0 : i32, i32
  }
  func.func @transform_5(%arg0: i32) -> (i32, i32) {
    %c0_i32 = arith.constant 0 : i32
    %c0_i32_0 = arith.constant 0 : i32
    %c0_i32_1 = arith.constant 0 : i32
    return %c0_i32, %c0_i32_0 : i32, i32
  }
  func.func @transform_6(%arg0: i32) -> (i32, i32) {
    %c0_i32 = arith.constant 0 : i32
    %c0_i32_0 = arith.constant 0 : i32
    %c0_i32_1 = arith.constant 0 : i32
    return %c0_i32, %c0_i32_0 : i32, i32
  }
  func.func @transform_7(%arg0: i32) -> (i32, i32) {
    %c0_i32 = arith.constant 0 : i32
    %c0_i32_0 = arith.constant 0 : i32
    %c0_i32_1 = arith.constant 0 : i32
    return %c0_i32, %c0_i32_0 : i32, i32
  }
  func.func @transform_8(%arg0: i32) -> (i32, i32) {
    %c0_i32 = arith.constant 0 : i32
    %c0_i32_0 = arith.constant 0 : i32
    %c0_i32_1 = arith.constant 0 : i32
    return %c0_i32, %c0_i32_0 : i32, i32
  }
  func.func @transform_9(%arg0: i32) -> (i32, i32) {
    %c0_i32 = arith.constant 0 : i32
    %c0_i32_0 = arith.constant 0 : i32
    %c0_i32_1 = arith.constant 0 : i32
    return %c0_i32, %c0_i32_0 : i32, i32
  }
  func.func @transform_10(%arg0: i32) -> (i32, i32) {
    %c0_i32 = arith.constant 0 : i32
    %c0_i32_0 = arith.constant 0 : i32
    %c0_i32_1 = arith.constant 0 : i32
    return %c0_i32, %c0_i32_0 : i32, i32
  }
  func.func @transform_11(%arg0: i32) -> (i32, i32) {
    %c0_i32 = arith.constant 0 : i32
    %c0_i32_0 = arith.constant 0 : i32
    %c0_i32_1 = arith.constant 0 : i32
    return %c0_i32, %c0_i32_0 : i32, i32
  }
  func.func @transform_12(%arg0: i32) -> (i32, i32) {
    %c0_i32 = arith.constant 0 : i32
    %c0_i32_0 = arith.constant 0 : i32
    %c0_i32_1 = arith.constant 0 : i32
    return %c0_i32, %c0_i32_0 : i32, i32
  }
  func.func @transform_13(%arg0: i32) -> (i32, i32) {
    %c0_i32 = arith.constant 0 : i32
    %c0_i32_0 = arith.constant 0 : i32
    %c0_i32_1 = arith.constant 0 : i32
    return %c0_i32, %c0_i32_0 : i32, i32
  }
  func.func @transform_14(%arg0: i32) -> (i32, i32) {
    %c0_i32 = arith.constant 0 : i32
    %c0_i32_0 = arith.constant 0 : i32
    %c0_i32_1 = arith.constant 0 : i32
    return %c0_i32, %c0_i32_0 : i32, i32
  }
  func.func @transform_15(%arg0: i32) -> (i32, i32) {
    %c0_i32 = arith.constant 0 : i32
    %c0_i32_0 = arith.constant 0 : i32
    %c0_i32_1 = arith.constant 0 : i32
    return %c0_i32, %c0_i32_0 : i32, i32
  }
  func.func @transform_16(%arg0: i32) -> (i32, i32) {
    %c0_i32 = arith.constant 0 : i32
    %c0_i32_0 = arith.constant 0 : i32
    %c0_i32_1 = arith.constant 0 : i32
    return %c0_i32, %c0_i32_0 : i32, i32
  }
  func.func @transform_17(%arg0: i32) -> (i32, i32) {
    %c0_i32 = arith.constant 0 : i32
    %c0_i32_0 = arith.constant 0 : i32
    %c0_i32_1 = arith.constant 0 : i32
    return %c0_i32, %c0_i32_0 : i32, i32
  }
  func.func @transform_18(%arg0: i32) -> (i32, i32) {
    %c0_i32 = arith.constant 0 : i32
    %c0_i32_0 = arith.constant 0 : i32
    %c0_i32_1 = arith.constant 0 : i32
    return %c0_i32, %c0_i32_0 : i32, i32
  }
  func.func @transform_19(%arg0: i32) -> (i32, i32) {
    %c0_i32 = arith.constant 0 : i32
    %c0_i32_0 = arith.constant 0 : i32
    %c0_i32_1 = arith.constant 0 : i32
    return %c0_i32, %c0_i32_0 : i32, i32
  }
  func.func @transform_20(%arg0: i32) -> (i32, i32) {
    %c0_i32 = arith.constant 0 : i32
    %c0_i32_0 = arith.constant 0 : i32
    %c0_i32_1 = arith.constant 0 : i32
    return %c0_i32, %c0_i32_0 : i32, i32
  }
  func.func @transform_21(%arg0: i32) -> (i32, i32) {
    %c0_i32 = arith.constant 0 : i32
    %c0_i32_0 = arith.constant 0 : i32
    %c0_i32_1 = arith.constant 0 : i32
    return %c0_i32, %c0_i32_0 : i32, i32
  }
  func.func @transform_22(%arg0: i32) -> (i32, i32) {
    %c0_i32 = arith.constant 0 : i32
    %c0_i32_0 = arith.constant 0 : i32
    %c0_i32_1 = arith.constant 0 : i32
    return %c0_i32, %c0_i32_0 : i32, i32
  }
  func.func @transform_23(%arg0: i32) -> (i32, i32) {
    %c0_i32 = arith.constant 0 : i32
    %c0_i32_0 = arith.constant 0 : i32
    %c0_i32_1 = arith.constant 0 : i32
    return %c0_i32, %c0_i32_0 : i32, i32
  }
  func.func @transform_24(%arg0: i32) -> (i32, i32, i32) {
    %c0_i32 = arith.constant 0 : i32
    %c0_i32_0 = arith.constant 0 : i32
    %c0_i32_1 = arith.constant 0 : i32
    return %c0_i32, %arg0, %c0_i32_0 : i32, i32, i32
  }
}

</mosaic_0001>

<llo_original>
// kernel: tpu_custom_call.1
$region0: #{tpu_custom_call.1}
  #allocation0 [shape = 'u32[]', space=smem, size = 0x4, offset = 0x4, fixed_abs, tag = 'smem constant byte address 0x4 - core index']
  #allocation1 [shape = 'u32[72,128]{1,0:T(1,128)}', space=vmem, size = 0x9000, scoped, tag = 'internal scratch']
  %s0 = inlined_call_operand.hbm [shape: f32[8,2,128], index: 0, kind: input, shape index: {}]
  %s1 = inlined_call_operand.hbm [shape: f32[16,2,128], index: 1, kind: input, shape index: {}]
  %s2 = inlined_call_operand.hbm [shape: f32[8,8], index: 2, kind: input, shape index: {}]
  %s3 = inlined_call_operand.hbm [shape: f32[8,16], index: 3, kind: input, shape index: {}]
  %s4 = inlined_call_operand.hbm [shape: f32[1,128], index: 4, kind: input, shape index: {}]
  %s5 = inlined_call_operand.hbm [shape: f32[1,128], index: 5, kind: input, shape index: {}]
  %s6 = inlined_call_operand.hbm [shape: bf16[128,128], index: 6, kind: input, shape index: {}]
  %s7 = inlined_call_operand.hbm [shape: f32[1,128], index: 7, kind: input, shape index: {}]
  %s8 = inlined_call_operand.hbm [shape: bf16[128,256], index: 8, kind: input, shape index: {}]
  %s9 = inlined_call_operand.vmem [shape: f32[1,256], index: 9, kind: input, shape index: {}]
  %s10 = inlined_call_operand.hbm [shape: bf16[128,128], index: 10, kind: input, shape index: {}]
  %s11 = inlined_call_operand.vmem [shape: f32[1,128], index: 11, kind: input, shape index: {}]
  %s12 = inlined_call_operand.vmem [shape: f32[1,128], index: 12, kind: input, shape index: {}]
  %s13 = inlined_call_operand.vmem [shape: f32[1,128], index: 13, kind: input, shape index: {}]
  %s14 = inlined_call_operand.hbm [shape: bf16[128,128], index: 14, kind: input, shape index: {}]
  %s15 = inlined_call_operand.vmem [shape: f32[1,128], index: 15, kind: input, shape index: {}]
  %s16 = inlined_call_operand.hbm [shape: bf16[128,256], index: 16, kind: input, shape index: {}]
  %s17 = inlined_call_operand.vmem [shape: f32[1,256], index: 17, kind: input, shape index: {}]
  %s18 = inlined_call_operand.hbm [shape: bf16[128,128], index: 18, kind: input, shape index: {}]
  %s19 = inlined_call_operand.vmem [shape: f32[1,128], index: 19, kind: input, shape index: {}]
  %s20 = inlined_call_operand.hbm [shape: bf16[128,512], index: 20, kind: input, shape index: {}]
  %s21 = inlined_call_operand.vmem [shape: f32[1,512], index: 21, kind: input, shape index: {}]
  %s22 = inlined_call_operand.hbm [shape: bf16[512,128], index: 22, kind: input, shape index: {}]
  %s23 = inlined_call_operand.vmem [shape: f32[1,128], index: 23, kind: input, shape index: {}]
  %s24 = inlined_call_operand.hbm [shape: f32[8,2,128], index: 24, kind: output, shape index: {}]
  %s25 = sld [smem:[#allocation0]]
  $region166: #{tpu_custom_call.1} parent=0
    _
  %s27 = ssub.s32 1, %s25
  %s28 = scalar_select 0, %s27, %s25
  $region1: #{tpu_custom_call.1} parent=0
    #allocation2 [shape = 'u8[8192]{0}', space=vmem, size = 0x2000, scoped, tag = 'input window, operand 0, single buffered']
    #allocation3 [shape = 's32[1]{0}', space=sflag, size = 0x4, scoped, tag = 'scoped memory for tpu_custom_call.1']
    #allocation4 [shape = 's32[1]{0}', space=sflag, size = 0x4, scoped, tag = 'scoped memory for tpu_custom_call.1']
    #allocation5 [shape = 'u8[16384]{0}', space=vmem, size = 0x4000, scoped, tag = 'input window, operand 1, single buffered']
    #allocation6 [shape = 's32[1]{0}', space=sflag, size = 0x4, scoped, tag = 'scoped memory for tpu_custom_call.1']
    #allocation7 [shape = 'u8[4096]{0}', space=vmem, size = 0x1000, scoped, tag = 'input window, operand 2, single buffered']
    #allocation8 [shape = 'u8[4096]{0}', space=vmem, size = 0x1000, scoped, tag = 'input window, operand 3, single buffered']
    #allocation9 [shape = 's32[1]{0}', space=sflag, size = 0x4, scoped, tag = 'scoped memory for tpu_custom_call.1']
    #allocation10 [shape = 'u8[512]{0}', space=vmem, size = 0x400, scoped, tag = 'input window, operand 4, single buffered']
    #allocation11 [shape = 'u8[512]{0}', space=vmem, size = 0x400, scoped, tag = 'input window, operand 5, single buffered']
    #allocation12 [shape = 's32[1]{0}', space=sflag, size = 0x4, scoped, tag = 'scoped memory for tpu_custom_call.1']
    #allocation13 [shape = 'u8[32768]{0}', space=vmem, size = 0x8000, scoped, tag = 'input window, operand 6, single buffered']
    #allocation14 [shape = 'u8[512]{0}', space=vmem, size = 0x400, scoped, tag = 'input window, operand 7, single buffered']
    #allocation15 [shape = 's32[1]{0}', space=sflag, size = 0x4, scoped, tag = 'scoped memory for tpu_custom_call.1']
    #allocation16 [shape = 'u8[65536]{0}', space=vmem, size = 0x10000, scoped, tag = 'input window, operand 8, single buffered']
    #allocation17 [shape = 'u8[32768]{0}', space=vmem, size = 0x8000, scoped, tag = 'input window, operand 10, single buffered']
    #allocation18 [shape = 's32[1]{0}', space=sflag, size = 0x4, scoped, tag = 'scoped memory for tpu_custom_call.1']
    #allocation19 [shape = 'u8[32768]{0}', space=vmem, size = 0x8000, scoped, tag = 'input window, operand 14, single buffered']
    #allocation20 [shape = 'u8[65536]{0}', space=vmem, size = 0x10000, scoped, tag = 'input window, operand 16, single buffered']
    #allocation21 [shape = 's32[1]{0}', space=sflag, size = 0x4, scoped, tag = 'scoped memory for tpu_custom_call.1']
    #allocation22 [shape = 'u8[32768]{0}', space=vmem, size = 0x8000, scoped, tag = 'input window, operand 18, single buffered']
    #allocation23 [shape = 'u8[131072]{0}', space=vmem, size = 0x20000, scoped, tag = 'input window, operand 20, single buffered']
    #allocation24 [shape = 's32[1]{0}', space=sflag, size = 0x4, scoped, tag = 'scoped memory for tpu_custom_call.1']
    #allocation25 [shape = 'u8[131072]{0}', space=vmem, size = 0x20000, scoped, tag = 'input window, operand 22, single buffered']
    #allocation26 [shape = 'u8[8192]{0}', space=vmem, size = 0x2000, scoped, tag = 'output window, operand 0, single buffered']
    %29 = vsyncpa [#allocation3], 0
    %30 = vsyncpa [#allocation6], 0
    %31 = vsyncpa [#allocation9], 0
    %32 = vsyncpa [#allocation12], 0
    %33 = vsyncpa [#allocation15], 0
    %34 = vsyncpa [#allocation18], 0
    %35 = vsyncpa [#allocation21], 0
    %36 = vsyncpa [#allocation24], 0
    %37 = vsyncpa [#allocation4], 0
    // Predicated region
    $region2: #{tpu_custom_call.1} parent=1 // pred_check
      _
    $region3: #{tpu_custom_call.1} parent=1 // pred_check_branch
      %39 = sbr.rel (0) target = $region5
    $region4: #{tpu_custom_call.1} parent=1 // pred_region
      %41 = vsyncadd [#allocation3], 0
      %s42 = sshll.u32 %s0, 4
      %s43 = int_to_ptr.hbm [resolvable:$true] %s42
      %s44 = sshll.u32 [#allocation2], 4
      %s45 = int_to_ptr.vmem [resolvable:$true] %s44
      %50 = dma.hbm_to_vmem [thread:$0]  %s43, 256, %s45, [#allocation3], 32, 32, 2
    $region5: #{tpu_custom_call.1} parent=1 // pred_fallthru
      _
    // Predicated region
    $region6: #{tpu_custom_call.1} parent=1 // pred_check
      _
    $region7: #{tpu_custom_call.1} parent=1 // pred_check_branch
      %52 = sbr.rel (0) target = $region9
    $region8: #{tpu_custom_call.1} parent=1 // pred_region
      %54 = vsyncadd [#allocation6], 0
      %s55 = sshll.u32 %s1, 4
      %s56 = int_to_ptr.hbm [resolvable:$true] %s55
      %s57 = sshll.u32 [#allocation5], 4
      %s58 = int_to_ptr.vmem [resolvable:$true] %s57
      %63 = dma.hbm_to_vmem [thread:$0]  %s56, 512, %s58, [#allocation6], 32, 32, 2
    $region9: #{tpu_custom_call.1} parent=1 // pred_fallthru
      _
    // Predicated region
    $region10: #{tpu_custom_call.1} parent=1 // pred_check
      _
    $region11: #{tpu_custom_call.1} parent=1 // pred_check_branch
      %65 = sbr.rel (0) target = $region13
    $region12: #{tpu_custom_call.1} parent=1 // pred_region
      %67 = vsyncadd [#allocation6], 0
      %s69 = sshll.u32 %s2, 4
      %s70 = int_to_ptr.hbm [resolvable:$true] %s69
      %s71 = sshll.u32 [#allocation7], 4
      %s72 = int_to_ptr.vmem [resolvable:$true] %s71
      %74 = dma.hbm_to_vmem [thread:$0]  %s70, 128, %s72, [#allocation6]
    $region13: #{tpu_custom_call.1} parent=1 // pred_fallthru
      _
    // Predicated region
    $region14: #{tpu_custom_call.1} parent=1 // pred_check
      _
    $region15: #{tpu_custom_call.1} parent=1 // pred_check_branch
      %76 = sbr.rel (0) target = $region17
    $region16: #{tpu_custom_call.1} parent=1 // pred_region
      %78 = vsyncadd [#allocation9], 0
      %s80 = sshll.u32 %s3, 4
      %s81 = int_to_ptr.hbm [resolvable:$true] %s80
      %s82 = sshll.u32 [#allocation8], 4
      %s83 = int_to_ptr.vmem [resolvable:$true] %s82
      %85 = dma.hbm_to_vmem [thread:$0]  %s81, 128, %s83, [#allocation9]
    $region17: #{tpu_custom_call.1} parent=1 // pred_fallthru
      _
    // Predicated region
    $region18: #{tpu_custom_call.1} parent=1 // pred_check
      _
    $region19: #{tpu_custom_call.1} parent=1 // pred_check_branch
      %87 = sbr.rel (0) target = $region21
    $region20: #{tpu_custom_call.1} parent=1 // pred_region
      %89 = vsyncadd [#allocation9], 0
      %s91 = sshll.u32 %s4, 4
      %s92 = int_to_ptr.hbm [resolvable:$true] %s91
      %s93 = sshll.u32 [#allocation10], 4
      %s94 = int_to_ptr.vmem [resolvable:$true] %s93
      %96 = dma.hbm_to_vmem [thread:$0]  %s92, 16, %s94, [#allocation9]
    $region21: #{tpu_custom_call.1} parent=1 // pred_fallthru
      _
    // Predicated region
    $region22: #{tpu_custom_call.1} parent=1 // pred_check
      _
    $region23: #{tpu_custom_call.1} parent=1 // pred_check_branch
      %98 = sbr.rel (0) target = $region25
    $region24: #{tpu_custom_call.1} parent=1 // pred_region
      %100 = vsyncadd [#allocation12], 0
      %s102 = sshll.u32 %s5, 4
      %s103 = int_to_ptr.hbm [resolvable:$true] %s102
      %s104 = sshll.u32 [#allocation11], 4
      %s105 = int_to_ptr.vmem [resolvable:$true] %s104
      %107 = dma.hbm_to_vmem [thread:$0]  %s103, 16, %s105, [#allocation12]
    $region25: #{tpu_custom_call.1} parent=1 // pred_fallthru
      _
    // Predicated region
    $region26: #{tpu_custom_call.1} parent=1 // pred_check
      _
    $region27: #{tpu_custom_call.1} parent=1 // pred_check_branch
      %109 = sbr.rel (0) target = $region29
    $region28: #{tpu_custom_call.1} parent=1 // pred_region
      %111 = vsyncadd [#allocation12], 0
      %s112 = sshll.u32 %s6, 4
      %s113 = int_to_ptr.hbm [resolvable:$true] %s112
      %s114 = sshll.u32 [#allocation13], 4
      %s115 = int_to_ptr.vmem [resolvable:$true] %s114
      %120 = dma.hbm_to_vmem [thread:$0]  %s113, 1024, %s115, [#allocation12], 64, 64, 4
    $region29: #{tpu_custom_call.1} parent=1 // pred_fallthru
      _
    // Predicated region
    $region30: #{tpu_custom_call.1} parent=1 // pred_check
      _
    $region31: #{tpu_custom_call.1} parent=1 // pred_check_branch
      %122 = sbr.rel (0) target = $region33
    $region32: #{tpu_custom_call.1} parent=1 // pred_region
      %124 = vsyncadd [#allocation15], 0
      %s126 = sshll.u32 %s7, 4
      %s127 = int_to_ptr.hbm [resolvable:$true] %s126
      %s128 = sshll.u32 [#allocation14], 4
      %s129 = int_to_ptr.vmem [resolvable:$true] %s128
      %131 = dma.hbm_to_vmem [thread:$0]  %s127, 16, %s129, [#allocation15]
    $region33: #{tpu_custom_call.1} parent=1 // pred_fallthru
      _
    // Predicated region
    $region34: #{tpu_custom_call.1} parent=1 // pred_check
      _
    $region35: #{tpu_custom_call.1} parent=1 // pred_check_branch
      %133 = sbr.rel (0) target = $region37
    $region36: #{tpu_custom_call.1} parent=1 // pred_region
      %135 = vsyncadd [#allocation15], 0
      %s136 = sshll.u32 %s8, 4
      %s137 = int_to_ptr.hbm [resolvable:$true] %s136
      %s138 = sshll.u32 [#allocation16], 4
      %s139 = int_to_ptr.vmem [resolvable:$true] %s138
      %144 = dma.hbm_to_vmem [thread:$0]  %s137, 2048, %s139, [#allocation15], 128, 128, 8
    $region37: #{tpu_custom_call.1} parent=1 // pred_fallthru
      _
    // Predicated region
    $region38: #{tpu_custom_call.1} parent=1 // pred_check
      _
    $region39: #{tpu_custom_call.1} parent=1 // pred_check_branch
      %146 = sbr.rel (0) target = $region41
    $region40: #{tpu_custom_call.1} parent=1 // pred_region
      _
    $region41: #{tpu_custom_call.1} parent=1 // pred_fallthru
      _
    // Predicated region
    $region42: #{tpu_custom_call.1} parent=1 // pred_check
      _
    $region43: #{tpu_custom_call.1} parent=1 // pred_check_branch
      %148 = sbr.rel (0) target = $region45
    $region44: #{tpu_custom_call.1} parent=1 // pred_region
      %150 = vsyncadd [#allocation18], 0
      %s151 = sshll.u32 %s10, 4
      %s152 = int_to_ptr.hbm [resolvable:$true] %s151
      %s153 = sshll.u32 [#allocation17], 4
      %s154 = int_to_ptr.vmem [resolvable:$true] %s153
      %159 = dma.hbm_to_vmem [thread:$0]  %s152, 1024, %s154, [#allocation18], 64, 64, 4
    $region45: #{tpu_custom_call.1} parent=1 // pred_fallthru
      _
    // Predicated region
    $region46: #{tpu_custom_call.1} parent=1 // pred_check
      _
    $region47: #{tpu_custom_call.1} parent=1 // pred_check_branch
      %161 = sbr.rel (0) target = $region49
    $region48: #{tpu_custom_call.1} parent=1 // pred_region
      _
    $region49: #{tpu_custom_call.1} parent=1 // pred_fallthru
      _
    // Predicated region
    $region50: #{tpu_custom_call.1} parent=1 // pred_check
      _
    $region51: #{tpu_custom_call.1} parent=1 // pred_check_branch
      %163 = sbr.rel (0) target = $region53
    $region52: #{tpu_custom_call.1} parent=1 // pred_region
      _
    $region53: #{tpu_custom_call.1} parent=1 // pred_fallthru
      _
    // Predicated region
    $region54: #{tpu_custom_call.1} parent=1 // pred_check
      _
    $region55: #{tpu_custom_call.1} parent=1 // pred_check_branch
      %165 = sbr.rel (0) target = $region57
    $region56: #{tpu_custom_call.1} parent=1 // pred_region
      _
    $region57: #{tpu_custom_call.1} parent=1 // pred_fallthru
      _
    // Predicated region
    $region58: #{tpu_custom_call.1} parent=1 // pred_check
      _
    $region59: #{tpu_custom_call.1} parent=1 // pred_check_branch
      %167 = sbr.rel (0) target = $region61
    $region60: #{tpu_custom_call.1} parent=1 // pred_region
      %169 = vsyncadd [#allocation18], 0
      %s170 = sshll.u32 %s14, 4
      %s171 = int_to_ptr.hbm [resolvable:$true] %s170
      %s172 = sshll.u32 [#allocation19], 4
      %s173 = int_to_ptr.vmem [resolvable:$true] %s172
      %178 = dma.hbm_to_vmem [thread:$0]  %s171, 1024, %s173, [#allocation18], 64, 64, 4
    $region61: #{tpu_custom_call.1} parent=1 // pred_fallthru
      _
    // Predicated region
    $region62: #{tpu_custom_call.1} parent=1 // pred_check
      _
    $region63: #{tpu_custom_call.1} parent=1 // pred_check_branch
      %180 = sbr.rel (0) target = $region65
    $region64: #{tpu_custom_call.1} parent=1 // pred_region
      _
    $region65: #{tpu_custom_call.1} parent=1 // pred_fallthru
      _
    // Predicated region
    $region66: #{tpu_custom_call.1} parent=1 // pred_check
      _
    $region67: #{tpu_custom_call.1} parent=1 // pred_check_branch
      %182 = sbr.rel (0) target = $region69
    $region68: #{tpu_custom_call.1} parent=1 // pred_region
      %184 = vsyncadd [#allocation21], 0
      %s185 = sshll.u32 %s16, 4
      %s186 = int_to_ptr.hbm [resolvable:$true] %s185
      %s187 = sshll.u32 [#allocation20], 4
      %s188 = int_to_ptr.vmem [resolvable:$true] %s187
      %193 = dma.hbm_to_vmem [thread:$0]  %s186, 2048, %s188, [#allocation21], 128, 128, 8
    $region69: #{tpu_custom_call.1} parent=1 // pred_fallthru
      _
    // Predicated region
    $region70: #{tpu_custom_call.1} parent=1 // pred_check
      _
    $region71: #{tpu_custom_call.1} parent=1 // pred_check_branch
      %195 = sbr.rel (0) target = $region73
    $region72: #{tpu_custom_call.1} parent=1 // pred_region
      _
    $region73: #{tpu_custom_call.1} parent=1 // pred_fallthru
      _
    // Predicated region
    $region74: #{tpu_custom_call.1} parent=1 // pred_check
      _
    $region75: #{tpu_custom_call.1} parent=1 // pred_check_branch
      %197 = sbr.rel (0) target = $region77
    $region76: #{tpu_custom_call.1} parent=1 // pred_region
      %199 = vsyncadd [#allocation21], 0
      %s200 = sshll.u32 %s18, 4
      %s201 = int_to_ptr.hbm [resolvable:$true] %s200
      %s202 = sshll.u32 [#allocation22], 4
      %s203 = int_to_ptr.vmem [resolvable:$true] %s202
      %208 = dma.hbm_to_vmem [thread:$0]  %s201, 1024, %s203, [#allocation21], 64, 64, 4
    $region77: #{tpu_custom_call.1} parent=1 // pred_fallthru
      _
    // Predicated region
    $region78: #{tpu_custom_call.1} parent=1 // pred_check
      _
    $region79: #{tpu_custom_call.1} parent=1 // pred_check_branch
      %210 = sbr.rel (0) target = $region81
    $region80: #{tpu_custom_call.1} parent=1 // pred_region
      _
    $region81: #{tpu_custom_call.1} parent=1 // pred_fallthru
      _
    // Predicated region
    $region82: #{tpu_custom_call.1} parent=1 // pred_check
      _
    $region83: #{tpu_custom_call.1} parent=1 // pred_check_branch
      %212 = sbr.rel (0) target = $region85
    $region84: #{tpu_custom_call.1} parent=1 // pred_region
      %214 = vsyncadd [#allocation24], 0
      %s215 = sshll.u32 %s20, 4
      %s216 = int_to_ptr.hbm [resolvable:$true] %s215
      %s217 = sshll.u32 [#allocation23], 4
      %s218 = int_to_ptr.vmem [resolvable:$true] %s217
      %223 = dma.hbm_to_vmem [thread:$0]  %s216, 4096, %s218, [#allocation24], 256, 256, 16
    $region85: #{tpu_custom_call.1} parent=1 // pred_fallthru
      _
    // Predicated region
    $region86: #{tpu_custom_call.1} parent=1 // pred_check
      _
    $region87: #{tpu_custom_call.1} parent=1 // pred_check_branch
      %225 = sbr.rel (0) target = $region89
    $region88: #{tpu_custom_call.1} parent=1 // pred_region
      _
    $region89: #{tpu_custom_call.1} parent=1 // pred_fallthru
      _
    // Predicated region
    $region90: #{tpu_custom_call.1} parent=1 // pred_check
      _
    $region91: #{tpu_custom_call.1} parent=1 // pred_check_branch
      %227 = sbr.rel (0) target = $region93
    $region92: #{tpu_custom_call.1} parent=1 // pred_region
      %229 = vsyncadd [#allocation24], 0
      %s230 = sshll.u32 %s22, 4
      %s231 = int_to_ptr.hbm [resolvable:$true] %s230
      %s232 = sshll.u32 [#allocation25], 4
      %s233 = int_to_ptr.vmem [resolvable:$true] %s232
      %238 = dma.hbm_to_vmem [thread:$0]  %s231, 4096, %s233, [#allocation24], 64, 64, 4
    $region93: #{tpu_custom_call.1} parent=1 // pred_fallthru
      _
    // Predicated region
    $region94: #{tpu_custom_call.1} parent=1 // pred_check
      _
    $region95: #{tpu_custom_call.1} parent=1 // pred_check_branch
      %240 = sbr.rel (0) target = $region97
    $region96: #{tpu_custom_call.1} parent=1 // pred_region
      _
    $region97: #{tpu_custom_call.1} parent=1 // pred_fallthru
      _
    // Predicated region
    $region98: #{tpu_custom_call.1} parent=1 // pred_check
      _
    $region99: #{tpu_custom_call.1} parent=1 // pred_check_branch
      %242 = sbr.rel (0) target = $region101
    $region100: #{tpu_custom_call.1} parent=1 // pred_region
      %244 = dma.done [#allocation3], 256
    $region101: #{tpu_custom_call.1} parent=1 // pred_fallthru
      _
    // Predicated region
    $region102: #{tpu_custom_call.1} parent=1 // pred_check
      _
    $region103: #{tpu_custom_call.1} parent=1 // pred_check_branch
      %246 = sbr.rel (0) target = $region105
    $region104: #{tpu_custom_call.1} parent=1 // pred_region
      %248 = dma.done [#allocation6], 512
    $region105: #{tpu_custom_call.1} parent=1 // pred_fallthru
      _
    // Predicated region
    $region106: #{tpu_custom_call.1} parent=1 // pred_check
      _
    $region107: #{tpu_custom_call.1} parent=1 // pred_check_branch
      %250 = sbr.rel (0) target = $region109
    $region108: #{tpu_custom_call.1} parent=1 // pred_region
      %252 = dma.done [#allocation6], 128
    $region109: #{tpu_custom_call.1} parent=1 // pred_fallthru
      _
    // Predicated region
    $region110: #{tpu_custom_call.1} parent=1 // pred_check
      _
    $region111: #{tpu_custom_call.1} parent=1 // pred_check_branch
      %254 = sbr.rel (0) target = $region113
    $region112: #{tpu_custom_call.1} parent=1 // pred_region
      %256 = dma.done [#allocation9], 128
    $region113: #{tpu_custom_call.1} parent=1 // pred_fallthru
      _
    // Predicated region
    $region114: #{tpu_custom_call.1} parent=1 // pred_check
      _
    $region115: #{tpu_custom_call.1} parent=1 // pred_check_branch
      %258 = sbr.rel (0) target = $region117
    $region116: #{tpu_custom_call.1} parent=1 // pred_region
      %260 = dma.done [#allocation9], 16
    $region117: #{tpu_custom_call.1} parent=1 // pred_fallthru
      _
    // Predicated region
    $region118: #{tpu_custom_call.1} parent=1 // pred_check
      _
    $region119: #{tpu_custom_call.1} parent=1 // pred_check_branch
      %262 = sbr.rel (0) target = $region121
    $region120: #{tpu_custom_call.1} parent=1 // pred_region
      %264 = dma.done [#allocation12], 16
    $region121: #{tpu_custom_call.1} parent=1 // pred_fallthru
      _
    // Predicated region
    $region122: #{tpu_custom_call.1} parent=1 // pred_check
      _
    $region123: #{tpu_custom_call.1} parent=1 // pred_check_branch
      %266 = sbr.rel (0) target = $region125
    $region124: #{tpu_custom_call.1} parent=1 // pred_region
      %268 = dma.done [#allocation12], 1024
    $region125: #{tpu_custom_call.1} parent=1 // pred_fallthru
      _
    // Predicated region
    $region126: #{tpu_custom_call.1} parent=1 // pred_check
      _
    $region127: #{tpu_custom_call.1} parent=1 // pred_check_branch
      %270 = sbr.rel (0) target = $region129
    $region128: #{tpu_custom_call.1} parent=1 // pred_region
      %272 = dma.done [#allocation15], 16
    $region129: #{tpu_custom_call.1} parent=1 // pred_fallthru
      _
    // Predicated region
    $region130: #{tpu_custom_call.1} parent=1 // pred_check
      _
    $region131: #{tpu_custom_call.1} parent=1 // pred_check_branch
      %274 = sbr.rel (0) target = $region133
    $region132: #{tpu_custom_call.1} parent=1 // pred_region
      %276 = dma.done [#allocation15], 2048
    $region133: #{tpu_custom_call.1} parent=1 // pred_fallthru
      _
    // Predicated region
    $region134: #{tpu_custom_call.1} parent=1 // pred_check
      _
    $region135: #{tpu_custom_call.1} parent=1 // pred_check_branch
      %278 = sbr.rel (0) target = $region137
    $region136: #{tpu_custom_call.1} parent=1 // pred_region
      %280 = dma.done [#allocation18], 1024
    $region137: #{tpu_custom_call.1} parent=1 // pred_fallthru
      _
    // Predicated region
    $region138: #{tpu_custom_call.1} parent=1 // pred_check
      _
    $region139: #{tpu_custom_call.1} parent=1 // pred_check_branch
      %282 = sbr.rel (0) target = $region141
    $region140: #{tpu_custom_call.1} parent=1 // pred_region
      %284 = dma.done [#allocation18], 1024
    $region141: #{tpu_custom_call.1} parent=1 // pred_fallthru
      _
    // Predicated region
    $region142: #{tpu_custom_call.1} parent=1 // pred_check
      _
    $region143: #{tpu_custom_call.1} parent=1 // pred_check_branch
      %286 = sbr.rel (0) target = $region145
    $region144: #{tpu_custom_call.1} parent=1 // pred_region
      %288 = dma.done [#allocation21], 2048
    $region145: #{tpu_custom_call.1} parent=1 // pred_fallthru
      _
    // Predicated region
    $region146: #{tpu_custom_call.1} parent=1 // pred_check
      _
    $region147: #{tpu_custom_call.1} parent=1 // pred_check_branch
      %290 = sbr.rel (0) target = $region149
    $region148: #{tpu_custom_call.1} parent=1 // pred_region
      %292 = dma.done [#allocation21], 1024
    $region149: #{tpu_custom_call.1} parent=1 // pred_fallthru
      _
    // Predicated region
    $region150: #{tpu_custom_call.1} parent=1 // pred_check
      _
    $region151: #{tpu_custom_call.1} parent=1 // pred_check_branch
      %294 = sbr.rel (0) target = $region153
    $region152: #{tpu_custom_call.1} parent=1 // pred_region
      %296 = dma.done [#allocation24], 4096
    $region153: #{tpu_custom_call.1} parent=1 // pred_fallthru
      _
    // Predicated region
    $region154: #{tpu_custom_call.1} parent=1 // pred_check
      _
    $region155: #{tpu_custom_call.1} parent=1 // pred_check_branch
      %298 = sbr.rel (0) target = $region157
    $region156: #{tpu_custom_call.1} parent=1 // pred_region
      %300 = dma.done [#allocation24], 4096
    $region157: #{tpu_custom_call.1} parent=1 // pred_fallthru
      _
    %v302 = vld [vmem:[#allocation2] sm:$0x3]
    %v303 = vld [vmem:[#allocation2 + $0x2] sm:$0x3]
    %v304 = vld [vmem:[#allocation2 + $0x4] sm:$0x3]
    %v305 = vld [vmem:[#allocation2 + $0x6] sm:$0x3]
    %v306 = vld [vmem:[#allocation2 + $0x8] sm:$0x3]
    %v307 = vld [vmem:[#allocation2 + $0xa] sm:$0x3]
    %v308 = vld [vmem:[#allocation2 + $0xc] sm:$0x3]
    %v309 = vld [vmem:[#allocation2 + $0xe] sm:$0x3]
    %v310 = vld [vmem:[#allocation5] sm:$0x3]
    %v311 = vld [vmem:[#allocation5 + $0x2] sm:$0x3]
    %v312 = vld [vmem:[#allocation5 + $0x4] sm:$0x3]
    %v313 = vld [vmem:[#allocation5 + $0x6] sm:$0x3]
    %v314 = vld [vmem:[#allocation5 + $0x8] sm:$0x3]
    %v315 = vld [vmem:[#allocation5 + $0xa] sm:$0x3]
    %v316 = vld [vmem:[#allocation5 + $0xc] sm:$0x3]
    %v317 = vld [vmem:[#allocation5 + $0xe] sm:$0x3]
    %v318 = vld [vmem:[#allocation5 + $0x10] sm:$0x3]
    %v319 = vld [vmem:[#allocation5 + $0x12] sm:$0x3]
    %v320 = vld [vmem:[#allocation5 + $0x14] sm:$0x3]
    %v321 = vld [vmem:[#allocation5 + $0x16] sm:$0x3]
    %v322 = vld [vmem:[#allocation5 + $0x18] sm:$0x3]
    %v323 = vld [vmem:[#allocation5 + $0x1a] sm:$0x3]
    %v324 = vld [vmem:[#allocation5 + $0x1c] sm:$0x3]
    %v325 = vld [vmem:[#allocation5 + $0x1e] sm:$0x3]
    %v326 = vld [vmem:[#allocation7] sm:$0xff]
    %v327 = vld [vmem:[#allocation8] sm:$0xff]
    %v328 = vld [vmem:[#allocation10] sm:$0x1]
    %v329 = vld [vmem:[#allocation11] sm:$0x1]
    %v330 = vld [vmem:[%s12] sm:$0x1]
    %v331 = vld [vmem:[%s13] sm:$0x1]
    %340 = vst [vmem:[#allocation1] ss:$4 sm:$0xff] %v302
    %s341 = scalar_lea.vmem [#allocation1], 1
    %342 = vst [vmem:[%s341] ss:$4 sm:$0xff] %v303
    %s343 = scalar_lea.vmem [#allocation1], 2
    %344 = vst [vmem:[%s343] ss:$4 sm:$0xff] %v304
    %s345 = scalar_lea.vmem [#allocation1], 3
    %346 = vst [vmem:[%s345] ss:$4 sm:$0xff] %v305
    %s347 = scalar_lea.vmem [#allocation1], 32
    %348 = vst [vmem:[%s347] ss:$4 sm:$0xff] %v306
    %s349 = scalar_lea.vmem [#allocation1], 33
    %350 = vst [vmem:[%s349] ss:$4 sm:$0xff] %v307
    %s351 = scalar_lea.vmem [#allocation1], 34
    %352 = vst [vmem:[%s351] ss:$4 sm:$0xff] %v308
    %s353 = scalar_lea.vmem [#allocation1], 35
    %354 = vst [vmem:[%s353] ss:$4 sm:$0xff] %v309
    %v355 = vld.sshfl [vmem:[#allocation1] sm:$0xff pattern:$0x73625140]
    %v356 = vld.sshfl [vmem:[#allocation1 + $0x20] sm:$0xff pattern:$0x73625140]
    %359 = vadd.xlane.f32.xlu0 %v355
    %v360 = vpop.xlane.xlu0 %359
    %361 = vadd.xlane.f32.xlu0 %v356
    %v362 = vpop.xlane.xlu0 %361
    %v363 = vrcp.pop 128.0
    %v364 = vmul.f32 128.0, %v363
    %v365 = vsub.f32 1.0, %v364
    %v366 = vmul.f32 %v363, %v365
    %v367 = vadd.f32 %v363, %v366
    %vm368 = vweird.f32 %v363
    %v369 = vsel %vm368, %v363, %v367
    %v370 = vmul.f32 %v360, %v369
    %v371 = vmul.f32 %v362, %v369
    %v375 = vunpack.c.l.s4 269488144
    %v376 = vunpack.c.0.s8 %v375
    %v377 = vperm.slane %v370, %v376
    %v379 = vunpack.c.l.s4 842150450
    %v380 = vunpack.c.0.s8 %v379
    %v381 = vperm.slane %v370, %v380
    %v383 = vunpack.c.l.s4 1414812756
    %v384 = vunpack.c.0.s8 %v383
    %v385 = vperm.slane %v370, %v384
    %v387 = vunpack.c.l.s4 1987475062
    %v388 = vunpack.c.0.s8 %v387
    %v389 = vperm.slane %v370, %v388
    %v391 = vunpack.c.l.s4 269488144
    %v392 = vunpack.c.0.s8 %v391
    %v393 = vperm.slane %v371, %v392
    %v395 = vunpack.c.l.s4 842150450
    %v396 = vunpack.c.0.s8 %v395
    %v397 = vperm.slane %v371, %v396
    %v399 = vunpack.c.l.s4 1414812756
    %v400 = vunpack.c.0.s8 %v399
    %v401 = vperm.slane %v371, %v400
    %v403 = vunpack.c.l.s4 1987475062
    %v404 = vunpack.c.0.s8 %v403
    %v405 = vperm.slane %v371, %v404
    %v414 = vsub.f32 %v302, %v377
    %v415 = vsub.f32 %v303, %v381
    %v416 = vsub.f32 %v304, %v385
    %v417 = vsub.f32 %v305, %v389
    %v418 = vsub.f32 %v306, %v393
    %v419 = vsub.f32 %v307, %v397
    %v420 = vsub.f32 %v308, %v401
    %v421 = vsub.f32 %v309, %v405
    %v422 = vmul.f32 %v414, %v414
    %v423 = vmul.f32 %v415, %v415
    %v424 = vmul.f32 %v416, %v416
    %v425 = vmul.f32 %v417, %v417
    %v426 = vmul.f32 %v418, %v418
    %v427 = vmul.f32 %v419, %v419
    %v428 = vmul.f32 %v420, %v420
    %v429 = vmul.f32 %v421, %v421
    %438 = vst [vmem:[#allocation1] ss:$4 sm:$0xff] %v422
    %s439 = scalar_lea.vmem [#allocation1], 1
    %440 = vst [vmem:[%s439] ss:$4 sm:$0xff] %v423
    %s441 = scalar_lea.vmem [#allocation1], 2
    %442 = vst [vmem:[%s441] ss:$4 sm:$0xff] %v424
    %s443 = scalar_lea.vmem [#allocation1], 3
    %444 = vst [vmem:[%s443] ss:$4 sm:$0xff] %v425
    %s445 = scalar_lea.vmem [#allocation1], 32
    %446 = vst [vmem:[%s445] ss:$4 sm:$0xff] %v426
    %s447 = scalar_lea.vmem [#allocation1], 33
    %448 = vst [vmem:[%s447] ss:$4 sm:$0xff] %v427
    %s449 = scalar_lea.vmem [#allocation1], 34
    %450 = vst [vmem:[%s449] ss:$4 sm:$0xff] %v428
    %s451 = scalar_lea.vmem [#allocation1], 35
    %452 = vst [vmem:[%s451] ss:$4 sm:$0xff] %v429
    %v453 = vld.sshfl [vmem:[#allocation1] sm:$0xff pattern:$0x73625140]
    %v454 = vld.sshfl [vmem:[#allocation1 + $0x20] sm:$0xff pattern:$0x73625140]
    %457 = vadd.xlane.f32.xlu0 %v453
    %v458 = vpop.xlane.xlu0 %457
    %459 = vadd.xlane.f32.xlu0 %v454
    %v460 = vpop.xlane.xlu0 %459
    %v461 = vmul.f32 %v458, %v369
    %v462 = vmul.f32 %v460, %v369
    %v463 = vadd.f32 %v461, 1e-05
    %v464 = vadd.f32 %v462, 1e-05
    %v465 = vrsqrt.pop %v463
    %v466 = vmul.f32 %v465, %v463
    %v467 = vmul.f32 %v466, %v465
    %v468 = vmul.f32 0.5, %v467
    %v469 = vsub.f32 1.5, %v468
    %v470 = vmul.f32 %v465, %v469
    %vm471 = vweird.f32 %v463
    %vm472 = vweird.f32 %v465
    %vm473 = vmor %vm471, %vm472
    %v474 = vsel %vm473, %v465, %v470
    %v475 = vrsqrt.pop %v464
    %v476 = vmul.f32 %v475, %v464
    %v477 = vmul.f32 %v476, %v475
    %v478 = vmul.f32 0.5, %v477
    %v479 = vsub.f32 1.5, %v478
    %v480 = vmul.f32 %v475, %v479
    %vm481 = vweird.f32 %v464
    %vm482 = vweird.f32 %v475
    %vm483 = vmor %vm481, %vm482
    %v484 = vsel %vm483, %v475, %v480
    %v488 = vunpack.c.l.s4 269488144
    %v489 = vunpack.c.0.s8 %v488
    %v490 = vperm.slane %v474, %v489
    %v492 = vunpack.c.l.s4 842150450
    %v493 = vunpack.c.0.s8 %v492
    %v494 = vperm.slane %v474, %v493
    %v496 = vunpack.c.l.s4 1414812756
    %v497 = vunpack.c.0.s8 %v496
    %v498 = vperm.slane %v474, %v497
    %v500 = vunpack.c.l.s4 1987475062
    %v501 = vunpack.c.0.s8 %v500
    %v502 = vperm.slane %v474, %v501
    %v504 = vunpack.c.l.s4 269488144
    %v505 = vunpack.c.0.s8 %v504
    %v506 = vperm.slane %v484, %v505
    %v508 = vunpack.c.l.s4 842150450
    %v509 = vunpack.c.0.s8 %v508
    %v510 = vperm.slane %v484, %v509
    %v512 = vunpack.c.l.s4 1414812756
    %v513 = vunpack.c.0.s8 %v512
    %v514 = vperm.slane %v484, %v513
    %v516 = vunpack.c.l.s4 1987475062
    %v517 = vunpack.c.0.s8 %v516
    %v518 = vperm.slane %v484, %v517
    %v527 = vmul.f32 %v414, %v490
    %v528 = vmul.f32 %v415, %v494
    %v529 = vmul.f32 %v416, %v498
    %v530 = vmul.f32 %v417, %v502
    %v531 = vmul.f32 %v418, %v506
    %v532 = vmul.f32 %v419, %v510
    %v533 = vmul.f32 %v420, %v514
    %v534 = vmul.f32 %v421, %v518
    %v536 = vperm.slane %v328, 0
    %v538 = vrot.slane %v536, 2
    %v539 = vrot.slane %v536, 4
    %v540 = vrot.slane %v536, 6
    %v544 = vmul.f32 %v527, %v536
    %v545 = vmul.f32 %v528, %v538
    %v546 = vmul.f32 %v529, %v539
    %v547 = vmul.f32 %v530, %v540
    %v548 = vmul.f32 %v531, %v536
    %v549 = vmul.f32 %v532, %v538
    %v550 = vmul.f32 %v533, %v539
    %v551 = vmul.f32 %v534, %v540
    %v553 = vperm.slane %v329, 0
    %v555 = vrot.slane %v553, 2
    %v556 = vrot.slane %v553, 4
    %v557 = vrot.slane %v553, 6
    %v561 = vadd.f32 %v544, %v553
    %v562 = vadd.f32 %v545, %v555
    %v563 = vadd.f32 %v546, %v556
    %v564 = vadd.f32 %v547, %v557
    %v565 = vadd.f32 %v548, %v553
    %v566 = vadd.f32 %v549, %v555
    %v567 = vadd.f32 %v550, %v556
    %v568 = vadd.f32 %v551, %v557
    %577 = vst [vmem:[#allocation1] ss:$4 sm:$0xff] %v561
    %s578 = scalar_lea.vmem [#allocation1], 1
    %579 = vst [vmem:[%s578] ss:$4 sm:$0xff] %v562
    %s580 = scalar_lea.vmem [#allocation1], 2
    %581 = vst [vmem:[%s580] ss:$4 sm:$0xff] %v563
    %s582 = scalar_lea.vmem [#allocation1], 3
    %583 = vst [vmem:[%s582] ss:$4 sm:$0xff] %v564
    %s584 = scalar_lea.vmem [#allocation1], 32
    %585 = vst [vmem:[%s584] ss:$4 sm:$0xff] %v565
    %s586 = scalar_lea.vmem [#allocation1], 33
    %587 = vst [vmem:[%s586] ss:$4 sm:$0xff] %v566
    %s588 = scalar_lea.vmem [#allocation1], 34
    %589 = vst [vmem:[%s588] ss:$4 sm:$0xff] %v567
    %s590 = scalar_lea.vmem [#allocation1], 35
    %591 = vst [vmem:[%s590] ss:$4 sm:$0xff] %v568
    %v592 = vld.sshfl [vmem:[#allocation1] sm:$0xff pattern:$0x73625140]
    %v593 = vld.sshfl [vmem:[#allocation1 + $0x20] sm:$0xff pattern:$0x73625140]
    %v596 = vpack.c.bf16 %v593, %v592
    %v597 = vld [vmem:[#allocation13] sm:$0xf]
    %v598 = vld [vmem:[#allocation13 + $0x4] sm:$0xf]
    %v599 = vld [vmem:[#allocation13 + $0x8] sm:$0xf]
    %v600 = vld [vmem:[#allocation13 + $0xc] sm:$0xf]
    %v601 = vld [vmem:[#allocation13 + $0x10] sm:$0xf]
    %v602 = vld [vmem:[#allocation13 + $0x14] sm:$0xf]
    %v603 = vld [vmem:[#allocation13 + $0x18] sm:$0xf]
    %v604 = vld [vmem:[#allocation13 + $0x1c] sm:$0xf]
    %v605 = vld [vmem:[#allocation13 + $0x20] sm:$0xf]
    %v606 = vld [vmem:[#allocation13 + $0x24] sm:$0xf]
    %v607 = vld [vmem:[#allocation13 + $0x28] sm:$0xf]
    %v608 = vld [vmem:[#allocation13 + $0x2c] sm:$0xf]
    %v609 = vld [vmem:[#allocation13 + $0x30] sm:$0xf]
    %v610 = vld [vmem:[#allocation13 + $0x34] sm:$0xf]
    %v611 = vld [vmem:[#allocation13 + $0x38] sm:$0xf]
    %v612 = vld [vmem:[#allocation13 + $0x3c] sm:$0xf]
    %v613 = vld [vmem:[#allocation14] sm:$0x1]
    %v615 = vperm.slane %v613, 0
    %v633 = vunpack.c.l.b16 %v597
    %v634 = vunpack.c.l.b16 %v598
    %v635 = vunpack.c.l.b16 %v599
    %v636 = vunpack.c.l.b16 %v600
    %v637 = vunpack.c.l.b16 %v601
    %v638 = vunpack.c.l.b16 %v602
    %v639 = vunpack.c.l.b16 %v603
    %v640 = vunpack.c.l.b16 %v604
    %v641 = vunpack.c.l.b16 %v605
    %v642 = vunpack.c.l.b16 %v606
    %v643 = vunpack.c.l.b16 %v607
    %v644 = vunpack.c.l.b16 %v608
    %v645 = vunpack.c.l.b16 %v609
    %v646 = vunpack.c.l.b16 %v610
    %v647 = vunpack.c.l.b16 %v611
    %v648 = vunpack.c.l.b16 %v612
    %v649 = vpack.c.b16 %v634, %v633
    %v650 = vpack.c.b16 %v636, %v635
    %v651 = vpack.c.b16 %v638, %v637
    %v652 = vpack.c.b16 %v640, %v639
    %v653 = vpack.c.b16 %v642, %v641
    %v654 = vpack.c.b16 %v644, %v643
    %v655 = vpack.c.b16 %v646, %v645
    %v656 = vpack.c.b16 %v648, %v647
    %665 = vmatpush.bf16.msra.mxu0 %v656
    %666 = vmatpush.bf16.msra.mxu0 %v655
    %667 = vmatpush.bf16.msra.mxu0 %v654
    %668 = vmatpush.bf16.msra.mxu0 %v653
    %669 = vmatpush.bf16.msra.mxu0 %v652
    %670 = vmatpush.bf16.msra.mxu0 %v651
    %671 = vmatpush.bf16.msra.mxu0 %v650
    %672 = vmatpush.bf16.msra.mxu0 %v649
    %673 = vmatmul.bf16.gmra.mxu0 %v596
    %v674 = vpop.f32.mrf.mxu0
    %v675 = vadd.f32 %v615, %v674
    %v676 = vpop.f32.mrf.mxu0
    %v677 = vadd.f32 %v615, %v676
    %678 = vdwg.mxu0
    %679 = vst [vmem:[#allocation1] ss:$4 sm:$0xff] %v302
    %s680 = scalar_lea.vmem [#allocation1], 1
    %681 = vst [vmem:[%s680] ss:$4 sm:$0xff] %v303
    %s682 = scalar_lea.vmem [#allocation1], 2
    %683 = vst [vmem:[%s682] ss:$4 sm:$0xff] %v304
    %s684 = scalar_lea.vmem [#allocation1], 3
    %685 = vst [vmem:[%s684] ss:$4 sm:$0xff] %v305
    %s686 = scalar_lea.vmem [#allocation1], 32
    %687 = vst [vmem:[%s686] ss:$4 sm:$0xff] %v306
    %s688 = scalar_lea.vmem [#allocation1], 33
    %689 = vst [vmem:[%s688] ss:$4 sm:$0xff] %v307
    %s690 = scalar_lea.vmem [#allocation1], 34
    %691 = vst [vmem:[%s690] ss:$4 sm:$0xff] %v308
    %s692 = scalar_lea.vmem [#allocation1], 35
    %693 = vst [vmem:[%s692] ss:$4 sm:$0xff] %v309
    %v694 = vld.sshfl [vmem:[#allocation1] sm:$0xff pattern:$0x73625140]
    %v695 = vld.sshfl [vmem:[#allocation1 + $0x20] sm:$0xff pattern:$0x73625140]
    %v698 = vpack.c.bf16 %v695, %v694
    %v699 = vld [vmem:[#allocation16] sm:$0xff]
    %v700 = vld [vmem:[#allocation16 + $0x8] sm:$0xff]
    %v701 = vld [vmem:[#allocation16 + $0x10] sm:$0xff]
    %v702 = vld [vmem:[#allocation16 + $0x18] sm:$0xff]
    %v703 = vld [vmem:[#allocation16 + $0x20] sm:$0xff]
    %v704 = vld [vmem:[#allocation16 + $0x28] sm:$0xff]
    %v705 = vld [vmem:[#allocation16 + $0x30] sm:$0xff]
    %v706 = vld [vmem:[#allocation16 + $0x38] sm:$0xff]
    %v707 = vld [vmem:[#allocation16 + $0x40] sm:$0xff]
    %v708 = vld [vmem:[#allocation16 + $0x48] sm:$0xff]
    %v709 = vld [vmem:[#allocation16 + $0x50] sm:$0xff]
    %v710 = vld [vmem:[#allocation16 + $0x58] sm:$0xff]
    %v711 = vld [vmem:[#allocation16 + $0x60] sm:$0xff]
    %v712 = vld [vmem:[#allocation16 + $0x68] sm:$0xff]
    %v713 = vld [vmem:[#allocation16 + $0x70] sm:$0xff]
    %v714 = vld [vmem:[#allocation16 + $0x78] sm:$0xff]
    %v715 = vld [vmem:[%s9] sm:$0x3]
    %v717 = vperm.slane %v715, 0
    %v718 = vperm.slane %v715, 1
    %v737 = vunpack.c.l.b16 %v699
    %v738 = vunpack.c.h.b16 %v699
    %v739 = vunpack.c.l.b16 %v700
    %v740 = vunpack.c.h.b16 %v700
    %v741 = vunpack.c.l.b16 %v701
    %v742 = vunpack.c.h.b16 %v701
    %v743 = vunpack.c.l.b16 %v702
    %v744 = vunpack.c.h.b16 %v702
    %v745 = vunpack.c.l.b16 %v703
    %v746 = vunpack.c.h.b16 %v703
    %v747 = vunpack.c.l.b16 %v704
    %v748 = vunpack.c.h.b16 %v704
    %v749 = vunpack.c.l.b16 %v705
    %v750 = vunpack.c.h.b16 %v705
    %v751 = vunpack.c.l.b16 %v706
    %v752 = vunpack.c.h.b16 %v706
    %v753 = vunpack.c.l.b16 %v707
    %v754 = vunpack.c.h.b16 %v707
    %v755 = vunpack.c.l.b16 %v708
    %v756 = vunpack.c.h.b16 %v708
    %v757 = vunpack.c.l.b16 %v709
    %v758 = vunpack.c.h.b16 %v709
    %v759 = vunpack.c.l.b16 %v710
    %v760 = vunpack.c.h.b16 %v710
    %v761 = vunpack.c.l.b16 %v711
    %v762 = vunpack.c.h.b16 %v711
    %v763 = vunpack.c.l.b16 %v712
    %v764 = vunpack.c.h.b16 %v712
    %v765 = vunpack.c.l.b16 %v713
    %v766 = vunpack.c.h.b16 %v713
    %v767 = vunpack.c.l.b16 %v714
    %v768 = vunpack.c.h.b16 %v714
    %v769 = vpack.c.b16 %v739, %v737
    %v770 = vpack.c.b16 %v740, %v738
    %v771 = vpack.c.b16 %v743, %v741
    %v772 = vpack.c.b16 %v744, %v742
    %v773 = vpack.c.b16 %v747, %v745
    %v774 = vpack.c.b16 %v748, %v746
    %v775 = vpack.c.b16 %v751, %v749
    %v776 = vpack.c.b16 %v752, %v750
    %v777 = vpack.c.b16 %v755, %v753
    %v778 = vpack.c.b16 %v756, %v754
    %v779 = vpack.c.b16 %v759, %v757
    %v780 = vpack.c.b16 %v760, %v758
    %v781 = vpack.c.b16 %v763, %v761
    %v782 = vpack.c.b16 %v764, %v762
    %v783 = vpack.c.b16 %v767, %v765
    %v784 = vpack.c.b16 %v768, %v766
    %801 = vmatpush.bf16.msra.mxu0 %v783
    %802 = vmatpush.bf16.msra.mxu0 %v781
    %803 = vmatpush.bf16.msra.mxu0 %v779
    %804 = vmatpush.bf16.msra.mxu0 %v777
    %805 = vmatpush.bf16.msra.mxu0 %v775
    %806 = vmatpush.bf16.msra.mxu0 %v773
    %807 = vmatpush.bf16.msra.mxu0 %v771
    %808 = vmatpush.bf16.msra.mxu0 %v769
    %809 = vmatmul.bf16.gmra.mxu0 %v698
    %v810 = vpop.f32.mrf.mxu0
    %v811 = vadd.f32 %v717, %v810
    %v812 = vpop.f32.mrf.mxu0
    %v813 = vadd.f32 %v717, %v812
    %814 = vdwg.mxu0
    %815 = vmatpush.bf16.msra.mxu0 %v784
    %816 = vmatpush.bf16.msra.mxu0 %v782
    %817 = vmatpush.bf16.msra.mxu0 %v780
    %818 = vmatpush.bf16.msra.mxu0 %v778
    %819 = vmatpush.bf16.msra.mxu0 %v776
    %820 = vmatpush.bf16.msra.mxu0 %v774
    %821 = vmatpush.bf16.msra.mxu0 %v772
    %822 = vmatpush.bf16.msra.mxu0 %v770
    %823 = vmatmul.bf16.gmra.mxu0 %v698
    %v824 = vpop.f32.mrf.mxu0
    %v825 = vadd.f32 %v718, %v824
    %v826 = vpop.f32.mrf.mxu0
    %v827 = vadd.f32 %v718, %v826
    %828 = vdwg.mxu0
    %v831 = vrot.slane %v675, 2
    %v832 = vrot.slane %v675, 4
    %v833 = vrot.slane %v675, 6
    %v834 = vrot.slane %v677, 2
    %v835 = vrot.slane %v677, 4
    %v836 = vrot.slane %v677, 6
    %v845 = vrot.slane %v811, 2
    %v846 = vrot.slane %v811, 4
    %v847 = vrot.slane %v811, 6
    %v848 = vrot.slane %v813, 2
    %v849 = vrot.slane %v813, 4
    %v850 = vrot.slane %v813, 6
    %v859 = vrot.slane %v825, 2
    %v860 = vrot.slane %v825, 4
    %v861 = vrot.slane %v825, 6
    %v862 = vrot.slane %v827, 2
    %v863 = vrot.slane %v827, 4
    %v864 = vrot.slane %v827, 6
    %871 = vrot.lane.b32.xlu0 %v675, 96
    %v872 = vpop.permute.xlu0 %871
    %873 = vrot.lane.b32.xlu0 %v831, 96
    %v874 = vpop.permute.xlu0 %873
    %875 = vrot.lane.b32.xlu0 %v832, 96
    %v876 = vpop.permute.xlu0 %875
    %877 = vrot.lane.b32.xlu0 %v833, 96
    %v878 = vpop.permute.xlu0 %877
    %879 = vrot.lane.b32.xlu0 %v677, 96
    %v880 = vpop.permute.xlu0 %879
    %881 = vrot.lane.b32.xlu0 %v834, 96
    %v882 = vpop.permute.xlu0 %881
    %883 = vrot.lane.b32.xlu0 %v835, 96
    %v884 = vpop.permute.xlu0 %883
    %885 = vrot.lane.b32.xlu0 %v836, 96
    %v886 = vpop.permute.xlu0 %885
    %895 = vrot.lane.b32.xlu0 %v675, 64
    %v896 = vpop.permute.xlu0 %895
    %897 = vrot.lane.b32.xlu0 %v831, 64
    %v898 = vpop.permute.xlu0 %897
    %899 = vrot.lane.b32.xlu0 %v832, 64
    %v900 = vpop.permute.xlu0 %899
    %901 = vrot.lane.b32.xlu0 %v833, 64
    %v902 = vpop.permute.xlu0 %901
    %903 = vrot.lane.b32.xlu0 %v677, 64
    %v904 = vpop.permute.xlu0 %903
    %905 = vrot.lane.b32.xlu0 %v834, 64
    %v906 = vpop.permute.xlu0 %905
    %907 = vrot.lane.b32.xlu0 %v835, 64
    %v908 = vpop.permute.xlu0 %907
    %909 = vrot.lane.b32.xlu0 %v836, 64
    %v910 = vpop.permute.xlu0 %909
    %919 = vrot.lane.b32.xlu0 %v675, 32
    %v920 = vpop.permute.xlu0 %919
    %921 = vrot.lane.b32.xlu0 %v831, 32
    %v922 = vpop.permute.xlu0 %921
    %923 = vrot.lane.b32.xlu0 %v832, 32
    %v924 = vpop.permute.xlu0 %923
    %925 = vrot.lane.b32.xlu0 %v833, 32
    %v926 = vpop.permute.xlu0 %925
    %927 = vrot.lane.b32.xlu0 %v677, 32
    %v928 = vpop.permute.xlu0 %927
    %929 = vrot.lane.b32.xlu0 %v834, 32
    %v930 = vpop.permute.xlu0 %929
    %931 = vrot.lane.b32.xlu0 %v835, 32
    %v932 = vpop.permute.xlu0 %931
    %933 = vrot.lane.b32.xlu0 %v836, 32
    %v934 = vpop.permute.xlu0 %933
    %v943 = vrot.slane %v872, 4
    %vm944 = vcmask 1047556
    %v945 = vsel %vm944, %v943, %v675
    %v947 = vunpack.c.l.s4 1934713408
    %v948 = vunpack.c.0.s8 %v947
    %v949 = vperm.slane %v945, %v948
    %v950 = vrot.slane %v920, 4
    %v951 = vsel %vm944, %v950, %v896
    %v953 = vunpack.c.l.s4 1934713408
    %v954 = vunpack.c.0.s8 %v953
    %v955 = vperm.slane %v951, %v954
    %v956 = vrot.slane %v874, 4
    %v957 = vsel %vm944, %v956, %v831
    %v959 = vunpack.c.l.s4 1934713408
    %v960 = vunpack.c.0.s8 %v959
    %v961 = vperm.slane %v957, %v960
    %v962 = vrot.slane %v922, 4
    %v963 = vsel %vm944, %v962, %v898
    %v965 = vunpack.c.l.s4 1934713408
    %v966 = vunpack.c.0.s8 %v965
    %v967 = vperm.slane %v963, %v966
    %v968 = vrot.slane %v876, 4
    %v969 = vsel %vm944, %v968, %v832
    %v971 = vunpack.c.l.s4 1934713408
    %v972 = vunpack.c.0.s8 %v971
    %v973 = vperm.slane %v969, %v972
    %v974 = vrot.slane %v924, 4
    %v975 = vsel %vm944, %v974, %v900
    %v977 = vunpack.c.l.s4 1934713408
    %v978 = vunpack.c.0.s8 %v977
    %v979 = vperm.slane %v975, %v978
    %v980 = vrot.slane %v878, 4
    %v981 = vsel %vm944, %v980, %v833
    %v983 = vunpack.c.l.s4 1934713408
    %v984 = vunpack.c.0.s8 %v983
    %v985 = vperm.slane %v981, %v984
    %v986 = vrot.slane %v926, 4
    %v987 = vsel %vm944, %v986, %v902
    %v989 = vunpack.c.l.s4 1934713408
    %v990 = vunpack.c.0.s8 %v989
    %v991 = vperm.slane %v987, %v990
    %v992 = vrot.slane %v880, 4
    %v993 = vsel %vm944, %v992, %v677
    %v995 = vunpack.c.l.s4 1934713408
    %v996 = vunpack.c.0.s8 %v995
    %v997 = vperm.slane %v993, %v996
    %v998 = vrot.slane %v928, 4
    %v999 = vsel %vm944, %v998, %v904
    %v1001 = vunpack.c.l.s4 1934713408
    %v1002 = vunpack.c.0.s8 %v1001
    %v1003 = vperm.slane %v999, %v1002
    %v1004 = vrot.slane %v882, 4
    %v1005 = vsel %vm944, %v1004, %v834
    %v1007 = vunpack.c.l.s4 1934713408
    %v1008 = vunpack.c.0.s8 %v1007
    %v1009 = vperm.slane %v1005, %v1008
    %v1010 = vrot.slane %v930, 4
    %v1011 = vsel %vm944, %v1010, %v906
    %v1013 = vunpack.c.l.s4 1934713408
    %v1014 = vunpack.c.0.s8 %v1013
    %v1015 = vperm.slane %v1011, %v1014
    %v1016 = vrot.slane %v884, 4
    %v1017 = vsel %vm944, %v1016, %v835
    %v1019 = vunpack.c.l.s4 1934713408
    %v1020 = vunpack.c.0.s8 %v1019
    %v1021 = vperm.slane %v1017, %v1020
    %v1022 = vrot.slane %v932, 4
    %v1023 = vsel %vm944, %v1022, %v908
    %v1025 = vunpack.c.l.s4 1934713408
    %v1026 = vunpack.c.0.s8 %v1025
    %v1027 = vperm.slane %v1023, %v1026
    %v1028 = vrot.slane %v886, 4
    %v1029 = vsel %vm944, %v1028, %v836
    %v1031 = vunpack.c.l.s4 1934713408
    %v1032 = vunpack.c.0.s8 %v1031
    %v1033 = vperm.slane %v1029, %v1032
    %v1034 = vrot.slane %v934, 4
    %v1035 = vsel %vm944, %v1034, %v910
    %v1037 = vunpack.c.l.s4 1934713408
    %v1038 = vunpack.c.0.s8 %v1037
    %v1039 = vperm.slane %v1035, %v1038
    %v1040 = vrot.slane %v961, 4
    %v1041 = vsel %vm944, %v1040, %v949
    %v1043 = vunpack.c.l.s4 1934713408
    %v1044 = vunpack.c.0.s8 %v1043
    %v1045 = vperm.slane %v1041, %v1044
    %v1046 = vrot.slane %v1045, 4
    %v1047 = vsel %vm944, 0.0, %v1046
    %v1048 = vrot.slane %v985, 4
    %v1049 = vsel %vm944, %v1048, %v973
    %v1051 = vunpack.c.l.s4 1934713408
    %v1052 = vunpack.c.0.s8 %v1051
    %v1053 = vperm.slane %v1049, %v1052
    %v1054 = vrot.slane %v1053, 4
    %v1055 = vsel %vm944, 0.0, %v1054
    %v1056 = vrot.slane %v1009, 4
    %v1057 = vsel %vm944, %v1056, %v997
    %v1059 = vunpack.c.l.s4 1934713408
    %v1060 = vunpack.c.0.s8 %v1059
    %v1061 = vperm.slane %v1057, %v1060
    %v1062 = vrot.slane %v1061, 4
    %v1063 = vsel %vm944, 0.0, %v1062
    %v1064 = vrot.slane %v1033, 4
    %v1065 = vsel %vm944, %v1064, %v1021
    %v1067 = vunpack.c.l.s4 1934713408
    %v1068 = vunpack.c.0.s8 %v1067
    %v1069 = vperm.slane %v1065, %v1068
    %v1070 = vrot.slane %v1069, 4
    %v1071 = vsel %vm944, 0.0, %v1070
    %v1072 = vrot.slane %v967, 4
    %v1073 = vsel %vm944, %v1072, %v955
    %v1075 = vunpack.c.l.s4 1934713408
    %v1076 = vunpack.c.0.s8 %v1075
    %v1077 = vperm.slane %v1073, %v1076
    %v1078 = vrot.slane %v1077, 4
    %v1079 = vsel %vm944, 0.0, %v1078
    %v1080 = vrot.slane %v991, 4
    %v1081 = vsel %vm944, %v1080, %v979
    %v1083 = vunpack.c.l.s4 1934713408
    %v1084 = vunpack.c.0.s8 %v1083
    %v1085 = vperm.slane %v1081, %v1084
    %v1086 = vrot.slane %v1085, 4
    %v1087 = vsel %vm944, 0.0, %v1086
    %v1088 = vrot.slane %v1015, 4
    %v1089 = vsel %vm944, %v1088, %v1003
    %v1091 = vunpack.c.l.s4 1934713408
    %v1092 = vunpack.c.0.s8 %v1091
    %v1093 = vperm.slane %v1089, %v1092
    %v1094 = vrot.slane %v1093, 4
    %v1095 = vsel %vm944, 0.0, %v1094
    %v1096 = vrot.slane %v1039, 4
    %v1097 = vsel %vm944, %v1096, %v1027
    %v1099 = vunpack.c.l.s4 1934713408
    %v1100 = vunpack.c.0.s8 %v1099
    %v1101 = vperm.slane %v1097, %v1100
    %v1102 = vrot.slane %v1101, 4
    %v1103 = vsel %vm944, 0.0, %v1102
    %1104 = vrot.lane.b32.xlu0 %v811, 96
    %v1105 = vpop.permute.xlu0 %1104
    %1106 = vrot.lane.b32.xlu0 %v845, 96
    %v1107 = vpop.permute.xlu0 %1106
    %1108 = vrot.lane.b32.xlu0 %v846, 96
    %v1109 = vpop.permute.xlu0 %1108
    %1110 = vrot.lane.b32.xlu0 %v847, 96
    %v1111 = vpop.permute.xlu0 %1110
    %1112 = vrot.lane.b32.xlu0 %v813, 96
    %v1113 = vpop.permute.xlu0 %1112
    %1114 = vrot.lane.b32.xlu0 %v848, 96
    %v1115 = vpop.permute.xlu0 %1114
    %1116 = vrot.lane.b32.xlu0 %v849, 96
    %v1117 = vpop.permute.xlu0 %1116
    %1118 = vrot.lane.b32.xlu0 %v850, 96
    %v1119 = vpop.permute.xlu0 %1118
    %1128 = vrot.lane.b32.xlu0 %v811, 64
    %v1129 = vpop.permute.xlu0 %1128
    %1130 = vrot.lane.b32.xlu0 %v845, 64
    %v1131 = vpop.permute.xlu0 %1130
    %1132 = vrot.lane.b32.xlu0 %v846, 64
    %v1133 = vpop.permute.xlu0 %1132
    %1134 = vrot.lane.b32.xlu0 %v847, 64
    %v1135 = vpop.permute.xlu0 %1134
    %1136 = vrot.lane.b32.xlu0 %v813, 64
    %v1137 = vpop.permute.xlu0 %1136
    %1138 = vrot.lane.b32.xlu0 %v848, 64
    %v1139 = vpop.permute.xlu0 %1138
    %1140 = vrot.lane.b32.xlu0 %v849, 64
    %v1141 = vpop.permute.xlu0 %1140
    %1142 = vrot.lane.b32.xlu0 %v850, 64
    %v1143 = vpop.permute.xlu0 %1142
    %1152 = vrot.lane.b32.xlu0 %v811, 32
    %v1153 = vpop.permute.xlu0 %1152
    %1154 = vrot.lane.b32.xlu0 %v845, 32
    %v1155 = vpop.permute.xlu0 %1154
    %1156 = vrot.lane.b32.xlu0 %v846, 32
    %v1157 = vpop.permute.xlu0 %1156
    %1158 = vrot.lane.b32.xlu0 %v847, 32
    %v1159 = vpop.permute.xlu0 %1158
    %1160 = vrot.lane.b32.xlu0 %v813, 32
    %v1161 = vpop.permute.xlu0 %1160
    %1162 = vrot.lane.b32.xlu0 %v848, 32
    %v1163 = vpop.permute.xlu0 %1162
    %1164 = vrot.lane.b32.xlu0 %v849, 32
    %v1165 = vpop.permute.xlu0 %1164
    %1166 = vrot.lane.b32.xlu0 %v850, 32
    %v1167 = vpop.permute.xlu0 %1166
    %v1176 = vrot.slane %v1105, 4
    %v1177 = vsel %vm944, %v1176, %v811
    %v1179 = vunpack.c.l.s4 1934713408
    %v1180 = vunpack.c.0.s8 %v1179
    %v1181 = vperm.slane %v1177, %v1180
    %v1182 = vrot.slane %v1153, 4
    %v1183 = vsel %vm944, %v1182, %v1129
    %v1185 = vunpack.c.l.s4 1934713408
    %v1186 = vunpack.c.0.s8 %v1185
    %v1187 = vperm.slane %v1183, %v1186
    %v1188 = vrot.slane %v1107, 4
    %v1189 = vsel %vm944, %v1188, %v845
    %v1191 = vunpack.c.l.s4 1934713408
    %v1192 = vunpack.c.0.s8 %v1191
    %v1193 = vperm.slane %v1189, %v1192
    %v1194 = vrot.slane %v1155, 4
    %v1195 = vsel %vm944, %v1194, %v1131
    %v1197 = vunpack.c.l.s4 1934713408
    %v1198 = vunpack.c.0.s8 %v1197
    %v1199 = vperm.slane %v1195, %v1198
    %v1200 = vrot.slane %v1109, 4
    %v1201 = vsel %vm944, %v1200, %v846
    %v1203 = vunpack.c.l.s4 1934713408
    %v1204 = vunpack.c.0.s8 %v1203
    %v1205 = vperm.slane %v1201, %v1204
    %v1206 = vrot.slane %v1157, 4
    %v1207 = vsel %vm944, %v1206, %v1133
    %v1209 = vunpack.c.l.s4 1934713408
    %v1210 = vunpack.c.0.s8 %v1209
    %v1211 = vperm.slane %v1207, %v1210
    %v1212 = vrot.slane %v1111, 4
    %v1213 = vsel %vm944, %v1212, %v847
    %v1215 = vunpack.c.l.s4 1934713408
    %v1216 = vunpack.c.0.s8 %v1215
    %v1217 = vperm.slane %v1213, %v1216
    %v1218 = vrot.slane %v1159, 4
    %v1219 = vsel %vm944, %v1218, %v1135
    %v1221 = vunpack.c.l.s4 1934713408
    %v1222 = vunpack.c.0.s8 %v1221
    %v1223 = vperm.slane %v1219, %v1222
    %v1224 = vrot.slane %v1113, 4
    %v1225 = vsel %vm944, %v1224, %v813
    %v1227 = vunpack.c.l.s4 1934713408
    %v1228 = vunpack.c.0.s8 %v1227
    %v1229 = vperm.slane %v1225, %v1228
    %v1230 = vrot.slane %v1161, 4
    %v1231 = vsel %vm944, %v1230, %v1137
    %v1233 = vunpack.c.l.s4 1934713408
    %v1234 = vunpack.c.0.s8 %v1233
    %v1235 = vperm.slane %v1231, %v1234
    %v1236 = vrot.slane %v1115, 4
    %v1237 = vsel %vm944, %v1236, %v848
    %v1239 = vunpack.c.l.s4 1934713408
    %v1240 = vunpack.c.0.s8 %v1239
    %v1241 = vperm.slane %v1237, %v1240
    %v1242 = vrot.slane %v1163, 4
    %v1243 = vsel %vm944, %v1242, %v1139
    %v1245 = vunpack.c.l.s4 1934713408
    %v1246 = vunpack.c.0.s8 %v1245
    %v1247 = vperm.slane %v1243, %v1246
    %v1248 = vrot.slane %v1117, 4
    %v1249 = vsel %vm944, %v1248, %v849
    %v1251 = vunpack.c.l.s4 1934713408
    %v1252 = vunpack.c.0.s8 %v1251
    %v1253 = vperm.slane %v1249, %v1252
    %v1254 = vrot.slane %v1165, 4
    %v1255 = vsel %vm944, %v1254, %v1141
    %v1257 = vunpack.c.l.s4 1934713408
    %v1258 = vunpack.c.0.s8 %v1257
    %v1259 = vperm.slane %v1255, %v1258
    %v1260 = vrot.slane %v1119, 4
    %v1261 = vsel %vm944, %v1260, %v850
    %v1263 = vunpack.c.l.s4 1934713408
    %v1264 = vunpack.c.0.s8 %v1263
    %v1265 = vperm.slane %v1261, %v1264
    %v1266 = vrot.slane %v1167, 4
    %v1267 = vsel %vm944, %v1266, %v1143
    %v1269 = vunpack.c.l.s4 1934713408
    %v1270 = vunpack.c.0.s8 %v1269
    %v1271 = vperm.slane %v1267, %v1270
    %v1272 = vrot.slane %v1193, 4
    %v1273 = vsel %vm944, %v1272, %v1181
    %v1275 = vunpack.c.l.s4 1934713408
    %v1276 = vunpack.c.0.s8 %v1275
    %v1277 = vperm.slane %v1273, %v1276
    %v1278 = vrot.slane %v1277, 4
    %v1279 = vsel %vm944, 0.0, %v1278
    %v1280 = vrot.slane %v1217, 4
    %v1281 = vsel %vm944, %v1280, %v1205
    %v1283 = vunpack.c.l.s4 1934713408
    %v1284 = vunpack.c.0.s8 %v1283
    %v1285 = vperm.slane %v1281, %v1284
    %v1286 = vrot.slane %v1285, 4
    %v1287 = vsel %vm944, 0.0, %v1286
    %v1288 = vrot.slane %v1241, 4
    %v1289 = vsel %vm944, %v1288, %v1229
    %v1291 = vunpack.c.l.s4 1934713408
    %v1292 = vunpack.c.0.s8 %v1291
    %v1293 = vperm.slane %v1289, %v1292
    %v1294 = vrot.slane %v1293, 4
    %v1295 = vsel %vm944, 0.0, %v1294
    %v1296 = vrot.slane %v1265, 4
    %v1297 = vsel %vm944, %v1296, %v1253
    %v1299 = vunpack.c.l.s4 1934713408
    %v1300 = vunpack.c.0.s8 %v1299
    %v1301 = vperm.slane %v1297, %v1300
    %v1302 = vrot.slane %v1301, 4
    %v1303 = vsel %vm944, 0.0, %v1302
    %v1304 = vrot.slane %v1199, 4
    %v1305 = vsel %vm944, %v1304, %v1187
    %v1307 = vunpack.c.l.s4 1934713408
    %v1308 = vunpack.c.0.s8 %v1307
    %v1309 = vperm.slane %v1305, %v1308
    %v1310 = vrot.slane %v1309, 4
    %v1311 = vsel %vm944, 0.0, %v1310
    %v1312 = vrot.slane %v1223, 4
    %v1313 = vsel %vm944, %v1312, %v1211
    %v1315 = vunpack.c.l.s4 1934713408
    %v1316 = vunpack.c.0.s8 %v1315
    %v1317 = vperm.slane %v1313, %v1316
    %v1318 = vrot.slane %v1317, 4
    %v1319 = vsel %vm944, 0.0, %v1318
    %v1320 = vrot.slane %v1247, 4
    %v1321 = vsel %vm944, %v1320, %v1235
    %v1323 = vunpack.c.l.s4 1934713408
    %v1324 = vunpack.c.0.s8 %v1323
    %v1325 = vperm.slane %v1321, %v1324
    %v1326 = vrot.slane %v1325, 4
    %v1327 = vsel %vm944, 0.0, %v1326
    %v1328 = vrot.slane %v1271, 4
    %v1329 = vsel %vm944, %v1328, %v1259
    %v1331 = vunpack.c.l.s4 1934713408
    %v1332 = vunpack.c.0.s8 %v1331
    %v1333 = vperm.slane %v1329, %v1332
    %v1334 = vrot.slane %v1333, 4
    %v1335 = vsel %vm944, 0.0, %v1334
    %1336 = vrot.lane.b32.xlu0 %v825, 96
    %v1337 = vpop.permute.xlu0 %1336
    %1338 = vrot.lane.b32.xlu0 %v859, 96
    %v1339 = vpop.permute.xlu0 %1338
    %1340 = vrot.lane.b32.xlu0 %v860, 96
    %v1341 = vpop.permute.xlu0 %1340
    %1342 = vrot.lane.b32.xlu0 %v861, 96
    %v1343 = vpop.permute.xlu0 %1342
    %1344 = vrot.lane.b32.xlu0 %v827, 96
    %v1345 = vpop.permute.xlu0 %1344
    %1346 = vrot.lane.b32.xlu0 %v862, 96
    %v1347 = vpop.permute.xlu0 %1346
    %1348 = vrot.lane.b32.xlu0 %v863, 96
    %v1349 = vpop.permute.xlu0 %1348
    %1350 = vrot.lane.b32.xlu0 %v864, 96
    %v1351 = vpop.permute.xlu0 %1350
    %1360 = vrot.lane.b32.xlu0 %v825, 64
    %v1361 = vpop.permute.xlu0 %1360
    %1362 = vrot.lane.b32.xlu0 %v859, 64
    %v1363 = vpop.permute.xlu0 %1362
    %1364 = vrot.lane.b32.xlu0 %v860, 64
    %v1365 = vpop.permute.xlu0 %1364
    %1366 = vrot.lane.b32.xlu0 %v861, 64
    %v1367 = vpop.permute.xlu0 %1366
    %1368 = vrot.lane.b32.xlu0 %v827, 64
    %v1369 = vpop.permute.xlu0 %1368
    %1370 = vrot.lane.b32.xlu0 %v862, 64
    %v1371 = vpop.permute.xlu0 %1370
    %1372 = vrot.lane.b32.xlu0 %v863, 64
    %v1373 = vpop.permute.xlu0 %1372
    %1374 = vrot.lane.b32.xlu0 %v864, 64
    %v1375 = vpop.permute.xlu0 %1374
    %1384 = vrot.lane.b32.xlu0 %v825, 32
    %v1385 = vpop.permute.xlu0 %1384
    %1386 = vrot.lane.b32.xlu0 %v859, 32
    %v1387 = vpop.permute.xlu0 %1386
    %1388 = vrot.lane.b32.xlu0 %v860, 32
    %v1389 = vpop.permute.xlu0 %1388
    %1390 = vrot.lane.b32.xlu0 %v861, 32
    %v1391 = vpop.permute.xlu0 %1390
    %1392 = vrot.lane.b32.xlu0 %v827, 32
    %v1393 = vpop.permute.xlu0 %1392
    %1394 = vrot.lane.b32.xlu0 %v862, 32
    %v1395 = vpop.permute.xlu0 %1394
    %1396 = vrot.lane.b32.xlu0 %v863, 32
    %v1397 = vpop.permute.xlu0 %1396
    %1398 = vrot.lane.b32.xlu0 %v864, 32
    %v1399 = vpop.permute.xlu0 %1398
    %v1408 = vrot.slane %v1337, 4
    %v1409 = vsel %vm944, %v1408, %v825
    %v1411 = vunpack.c.l.s4 1934713408
    %v1412 = vunpack.c.0.s8 %v1411
    %v1413 = vperm.slane %v1409, %v1412
    %v1414 = vrot.slane %v1385, 4
    %v1415 = vsel %vm944, %v1414, %v1361
    %v1417 = vunpack.c.l.s4 1934713408
    %v1418 = vunpack.c.0.s8 %v1417
    %v1419 = vperm.slane %v1415, %v1418
    %v1420 = vrot.slane %v1339, 4
    %v1421 = vsel %vm944, %v1420, %v859
    %v1423 = vunpack.c.l.s4 1934713408
    %v1424 = vunpack.c.0.s8 %v1423
    %v1425 = vperm.slane %v1421, %v1424
    %v1426 = vrot.slane %v1387, 4
    %v1427 = vsel %vm944, %v1426, %v1363
    %v1429 = vunpack.c.l.s4 1934713408
    %v1430 = vunpack.c.0.s8 %v1429
    %v1431 = vperm.slane %v1427, %v1430
    %v1432 = vrot.slane %v1341, 4
    %v1433 = vsel %vm944, %v1432, %v860
    %v1435 = vunpack.c.l.s4 1934713408
    %v1436 = vunpack.c.0.s8 %v1435
    %v1437 = vperm.slane %v1433, %v1436
    %v1438 = vrot.slane %v1389, 4
    %v1439 = vsel %vm944, %v1438, %v1365
    %v1441 = vunpack.c.l.s4 1934713408
    %v1442 = vunpack.c.0.s8 %v1441
    %v1443 = vperm.slane %v1439, %v1442
    %v1444 = vrot.slane %v1343, 4
    %v1445 = vsel %vm944, %v1444, %v861
    %v1447 = vunpack.c.l.s4 1934713408
    %v1448 = vunpack.c.0.s8 %v1447
    %v1449 = vperm.slane %v1445, %v1448
    %v1450 = vrot.slane %v1391, 4
    %v1451 = vsel %vm944, %v1450, %v1367
    %v1453 = vunpack.c.l.s4 1934713408
    %v1454 = vunpack.c.0.s8 %v1453
    %v1455 = vperm.slane %v1451, %v1454
    %v1456 = vrot.slane %v1345, 4
    %v1457 = vsel %vm944, %v1456, %v827
    %v1459 = vunpack.c.l.s4 1934713408
    %v1460 = vunpack.c.0.s8 %v1459
    %v1461 = vperm.slane %v1457, %v1460
    %v1462 = vrot.slane %v1393, 4
    %v1463 = vsel %vm944, %v1462, %v1369
    %v1465 = vunpack.c.l.s4 1934713408
    %v1466 = vunpack.c.0.s8 %v1465
    %v1467 = vperm.slane %v1463, %v1466
    %v1468 = vrot.slane %v1347, 4
    %v1469 = vsel %vm944, %v1468, %v862
    %v1471 = vunpack.c.l.s4 1934713408
    %v1472 = vunpack.c.0.s8 %v1471
    %v1473 = vperm.slane %v1469, %v1472
    %v1474 = vrot.slane %v1395, 4
    %v1475 = vsel %vm944, %v1474, %v1371
    %v1477 = vunpack.c.l.s4 1934713408
    %v1478 = vunpack.c.0.s8 %v1477
    %v1479 = vperm.slane %v1475, %v1478
    %v1480 = vrot.slane %v1349, 4
    %v1481 = vsel %vm944, %v1480, %v863
    %v1483 = vunpack.c.l.s4 1934713408
    %v1484 = vunpack.c.0.s8 %v1483
    %v1485 = vperm.slane %v1481, %v1484
    %v1486 = vrot.slane %v1397, 4
    %v1487 = vsel %vm944, %v1486, %v1373
    %v1489 = vunpack.c.l.s4 1934713408
    %v1490 = vunpack.c.0.s8 %v1489
    %v1491 = vperm.slane %v1487, %v1490
    %v1492 = vrot.slane %v1351, 4
    %v1493 = vsel %vm944, %v1492, %v864
    %v1495 = vunpack.c.l.s4 1934713408
    %v1496 = vunpack.c.0.s8 %v1495
    %v1497 = vperm.slane %v1493, %v1496
    %v1498 = vrot.slane %v1399, 4
    %v1499 = vsel %vm944, %v1498, %v1375
    %v1501 = vunpack.c.l.s4 1934713408
    %v1502 = vunpack.c.0.s8 %v1501
    %v1503 = vperm.slane %v1499, %v1502
    %v1504 = vrot.slane %v1425, 4
    %v1505 = vsel %vm944, %v1504, %v1413
    %v1507 = vunpack.c.l.s4 1934713408
    %v1508 = vunpack.c.0.s8 %v1507
    %v1509 = vperm.slane %v1505, %v1508
    %v1510 = vrot.slane %v1509, 4
    %v1511 = vsel %vm944, 0.0, %v1510
    %v1512 = vrot.slane %v1449, 4
    %v1513 = vsel %vm944, %v1512, %v1437
    %v1515 = vunpack.c.l.s4 1934713408
    %v1516 = vunpack.c.0.s8 %v1515
    %v1517 = vperm.slane %v1513, %v1516
    %v1518 = vrot.slane %v1517, 4
    %v1519 = vsel %vm944, 0.0, %v1518
    %v1520 = vrot.slane %v1473, 4
    %v1521 = vsel %vm944, %v1520, %v1461
    %v1523 = vunpack.c.l.s4 1934713408
    %v1524 = vunpack.c.0.s8 %v1523
    %v1525 = vperm.slane %v1521, %v1524
    %v1526 = vrot.slane %v1525, 4
    %v1527 = vsel %vm944, 0.0, %v1526
    %v1528 = vrot.slane %v1497, 4
    %v1529 = vsel %vm944, %v1528, %v1485
    %v1531 = vunpack.c.l.s4 1934713408
    %v1532 = vunpack.c.0.s8 %v1531
    %v1533 = vperm.slane %v1529, %v1532
    %v1534 = vrot.slane %v1533, 4
    %v1535 = vsel %vm944, 0.0, %v1534
    %v1536 = vrot.slane %v1431, 4
    %v1537 = vsel %vm944, %v1536, %v1419
    %v1539 = vunpack.c.l.s4 1934713408
    %v1540 = vunpack.c.0.s8 %v1539
    %v1541 = vperm.slane %v1537, %v1540
    %v1542 = vrot.slane %v1541, 4
    %v1543 = vsel %vm944, 0.0, %v1542
    %v1544 = vrot.slane %v1455, 4
    %v1545 = vsel %vm944, %v1544, %v1443
    %v1547 = vunpack.c.l.s4 1934713408
    %v1548 = vunpack.c.0.s8 %v1547
    %v1549 = vperm.slane %v1545, %v1548
    %v1550 = vrot.slane %v1549, 4
    %v1551 = vsel %vm944, 0.0, %v1550
    %v1552 = vrot.slane %v1479, 4
    %v1553 = vsel %vm944, %v1552, %v1467
    %v1555 = vunpack.c.l.s4 1934713408
    %v1556 = vunpack.c.0.s8 %v1555
    %v1557 = vperm.slane %v1553, %v1556
    %v1558 = vrot.slane %v1557, 4
    %v1559 = vsel %vm944, 0.0, %v1558
    %v1560 = vrot.slane %v1503, 4
    %v1561 = vsel %vm944, %v1560, %v1491
    %v1563 = vunpack.c.l.s4 1934713408
    %v1564 = vunpack.c.0.s8 %v1563
    %v1565 = vperm.slane %v1561, %v1564
    %v1566 = vrot.slane %v1565, 4
    %v1567 = vsel %vm944, 0.0, %v1566
    %1584 = vst [vmem:[#allocation1] ss:$4 sm:$0xff] %v1045
    %s1585 = scalar_lea.vmem [#allocation1], 1
    %1586 = vst [vmem:[%s1585] ss:$4 sm:$0xff] %v1053
    %s1587 = scalar_lea.vmem [#allocation1], 2
    %1588 = vst [vmem:[%s1587] ss:$4 sm:$0xff] %v1061
    %s1589 = scalar_lea.vmem [#allocation1], 3
    %1590 = vst [vmem:[%s1589] ss:$4 sm:$0xff] %v1069
    %v1591 = vld.sshfl [vmem:[#allocation1] sm:$0xff pattern:$0x73625140]
    %s1592 = scalar_lea.vmem [#allocation1], 32
    %1593 = vst [vmem:[%s1592] ss:$4 sm:$0xff] %v1047
    %s1594 = scalar_lea.vmem [#allocation1], 33
    %1595 = vst [vmem:[%s1594] ss:$4 sm:$0xff] %v1055
    %s1596 = scalar_lea.vmem [#allocation1], 34
    %1597 = vst [vmem:[%s1596] ss:$4 sm:$0xff] %v1063
    %s1598 = scalar_lea.vmem [#allocation1], 35
    %1599 = vst [vmem:[%s1598] ss:$4 sm:$0xff] %v1071
    %v1600 = vld.sshfl [vmem:[#allocation1 + $0x20] sm:$0xff pattern:$0x73625140]
    %1601 = vst [vmem:[#allocation1] ss:$4 sm:$0xff] %v1077
    %1602 = vst [vmem:[%s1585] ss:$4 sm:$0xff] %v1085
    %1603 = vst [vmem:[%s1587] ss:$4 sm:$0xff] %v1093
    %1604 = vst [vmem:[%s1589] ss:$4 sm:$0xff] %v1101
    %v1605 = vld.sshfl [vmem:[#allocation1] sm:$0xff pattern:$0x73625140]
    %1606 = vst [vmem:[%s1592] ss:$4 sm:$0xff] %v1079
    %1607 = vst [vmem:[%s1594] ss:$4 sm:$0xff] %v1087
    %1608 = vst [vmem:[%s1596] ss:$4 sm:$0xff] %v1095
    %1609 = vst [vmem:[%s1598] ss:$4 sm:$0xff] %v1103
    %v1610 = vld.sshfl [vmem:[#allocation1 + $0x20] sm:$0xff pattern:$0x73625140]
    %v1615 = vpack.c.bf16 %v1591, %v1591
    %v1616 = vpack.c.bf16 %v1600, %v1600
    %v1617 = vpack.c.bf16 %v1605, %v1605
    %v1618 = vpack.c.bf16 %v1610, %v1610
    %1635 = vst [vmem:[#allocation1] ss:$4 sm:$0xff] %v1277
    %s1636 = scalar_lea.vmem [#allocation1], 1
    %1637 = vst [vmem:[%s1636] ss:$4 sm:$0xff] %v1285
    %s1638 = scalar_lea.vmem [#allocation1], 2
    %1639 = vst [vmem:[%s1638] ss:$4 sm:$0xff] %v1293
    %s1640 = scalar_lea.vmem [#allocation1], 3
    %1641 = vst [vmem:[%s1640] ss:$4 sm:$0xff] %v1301
    %v1642 = vld.sshfl [vmem:[#allocation1] sm:$0xff pattern:$0x73625140]
    %s1643 = scalar_lea.vmem [#allocation1], 32
    %1644 = vst [vmem:[%s1643] ss:$4 sm:$0xff] %v1279
    %s1645 = scalar_lea.vmem [#allocation1], 33
    %1646 = vst [vmem:[%s1645] ss:$4 sm:$0xff] %v1287
    %s1647 = scalar_lea.vmem [#allocation1], 34
    %1648 = vst [vmem:[%s1647] ss:$4 sm:$0xff] %v1295
    %s1649 = scalar_lea.vmem [#allocation1], 35
    %1650 = vst [vmem:[%s1649] ss:$4 sm:$0xff] %v1303
    %v1651 = vld.sshfl [vmem:[#allocation1 + $0x20] sm:$0xff pattern:$0x73625140]
    %1652 = vst [vmem:[#allocation1] ss:$4 sm:$0xff] %v1309
    %1653 = vst [vmem:[%s1636] ss:$4 sm:$0xff] %v1317
    %1654 = vst [vmem:[%s1638] ss:$4 sm:$0xff] %v1325
    %1655 = vst [vmem:[%s1640] ss:$4 sm:$0xff] %v1333
    %v1656 = vld.sshfl [vmem:[#allocation1] sm:$0xff pattern:$0x73625140]
    %1657 = vst [vmem:[%s1643] ss:$4 sm:$0xff] %v1311
    %1658 = vst [vmem:[%s1645] ss:$4 sm:$0xff] %v1319
    %1659 = vst [vmem:[%s1647] ss:$4 sm:$0xff] %v1327
    %1660 = vst [vmem:[%s1649] ss:$4 sm:$0xff] %v1335
    %v1661 = vld.sshfl [vmem:[#allocation1 + $0x20] sm:$0xff pattern:$0x73625140]
    %v1666 = vpack.c.bf16 %v1642, %v1642
    %v1667 = vpack.c.bf16 %v1651, %v1651
    %v1668 = vpack.c.bf16 %v1656, %v1656
    %v1669 = vpack.c.bf16 %v1661, %v1661
    %vm1670 = vcmask 261120
    %v1672 = vsel %vm1670, %v1615, 0
    %v1675 = vsel %vm1670, %v1666, 0
    %1677 = vmatpush.bf16.xpose.msra.mxu0 0
    %1678 = vmatpush.bf16.xpose.msra.mxu0 0
    %1679 = vmatpush.bf16.xpose.msra.mxu0 0
    %1680 = vmatpush.bf16.xpose.msra.mxu0 0
    %1681 = vmatpush.bf16.xpose.msra.mxu0 0
    %1682 = vmatpush.bf16.xpose.msra.mxu0 0
    %1683 = vmatpush.bf16.xpose.msra.mxu0 0
    %1684 = vmatpush.bf16.xpose.msra.mxu0 %v1675
    %1685 = vmatmul.bf16.gmra.mxu0 %v1672
    %v1686 = vpop.f32.mrf.mxu0
    %v1687 = vadd.f32 %v326, %v1686
    %v1688 = vpop.f32.mrf.mxu0
    %1689 = vdwg.mxu0
    %v1691 = vsel %vm1670, %v1616, 0
    %v1694 = vsel %vm1670, %v1667, 0
    %1696 = vmatpush.bf16.xpose.msra.mxu0 0
    %1697 = vmatpush.bf16.xpose.msra.mxu0 0
    %1698 = vmatpush.bf16.xpose.msra.mxu0 0
    %1699 = vmatpush.bf16.xpose.msra.mxu0 0
    %1700 = vmatpush.bf16.xpose.msra.mxu0 0
    %1701 = vmatpush.bf16.xpose.msra.mxu0 0
    %1702 = vmatpush.bf16.xpose.msra.mxu0 0
    %1703 = vmatpush.bf16.xpose.msra.mxu0 %v1694
    %1704 = vmatmul.bf16.gmra.mxu0 %v1691
    %v1705 = vpop.f32.mrf.mxu0
    %v1706 = vadd.f32 %v326, %v1705
    %v1707 = vpop.f32.mrf.mxu0
    %1708 = vdwg.mxu0
    %v1710 = vsel %vm1670, %v1617, 0
    %v1713 = vsel %vm1670, %v1668, 0
    %1715 = vmatpush.bf16.xpose.msra.mxu0 0
    %1716 = vmatpush.bf16.xpose.msra.mxu0 0
    %1717 = vmatpush.bf16.xpose.msra.mxu0 0
    %1718 = vmatpush.bf16.xpose.msra.mxu0 0
    %1719 = vmatpush.bf16.xpose.msra.mxu0 0
    %1720 = vmatpush.bf16.xpose.msra.mxu0 0
    %1721 = vmatpush.bf16.xpose.msra.mxu0 0
    %1722 = vmatpush.bf16.xpose.msra.mxu0 %v1713
    %1723 = vmatmul.bf16.gmra.mxu0 %v1710
    %v1724 = vpop.f32.mrf.mxu0
    %v1725 = vadd.f32 %v326, %v1724
    %v1726 = vpop.f32.mrf.mxu0
    %1727 = vdwg.mxu0
    %v1729 = vsel %vm1670, %v1618, 0
    %v1732 = vsel %vm1670, %v1669, 0
    %1734 = vmatpush.bf16.xpose.msra.mxu0 0
    %1735 = vmatpush.bf16.xpose.msra.mxu0 0
    %1736 = vmatpush.bf16.xpose.msra.mxu0 0
    %1737 = vmatpush.bf16.xpose.msra.mxu0 0
    %1738 = vmatpush.bf16.xpose.msra.mxu0 0
    %1739 = vmatpush.bf16.xpose.msra.mxu0 0
    %1740 = vmatpush.bf16.xpose.msra.mxu0 0
    %1741 = vmatpush.bf16.xpose.msra.mxu0 %v1732
    %1742 = vmatmul.bf16.gmra.mxu0 %v1729
    %v1743 = vpop.f32.mrf.mxu0
    %v1744 = vadd.f32 %v326, %v1743
    %v1745 = vpop.f32.mrf.mxu0
    %1746 = vdwg.mxu0
    %vm1747 = vcmask 64512
    %v1748 = vsel %vm1747, %v1687, -inf
    %1749 = vmax.xlane.f32.xlu0 %v1748
    %v1750 = vpop.xlane.xlu0 %1749
    %v1751 = vsel %vm1747, %v1706, -inf
    %1752 = vmax.xlane.f32.xlu0 %v1751
    %v1753 = vpop.xlane.xlu0 %1752
    %v1754 = vsel %vm1747, %v1725, -inf
    %1755 = vmax.xlane.f32.xlu0 %v1754
    %v1756 = vpop.xlane.xlu0 %1755
    %v1757 = vsel %vm1747, %v1744, -inf
    %1758 = vmax.xlane.f32.xlu0 %v1757
    %v1759 = vpop.xlane.xlu0 %1758
    %v1760 = vsub.f32 %v1687, %v1750
    %v1761 = vsub.f32 %v1706, %v1753
    %v1762 = vsub.f32 %v1725, %v1756
    %v1763 = vsub.f32 %v1744, %v1759
    %v1764 = vmul.f32 %v1760, 1.442695
    %v1765 = vpow.pop %v1764
    %v1766 = vmul.f32 %v1761, 1.442695
    %v1767 = vpow.pop %v1766
    %v1768 = vmul.f32 %v1762, 1.442695
    %v1769 = vpow.pop %v1768
    %v1770 = vmul.f32 %v1763, 1.442695
    %v1771 = vpow.pop %v1770
    %v1772 = vsel %vm1747, %v1765, 0.0
    %1773 = vadd.xlane.f32.xlu0 %v1772
    %v1774 = vpop.xlane.xlu0 %1773
    %v1775 = vsel %vm1747, %v1767, 0.0
    %1776 = vadd.xlane.f32.xlu0 %v1775
    %v1777 = vpop.xlane.xlu0 %1776
    %v1778 = vsel %vm1747, %v1769, 0.0
    %1779 = vadd.xlane.f32.xlu0 %v1778
    %v1780 = vpop.xlane.xlu0 %1779
    %v1781 = vsel %vm1747, %v1771, 0.0
    %1782 = vadd.xlane.f32.xlu0 %v1781
    %v1783 = vpop.xlane.xlu0 %1782
    %v1784 = vrcp.pop %v1774
    %v1785 = vrcp.pop %v1777
    %v1786 = vrcp.pop %v1780
    %v1787 = vrcp.pop %v1783
    %v1788 = vmul.f32 %v1765, %v1784
    %v1789 = vmul.f32 %v1767, %v1785
    %v1790 = vmul.f32 %v1769, %v1786
    %v1791 = vmul.f32 %v1771, %v1787
    %v1792 = vpack.c.bf16 %v1788, %v1788
    %v1793 = vpack.c.bf16 %v1789, %v1789
    %v1794 = vpack.c.bf16 %v1790, %v1790
    %v1795 = vpack.c.bf16 %v1791, %v1791
    %1812 = vst [vmem:[#allocation1] ss:$4 sm:$0xff] %v1509
    %s1813 = scalar_lea.vmem [#allocation1], 1
    %1814 = vst [vmem:[%s1813] ss:$4 sm:$0xff] %v1517
    %s1815 = scalar_lea.vmem [#allocation1], 2
    %1816 = vst [vmem:[%s1815] ss:$4 sm:$0xff] %v1525
    %s1817 = scalar_lea.vmem [#allocation1], 3
    %1818 = vst [vmem:[%s1817] ss:$4 sm:$0xff] %v1533
    %v1819 = vld.sshfl [vmem:[#allocation1] sm:$0xff pattern:$0x73625140]
    %s1820 = scalar_lea.vmem [#allocation1], 32
    %1821 = vst [vmem:[%s1820] ss:$4 sm:$0xff] %v1511
    %s1822 = scalar_lea.vmem [#allocation1], 33
    %1823 = vst [vmem:[%s1822] ss:$4 sm:$0xff] %v1519
    %s1824 = scalar_lea.vmem [#allocation1], 34
    %1825 = vst [vmem:[%s1824] ss:$4 sm:$0xff] %v1527
    %s1826 = scalar_lea.vmem [#allocation1], 35
    %1827 = vst [vmem:[%s1826] ss:$4 sm:$0xff] %v1535
    %v1828 = vld.sshfl [vmem:[#allocation1 + $0x20] sm:$0xff pattern:$0x73625140]
    %1829 = vst [vmem:[#allocation1] ss:$4 sm:$0xff] %v1541
    %1830 = vst [vmem:[%s1813] ss:$4 sm:$0xff] %v1549
    %1831 = vst [vmem:[%s1815] ss:$4 sm:$0xff] %v1557
    %1832 = vst [vmem:[%s1817] ss:$4 sm:$0xff] %v1565
    %v1833 = vld.sshfl [vmem:[#allocation1] sm:$0xff pattern:$0x73625140]
    %1834 = vst [vmem:[%s1820] ss:$4 sm:$0xff] %v1543
    %1835 = vst [vmem:[%s1822] ss:$4 sm:$0xff] %v1551
    %1836 = vst [vmem:[%s1824] ss:$4 sm:$0xff] %v1559
    %1837 = vst [vmem:[%s1826] ss:$4 sm:$0xff] %v1567
    %v1838 = vld.sshfl [vmem:[#allocation1 + $0x20] sm:$0xff pattern:$0x73625140]
    %v1843 = vpack.c.bf16 %v1819, %v1819
    %v1844 = vpack.c.bf16 %v1828, %v1828
    %v1845 = vpack.c.bf16 %v1833, %v1833
    %v1846 = vpack.c.bf16 %v1838, %v1838
    %v1848 = vsel %vm1747, %v1792, 0
    %vm1850 = vcmask 1043456
    %v1852 = vsel %vm1850, %v1843, 0
    %1854 = vmatpush.bf16.msra.mxu0 0
    %1855 = vmatpush.bf16.msra.mxu0 0
    %1856 = vmatpush.bf16.msra.mxu0 0
    %1857 = vmatpush.bf16.msra.mxu0 0
    %1858 = vmatpush.bf16.msra.mxu0 0
    %1859 = vmatpush.bf16.msra.mxu0 0
    %1860 = vmatpush.bf16.msra.mxu0 0
    %1861 = vmatpush.bf16.msra.mxu0 %v1852
    %1862 = vmatmul.bf16.gmra.mxu0 %v1848
    %v1863 = vpop.f32.mrf.mxu0
    %v1864 = vadd.f32 0.0, %v1863
    %v1865 = vpop.f32.mrf.mxu0
    %1866 = vdwg.mxu0
    %v1868 = vsel %vm1747, %v1793, 0
    %v1871 = vsel %vm1850, %v1844, 0
    %1873 = vmatpush.bf16.msra.mxu0 0
    %1874 = vmatpush.bf16.msra.mxu0 0
    %1875 = vmatpush.bf16.msra.mxu0 0
    %1876 = vmatpush.bf16.msra.mxu0 0
    %1877 = vmatpush.bf16.msra.mxu0 0
    %1878 = vmatpush.bf16.msra.mxu0 0
    %1879 = vmatpush.bf16.msra.mxu0 0
    %1880 = vmatpush.bf16.msra.mxu0 %v1871
    %1881 = vmatmul.bf16.gmra.mxu0 %v1868
    %v1882 = vpop.f32.mrf.mxu0
    %v1883 = vadd.f32 0.0, %v1882
    %v1884 = vpop.f32.mrf.mxu0
    %1885 = vdwg.mxu0
    %v1887 = vsel %vm1747, %v1794, 0
    %v1890 = vsel %vm1850, %v1845, 0
    %1892 = vmatpush.bf16.msra.mxu0 0
    %1893 = vmatpush.bf16.msra.mxu0 0
    %1894 = vmatpush.bf16.msra.mxu0 0
    %1895 = vmatpush.bf16.msra.mxu0 0
    %1896 = vmatpush.bf16.msra.mxu0 0
    %1897 = vmatpush.bf16.msra.mxu0 0
    %1898 = vmatpush.bf16.msra.mxu0 0
    %1899 = vmatpush.bf16.msra.mxu0 %v1890
    %1900 = vmatmul.bf16.gmra.mxu0 %v1887
    %v1901 = vpop.f32.mrf.mxu0
    %v1902 = vadd.f32 0.0, %v1901
    %v1903 = vpop.f32.mrf.mxu0
    %1904 = vdwg.mxu0
    %v1906 = vsel %vm1747, %v1795, 0
    %v1909 = vsel %vm1850, %v1846, 0
    %1911 = vmatpush.bf16.msra.mxu0 0
    %1912 = vmatpush.bf16.msra.mxu0 0
    %1913 = vmatpush.bf16.msra.mxu0 0
    %1914 = vmatpush.bf16.msra.mxu0 0
    %1915 = vmatpush.bf16.msra.mxu0 0
    %1916 = vmatpush.bf16.msra.mxu0 0
    %1917 = vmatpush.bf16.msra.mxu0 0
    %1918 = vmatpush.bf16.msra.mxu0 %v1909
    %1919 = vmatmul.bf16.gmra.mxu0 %v1906
    %v1920 = vpop.f32.mrf.mxu0
    %v1921 = vadd.f32 0.0, %v1920
    %v1922 = vpop.f32.mrf.mxu0
    %1923 = vdwg.mxu0
    %v1924 = vrot.slane %v1902, 4
    %v1925 = vsel %vm944, %v1924, %v1864
    %v1926 = vrot.slane %v1864, 4
    %v1927 = vsel %vm944, %v1902, %v1926
    %v1929 = vunpack.c.l.s4 1983009808
    %v1930 = vunpack.c.0.s8 %v1929
    %v1931 = vperm.slane %v1925, %v1930
    %v1933 = vunpack.c.l.s4 1983009808
    %v1934 = vunpack.c.0.s8 %v1933
    %v1935 = vperm.slane %v1927, %v1934
    %v1936 = vrot.slane %v1921, 4
    %v1937 = vsel %vm944, %v1936, %v1883
    %v1938 = vrot.slane %v1883, 4
    %v1939 = vsel %vm944, %v1921, %v1938
    %v1941 = vunpack.c.l.s4 1983009808
    %v1942 = vunpack.c.0.s8 %v1941
    %v1943 = vperm.slane %v1937, %v1942
    %v1945 = vunpack.c.l.s4 1983009808
    %v1946 = vunpack.c.0.s8 %v1945
    %v1947 = vperm.slane %v1939, %v1946
    %v1948 = vrot.slane %v1943, 4
    %v1949 = vsel %vm944, %v1948, %v1931
    %v1950 = vrot.slane %v1931, 4
    %v1951 = vsel %vm944, %v1943, %v1950
    %v1953 = vunpack.c.l.s4 1934713408
    %v1954 = vunpack.c.0.s8 %v1953
    %v1955 = vperm.slane %v1949, %v1954
    %v1957 = vunpack.c.l.s4 1934713408
    %v1958 = vunpack.c.0.s8 %v1957
    %v1959 = vperm.slane %v1951, %v1958
    %v1960 = vrot.slane %v1947, 4
    %v1961 = vsel %vm944, %v1960, %v1935
    %v1962 = vrot.slane %v1935, 4
    %v1963 = vsel %vm944, %v1947, %v1962
    %v1965 = vunpack.c.l.s4 1934713408
    %v1966 = vunpack.c.0.s8 %v1965
    %v1967 = vperm.slane %v1961, %v1966
    %v1969 = vunpack.c.l.s4 1934713408
    %v1970 = vunpack.c.0.s8 %v1969
    %v1971 = vperm.slane %v1963, %v1970
    %v1972 = vrot.slane %v675, 7
    %v1973 = vrot.slane %v1972, 2
    %v1974 = vrot.slane %v872, 7
    %v1975 = vrot.slane %v1974, 2
    %v1976 = vrot.slane %v896, 7
    %v1977 = vrot.slane %v1976, 2
    %v1978 = vrot.slane %v920, 7
    %v1979 = vrot.slane %v1978, 2
    %v1980 = vrot.slane %v831, 7
    %v1981 = vrot.slane %v1980, 2
    %v1982 = vrot.slane %v874, 7
    %v1983 = vrot.slane %v1982, 2
    %v1984 = vrot.slane %v898, 7
    %v1985 = vrot.slane %v1984, 2
    %v1986 = vrot.slane %v922, 7
    %v1987 = vrot.slane %v1986, 2
    %v1988 = vrot.slane %v832, 7
    %v1989 = vrot.slane %v1988, 2
    %v1990 = vrot.slane %v876, 7
    %v1991 = vrot.slane %v1990, 2
    %v1992 = vrot.slane %v900, 7
    %v1993 = vrot.slane %v1992, 2
    %v1994 = vrot.slane %v924, 7
    %v1995 = vrot.slane %v1994, 2
    %v1996 = vrot.slane %v833, 7
    %v1997 = vrot.slane %v1996, 2
    %v1998 = vrot.slane %v878, 7
    %v1999 = vrot.slane %v1998, 2
    %v2000 = vrot.slane %v902, 7
    %v2001 = vrot.slane %v2000, 2
    %v2002 = vrot.slane %v926, 7
    %v2003 = vrot.slane %v2002, 2
    %v2004 = vrot.slane %v677, 7
    %v2005 = vrot.slane %v2004, 2
    %v2006 = vrot.slane %v880, 7
    %v2007 = vrot.slane %v2006, 2
    %v2008 = vrot.slane %v904, 7
    %v2009 = vrot.slane %v2008, 2
    %v2010 = vrot.slane %v928, 7
    %v2011 = vrot.slane %v2010, 2
    %v2012 = vrot.slane %v834, 7
    %v2013 = vrot.slane %v2012, 2
    %v2014 = vrot.slane %v882, 7
    %v2015 = vrot.slane %v2014, 2
    %v2016 = vrot.slane %v906, 7
    %v2017 = vrot.slane %v2016, 2
    %v2018 = vrot.slane %v930, 7
    %v2019 = vrot.slane %v2018, 2
    %v2020 = vrot.slane %v835, 7
    %v2021 = vrot.slane %v2020, 2
    %v2022 = vrot.slane %v884, 7
    %v2023 = vrot.slane %v2022, 2
    %v2024 = vrot.slane %v908, 7
    %v2025 = vrot.slane %v2024, 2
    %v2026 = vrot.slane %v932, 7
    %v2027 = vrot.slane %v2026, 2
    %v2028 = vrot.slane %v836, 7
    %v2029 = vrot.slane %v2028, 2
    %v2030 = vrot.slane %v886, 7
    %v2031 = vrot.slane %v2030, 2
    %v2032 = vrot.slane %v910, 7
    %v2033 = vrot.slane %v2032, 2
    %v2034 = vrot.slane %v934, 7
    %v2035 = vrot.slane %v2034, 2
    %v2068 = vrot.slane %v1975, 4
    %v2069 = vsel %vm944, %v2068, %v1973
    %v2071 = vunpack.c.l.s4 1934713408
    %v2072 = vunpack.c.0.s8 %v2071
    %v2073 = vperm.slane %v2069, %v2072
    %v2074 = vrot.slane %v1979, 4
    %v2075 = vsel %vm944, %v2074, %v1977
    %v2077 = vunpack.c.l.s4 1934713408
    %v2078 = vunpack.c.0.s8 %v2077
    %v2079 = vperm.slane %v2075, %v2078
    %v2080 = vrot.slane %v1983, 4
    %v2081 = vsel %vm944, %v2080, %v1981
    %v2083 = vunpack.c.l.s4 1934713408
    %v2084 = vunpack.c.0.s8 %v2083
    %v2085 = vperm.slane %v2081, %v2084
    %v2086 = vrot.slane %v1987, 4
    %v2087 = vsel %vm944, %v2086, %v1985
    %v2089 = vunpack.c.l.s4 1934713408
    %v2090 = vunpack.c.0.s8 %v2089
    %v2091 = vperm.slane %v2087, %v2090
    %v2092 = vrot.slane %v1991, 4
    %v2093 = vsel %vm944, %v2092, %v1989
    %v2095 = vunpack.c.l.s4 1934713408
    %v2096 = vunpack.c.0.s8 %v2095
    %v2097 = vperm.slane %v2093, %v2096
    %v2098 = vrot.slane %v1995, 4
    %v2099 = vsel %vm944, %v2098, %v1993
    %v2101 = vunpack.c.l.s4 1934713408
    %v2102 = vunpack.c.0.s8 %v2101
    %v2103 = vperm.slane %v2099, %v2102
    %v2104 = vrot.slane %v1999, 4
    %v2105 = vsel %vm944, %v2104, %v1997
    %v2107 = vunpack.c.l.s4 1934713408
    %v2108 = vunpack.c.0.s8 %v2107
    %v2109 = vperm.slane %v2105, %v2108
    %v2110 = vrot.slane %v2003, 4
    %v2111 = vsel %vm944, %v2110, %v2001
    %v2113 = vunpack.c.l.s4 1934713408
    %v2114 = vunpack.c.0.s8 %v2113
    %v2115 = vperm.slane %v2111, %v2114
    %v2116 = vrot.slane %v2007, 4
    %v2117 = vsel %vm944, %v2116, %v2005
    %v2119 = vunpack.c.l.s4 1934713408
    %v2120 = vunpack.c.0.s8 %v2119
    %v2121 = vperm.slane %v2117, %v2120
    %v2122 = vrot.slane %v2011, 4
    %v2123 = vsel %vm944, %v2122, %v2009
    %v2125 = vunpack.c.l.s4 1934713408
    %v2126 = vunpack.c.0.s8 %v2125
    %v2127 = vperm.slane %v2123, %v2126
    %v2128 = vrot.slane %v2015, 4
    %v2129 = vsel %vm944, %v2128, %v2013
    %v2131 = vunpack.c.l.s4 1934713408
    %v2132 = vunpack.c.0.s8 %v2131
    %v2133 = vperm.slane %v2129, %v2132
    %v2134 = vrot.slane %v2019, 4
    %v2135 = vsel %vm944, %v2134, %v2017
    %v2137 = vunpack.c.l.s4 1934713408
    %v2138 = vunpack.c.0.s8 %v2137
    %v2139 = vperm.slane %v2135, %v2138
    %v2140 = vrot.slane %v2023, 4
    %v2141 = vsel %vm944, %v2140, %v2021
    %v2143 = vunpack.c.l.s4 1934713408
    %v2144 = vunpack.c.0.s8 %v2143
    %v2145 = vperm.slane %v2141, %v2144
    %v2146 = vrot.slane %v2027, 4
    %v2147 = vsel %vm944, %v2146, %v2025
    %v2149 = vunpack.c.l.s4 1934713408
    %v2150 = vunpack.c.0.s8 %v2149
    %v2151 = vperm.slane %v2147, %v2150
    %v2152 = vrot.slane %v2031, 4
    %v2153 = vsel %vm944, %v2152, %v2029
    %v2155 = vunpack.c.l.s4 1934713408
    %v2156 = vunpack.c.0.s8 %v2155
    %v2157 = vperm.slane %v2153, %v2156
    %v2158 = vrot.slane %v2035, 4
    %v2159 = vsel %vm944, %v2158, %v2033
    %v2161 = vunpack.c.l.s4 1934713408
    %v2162 = vunpack.c.0.s8 %v2161
    %v2163 = vperm.slane %v2159, %v2162
    %v2164 = vrot.slane %v2085, 4
    %v2165 = vsel %vm944, %v2164, %v2073
    %v2167 = vunpack.c.l.s4 1934713408
    %v2168 = vunpack.c.0.s8 %v2167
    %v2169 = vperm.slane %v2165, %v2168
    %v2170 = vrot.slane %v2169, 4
    %v2171 = vsel %vm944, 0.0, %v2170
    %v2172 = vrot.slane %v2109, 4
    %v2173 = vsel %vm944, %v2172, %v2097
    %v2175 = vunpack.c.l.s4 1934713408
    %v2176 = vunpack.c.0.s8 %v2175
    %v2177 = vperm.slane %v2173, %v2176
    %v2178 = vrot.slane %v2177, 4
    %v2179 = vsel %vm944, 0.0, %v2178
    %v2180 = vrot.slane %v2133, 4
    %v2181 = vsel %vm944, %v2180, %v2121
    %v2183 = vunpack.c.l.s4 1934713408
    %v2184 = vunpack.c.0.s8 %v2183
    %v2185 = vperm.slane %v2181, %v2184
    %v2186 = vrot.slane %v2185, 4
    %v2187 = vsel %vm944, 0.0, %v2186
    %v2188 = vrot.slane %v2157, 4
    %v2189 = vsel %vm944, %v2188, %v2145
    %v2191 = vunpack.c.l.s4 1934713408
    %v2192 = vunpack.c.0.s8 %v2191
    %v2193 = vperm.slane %v2189, %v2192
    %v2194 = vrot.slane %v2193, 4
    %v2195 = vsel %vm944, 0.0, %v2194
    %v2196 = vrot.slane %v2091, 4
    %v2197 = vsel %vm944, %v2196, %v2079
    %v2199 = vunpack.c.l.s4 1934713408
    %v2200 = vunpack.c.0.s8 %v2199
    %v2201 = vperm.slane %v2197, %v2200
    %v2202 = vrot.slane %v2201, 4
    %v2203 = vsel %vm944, 0.0, %v2202
    %v2204 = vrot.slane %v2115, 4
    %v2205 = vsel %vm944, %v2204, %v2103
    %v2207 = vunpack.c.l.s4 1934713408
    %v2208 = vunpack.c.0.s8 %v2207
    %v2209 = vperm.slane %v2205, %v2208
    %v2210 = vrot.slane %v2209, 4
    %v2211 = vsel %vm944, 0.0, %v2210
    %v2212 = vrot.slane %v2139, 4
    %v2213 = vsel %vm944, %v2212, %v2127
    %v2215 = vunpack.c.l.s4 1934713408
    %v2216 = vunpack.c.0.s8 %v2215
    %v2217 = vperm.slane %v2213, %v2216
    %v2218 = vrot.slane %v2217, 4
    %v2219 = vsel %vm944, 0.0, %v2218
    %v2220 = vrot.slane %v2163, 4
    %v2221 = vsel %vm944, %v2220, %v2151
    %v2223 = vunpack.c.l.s4 1934713408
    %v2224 = vunpack.c.0.s8 %v2223
    %v2225 = vperm.slane %v2221, %v2224
    %v2226 = vrot.slane %v2225, 4
    %v2227 = vsel %vm944, 0.0, %v2226
    %v2228 = vrot.slane %v811, 7
    %v2229 = vrot.slane %v2228, 2
    %v2230 = vrot.slane %v1105, 7
    %v2231 = vrot.slane %v2230, 2
    %v2232 = vrot.slane %v1129, 7
    %v2233 = vrot.slane %v2232, 2
    %v2234 = vrot.slane %v1153, 7
    %v2235 = vrot.slane %v2234, 2
    %v2236 = vrot.slane %v845, 7
    %v2237 = vrot.slane %v2236, 2
    %v2238 = vrot.slane %v1107, 7
    %v2239 = vrot.slane %v2238, 2
    %v2240 = vrot.slane %v1131, 7
    %v2241 = vrot.slane %v2240, 2
    %v2242 = vrot.slane %v1155, 7
    %v2243 = vrot.slane %v2242, 2
    %v2244 = vrot.slane %v846, 7
    %v2245 = vrot.slane %v2244, 2
    %v2246 = vrot.slane %v1109, 7
    %v2247 = vrot.slane %v2246, 2
    %v2248 = vrot.slane %v1133, 7
    %v2249 = vrot.slane %v2248, 2
    %v2250 = vrot.slane %v1157, 7
    %v2251 = vrot.slane %v2250, 2
    %v2252 = vrot.slane %v847, 7
    %v2253 = vrot.slane %v2252, 2
    %v2254 = vrot.slane %v1111, 7
    %v2255 = vrot.slane %v2254, 2
    %v2256 = vrot.slane %v1135, 7
    %v2257 = vrot.slane %v2256, 2
    %v2258 = vrot.slane %v1159, 7
    %v2259 = vrot.slane %v2258, 2
    %v2260 = vrot.slane %v813, 7
    %v2261 = vrot.slane %v2260, 2
    %v2262 = vrot.slane %v1113, 7
    %v2263 = vrot.slane %v2262, 2
    %v2264 = vrot.slane %v1137, 7
    %v2265 = vrot.slane %v2264, 2
    %v2266 = vrot.slane %v1161, 7
    %v2267 = vrot.slane %v2266, 2
    %v2268 = vrot.slane %v848, 7
    %v2269 = vrot.slane %v2268, 2
    %v2270 = vrot.slane %v1115, 7
    %v2271 = vrot.slane %v2270, 2
    %v2272 = vrot.slane %v1139, 7
    %v2273 = vrot.slane %v2272, 2
    %v2274 = vrot.slane %v1163, 7
    %v2275 = vrot.slane %v2274, 2
    %v2276 = vrot.slane %v849, 7
    %v2277 = vrot.slane %v2276, 2
    %v2278 = vrot.slane %v1117, 7
    %v2279 = vrot.slane %v2278, 2
    %v2280 = vrot.slane %v1141, 7
    %v2281 = vrot.slane %v2280, 2
    %v2282 = vrot.slane %v1165, 7
    %v2283 = vrot.slane %v2282, 2
    %v2284 = vrot.slane %v850, 7
    %v2285 = vrot.slane %v2284, 2
    %v2286 = vrot.slane %v1119, 7
    %v2287 = vrot.slane %v2286, 2
    %v2288 = vrot.slane %v1143, 7
    %v2289 = vrot.slane %v2288, 2
    %v2290 = vrot.slane %v1167, 7
    %v2291 = vrot.slane %v2290, 2
    %v2324 = vrot.slane %v2231, 4
    %v2325 = vsel %vm944, %v2324, %v2229
    %v2327 = vunpack.c.l.s4 1934713408
    %v2328 = vunpack.c.0.s8 %v2327
    %v2329 = vperm.slane %v2325, %v2328
    %v2330 = vrot.slane %v2235, 4
    %v2331 = vsel %vm944, %v2330, %v2233
    %v2333 = vunpack.c.l.s4 1934713408
    %v2334 = vunpack.c.0.s8 %v2333
    %v2335 = vperm.slane %v2331, %v2334
    %v2336 = vrot.slane %v2239, 4
    %v2337 = vsel %vm944, %v2336, %v2237
    %v2339 = vunpack.c.l.s4 1934713408
    %v2340 = vunpack.c.0.s8 %v2339
    %v2341 = vperm.slane %v2337, %v2340
    %v2342 = vrot.slane %v2243, 4
    %v2343 = vsel %vm944, %v2342, %v2241
    %v2345 = vunpack.c.l.s4 1934713408
    %v2346 = vunpack.c.0.s8 %v2345
    %v2347 = vperm.slane %v2343, %v2346
    %v2348 = vrot.slane %v2247, 4
    %v2349 = vsel %vm944, %v2348, %v2245
    %v2351 = vunpack.c.l.s4 1934713408
    %v2352 = vunpack.c.0.s8 %v2351
    %v2353 = vperm.slane %v2349, %v2352
    %v2354 = vrot.slane %v2251, 4
    %v2355 = vsel %vm944, %v2354, %v2249
    %v2357 = vunpack.c.l.s4 1934713408
    %v2358 = vunpack.c.0.s8 %v2357
    %v2359 = vperm.slane %v2355, %v2358
    %v2360 = vrot.slane %v2255, 4
    %v2361 = vsel %vm944, %v2360, %v2253
    %v2363 = vunpack.c.l.s4 1934713408
    %v2364 = vunpack.c.0.s8 %v2363
    %v2365 = vperm.slane %v2361, %v2364
    %v2366 = vrot.slane %v2259, 4
    %v2367 = vsel %vm944, %v2366, %v2257
    %v2369 = vunpack.c.l.s4 1934713408
    %v2370 = vunpack.c.0.s8 %v2369
    %v2371 = vperm.slane %v2367, %v2370
    %v2372 = vrot.slane %v2263, 4
    %v2373 = vsel %vm944, %v2372, %v2261
    %v2375 = vunpack.c.l.s4 1934713408
    %v2376 = vunpack.c.0.s8 %v2375
    %v2377 = vperm.slane %v2373, %v2376
    %v2378 = vrot.slane %v2267, 4
    %v2379 = vsel %vm944, %v2378, %v2265
    %v2381 = vunpack.c.l.s4 1934713408
    %v2382 = vunpack.c.0.s8 %v2381
    %v2383 = vperm.slane %v2379, %v2382
    %v2384 = vrot.slane %v2271, 4
    %v2385 = vsel %vm944, %v2384, %v2269
    %v2387 = vunpack.c.l.s4 1934713408
    %v2388 = vunpack.c.0.s8 %v2387
    %v2389 = vperm.slane %v2385, %v2388
    %v2390 = vrot.slane %v2275, 4
    %v2391 = vsel %vm944, %v2390, %v2273
    %v2393 = vunpack.c.l.s4 1934713408
    %v2394 = vunpack.c.0.s8 %v2393
    %v2395 = vperm.slane %v2391, %v2394
    %v2396 = vrot.slane %v2279, 4
    %v2397 = vsel %vm944, %v2396, %v2277
    %v2399 = vunpack.c.l.s4 1934713408
    %v2400 = vunpack.c.0.s8 %v2399
    %v2401 = vperm.slane %v2397, %v2400
    %v2402 = vrot.slane %v2283, 4
    %v2403 = vsel %vm944, %v2402, %v2281
    %v2405 = vunpack.c.l.s4 1934713408
    %v2406 = vunpack.c.0.s8 %v2405
    %v2407 = vperm.slane %v2403, %v2406
    %v2408 = vrot.slane %v2287, 4
    %v2409 = vsel %vm944, %v2408, %v2285
    %v2411 = vunpack.c.l.s4 1934713408
    %v2412 = vunpack.c.0.s8 %v2411
    %v2413 = vperm.slane %v2409, %v2412
    %v2414 = vrot.slane %v2291, 4
    %v2415 = vsel %vm944, %v2414, %v2289
    %v2417 = vunpack.c.l.s4 1934713408
    %v2418 = vunpack.c.0.s8 %v2417
    %v2419 = vperm.slane %v2415, %v2418
    %v2420 = vrot.slane %v2341, 4
    %v2421 = vsel %vm944, %v2420, %v2329
    %v2423 = vunpack.c.l.s4 1934713408
    %v2424 = vunpack.c.0.s8 %v2423
    %v2425 = vperm.slane %v2421, %v2424
    %v2426 = vrot.slane %v2425, 4
    %v2427 = vsel %vm944, 0.0, %v2426
    %v2428 = vrot.slane %v2365, 4
    %v2429 = vsel %vm944, %v2428, %v2353
    %v2431 = vunpack.c.l.s4 1934713408
    %v2432 = vunpack.c.0.s8 %v2431
    %v2433 = vperm.slane %v2429, %v2432
    %v2434 = vrot.slane %v2433, 4
    %v2435 = vsel %vm944, 0.0, %v2434
    %v2436 = vrot.slane %v2389, 4
    %v2437 = vsel %vm944, %v2436, %v2377
    %v2439 = vunpack.c.l.s4 1934713408
    %v2440 = vunpack.c.0.s8 %v2439
    %v2441 = vperm.slane %v2437, %v2440
    %v2442 = vrot.slane %v2441, 4
    %v2443 = vsel %vm944, 0.0, %v2442
    %v2444 = vrot.slane %v2413, 4
    %v2445 = vsel %vm944, %v2444, %v2401
    %v2447 = vunpack.c.l.s4 1934713408
    %v2448 = vunpack.c.0.s8 %v2447
    %v2449 = vperm.slane %v2445, %v2448
    %v2450 = vrot.slane %v2449, 4
    %v2451 = vsel %vm944, 0.0, %v2450
    %v2452 = vrot.slane %v2347, 4
    %v2453 = vsel %vm944, %v2452, %v2335
    %v2455 = vunpack.c.l.s4 1934713408
    %v2456 = vunpack.c.0.s8 %v2455
    %v2457 = vperm.slane %v2453, %v2456
    %v2458 = vrot.slane %v2457, 4
    %v2459 = vsel %vm944, 0.0, %v2458
    %v2460 = vrot.slane %v2371, 4
    %v2461 = vsel %vm944, %v2460, %v2359
    %v2463 = vunpack.c.l.s4 1934713408
    %v2464 = vunpack.c.0.s8 %v2463
    %v2465 = vperm.slane %v2461, %v2464
    %v2466 = vrot.slane %v2465, 4
    %v2467 = vsel %vm944, 0.0, %v2466
    %v2468 = vrot.slane %v2395, 4
    %v2469 = vsel %vm944, %v2468, %v2383
    %v2471 = vunpack.c.l.s4 1934713408
    %v2472 = vunpack.c.0.s8 %v2471
    %v2473 = vperm.slane %v2469, %v2472
    %v2474 = vrot.slane %v2473, 4
    %v2475 = vsel %vm944, 0.0, %v2474
    %v2476 = vrot.slane %v2419, 4
    %v2477 = vsel %vm944, %v2476, %v2407
    %v2479 = vunpack.c.l.s4 1934713408
    %v2480 = vunpack.c.0.s8 %v2479
    %v2481 = vperm.slane %v2477, %v2480
    %v2482 = vrot.slane %v2481, 4
    %v2483 = vsel %vm944, 0.0, %v2482
    %v2484 = vrot.slane %v825, 7
    %v2485 = vrot.slane %v2484, 2
    %v2486 = vrot.slane %v1337, 7
    %v2487 = vrot.slane %v2486, 2
    %v2488 = vrot.slane %v1361, 7
    %v2489 = vrot.slane %v2488, 2
    %v2490 = vrot.slane %v1385, 7
    %v2491 = vrot.slane %v2490, 2
    %v2492 = vrot.slane %v859, 7
    %v2493 = vrot.slane %v2492, 2
    %v2494 = vrot.slane %v1339, 7
    %v2495 = vrot.slane %v2494, 2
    %v2496 = vrot.slane %v1363, 7
    %v2497 = vrot.slane %v2496, 2
    %v2498 = vrot.slane %v1387, 7
    %v2499 = vrot.slane %v2498, 2
    %v2500 = vrot.slane %v860, 7
    %v2501 = vrot.slane %v2500, 2
    %v2502 = vrot.slane %v1341, 7
    %v2503 = vrot.slane %v2502, 2
    %v2504 = vrot.slane %v1365, 7
    %v2505 = vrot.slane %v2504, 2
    %v2506 = vrot.slane %v1389, 7
    %v2507 = vrot.slane %v2506, 2
    %v2508 = vrot.slane %v861, 7
    %v2509 = vrot.slane %v2508, 2
    %v2510 = vrot.slane %v1343, 7
    %v2511 = vrot.slane %v2510, 2
    %v2512 = vrot.slane %v1367, 7
    %v2513 = vrot.slane %v2512, 2
    %v2514 = vrot.slane %v1391, 7
    %v2515 = vrot.slane %v2514, 2
    %v2516 = vrot.slane %v827, 7
    %v2517 = vrot.slane %v2516, 2
    %v2518 = vrot.slane %v1345, 7
    %v2519 = vrot.slane %v2518, 2
    %v2520 = vrot.slane %v1369, 7
    %v2521 = vrot.slane %v2520, 2
    %v2522 = vrot.slane %v1393, 7
    %v2523 = vrot.slane %v2522, 2
    %v2524 = vrot.slane %v862, 7
    %v2525 = vrot.slane %v2524, 2
    %v2526 = vrot.slane %v1347, 7
    %v2527 = vrot.slane %v2526, 2
    %v2528 = vrot.slane %v1371, 7
    %v2529 = vrot.slane %v2528, 2
    %v2530 = vrot.slane %v1395, 7
    %v2531 = vrot.slane %v2530, 2
    %v2532 = vrot.slane %v863, 7
    %v2533 = vrot.slane %v2532, 2
    %v2534 = vrot.slane %v1349, 7
    %v2535 = vrot.slane %v2534, 2
    %v2536 = vrot.slane %v1373, 7
    %v2537 = vrot.slane %v2536, 2
    %v2538 = vrot.slane %v1397, 7
    %v2539 = vrot.slane %v2538, 2
    %v2540 = vrot.slane %v864, 7
    %v2541 = vrot.slane %v2540, 2
    %v2542 = vrot.slane %v1351, 7
    %v2543 = vrot.slane %v2542, 2
    %v2544 = vrot.slane %v1375, 7
    %v2545 = vrot.slane %v2544, 2
    %v2546 = vrot.slane %v1399, 7
    %v2547 = vrot.slane %v2546, 2
    %v2580 = vrot.slane %v2487, 4
    %v2581 = vsel %vm944, %v2580, %v2485
    %v2583 = vunpack.c.l.s4 1934713408
    %v2584 = vunpack.c.0.s8 %v2583
    %v2585 = vperm.slane %v2581, %v2584
    %v2586 = vrot.slane %v2491, 4
    %v2587 = vsel %vm944, %v2586, %v2489
    %v2589 = vunpack.c.l.s4 1934713408
    %v2590 = vunpack.c.0.s8 %v2589
    %v2591 = vperm.slane %v2587, %v2590
    %v2592 = vrot.slane %v2495, 4
    %v2593 = vsel %vm944, %v2592, %v2493
    %v2595 = vunpack.c.l.s4 1934713408
    %v2596 = vunpack.c.0.s8 %v2595
    %v2597 = vperm.slane %v2593, %v2596
    %v2598 = vrot.slane %v2499, 4
    %v2599 = vsel %vm944, %v2598, %v2497
    %v2601 = vunpack.c.l.s4 1934713408
    %v2602 = vunpack.c.0.s8 %v2601
    %v2603 = vperm.slane %v2599, %v2602
    %v2604 = vrot.slane %v2503, 4
    %v2605 = vsel %vm944, %v2604, %v2501
    %v2607 = vunpack.c.l.s4 1934713408
    %v2608 = vunpack.c.0.s8 %v2607
    %v2609 = vperm.slane %v2605, %v2608
    %v2610 = vrot.slane %v2507, 4
    %v2611 = vsel %vm944, %v2610, %v2505
    %v2613 = vunpack.c.l.s4 1934713408
    %v2614 = vunpack.c.0.s8 %v2613
    %v2615 = vperm.slane %v2611, %v2614
    %v2616 = vrot.slane %v2511, 4
    %v2617 = vsel %vm944, %v2616, %v2509
    %v2619 = vunpack.c.l.s4 1934713408
    %v2620 = vunpack.c.0.s8 %v2619
    %v2621 = vperm.slane %v2617, %v2620
    %v2622 = vrot.slane %v2515, 4
    %v2623 = vsel %vm944, %v2622, %v2513
    %v2625 = vunpack.c.l.s4 1934713408
    %v2626 = vunpack.c.0.s8 %v2625
    %v2627 = vperm.slane %v2623, %v2626
    %v2628 = vrot.slane %v2519, 4
    %v2629 = vsel %vm944, %v2628, %v2517
    %v2631 = vunpack.c.l.s4 1934713408
    %v2632 = vunpack.c.0.s8 %v2631
    %v2633 = vperm.slane %v2629, %v2632
    %v2634 = vrot.slane %v2523, 4
    %v2635 = vsel %vm944, %v2634, %v2521
    %v2637 = vunpack.c.l.s4 1934713408
    %v2638 = vunpack.c.0.s8 %v2637
    %v2639 = vperm.slane %v2635, %v2638
    %v2640 = vrot.slane %v2527, 4
    %v2641 = vsel %vm944, %v2640, %v2525
    %v2643 = vunpack.c.l.s4 1934713408
    %v2644 = vunpack.c.0.s8 %v2643
    %v2645 = vperm.slane %v2641, %v2644
    %v2646 = vrot.slane %v2531, 4
    %v2647 = vsel %vm944, %v2646, %v2529
    %v2649 = vunpack.c.l.s4 1934713408
    %v2650 = vunpack.c.0.s8 %v2649
    %v2651 = vperm.slane %v2647, %v2650
    %v2652 = vrot.slane %v2535, 4
    %v2653 = vsel %vm944, %v2652, %v2533
    %v2655 = vunpack.c.l.s4 1934713408
    %v2656 = vunpack.c.0.s8 %v2655
    %v2657 = vperm.slane %v2653, %v2656
    %v2658 = vrot.slane %v2539, 4
    %v2659 = vsel %vm944, %v2658, %v2537
    %v2661 = vunpack.c.l.s4 1934713408
    %v2662 = vunpack.c.0.s8 %v2661
    %v2663 = vperm.slane %v2659, %v2662
    %v2664 = vrot.slane %v2543, 4
    %v2665 = vsel %vm944, %v2664, %v2541
    %v2667 = vunpack.c.l.s4 1934713408
    %v2668 = vunpack.c.0.s8 %v2667
    %v2669 = vperm.slane %v2665, %v2668
    %v2670 = vrot.slane %v2547, 4
    %v2671 = vsel %vm944, %v2670, %v2545
    %v2673 = vunpack.c.l.s4 1934713408
    %v2674 = vunpack.c.0.s8 %v2673
    %v2675 = vperm.slane %v2671, %v2674
    %v2676 = vrot.slane %v2597, 4
    %v2677 = vsel %vm944, %v2676, %v2585
    %v2679 = vunpack.c.l.s4 1934713408
    %v2680 = vunpack.c.0.s8 %v2679
    %v2681 = vperm.slane %v2677, %v2680
    %v2682 = vrot.slane %v2681, 4
    %v2683 = vsel %vm944, 0.0, %v2682
    %v2684 = vrot.slane %v2621, 4
    %v2685 = vsel %vm944, %v2684, %v2609
    %v2687 = vunpack.c.l.s4 1934713408
    %v2688 = vunpack.c.0.s8 %v2687
    %v2689 = vperm.slane %v2685, %v2688
    %v2690 = vrot.slane %v2689, 4
    %v2691 = vsel %vm944, 0.0, %v2690
    %v2692 = vrot.slane %v2645, 4
    %v2693 = vsel %vm944, %v2692, %v2633
    %v2695 = vunpack.c.l.s4 1934713408
    %v2696 = vunpack.c.0.s8 %v2695
    %v2697 = vperm.slane %v2693, %v2696
    %v2698 = vrot.slane %v2697, 4
    %v2699 = vsel %vm944, 0.0, %v2698
    %v2700 = vrot.slane %v2669, 4
    %v2701 = vsel %vm944, %v2700, %v2657
    %v2703 = vunpack.c.l.s4 1934713408
    %v2704 = vunpack.c.0.s8 %v2703
    %v2705 = vperm.slane %v2701, %v2704
    %v2706 = vrot.slane %v2705, 4
    %v2707 = vsel %vm944, 0.0, %v2706
    %v2708 = vrot.slane %v2603, 4
    %v2709 = vsel %vm944, %v2708, %v2591
    %v2711 = vunpack.c.l.s4 1934713408
    %v2712 = vunpack.c.0.s8 %v2711
    %v2713 = vperm.slane %v2709, %v2712
    %v2714 = vrot.slane %v2713, 4
    %v2715 = vsel %vm944, 0.0, %v2714
    %v2716 = vrot.slane %v2627, 4
    %v2717 = vsel %vm944, %v2716, %v2615
    %v2719 = vunpack.c.l.s4 1934713408
    %v2720 = vunpack.c.0.s8 %v2719
    %v2721 = vperm.slane %v2717, %v2720
    %v2722 = vrot.slane %v2721, 4
    %v2723 = vsel %vm944, 0.0, %v2722
    %v2724 = vrot.slane %v2651, 4
    %v2725 = vsel %vm944, %v2724, %v2639
    %v2727 = vunpack.c.l.s4 1934713408
    %v2728 = vunpack.c.0.s8 %v2727
    %v2729 = vperm.slane %v2725, %v2728
    %v2730 = vrot.slane %v2729, 4
    %v2731 = vsel %vm944, 0.0, %v2730
    %v2732 = vrot.slane %v2675, 4
    %v2733 = vsel %vm944, %v2732, %v2663
    %v2735 = vunpack.c.l.s4 1934713408
    %v2736 = vunpack.c.0.s8 %v2735
    %v2737 = vperm.slane %v2733, %v2736
    %v2738 = vrot.slane %v2737, 4
    %v2739 = vsel %vm944, 0.0, %v2738
    %2756 = vst [vmem:[#allocation1] ss:$4 sm:$0xff] %v2169
    %s2757 = scalar_lea.vmem [#allocation1], 1
    %2758 = vst [vmem:[%s2757] ss:$4 sm:$0xff] %v2177
    %s2759 = scalar_lea.vmem [#allocation1], 2
    %2760 = vst [vmem:[%s2759] ss:$4 sm:$0xff] %v2185
    %s2761 = scalar_lea.vmem [#allocation1], 3
    %2762 = vst [vmem:[%s2761] ss:$4 sm:$0xff] %v2193
    %v2763 = vld.sshfl [vmem:[#allocation1] sm:$0xff pattern:$0x73625140]
    %s2764 = scalar_lea.vmem [#allocation1], 32
    %2765 = vst [vmem:[%s2764] ss:$4 sm:$0xff] %v2171
    %s2766 = scalar_lea.vmem [#allocation1], 33
    %2767 = vst [vmem:[%s2766] ss:$4 sm:$0xff] %v2179
    %s2768 = scalar_lea.vmem [#allocation1], 34
    %2769 = vst [vmem:[%s2768] ss:$4 sm:$0xff] %v2187
    %s2770 = scalar_lea.vmem [#allocation1], 35
    %2771 = vst [vmem:[%s2770] ss:$4 sm:$0xff] %v2195
    %v2772 = vld.sshfl [vmem:[#allocation1 + $0x20] sm:$0xff pattern:$0x73625140]
    %2773 = vst [vmem:[#allocation1] ss:$4 sm:$0xff] %v2201
    %2774 = vst [vmem:[%s2757] ss:$4 sm:$0xff] %v2209
    %2775 = vst [vmem:[%s2759] ss:$4 sm:$0xff] %v2217
    %2776 = vst [vmem:[%s2761] ss:$4 sm:$0xff] %v2225
    %v2777 = vld.sshfl [vmem:[#allocation1] sm:$0xff pattern:$0x73625140]
    %2778 = vst [vmem:[%s2764] ss:$4 sm:$0xff] %v2203
    %2779 = vst [vmem:[%s2766] ss:$4 sm:$0xff] %v2211
    %2780 = vst [vmem:[%s2768] ss:$4 sm:$0xff] %v2219
    %2781 = vst [vmem:[%s2770] ss:$4 sm:$0xff] %v2227
    %v2782 = vld.sshfl [vmem:[#allocation1 + $0x20] sm:$0xff pattern:$0x73625140]
    %v2787 = vpack.c.bf16 %v2763, %v2763
    %v2788 = vpack.c.bf16 %v2772, %v2772
    %v2789 = vpack.c.bf16 %v2777, %v2777
    %v2790 = vpack.c.bf16 %v2782, %v2782
    %2807 = vst [vmem:[#allocation1] ss:$4 sm:$0xff] %v2425
    %s2808 = scalar_lea.vmem [#allocation1], 1
    %2809 = vst [vmem:[%s2808] ss:$4 sm:$0xff] %v2433
    %s2810 = scalar_lea.vmem [#allocation1], 2
    %2811 = vst [vmem:[%s2810] ss:$4 sm:$0xff] %v2441
    %s2812 = scalar_lea.vmem [#allocation1], 3
    %2813 = vst [vmem:[%s2812] ss:$4 sm:$0xff] %v2449
    %v2814 = vld.sshfl [vmem:[#allocation1] sm:$0xff pattern:$0x73625140]
    %s2815 = scalar_lea.vmem [#allocation1], 32
    %2816 = vst [vmem:[%s2815] ss:$4 sm:$0xff] %v2427
    %s2817 = scalar_lea.vmem [#allocation1], 33
    %2818 = vst [vmem:[%s2817] ss:$4 sm:$0xff] %v2435
    %s2819 = scalar_lea.vmem [#allocation1], 34
    %2820 = vst [vmem:[%s2819] ss:$4 sm:$0xff] %v2443
    %s2821 = scalar_lea.vmem [#allocation1], 35
    %2822 = vst [vmem:[%s2821] ss:$4 sm:$0xff] %v2451
    %v2823 = vld.sshfl [vmem:[#allocation1 + $0x20] sm:$0xff pattern:$0x73625140]
    %2824 = vst [vmem:[#allocation1] ss:$4 sm:$0xff] %v2457
    %2825 = vst [vmem:[%s2808] ss:$4 sm:$0xff] %v2465
    %2826 = vst [vmem:[%s2810] ss:$4 sm:$0xff] %v2473
    %2827 = vst [vmem:[%s2812] ss:$4 sm:$0xff] %v2481
    %v2828 = vld.sshfl [vmem:[#allocation1] sm:$0xff pattern:$0x73625140]
    %2829 = vst [vmem:[%s2815] ss:$4 sm:$0xff] %v2459
    %2830 = vst [vmem:[%s2817] ss:$4 sm:$0xff] %v2467
    %2831 = vst [vmem:[%s2819] ss:$4 sm:$0xff] %v2475
    %2832 = vst [vmem:[%s2821] ss:$4 sm:$0xff] %v2483
    %v2833 = vld.sshfl [vmem:[#allocation1 + $0x20] sm:$0xff pattern:$0x73625140]
    %v2838 = vpack.c.bf16 %v2814, %v2814
    %v2839 = vpack.c.bf16 %v2823, %v2823
    %v2840 = vpack.c.bf16 %v2828, %v2828
    %v2841 = vpack.c.bf16 %v2833, %v2833
    %v2843 = vsel %vm1670, %v2787, 0
    %v2846 = vsel %vm1670, %v2838, 0
    %2848 = vmatpush.bf16.xpose.msra.mxu0 0
    %2849 = vmatpush.bf16.xpose.msra.mxu0 0
    %2850 = vmatpush.bf16.xpose.msra.mxu0 0
    %2851 = vmatpush.bf16.xpose.msra.mxu0 0
    %2852 = vmatpush.bf16.xpose.msra.mxu0 0
    %2853 = vmatpush.bf16.xpose.msra.mxu0 0
    %2854 = vmatpush.bf16.xpose.msra.mxu0 0
    %2855 = vmatpush.bf16.xpose.msra.mxu0 %v2846
    %2856 = vmatmul.bf16.gmra.mxu0 %v2843
    %v2857 = vpop.f32.mrf.mxu0
    %v2858 = vadd.f32 %v326, %v2857
    %v2859 = vpop.f32.mrf.mxu0
    %2860 = vdwg.mxu0
    %v2862 = vsel %vm1670, %v2788, 0
    %v2865 = vsel %vm1670, %v2839, 0
    %2867 = vmatpush.bf16.xpose.msra.mxu0 0
    %2868 = vmatpush.bf16.xpose.msra.mxu0 0
    %2869 = vmatpush.bf16.xpose.msra.mxu0 0
    %2870 = vmatpush.bf16.xpose.msra.mxu0 0
    %2871 = vmatpush.bf16.xpose.msra.mxu0 0
    %2872 = vmatpush.bf16.xpose.msra.mxu0 0
    %2873 = vmatpush.bf16.xpose.msra.mxu0 0
    %2874 = vmatpush.bf16.xpose.msra.mxu0 %v2865
    %2875 = vmatmul.bf16.gmra.mxu0 %v2862
    %v2876 = vpop.f32.mrf.mxu0
    %v2877 = vadd.f32 %v326, %v2876
    %v2878 = vpop.f32.mrf.mxu0
    %2879 = vdwg.mxu0
    %v2881 = vsel %vm1670, %v2789, 0
    %v2884 = vsel %vm1670, %v2840, 0
    %2886 = vmatpush.bf16.xpose.msra.mxu0 0
    %2887 = vmatpush.bf16.xpose.msra.mxu0 0
    %2888 = vmatpush.bf16.xpose.msra.mxu0 0
    %2889 = vmatpush.bf16.xpose.msra.mxu0 0
    %2890 = vmatpush.bf16.xpose.msra.mxu0 0
    %2891 = vmatpush.bf16.xpose.msra.mxu0 0
    %2892 = vmatpush.bf16.xpose.msra.mxu0 0
    %2893 = vmatpush.bf16.xpose.msra.mxu0 %v2884
    %2894 = vmatmul.bf16.gmra.mxu0 %v2881
    %v2895 = vpop.f32.mrf.mxu0
    %v2896 = vadd.f32 %v326, %v2895
    %v2897 = vpop.f32.mrf.mxu0
    %2898 = vdwg.mxu0
    %v2900 = vsel %vm1670, %v2790, 0
    %v2903 = vsel %vm1670, %v2841, 0
    %2905 = vmatpush.bf16.xpose.msra.mxu0 0
    %2906 = vmatpush.bf16.xpose.msra.mxu0 0
    %2907 = vmatpush.bf16.xpose.msra.mxu0 0
    %2908 = vmatpush.bf16.xpose.msra.mxu0 0
    %2909 = vmatpush.bf16.xpose.msra.mxu0 0
    %2910 = vmatpush.bf16.xpose.msra.mxu0 0
    %2911 = vmatpush.bf16.xpose.msra.mxu0 0
    %2912 = vmatpush.bf16.xpose.msra.mxu0 %v2903
    %2913 = vmatmul.bf16.gmra.mxu0 %v2900
    %v2914 = vpop.f32.mrf.mxu0
    %v2915 = vadd.f32 %v326, %v2914
    %v2916 = vpop.f32.mrf.mxu0
    %2917 = vdwg.mxu0
    %v2918 = vsel %vm1747, %v2858, -inf
    %2919 = vmax.xlane.f32.xlu0 %v2918
    %v2920 = vpop.xlane.xlu0 %2919
    %v2921 = vsel %vm1747, %v2877, -inf
    %2922 = vmax.xlane.f32.xlu0 %v2921
    %v2923 = vpop.xlane.xlu0 %2922
    %v2924 = vsel %vm1747, %v2896, -inf
    %2925 = vmax.xlane.f32.xlu0 %v2924
    %v2926 = vpop.xlane.xlu0 %2925
    %v2927 = vsel %vm1747, %v2915, -inf
    %2928 = vmax.xlane.f32.xlu0 %v2927
    %v2929 = vpop.xlane.xlu0 %2928
    %v2930 = vsub.f32 %v2858, %v2920
    %v2931 = vsub.f32 %v2877, %v2923
    %v2932 = vsub.f32 %v2896, %v2926
    %v2933 = vsub.f32 %v2915, %v2929
    %v2934 = vmul.f32 %v2930, 1.442695
    %v2935 = vpow.pop %v2934
    %v2936 = vmul.f32 %v2931, 1.442695
    %v2937 = vpow.pop %v2936
    %v2938 = vmul.f32 %v2932, 1.442695
    %v2939 = vpow.pop %v2938
    %v2940 = vmul.f32 %v2933, 1.442695
    %v2941 = vpow.pop %v2940
    %v2942 = vsel %vm1747, %v2935, 0.0
    %2943 = vadd.xlane.f32.xlu0 %v2942
    %v2944 = vpop.xlane.xlu0 %2943
    %v2945 = vsel %vm1747, %v2937, 0.0
    %2946 = vadd.xlane.f32.xlu0 %v2945
    %v2947 = vpop.xlane.xlu0 %2946
    %v2948 = vsel %vm1747, %v2939, 0.0
    %2949 = vadd.xlane.f32.xlu0 %v2948
    %v2950 = vpop.xlane.xlu0 %2949
    %v2951 = vsel %vm1747, %v2941, 0.0
    %2952 = vadd.xlane.f32.xlu0 %v2951
    %v2953 = vpop.xlane.xlu0 %2952
    %v2954 = vrcp.pop %v2944
    %v2955 = vrcp.pop %v2947
    %v2956 = vrcp.pop %v2950
    %v2957 = vrcp.pop %v2953
    %v2958 = vmul.f32 %v2935, %v2954
    %v2959 = vmul.f32 %v2937, %v2955
    %v2960 = vmul.f32 %v2939, %v2956
    %v2961 = vmul.f32 %v2941, %v2957
    %v2962 = vpack.c.bf16 %v2958, %v2958
    %v2963 = vpack.c.bf16 %v2959, %v2959
    %v2964 = vpack.c.bf16 %v2960, %v2960
    %v2965 = vpack.c.bf16 %v2961, %v2961
    %2982 = vst [vmem:[#allocation1] ss:$4 sm:$0xff] %v2681
    %s2983 = scalar_lea.vmem [#allocation1], 1
    %2984 = vst [vmem:[%s2983] ss:$4 sm:$0xff] %v2689
    %s2985 = scalar_lea.vmem [#allocation1], 2
    %2986 = vst [vmem:[%s2985] ss:$4 sm:$0xff] %v2697
    %s2987 = scalar_lea.vmem [#allocation1], 3
    %2988 = vst [vmem:[%s2987] ss:$4 sm:$0xff] %v2705
    %v2989 = vld.sshfl [vmem:[#allocation1] sm:$0xff pattern:$0x73625140]
    %s2990 = scalar_lea.vmem [#allocation1], 32
    %2991 = vst [vmem:[%s2990] ss:$4 sm:$0xff] %v2683
    %s2992 = scalar_lea.vmem [#allocation1], 33
    %2993 = vst [vmem:[%s2992] ss:$4 sm:$0xff] %v2691
    %s2994 = scalar_lea.vmem [#allocation1], 34
    %2995 = vst [vmem:[%s2994] ss:$4 sm:$0xff] %v2699
    %s2996 = scalar_lea.vmem [#allocation1], 35
    %2997 = vst [vmem:[%s2996] ss:$4 sm:$0xff] %v2707
    %v2998 = vld.sshfl [vmem:[#allocation1 + $0x20] sm:$0xff pattern:$0x73625140]
    %2999 = vst [vmem:[#allocation1] ss:$4 sm:$0xff] %v2713
    %3000 = vst [vmem:[%s2983] ss:$4 sm:$0xff] %v2721
    %3001 = vst [vmem:[%s2985] ss:$4 sm:$0xff] %v2729
    %3002 = vst [vmem:[%s2987] ss:$4 sm:$0xff] %v2737
    %v3003 = vld.sshfl [vmem:[#allocation1] sm:$0xff pattern:$0x73625140]
    %3004 = vst [vmem:[%s2990] ss:$4 sm:$0xff] %v2715
    %3005 = vst [vmem:[%s2992] ss:$4 sm:$0xff] %v2723
    %3006 = vst [vmem:[%s2994] ss:$4 sm:$0xff] %v2731
    %3007 = vst [vmem:[%s2996] ss:$4 sm:$0xff] %v2739
    %v3008 = vld.sshfl [vmem:[#allocation1 + $0x20] sm:$0xff pattern:$0x73625140]
    %v3013 = vpack.c.bf16 %v2989, %v2989
    %v3014 = vpack.c.bf16 %v2998, %v2998
    %v3015 = vpack.c.bf16 %v3003, %v3003
    %v3016 = vpack.c.bf16 %v3008, %v3008
    %v3018 = vsel %vm1747, %v2962, 0
    %v3021 = vsel %vm1850, %v3013, 0
    %3023 = vmatpush.bf16.msra.mxu0 0
    %3024 = vmatpush.bf16.msra.mxu0 0
    %3025 = vmatpush.bf16.msra.mxu0 0
    %3026 = vmatpush.bf16.msra.mxu0 0
    %3027 = vmatpush.bf16.msra.mxu0 0
    %3028 = vmatpush.bf16.msra.mxu0 0
    %3029 = vmatpush.bf16.msra.mxu0 0
    %3030 = vmatpush.bf16.msra.mxu0 %v3021
    %3031 = vmatmul.bf16.gmra.mxu0 %v3018
    %v3032 = vpop.f32.mrf.mxu0
    %v3033 = vadd.f32 0.0, %v3032
    %v3034 = vpop.f32.mrf.mxu0
    %3035 = vdwg.mxu0
    %v3037 = vsel %vm1747, %v2963, 0
    %v3040 = vsel %vm1850, %v3014, 0
    %3042 = vmatpush.bf16.msra.mxu0 0
    %3043 = vmatpush.bf16.msra.mxu0 0
    %3044 = vmatpush.bf16.msra.mxu0 0
    %3045 = vmatpush.bf16.msra.mxu0 0
    %3046 = vmatpush.bf16.msra.mxu0 0
    %3047 = vmatpush.bf16.msra.mxu0 0
    %3048 = vmatpush.bf16.msra.mxu0 0
    %3049 = vmatpush.bf16.msra.mxu0 %v3040
    %3050 = vmatmul.bf16.gmra.mxu0 %v3037
    %v3051 = vpop.f32.mrf.mxu0
    %v3052 = vadd.f32 0.0, %v3051
    %v3053 = vpop.f32.mrf.mxu0
    %3054 = vdwg.mxu0
    %v3056 = vsel %vm1747, %v2964, 0
    %v3059 = vsel %vm1850, %v3015, 0
    %3061 = vmatpush.bf16.msra.mxu0 0
    %3062 = vmatpush.bf16.msra.mxu0 0
    %3063 = vmatpush.bf16.msra.mxu0 0
    %3064 = vmatpush.bf16.msra.mxu0 0
    %3065 = vmatpush.bf16.msra.mxu0 0
    %3066 = vmatpush.bf16.msra.mxu0 0
    %3067 = vmatpush.bf16.msra.mxu0 0
    %3068 = vmatpush.bf16.msra.mxu0 %v3059
    %3069 = vmatmul.bf16.gmra.mxu0 %v3056
    %v3070 = vpop.f32.mrf.mxu0
    %v3071 = vadd.f32 0.0, %v3070
    %v3072 = vpop.f32.mrf.mxu0
    %3073 = vdwg.mxu0
    %v3075 = vsel %vm1747, %v2965, 0
    %v3078 = vsel %vm1850, %v3016, 0
    %3080 = vmatpush.bf16.msra.mxu0 0
    %3081 = vmatpush.bf16.msra.mxu0 0
    %3082 = vmatpush.bf16.msra.mxu0 0
    %3083 = vmatpush.bf16.msra.mxu0 0
    %3084 = vmatpush.bf16.msra.mxu0 0
    %3085 = vmatpush.bf16.msra.mxu0 0
    %3086 = vmatpush.bf16.msra.mxu0 0
    %3087 = vmatpush.bf16.msra.mxu0 %v3078
    %3088 = vmatmul.bf16.gmra.mxu0 %v3075
    %v3089 = vpop.f32.mrf.mxu0
    %v3090 = vadd.f32 0.0, %v3089
    %v3091 = vpop.f32.mrf.mxu0
    %3092 = vdwg.mxu0
    %v3093 = vrot.slane %v3071, 4
    %v3094 = vsel %vm944, %v3093, %v3033
    %v3095 = vrot.slane %v3033, 4
    %v3096 = vsel %vm944, %v3071, %v3095
    %v3098 = vunpack.c.l.s4 1983009808
    %v3099 = vunpack.c.0.s8 %v3098
    %v3100 = vperm.slane %v3094, %v3099
    %v3102 = vunpack.c.l.s4 1983009808
    %v3103 = vunpack.c.0.s8 %v3102
    %v3104 = vperm.slane %v3096, %v3103
    %v3105 = vrot.slane %v3090, 4
    %v3106 = vsel %vm944, %v3105, %v3052
    %v3107 = vrot.slane %v3052, 4
    %v3108 = vsel %vm944, %v3090, %v3107
    %v3110 = vunpack.c.l.s4 1983009808
    %v3111 = vunpack.c.0.s8 %v3110
    %v3112 = vperm.slane %v3106, %v3111
    %v3114 = vunpack.c.l.s4 1983009808
    %v3115 = vunpack.c.0.s8 %v3114
    %v3116 = vperm.slane %v3108, %v3115
    %v3117 = vrot.slane %v3112, 4
    %v3118 = vsel %vm944, %v3117, %v3100
    %v3119 = vrot.slane %v3100, 4
    %v3120 = vsel %vm944, %v3112, %v3119
    %v3122 = vunpack.c.l.s4 1934713408
    %v3123 = vunpack.c.0.s8 %v3122
    %v3124 = vperm.slane %v3118, %v3123
    %v3126 = vunpack.c.l.s4 1934713408
    %v3127 = vunpack.c.0.s8 %v3126
    %v3128 = vperm.slane %v3120, %v3127
    %v3129 = vrot.slane %v3116, 4
    %v3130 = vsel %vm944, %v3129, %v3104
    %v3131 = vrot.slane %v3104, 4
    %v3132 = vsel %vm944, %v3116, %v3131
    %v3134 = vunpack.c.l.s4 1934713408
    %v3135 = vunpack.c.0.s8 %v3134
    %v3136 = vperm.slane %v3130, %v3135
    %v3138 = vunpack.c.l.s4 1934713408
    %v3139 = vunpack.c.0.s8 %v3138
    %v3140 = vperm.slane %v3132, %v3139
    %v3142 = vunpack.c.l.s4 1983009808
    %v3143 = vunpack.c.0.s8 %v3142
    %v3144 = vperm.slane %v1955, %v3143
    %v3145 = vrot.slane %v3144, 4
    %v3146 = vsel %vm944, 0.0, %v3145
    %v3148 = vunpack.c.l.s4 1934713408
    %v3149 = vunpack.c.0.s8 %v3148
    %v3150 = vperm.slane %v3144, %v3149
    %v3152 = vunpack.c.l.s4 1934713408
    %v3153 = vunpack.c.0.s8 %v3152
    %v3154 = vperm.slane %v3146, %v3153
    %v3155 = vrot.slane %v3150, 4
    %v3156 = vsel %vm944, 0.0, %v3155
    %v3157 = vrot.slane %v3154, 4
    %v3158 = vsel %vm944, 0.0, %v3157
    %v3159 = vrot.slane %v1955, 4
    %v3160 = vsel %vm944, 0.0, %v3159
    %v3162 = vunpack.c.l.s4 1983009808
    %v3163 = vunpack.c.0.s8 %v3162
    %v3164 = vperm.slane %v3160, %v3163
    %v3165 = vrot.slane %v3164, 4
    %v3166 = vsel %vm944, 0.0, %v3165
    %v3168 = vunpack.c.l.s4 1934713408
    %v3169 = vunpack.c.0.s8 %v3168
    %v3170 = vperm.slane %v3164, %v3169
    %v3172 = vunpack.c.l.s4 1934713408
    %v3173 = vunpack.c.0.s8 %v3172
    %v3174 = vperm.slane %v3166, %v3173
    %v3175 = vrot.slane %v3170, 4
    %v3176 = vsel %vm944, 0.0, %v3175
    %v3177 = vrot.slane %v3174, 4
    %v3178 = vsel %vm944, 0.0, %v3177
    %v3180 = vunpack.c.l.s4 1983009808
    %v3181 = vunpack.c.0.s8 %v3180
    %v3182 = vperm.slane %v1959, %v3181
    %v3183 = vrot.slane %v3182, 4
    %v3184 = vsel %vm944, 0.0, %v3183
    %v3186 = vunpack.c.l.s4 1934713408
    %v3187 = vunpack.c.0.s8 %v3186
    %v3188 = vperm.slane %v3182, %v3187
    %v3190 = vunpack.c.l.s4 1934713408
    %v3191 = vunpack.c.0.s8 %v3190
    %v3192 = vperm.slane %v3184, %v3191
    %v3193 = vrot.slane %v3188, 4
    %v3194 = vsel %vm944, 0.0, %v3193
    %v3195 = vrot.slane %v3192, 4
    %v3196 = vsel %vm944, 0.0, %v3195
    %v3197 = vrot.slane %v1959, 4
    %v3198 = vsel %vm944, 0.0, %v3197
    %v3200 = vunpack.c.l.s4 1983009808
    %v3201 = vunpack.c.0.s8 %v3200
    %v3202 = vperm.slane %v3198, %v3201
    %v3203 = vrot.slane %v3202, 4
    %v3204 = vsel %vm944, 0.0, %v3203
    %v3206 = vunpack.c.l.s4 1934713408
    %v3207 = vunpack.c.0.s8 %v3206
    %v3208 = vperm.slane %v3202, %v3207
    %v3210 = vunpack.c.l.s4 1934713408
    %v3211 = vunpack.c.0.s8 %v3210
    %v3212 = vperm.slane %v3204, %v3211
    %v3213 = vrot.slane %v3208, 4
    %v3214 = vsel %vm944, 0.0, %v3213
    %v3215 = vrot.slane %v3212, 4
    %v3216 = vsel %vm944, 0.0, %v3215
    %v3218 = vunpack.c.l.s4 1983009808
    %v3219 = vunpack.c.0.s8 %v3218
    %v3220 = vperm.slane %v1967, %v3219
    %v3221 = vrot.slane %v3220, 4
    %v3222 = vsel %vm944, 0.0, %v3221
    %v3224 = vunpack.c.l.s4 1934713408
    %v3225 = vunpack.c.0.s8 %v3224
    %v3226 = vperm.slane %v3220, %v3225
    %v3228 = vunpack.c.l.s4 1934713408
    %v3229 = vunpack.c.0.s8 %v3228
    %v3230 = vperm.slane %v3222, %v3229
    %v3231 = vrot.slane %v3226, 4
    %v3232 = vsel %vm944, 0.0, %v3231
    %v3233 = vrot.slane %v3230, 4
    %v3234 = vsel %vm944, 0.0, %v3233
    %v3235 = vrot.slane %v1967, 4
    %v3236 = vsel %vm944, 0.0, %v3235
    %v3238 = vunpack.c.l.s4 1983009808
    %v3239 = vunpack.c.0.s8 %v3238
    %v3240 = vperm.slane %v3236, %v3239
    %v3241 = vrot.slane %v3240, 4
    %v3242 = vsel %vm944, 0.0, %v3241
    %v3244 = vunpack.c.l.s4 1934713408
    %v3245 = vunpack.c.0.s8 %v3244
    %v3246 = vperm.slane %v3240, %v3245
    %v3248 = vunpack.c.l.s4 1934713408
    %v3249 = vunpack.c.0.s8 %v3248
    %v3250 = vperm.slane %v3242, %v3249
    %v3251 = vrot.slane %v3246, 4
    %v3252 = vsel %vm944, 0.0, %v3251
    %v3253 = vrot.slane %v3250, 4
    %v3254 = vsel %vm944, 0.0, %v3253
    %v3256 = vunpack.c.l.s4 1983009808
    %v3257 = vunpack.c.0.s8 %v3256
    %v3258 = vperm.slane %v1971, %v3257
    %v3259 = vrot.slane %v3258, 4
    %v3260 = vsel %vm944, 0.0, %v3259
    %v3262 = vunpack.c.l.s4 1934713408
    %v3263 = vunpack.c.0.s8 %v3262
    %v3264 = vperm.slane %v3258, %v3263
    %v3266 = vunpack.c.l.s4 1934713408
    %v3267 = vunpack.c.0.s8 %v3266
    %v3268 = vperm.slane %v3260, %v3267
    %v3269 = vrot.slane %v3264, 4
    %v3270 = vsel %vm944, 0.0, %v3269
    %v3271 = vrot.slane %v3268, 4
    %v3272 = vsel %vm944, 0.0, %v3271
    %v3273 = vrot.slane %v1971, 4
    %v3274 = vsel %vm944, 0.0, %v3273
    %v3276 = vunpack.c.l.s4 1983009808
    %v3277 = vunpack.c.0.s8 %v3276
    %v3278 = vperm.slane %v3274, %v3277
    %v3279 = vrot.slane %v3278, 4
    %v3280 = vsel %vm944, 0.0, %v3279
    %v3282 = vunpack.c.l.s4 1934713408
    %v3283 = vunpack.c.0.s8 %v3282
    %v3284 = vperm.slane %v3278, %v3283
    %v3286 = vunpack.c.l.s4 1934713408
    %v3287 = vunpack.c.0.s8 %v3286
    %v3288 = vperm.slane %v3280, %v3287
    %v3289 = vrot.slane %v3284, 4
    %v3290 = vsel %vm944, 0.0, %v3289
    %v3291 = vrot.slane %v3288, 4
    %v3292 = vsel %vm944, 0.0, %v3291
    %3301 = vrot.lane.b32.xlu0 %v3156, 32
    %v3302 = vpop.permute.xlu0 %3301
    %3303 = vrot.lane.b32.xlu0 %v3176, 32
    %v3304 = vpop.permute.xlu0 %3303
    %3305 = vrot.lane.b32.xlu0 %v3194, 32
    %v3306 = vpop.permute.xlu0 %3305
    %3307 = vrot.lane.b32.xlu0 %v3214, 32
    %v3308 = vpop.permute.xlu0 %3307
    %3309 = vrot.lane.b32.xlu0 %v3232, 32
    %v3310 = vpop.permute.xlu0 %3309
    %3311 = vrot.lane.b32.xlu0 %v3252, 32
    %v3312 = vpop.permute.xlu0 %3311
    %3313 = vrot.lane.b32.xlu0 %v3270, 32
    %v3314 = vpop.permute.xlu0 %3313
    %3315 = vrot.lane.b32.xlu0 %v3290, 32
    %v3316 = vpop.permute.xlu0 %3315
    %3333 = vrot.lane.b32.xlu0 %v3154, 64
    %v3334 = vpop.permute.xlu0 %3333
    %3335 = vrot.lane.b32.xlu0 %v3174, 64
    %v3336 = vpop.permute.xlu0 %3335
    %3337 = vrot.lane.b32.xlu0 %v3192, 64
    %v3338 = vpop.permute.xlu0 %3337
    %3339 = vrot.lane.b32.xlu0 %v3212, 64
    %v3340 = vpop.permute.xlu0 %3339
    %3341 = vrot.lane.b32.xlu0 %v3230, 64
    %v3342 = vpop.permute.xlu0 %3341
    %3343 = vrot.lane.b32.xlu0 %v3250, 64
    %v3344 = vpop.permute.xlu0 %3343
    %3345 = vrot.lane.b32.xlu0 %v3268, 64
    %v3346 = vpop.permute.xlu0 %3345
    %3347 = vrot.lane.b32.xlu0 %v3288, 64
    %v3348 = vpop.permute.xlu0 %3347
    %3365 = vrot.lane.b32.xlu0 %v3158, 96
    %v3366 = vpop.permute.xlu0 %3365
    %3367 = vrot.lane.b32.xlu0 %v3178, 96
    %v3368 = vpop.permute.xlu0 %3367
    %3369 = vrot.lane.b32.xlu0 %v3196, 96
    %v3370 = vpop.permute.xlu0 %3369
    %3371 = vrot.lane.b32.xlu0 %v3216, 96
    %v3372 = vpop.permute.xlu0 %3371
    %3373 = vrot.lane.b32.xlu0 %v3234, 96
    %v3374 = vpop.permute.xlu0 %3373
    %3375 = vrot.lane.b32.xlu0 %v3254, 96
    %v3376 = vpop.permute.xlu0 %3375
    %3377 = vrot.lane.b32.xlu0 %v3272, 96
    %v3378 = vpop.permute.xlu0 %3377
    %3379 = vrot.lane.b32.xlu0 %v3292, 96
    %v3380 = vpop.permute.xlu0 %3379
    %v3389 = vsel %vm1670, %v3150, %v3302
    %v3390 = vsel %vm1670, %v3170, %v3304
    %v3391 = vsel %vm1670, %v3188, %v3306
    %v3392 = vsel %vm1670, %v3208, %v3308
    %v3393 = vsel %vm1670, %v3226, %v3310
    %v3394 = vsel %vm1670, %v3246, %v3312
    %v3395 = vsel %vm1670, %v3264, %v3314
    %v3396 = vsel %vm1670, %v3284, %v3316
    %vm3397 = vcmask 523264
    %v3398 = vsel %vm3397, %v3389, %v3334
    %v3399 = vsel %vm3397, %v3390, %v3336
    %v3400 = vsel %vm3397, %v3391, %v3338
    %v3401 = vsel %vm3397, %v3392, %v3340
    %v3402 = vsel %vm3397, %v3393, %v3342
    %v3403 = vsel %vm3397, %v3394, %v3344
    %v3404 = vsel %vm3397, %v3395, %v3346
    %v3405 = vsel %vm3397, %v3396, %v3348
    %vm3406 = vcmask 785408
    %v3407 = vsel %vm3406, %v3398, %v3366
    %v3408 = vsel %vm3406, %v3399, %v3368
    %v3409 = vsel %vm3406, %v3400, %v3370
    %v3410 = vsel %vm3406, %v3401, %v3372
    %v3411 = vsel %vm3406, %v3402, %v3374
    %v3412 = vsel %vm3406, %v3403, %v3376
    %v3413 = vsel %vm3406, %v3404, %v3378
    %v3414 = vsel %vm3406, %v3405, %v3380
    %v3416 = vunpack.c.l.s4 1983009808
    %v3417 = vunpack.c.0.s8 %v3416
    %v3418 = vperm.slane %v3124, %v3417
    %v3419 = vrot.slane %v3418, 4
    %v3420 = vsel %vm944, 0.0, %v3419
    %v3422 = vunpack.c.l.s4 1934713408
    %v3423 = vunpack.c.0.s8 %v3422
    %v3424 = vperm.slane %v3418, %v3423
    %v3426 = vunpack.c.l.s4 1934713408
    %v3427 = vunpack.c.0.s8 %v3426
    %v3428 = vperm.slane %v3420, %v3427
    %v3429 = vrot.slane %v3424, 4
    %v3430 = vsel %vm944, 0.0, %v3429
    %v3431 = vrot.slane %v3428, 4
    %v3432 = vsel %vm944, 0.0, %v3431
    %v3433 = vrot.slane %v3124, 4
    %v3434 = vsel %vm944, 0.0, %v3433
    %v3436 = vunpack.c.l.s4 1983009808
    %v3437 = vunpack.c.0.s8 %v3436
    %v3438 = vperm.slane %v3434, %v3437
    %v3439 = vrot.slane %v3438, 4
    %v3440 = vsel %vm944, 0.0, %v3439
    %v3442 = vunpack.c.l.s4 1934713408
    %v3443 = vunpack.c.0.s8 %v3442
    %v3444 = vperm.slane %v3438, %v3443
    %v3446 = vunpack.c.l.s4 1934713408
    %v3447 = vunpack.c.0.s8 %v3446
    %v3448 = vperm.slane %v3440, %v3447
    %v3449 = vrot.slane %v3444, 4
    %v3450 = vsel %vm944, 0.0, %v3449
    %v3451 = vrot.slane %v3448, 4
    %v3452 = vsel %vm944, 0.0, %v3451
    %v3454 = vunpack.c.l.s4 1983009808
    %v3455 = vunpack.c.0.s8 %v3454
    %v3456 = vperm.slane %v3128, %v3455
    %v3457 = vrot.slane %v3456, 4
    %v3458 = vsel %vm944, 0.0, %v3457
    %v3460 = vunpack.c.l.s4 1934713408
    %v3461 = vunpack.c.0.s8 %v3460
    %v3462 = vperm.slane %v3456, %v3461
    %v3464 = vunpack.c.l.s4 1934713408
    %v3465 = vunpack.c.0.s8 %v3464
    %v3466 = vperm.slane %v3458, %v3465
    %v3467 = vrot.slane %v3462, 4
    %v3468 = vsel %vm944, 0.0, %v3467
    %v3469 = vrot.slane %v3466, 4
    %v3470 = vsel %vm944, 0.0, %v3469
    %v3471 = vrot.slane %v3128, 4
    %v3472 = vsel %vm944, 0.0, %v3471
    %v3474 = vunpack.c.l.s4 1983009808
    %v3475 = vunpack.c.0.s8 %v3474
    %v3476 = vperm.slane %v3472, %v3475
    %v3477 = vrot.slane %v3476, 4
    %v3478 = vsel %vm944, 0.0, %v3477
    %v3480 = vunpack.c.l.s4 1934713408
    %v3481 = vunpack.c.0.s8 %v3480
    %v3482 = vperm.slane %v3476, %v3481
    %v3484 = vunpack.c.l.s4 1934713408
    %v3485 = vunpack.c.0.s8 %v3484
    %v3486 = vperm.slane %v3478, %v3485
    %v3487 = vrot.slane %v3482, 4
    %v3488 = vsel %vm944, 0.0, %v3487
    %v3489 = vrot.slane %v3486, 4
    %v3490 = vsel %vm944, 0.0, %v3489
    %v3492 = vunpack.c.l.s4 1983009808
    %v3493 = vunpack.c.0.s8 %v3492
    %v3494 = vperm.slane %v3136, %v3493
    %v3495 = vrot.slane %v3494, 4
    %v3496 = vsel %vm944, 0.0, %v3495
    %v3498 = vunpack.c.l.s4 1934713408
    %v3499 = vunpack.c.0.s8 %v3498
    %v3500 = vperm.slane %v3494, %v3499
    %v3502 = vunpack.c.l.s4 1934713408
    %v3503 = vunpack.c.0.s8 %v3502
    %v3504 = vperm.slane %v3496, %v3503
    %v3505 = vrot.slane %v3500, 4
    %v3506 = vsel %vm944, 0.0, %v3505
    %v3507 = vrot.slane %v3504, 4
    %v3508 = vsel %vm944, 0.0, %v3507
    %v3509 = vrot.slane %v3136, 4
    %v3510 = vsel %vm944, 0.0, %v3509
    %v3512 = vunpack.c.l.s4 1983009808
    %v3513 = vunpack.c.0.s8 %v3512
    %v3514 = vperm.slane %v3510, %v3513
    %v3515 = vrot.slane %v3514, 4
    %v3516 = vsel %vm944, 0.0, %v3515
    %v3518 = vunpack.c.l.s4 1934713408
    %v3519 = vunpack.c.0.s8 %v3518
    %v3520 = vperm.slane %v3514, %v3519
    %v3522 = vunpack.c.l.s4 1934713408
    %v3523 = vunpack.c.0.s8 %v3522
    %v3524 = vperm.slane %v3516, %v3523
    %v3525 = vrot.slane %v3520, 4
    %v3526 = vsel %vm944, 0.0, %v3525
    %v3527 = vrot.slane %v3524, 4
    %v3528 = vsel %vm944, 0.0, %v3527
    %v3530 = vunpack.c.l.s4 1983009808
    %v3531 = vunpack.c.0.s8 %v3530
    %v3532 = vperm.slane %v3140, %v3531
    %v3533 = vrot.slane %v3532, 4
    %v3534 = vsel %vm944, 0.0, %v3533
    %v3536 = vunpack.c.l.s4 1934713408
    %v3537 = vunpack.c.0.s8 %v3536
    %v3538 = vperm.slane %v3532, %v3537
    %v3540 = vunpack.c.l.s4 1934713408
    %v3541 = vunpack.c.0.s8 %v3540
    %v3542 = vperm.slane %v3534, %v3541
    %v3543 = vrot.slane %v3538, 4
    %v3544 = vsel %vm944, 0.0, %v3543
    %v3545 = vrot.slane %v3542, 4
    %v3546 = vsel %vm944, 0.0, %v3545
    %v3547 = vrot.slane %v3140, 4
    %v3548 = vsel %vm944, 0.0, %v3547
    %v3550 = vunpack.c.l.s4 1983009808
    %v3551 = vunpack.c.0.s8 %v3550
    %v3552 = vperm.slane %v3548, %v3551
    %v3553 = vrot.slane %v3552, 4
    %v3554 = vsel %vm944, 0.0, %v3553
    %v3556 = vunpack.c.l.s4 1934713408
    %v3557 = vunpack.c.0.s8 %v3556
    %v3558 = vperm.slane %v3552, %v3557
    %v3560 = vunpack.c.l.s4 1934713408
    %v3561 = vunpack.c.0.s8 %v3560
    %v3562 = vperm.slane %v3554, %v3561
    %v3563 = vrot.slane %v3558, 4
    %v3564 = vsel %vm944, 0.0, %v3563
    %v3565 = vrot.slane %v3562, 4
    %v3566 = vsel %vm944, 0.0, %v3565
    %3575 = vrot.lane.b32.xlu0 %v3430, 32
    %v3576 = vpop.permute.xlu0 %3575
    %3577 = vrot.lane.b32.xlu0 %v3450, 32
    %v3578 = vpop.permute.xlu0 %3577
    %3579 = vrot.lane.b32.xlu0 %v3468, 32
    %v3580 = vpop.permute.xlu0 %3579
    %3581 = vrot.lane.b32.xlu0 %v3488, 32
    %v3582 = vpop.permute.xlu0 %3581
    %3583 = vrot.lane.b32.xlu0 %v3506, 32
    %v3584 = vpop.permute.xlu0 %3583
    %3585 = vrot.lane.b32.xlu0 %v3526, 32
    %v3586 = vpop.permute.xlu0 %3585
    %3587 = vrot.lane.b32.xlu0 %v3544, 32
    %v3588 = vpop.permute.xlu0 %3587
    %3589 = vrot.lane.b32.xlu0 %v3564, 32
    %v3590 = vpop.permute.xlu0 %3589
    %3607 = vrot.lane.b32.xlu0 %v3428, 64
    %v3608 = vpop.permute.xlu0 %3607
    %3609 = vrot.lane.b32.xlu0 %v3448, 64
    %v3610 = vpop.permute.xlu0 %3609
    %3611 = vrot.lane.b32.xlu0 %v3466, 64
    %v3612 = vpop.permute.xlu0 %3611
    %3613 = vrot.lane.b32.xlu0 %v3486, 64
    %v3614 = vpop.permute.xlu0 %3613
    %3615 = vrot.lane.b32.xlu0 %v3504, 64
    %v3616 = vpop.permute.xlu0 %3615
    %3617 = vrot.lane.b32.xlu0 %v3524, 64
    %v3618 = vpop.permute.xlu0 %3617
    %3619 = vrot.lane.b32.xlu0 %v3542, 64
    %v3620 = vpop.permute.xlu0 %3619
    %3621 = vrot.lane.b32.xlu0 %v3562, 64
    %v3622 = vpop.permute.xlu0 %3621
    %3639 = vrot.lane.b32.xlu0 %v3432, 96
    %v3640 = vpop.permute.xlu0 %3639
    %3641 = vrot.lane.b32.xlu0 %v3452, 96
    %v3642 = vpop.permute.xlu0 %3641
    %3643 = vrot.lane.b32.xlu0 %v3470, 96
    %v3644 = vpop.permute.xlu0 %3643
    %3645 = vrot.lane.b32.xlu0 %v3490, 96
    %v3646 = vpop.permute.xlu0 %3645
    %3647 = vrot.lane.b32.xlu0 %v3508, 96
    %v3648 = vpop.permute.xlu0 %3647
    %3649 = vrot.lane.b32.xlu0 %v3528, 96
    %v3650 = vpop.permute.xlu0 %3649
    %3651 = vrot.lane.b32.xlu0 %v3546, 96
    %v3652 = vpop.permute.xlu0 %3651
    %3653 = vrot.lane.b32.xlu0 %v3566, 96
    %v3654 = vpop.permute.xlu0 %3653
    %v3663 = vsel %vm1670, %v3424, %v3576
    %v3664 = vsel %vm1670, %v3444, %v3578
    %v3665 = vsel %vm1670, %v3462, %v3580
    %v3666 = vsel %vm1670, %v3482, %v3582
    %v3667 = vsel %vm1670, %v3500, %v3584
    %v3668 = vsel %vm1670, %v3520, %v3586
    %v3669 = vsel %vm1670, %v3538, %v3588
    %v3670 = vsel %vm1670, %v3558, %v3590
    %v3671 = vsel %vm3397, %v3663, %v3608
    %v3672 = vsel %vm3397, %v3664, %v3610
    %v3673 = vsel %vm3397, %v3665, %v3612
    %v3674 = vsel %vm3397, %v3666, %v3614
    %v3675 = vsel %vm3397, %v3667, %v3616
    %v3676 = vsel %vm3397, %v3668, %v3618
    %v3677 = vsel %vm3397, %v3669, %v3620
    %v3678 = vsel %vm3397, %v3670, %v3622
    %v3679 = vsel %vm3406, %v3671, %v3640
    %v3680 = vsel %vm3406, %v3672, %v3642
    %v3681 = vsel %vm3406, %v3673, %v3644
    %v3682 = vsel %vm3406, %v3674, %v3646
    %v3683 = vsel %vm3406, %v3675, %v3648
    %v3684 = vsel %vm3406, %v3676, %v3650
    %v3685 = vsel %vm3406, %v3677, %v3652
    %v3686 = vsel %vm3406, %v3678, %v3654
    %v3695 = vrot.slane %v3679, 7
    %v3696 = vrot.slane %v3680, 7
    %v3697 = vrot.slane %v3681, 7
    %v3698 = vrot.slane %v3682, 7
    %v3699 = vrot.slane %v3683, 7
    %v3700 = vrot.slane %v3684, 7
    %v3701 = vrot.slane %v3685, 7
    %v3702 = vrot.slane %v3686, 7
    %vm3711 = vcmask 1040384
    %v3712 = vsel %vm3711, %v3407, %v3695
    %v3713 = vsel %vm3711, %v3408, %v3696
    %v3714 = vsel %vm3711, %v3409, %v3697
    %v3715 = vsel %vm3711, %v3410, %v3698
    %v3716 = vsel %vm3711, %v3411, %v3699
    %v3717 = vsel %vm3711, %v3412, %v3700
    %v3718 = vsel %vm3711, %v3413, %v3701
    %v3719 = vsel %vm3711, %v3414, %v3702
    %3728 = vst [vmem:[#allocation1] ss:$4 sm:$0xff] %v3712
    %s3729 = scalar_lea.vmem [#allocation1], 1
    %3730 = vst [vmem:[%s3729] ss:$4 sm:$0xff] %v3713
    %s3731 = scalar_lea.vmem [#allocation1], 2
    %3732 = vst [vmem:[%s3731] ss:$4 sm:$0xff] %v3714
    %s3733 = scalar_lea.vmem [#allocation1], 3
    %3734 = vst [vmem:[%s3733] ss:$4 sm:$0xff] %v3715
    %s3735 = scalar_lea.vmem [#allocation1], 32
    %3736 = vst [vmem:[%s3735] ss:$4 sm:$0xff] %v3716
    %s3737 = scalar_lea.vmem [#allocation1], 33
    %3738 = vst [vmem:[%s3737] ss:$4 sm:$0xff] %v3717
    %s3739 = scalar_lea.vmem [#allocation1], 34
    %3740 = vst [vmem:[%s3739] ss:$4 sm:$0xff] %v3718
    %s3741 = scalar_lea.vmem [#allocation1], 35
    %3742 = vst [vmem:[%s3741] ss:$4 sm:$0xff] %v3719
    %v3743 = vld.sshfl [vmem:[#allocation1] sm:$0xff pattern:$0x73625140]
    %v3744 = vld.sshfl [vmem:[#allocation1 + $0x20] sm:$0xff pattern:$0x73625140]
    %v3747 = vpack.c.bf16 %v3744, %v3743
    %v3748 = vld [vmem:[#allocation17] sm:$0xf]
    %v3749 = vld [vmem:[#allocation17 + $0x4] sm:$0xf]
    %v3750 = vld [vmem:[#allocation17 + $0x8] sm:$0xf]
    %v3751 = vld [vmem:[#allocation17 + $0xc] sm:$0xf]
    %v3752 = vld [vmem:[#allocation17 + $0x10] sm:$0xf]
    %v3753 = vld [vmem:[#allocation17 + $0x14] sm:$0xf]
    %v3754 = vld [vmem:[#allocation17 + $0x18] sm:$0xf]
    %v3755 = vld [vmem:[#allocation17 + $0x1c] sm:$0xf]
    %v3756 = vld [vmem:[#allocation17 + $0x20] sm:$0xf]
    %v3757 = vld [vmem:[#allocation17 + $0x24] sm:$0xf]
    %v3758 = vld [vmem:[#allocation17 + $0x28] sm:$0xf]
    %v3759 = vld [vmem:[#allocation17 + $0x2c] sm:$0xf]
    %v3760 = vld [vmem:[#allocation17 + $0x30] sm:$0xf]
    %v3761 = vld [vmem:[#allocation17 + $0x34] sm:$0xf]
    %v3762 = vld [vmem:[#allocation17 + $0x38] sm:$0xf]
    %v3763 = vld [vmem:[#allocation17 + $0x3c] sm:$0xf]
    %v3780 = vunpack.c.l.b16 %v3748
    %v3781 = vunpack.c.l.b16 %v3749
    %v3782 = vunpack.c.l.b16 %v3750
    %v3783 = vunpack.c.l.b16 %v3751
    %v3784 = vunpack.c.l.b16 %v3752
    %v3785 = vunpack.c.l.b16 %v3753
    %v3786 = vunpack.c.l.b16 %v3754
    %v3787 = vunpack.c.l.b16 %v3755
    %v3788 = vunpack.c.l.b16 %v3756
    %v3789 = vunpack.c.l.b16 %v3757
    %v3790 = vunpack.c.l.b16 %v3758
    %v3791 = vunpack.c.l.b16 %v3759
    %v3792 = vunpack.c.l.b16 %v3760
    %v3793 = vunpack.c.l.b16 %v3761
    %v3794 = vunpack.c.l.b16 %v3762
    %v3795 = vunpack.c.l.b16 %v3763
    %v3796 = vpack.c.b16 %v3781, %v3780
    %v3797 = vpack.c.b16 %v3783, %v3782
    %v3798 = vpack.c.b16 %v3785, %v3784
    %v3799 = vpack.c.b16 %v3787, %v3786
    %v3800 = vpack.c.b16 %v3789, %v3788
    %v3801 = vpack.c.b16 %v3791, %v3790
    %v3802 = vpack.c.b16 %v3793, %v3792
    %v3803 = vpack.c.b16 %v3795, %v3794
    %3812 = vmatpush.bf16.msra.mxu0 %v3803
    %3813 = vmatpush.bf16.msra.mxu0 %v3802
    %3814 = vmatpush.bf16.msra.mxu0 %v3801
    %3815 = vmatpush.bf16.msra.mxu0 %v3800
    %3816 = vmatpush.bf16.msra.mxu0 %v3799
    %3817 = vmatpush.bf16.msra.mxu0 %v3798
    %3818 = vmatpush.bf16.msra.mxu0 %v3797
    %3819 = vmatpush.bf16.msra.mxu0 %v3796
    %3820 = vmatmul.bf16.gmra.mxu0 %v3747
    %v3821 = vpop.f32.mrf.mxu0
    %v3822 = vadd.f32 0.0, %v3821
    %v3823 = vpop.f32.mrf.mxu0
    %v3824 = vadd.f32 0.0, %v3823
    %3825 = vdwg.mxu0
    %v3828 = vrot.slane %v3822, 2
    %v3829 = vrot.slane %v3822, 4
    %v3830 = vrot.slane %v3822, 6
    %v3831 = vrot.slane %v3824, 2
    %v3832 = vrot.slane %v3824, 4
    %v3833 = vrot.slane %v3824, 6
    %v3840 = vadd.f32 %v302, %v3822
    %v3841 = vadd.f32 %v303, %v3828
    %v3842 = vadd.f32 %v304, %v3829
    %v3843 = vadd.f32 %v305, %v3830
    %v3844 = vadd.f32 %v306, %v3824
    %v3845 = vadd.f32 %v307, %v3831
    %v3846 = vadd.f32 %v308, %v3832
    %v3847 = vadd.f32 %v309, %v3833
    %v3848 = vld [vmem:[%s11] sm:$0x1]
    %v3850 = vperm.slane %v3848, 0
    %v3852 = vrot.slane %v3850, 2
    %v3853 = vrot.slane %v3850, 4
    %v3854 = vrot.slane %v3850, 6
    %v3858 = vadd.f32 %v3840, %v3850
    %v3859 = vadd.f32 %v3841, %v3852
    %v3860 = vadd.f32 %v3842, %v3853
    %v3861 = vadd.f32 %v3843, %v3854
    %v3862 = vadd.f32 %v3844, %v3850
    %v3863 = vadd.f32 %v3845, %v3852
    %v3864 = vadd.f32 %v3846, %v3853
    %v3865 = vadd.f32 %v3847, %v3854
    %3874 = vst [vmem:[#allocation1] ss:$4 sm:$0xff] %v3858
    %s3875 = scalar_lea.vmem [#allocation1], 1
    %3876 = vst [vmem:[%s3875] ss:$4 sm:$0xff] %v3859
    %s3877 = scalar_lea.vmem [#allocation1], 2
    %3878 = vst [vmem:[%s3877] ss:$4 sm:$0xff] %v3860
    %s3879 = scalar_lea.vmem [#allocation1], 3
    %3880 = vst [vmem:[%s3879] ss:$4 sm:$0xff] %v3861
    %s3881 = scalar_lea.vmem [#allocation1], 32
    %3882 = vst [vmem:[%s3881] ss:$4 sm:$0xff] %v3862
    %s3883 = scalar_lea.vmem [#allocation1], 33
    %3884 = vst [vmem:[%s3883] ss:$4 sm:$0xff] %v3863
    %s3885 = scalar_lea.vmem [#allocation1], 34
    %3886 = vst [vmem:[%s3885] ss:$4 sm:$0xff] %v3864
    %s3887 = scalar_lea.vmem [#allocation1], 35
    %3888 = vst [vmem:[%s3887] ss:$4 sm:$0xff] %v3865
    %v3889 = vld.sshfl [vmem:[#allocation1] sm:$0xff pattern:$0x73625140]
    %v3890 = vld.sshfl [vmem:[#allocation1 + $0x20] sm:$0xff pattern:$0x73625140]
    %3893 = vadd.xlane.f32.xlu0 %v3889
    %v3894 = vpop.xlane.xlu0 %3893
    %3895 = vadd.xlane.f32.xlu0 %v3890
    %v3896 = vpop.xlane.xlu0 %3895
    %v3897 = vmul.f32 %v3894, %v369
    %v3898 = vmul.f32 %v3896, %v369
    %v3902 = vunpack.c.l.s4 269488144
    %v3903 = vunpack.c.0.s8 %v3902
    %v3904 = vperm.slane %v3897, %v3903
    %v3906 = vunpack.c.l.s4 842150450
    %v3907 = vunpack.c.0.s8 %v3906
    %v3908 = vperm.slane %v3897, %v3907
    %v3910 = vunpack.c.l.s4 1414812756
    %v3911 = vunpack.c.0.s8 %v3910
    %v3912 = vperm.slane %v3897, %v3911
    %v3914 = vunpack.c.l.s4 1987475062
    %v3915 = vunpack.c.0.s8 %v3914
    %v3916 = vperm.slane %v3897, %v3915
    %v3918 = vunpack.c.l.s4 269488144
    %v3919 = vunpack.c.0.s8 %v3918
    %v3920 = vperm.slane %v3898, %v3919
    %v3922 = vunpack.c.l.s4 842150450
    %v3923 = vunpack.c.0.s8 %v3922
    %v3924 = vperm.slane %v3898, %v3923
    %v3926 = vunpack.c.l.s4 1414812756
    %v3927 = vunpack.c.0.s8 %v3926
    %v3928 = vperm.slane %v3898, %v3927
    %v3930 = vunpack.c.l.s4 1987475062
    %v3931 = vunpack.c.0.s8 %v3930
    %v3932 = vperm.slane %v3898, %v3931
    %v3941 = vsub.f32 %v3858, %v3904
    %v3942 = vsub.f32 %v3859, %v3908
    %v3943 = vsub.f32 %v3860, %v3912
    %v3944 = vsub.f32 %v3861, %v3916
    %v3945 = vsub.f32 %v3862, %v3920
    %v3946 = vsub.f32 %v3863, %v3924
    %v3947 = vsub.f32 %v3864, %v3928
    %v3948 = vsub.f32 %v3865, %v3932
    %v3949 = vmul.f32 %v3941, %v3941
    %v3950 = vmul.f32 %v3942, %v3942
    %v3951 = vmul.f32 %v3943, %v3943
    %v3952 = vmul.f32 %v3944, %v3944
    %v3953 = vmul.f32 %v3945, %v3945
    %v3954 = vmul.f32 %v3946, %v3946
    %v3955 = vmul.f32 %v3947, %v3947
    %v3956 = vmul.f32 %v3948, %v3948
    %3965 = vst [vmem:[#allocation1] ss:$4 sm:$0xff] %v3949
    %s3966 = scalar_lea.vmem [#allocation1], 1
    %3967 = vst [vmem:[%s3966] ss:$4 sm:$0xff] %v3950
    %s3968 = scalar_lea.vmem [#allocation1], 2
    %3969 = vst [vmem:[%s3968] ss:$4 sm:$0xff] %v3951
    %s3970 = scalar_lea.vmem [#allocation1], 3
    %3971 = vst [vmem:[%s3970] ss:$4 sm:$0xff] %v3952
    %s3972 = scalar_lea.vmem [#allocation1], 32
    %3973 = vst [vmem:[%s3972] ss:$4 sm:$0xff] %v3953
    %s3974 = scalar_lea.vmem [#allocation1], 33
    %3975 = vst [vmem:[%s3974] ss:$4 sm:$0xff] %v3954
    %s3976 = scalar_lea.vmem [#allocation1], 34
    %3977 = vst [vmem:[%s3976] ss:$4 sm:$0xff] %v3955
    %s3978 = scalar_lea.vmem [#allocation1], 35
    %3979 = vst [vmem:[%s3978] ss:$4 sm:$0xff] %v3956
    %v3980 = vld.sshfl [vmem:[#allocation1] sm:$0xff pattern:$0x73625140]
    %v3981 = vld.sshfl [vmem:[#allocation1 + $0x20] sm:$0xff pattern:$0x73625140]
    %3984 = vadd.xlane.f32.xlu0 %v3980
    %v3985 = vpop.xlane.xlu0 %3984
    %3986 = vadd.xlane.f32.xlu0 %v3981
    %v3987 = vpop.xlane.xlu0 %3986
    %v3988 = vmul.f32 %v3985, %v369
    %v3989 = vmul.f32 %v3987, %v369
    %v3990 = vadd.f32 %v3988, 1e-05
    %v3991 = vadd.f32 %v3989, 1e-05
    %v3992 = vrsqrt.pop %v3990
    %v3993 = vmul.f32 %v3992, %v3990
    %v3994 = vmul.f32 %v3993, %v3992
    %v3995 = vmul.f32 0.5, %v3994
    %v3996 = vsub.f32 1.5, %v3995
    %v3997 = vmul.f32 %v3992, %v3996
    %vm3998 = vweird.f32 %v3990
    %vm3999 = vweird.f32 %v3992
    %vm4000 = vmor %vm3998, %vm3999
    %v4001 = vsel %vm4000, %v3992, %v3997
    %v4002 = vrsqrt.pop %v3991
    %v4003 = vmul.f32 %v4002, %v3991
    %v4004 = vmul.f32 %v4003, %v4002
    %v4005 = vmul.f32 0.5, %v4004
    %v4006 = vsub.f32 1.5, %v4005
    %v4007 = vmul.f32 %v4002, %v4006
    %vm4008 = vweird.f32 %v3991
    %vm4009 = vweird.f32 %v4002
    %vm4010 = vmor %vm4008, %vm4009
    %v4011 = vsel %vm4010, %v4002, %v4007
    %v4015 = vunpack.c.l.s4 269488144
    %v4016 = vunpack.c.0.s8 %v4015
    %v4017 = vperm.slane %v4001, %v4016
    %v4019 = vunpack.c.l.s4 842150450
    %v4020 = vunpack.c.0.s8 %v4019
    %v4021 = vperm.slane %v4001, %v4020
    %v4023 = vunpack.c.l.s4 1414812756
    %v4024 = vunpack.c.0.s8 %v4023
    %v4025 = vperm.slane %v4001, %v4024
    %v4027 = vunpack.c.l.s4 1987475062
    %v4028 = vunpack.c.0.s8 %v4027
    %v4029 = vperm.slane %v4001, %v4028
    %v4031 = vunpack.c.l.s4 269488144
    %v4032 = vunpack.c.0.s8 %v4031
    %v4033 = vperm.slane %v4011, %v4032
    %v4035 = vunpack.c.l.s4 842150450
    %v4036 = vunpack.c.0.s8 %v4035
    %v4037 = vperm.slane %v4011, %v4036
    %v4039 = vunpack.c.l.s4 1414812756
    %v4040 = vunpack.c.0.s8 %v4039
    %v4041 = vperm.slane %v4011, %v4040
    %v4043 = vunpack.c.l.s4 1987475062
    %v4044 = vunpack.c.0.s8 %v4043
    %v4045 = vperm.slane %v4011, %v4044
    %v4054 = vmul.f32 %v3941, %v4017
    %v4055 = vmul.f32 %v3942, %v4021
    %v4056 = vmul.f32 %v3943, %v4025
    %v4057 = vmul.f32 %v3944, %v4029
    %v4058 = vmul.f32 %v3945, %v4033
    %v4059 = vmul.f32 %v3946, %v4037
    %v4060 = vmul.f32 %v3947, %v4041
    %v4061 = vmul.f32 %v3948, %v4045
    %v4063 = vperm.slane %v330, 0
    %v4065 = vrot.slane %v4063, 2
    %v4066 = vrot.slane %v4063, 4
    %v4067 = vrot.slane %v4063, 6
    %v4071 = vmul.f32 %v4054, %v4063
    %v4072 = vmul.f32 %v4055, %v4065
    %v4073 = vmul.f32 %v4056, %v4066
    %v4074 = vmul.f32 %v4057, %v4067
    %v4075 = vmul.f32 %v4058, %v4063
    %v4076 = vmul.f32 %v4059, %v4065
    %v4077 = vmul.f32 %v4060, %v4066
    %v4078 = vmul.f32 %v4061, %v4067
    %v4080 = vperm.slane %v331, 0
    %v4082 = vrot.slane %v4080, 2
    %v4083 = vrot.slane %v4080, 4
    %v4084 = vrot.slane %v4080, 6
    %v4088 = vadd.f32 %v4071, %v4080
    %v4089 = vadd.f32 %v4072, %v4082
    %v4090 = vadd.f32 %v4073, %v4083
    %v4091 = vadd.f32 %v4074, %v4084
    %v4092 = vadd.f32 %v4075, %v4080
    %v4093 = vadd.f32 %v4076, %v4082
    %v4094 = vadd.f32 %v4077, %v4083
    %v4095 = vadd.f32 %v4078, %v4084
    %4104 = vst [vmem:[#allocation1] ss:$4 sm:$0xff] %v4088
    %s4105 = scalar_lea.vmem [#allocation1], 1
    %4106 = vst [vmem:[%s4105] ss:$4 sm:$0xff] %v4089
    %s4107 = scalar_lea.vmem [#allocation1], 2
    %4108 = vst [vmem:[%s4107] ss:$4 sm:$0xff] %v4090
    %s4109 = scalar_lea.vmem [#allocation1], 3
    %4110 = vst [vmem:[%s4109] ss:$4 sm:$0xff] %v4091
    %s4111 = scalar_lea.vmem [#allocation1], 32
    %4112 = vst [vmem:[%s4111] ss:$4 sm:$0xff] %v4092
    %s4113 = scalar_lea.vmem [#allocation1], 33
    %4114 = vst [vmem:[%s4113] ss:$4 sm:$0xff] %v4093
    %s4115 = scalar_lea.vmem [#allocation1], 34
    %4116 = vst [vmem:[%s4115] ss:$4 sm:$0xff] %v4094
    %s4117 = scalar_lea.vmem [#allocation1], 35
    %4118 = vst [vmem:[%s4117] ss:$4 sm:$0xff] %v4095
    %v4119 = vld.sshfl [vmem:[#allocation1] sm:$0xff pattern:$0x73625140]
    %v4120 = vld.sshfl [vmem:[#allocation1 + $0x20] sm:$0xff pattern:$0x73625140]
    %v4123 = vpack.c.bf16 %v4120, %v4119
    %v4124 = vld [vmem:[#allocation19] sm:$0xf]
    %v4125 = vld [vmem:[#allocation19 + $0x4] sm:$0xf]
    %v4126 = vld [vmem:[#allocation19 + $0x8] sm:$0xf]
    %v4127 = vld [vmem:[#allocation19 + $0xc] sm:$0xf]
    %v4128 = vld [vmem:[#allocation19 + $0x10] sm:$0xf]
    %v4129 = vld [vmem:[#allocation19 + $0x14] sm:$0xf]
    %v4130 = vld [vmem:[#allocation19 + $0x18] sm:$0xf]
    %v4131 = vld [vmem:[#allocation19 + $0x1c] sm:$0xf]
    %v4132 = vld [vmem:[#allocation19 + $0x20] sm:$0xf]
    %v4133 = vld [vmem:[#allocation19 + $0x24] sm:$0xf]
    %v4134 = vld [vmem:[#allocation19 + $0x28] sm:$0xf]
    %v4135 = vld [vmem:[#allocation19 + $0x2c] sm:$0xf]
    %v4136 = vld [vmem:[#allocation19 + $0x30] sm:$0xf]
    %v4137 = vld [vmem:[#allocation19 + $0x34] sm:$0xf]
    %v4138 = vld [vmem:[#allocation19 + $0x38] sm:$0xf]
    %v4139 = vld [vmem:[#allocation19 + $0x3c] sm:$0xf]
    %v4140 = vld [vmem:[%s15] sm:$0x1]
    %v4142 = vperm.slane %v4140, 0
    %v4160 = vunpack.c.l.b16 %v4124
    %v4161 = vunpack.c.l.b16 %v4125
    %v4162 = vunpack.c.l.b16 %v4126
    %v4163 = vunpack.c.l.b16 %v4127
    %v4164 = vunpack.c.l.b16 %v4128
    %v4165 = vunpack.c.l.b16 %v4129
    %v4166 = vunpack.c.l.b16 %v4130
    %v4167 = vunpack.c.l.b16 %v4131
    %v4168 = vunpack.c.l.b16 %v4132
    %v4169 = vunpack.c.l.b16 %v4133
    %v4170 = vunpack.c.l.b16 %v4134
    %v4171 = vunpack.c.l.b16 %v4135
    %v4172 = vunpack.c.l.b16 %v4136
    %v4173 = vunpack.c.l.b16 %v4137
    %v4174 = vunpack.c.l.b16 %v4138
    %v4175 = vunpack.c.l.b16 %v4139
    %v4176 = vpack.c.b16 %v4161, %v4160
    %v4177 = vpack.c.b16 %v4163, %v4162
    %v4178 = vpack.c.b16 %v4165, %v4164
    %v4179 = vpack.c.b16 %v4167, %v4166
    %v4180 = vpack.c.b16 %v4169, %v4168
    %v4181 = vpack.c.b16 %v4171, %v4170
    %v4182 = vpack.c.b16 %v4173, %v4172
    %v4183 = vpack.c.b16 %v4175, %v4174
    %4192 = vmatpush.bf16.msra.mxu0 %v4183
    %4193 = vmatpush.bf16.msra.mxu0 %v4182
    %4194 = vmatpush.bf16.msra.mxu0 %v4181
    %4195 = vmatpush.bf16.msra.mxu0 %v4180
    %4196 = vmatpush.bf16.msra.mxu0 %v4179
    %4197 = vmatpush.bf16.msra.mxu0 %v4178
    %4198 = vmatpush.bf16.msra.mxu0 %v4177
    %4199 = vmatpush.bf16.msra.mxu0 %v4176
    %4200 = vmatmul.bf16.gmra.mxu0 %v4123
    %v4201 = vpop.f32.mrf.mxu0
    %v4202 = vadd.f32 %v4142, %v4201
    %v4203 = vpop.f32.mrf.mxu0
    %v4204 = vadd.f32 %v4142, %v4203
    %4205 = vdwg.mxu0
    %4222 = vst [vmem:[#allocation1] ss:$4 sm:$0xff] %v310
    %s4223 = scalar_lea.vmem [#allocation1], 1
    %4224 = vst [vmem:[%s4223] ss:$4 sm:$0xff] %v311
    %s4225 = scalar_lea.vmem [#allocation1], 2
    %4226 = vst [vmem:[%s4225] ss:$4 sm:$0xff] %v312
    %s4227 = scalar_lea.vmem [#allocation1], 3
    %4228 = vst [vmem:[%s4227] ss:$4 sm:$0xff] %v313
    %s4229 = scalar_lea.vmem [#allocation1], 32
    %4230 = vst [vmem:[%s4229] ss:$4 sm:$0xff] %v314
    %s4231 = scalar_lea.vmem [#allocation1], 33
    %4232 = vst [vmem:[%s4231] ss:$4 sm:$0xff] %v315
    %s4233 = scalar_lea.vmem [#allocation1], 34
    %4234 = vst [vmem:[%s4233] ss:$4 sm:$0xff] %v316
    %s4235 = scalar_lea.vmem [#allocation1], 35
    %4236 = vst [vmem:[%s4235] ss:$4 sm:$0xff] %v317
    %v4237 = vld.sshfl [vmem:[#allocation1] sm:$0xff pattern:$0x73625140]
    %v4238 = vld.sshfl [vmem:[#allocation1 + $0x20] sm:$0xff pattern:$0x73625140]
    %4239 = vst [vmem:[#allocation1] ss:$4 sm:$0xff] %v318
    %4240 = vst [vmem:[%s4223] ss:$4 sm:$0xff] %v319
    %4241 = vst [vmem:[%s4225] ss:$4 sm:$0xff] %v320
    %4242 = vst [vmem:[%s4227] ss:$4 sm:$0xff] %v321
    %4243 = vst [vmem:[%s4229] ss:$4 sm:$0xff] %v322
    %4244 = vst [vmem:[%s4231] ss:$4 sm:$0xff] %v323
    %4245 = vst [vmem:[%s4233] ss:$4 sm:$0xff] %v324
    %4246 = vst [vmem:[%s4235] ss:$4 sm:$0xff] %v325
    %v4247 = vld.sshfl [vmem:[#allocation1] sm:$0xff pattern:$0x73625140]
    %v4248 = vld.sshfl [vmem:[#allocation1 + $0x20] sm:$0xff pattern:$0x73625140]
    %v4253 = vpack.c.bf16 %v4238, %v4237
    %v4254 = vpack.c.bf16 %v4248, %v4247
    %v4255 = vld [vmem:[#allocation20] sm:$0xff]
    %v4256 = vld [vmem:[#allocation20 + $0x8] sm:$0xff]
    %v4257 = vld [vmem:[#allocation20 + $0x10] sm:$0xff]
    %v4258 = vld [vmem:[#allocation20 + $0x18] sm:$0xff]
    %v4259 = vld [vmem:[#allocation20 + $0x20] sm:$0xff]
    %v4260 = vld [vmem:[#allocation20 + $0x28] sm:$0xff]
    %v4261 = vld [vmem:[#allocation20 + $0x30] sm:$0xff]
    %v4262 = vld [vmem:[#allocation20 + $0x38] sm:$0xff]
    %v4263 = vld [vmem:[#allocation20 + $0x40] sm:$0xff]
    %v4264 = vld [vmem:[#allocation20 + $0x48] sm:$0xff]
    %v4265 = vld [vmem:[#allocation20 + $0x50] sm:$0xff]
    %v4266 = vld [vmem:[#allocation20 + $0x58] sm:$0xff]
    %v4267 = vld [vmem:[#allocation20 + $0x60] sm:$0xff]
    %v4268 = vld [vmem:[#allocation20 + $0x68] sm:$0xff]
    %v4269 = vld [vmem:[#allocation20 + $0x70] sm:$0xff]
    %v4270 = vld [vmem:[#allocation20 + $0x78] sm:$0xff]
    %v4271 = vld [vmem:[%s17] sm:$0x3]
    %v4273 = vperm.slane %v4271, 0
    %v4274 = vperm.slane %v4271, 1
    %v4293 = vunpack.c.l.b16 %v4255
    %v4294 = vunpack.c.h.b16 %v4255
    %v4295 = vunpack.c.l.b16 %v4256
    %v4296 = vunpack.c.h.b16 %v4256
    %v4297 = vunpack.c.l.b16 %v4257
    %v4298 = vunpack.c.h.b16 %v4257
    %v4299 = vunpack.c.l.b16 %v4258
    %v4300 = vunpack.c.h.b16 %v4258
    %v4301 = vunpack.c.l.b16 %v4259
    %v4302 = vunpack.c.h.b16 %v4259
    %v4303 = vunpack.c.l.b16 %v4260
    %v4304 = vunpack.c.h.b16 %v4260
    %v4305 = vunpack.c.l.b16 %v4261
    %v4306 = vunpack.c.h.b16 %v4261
    %v4307 = vunpack.c.l.b16 %v4262
    %v4308 = vunpack.c.h.b16 %v4262
    %v4309 = vunpack.c.l.b16 %v4263
    %v4310 = vunpack.c.h.b16 %v4263
    %v4311 = vunpack.c.l.b16 %v4264
    %v4312 = vunpack.c.h.b16 %v4264
    %v4313 = vunpack.c.l.b16 %v4265
    %v4314 = vunpack.c.h.b16 %v4265
    %v4315 = vunpack.c.l.b16 %v4266
    %v4316 = vunpack.c.h.b16 %v4266
    %v4317 = vunpack.c.l.b16 %v4267
    %v4318 = vunpack.c.h.b16 %v4267
    %v4319 = vunpack.c.l.b16 %v4268
    %v4320 = vunpack.c.h.b16 %v4268
    %v4321 = vunpack.c.l.b16 %v4269
    %v4322 = vunpack.c.h.b16 %v4269
    %v4323 = vunpack.c.l.b16 %v4270
    %v4324 = vunpack.c.h.b16 %v4270
    %v4325 = vpack.c.b16 %v4295, %v4293
    %v4326 = vpack.c.b16 %v4296, %v4294
    %v4327 = vpack.c.b16 %v4299, %v4297
    %v4328 = vpack.c.b16 %v4300, %v4298
    %v4329 = vpack.c.b16 %v4303, %v4301
    %v4330 = vpack.c.b16 %v4304, %v4302
    %v4331 = vpack.c.b16 %v4307, %v4305
    %v4332 = vpack.c.b16 %v4308, %v4306
    %v4333 = vpack.c.b16 %v4311, %v4309
    %v4334 = vpack.c.b16 %v4312, %v4310
    %v4335 = vpack.c.b16 %v4315, %v4313
    %v4336 = vpack.c.b16 %v4316, %v4314
    %v4337 = vpack.c.b16 %v4319, %v4317
    %v4338 = vpack.c.b16 %v4320, %v4318
    %v4339 = vpack.c.b16 %v4323, %v4321
    %v4340 = vpack.c.b16 %v4324, %v4322
    %4357 = vmatpush.bf16.msra.mxu0 %v4339
    %4358 = vmatpush.bf16.msra.mxu0 %v4337
    %4359 = vmatpush.bf16.msra.mxu0 %v4335
    %4360 = vmatpush.bf16.msra.mxu0 %v4333
    %4361 = vmatpush.bf16.msra.mxu0 %v4331
    %4362 = vmatpush.bf16.msra.mxu0 %v4329
    %4363 = vmatpush.bf16.msra.mxu0 %v4327
    %4364 = vmatpush.bf16.msra.mxu0 %v4325
    %4365 = vmatmul.bf16.gmra.mxu0 %v4253
    %v4366 = vpop.f32.mrf.mxu0
    %v4367 = vadd.f32 %v4273, %v4366
    %v4368 = vpop.f32.mrf.mxu0
    %v4369 = vadd.f32 %v4273, %v4368
    %4370 = vmatmul.bf16.gmra.mxu0 %v4254
    %v4371 = vpop.f32.mrf.mxu0
    %v4372 = vadd.f32 %v4273, %v4371
    %v4373 = vpop.f32.mrf.mxu0
    %v4374 = vadd.f32 %v4273, %v4373
    %4375 = vdwg.mxu0
    %4376 = vmatpush.bf16.msra.mxu0 %v4340
    %4377 = vmatpush.bf16.msra.mxu0 %v4338
    %4378 = vmatpush.bf16.msra.mxu0 %v4336
    %4379 = vmatpush.bf16.msra.mxu0 %v4334
    %4380 = vmatpush.bf16.msra.mxu0 %v4332
    %4381 = vmatpush.bf16.msra.mxu0 %v4330
    %4382 = vmatpush.bf16.msra.mxu0 %v4328
    %4383 = vmatpush.bf16.msra.mxu0 %v4326
    %4384 = vmatmul.bf16.gmra.mxu0 %v4253
    %v4385 = vpop.f32.mrf.mxu0
    %v4386 = vadd.f32 %v4274, %v4385
    %v4387 = vpop.f32.mrf.mxu0
    %v4388 = vadd.f32 %v4274, %v4387
    %4389 = vmatmul.bf16.gmra.mxu0 %v4254
    %v4390 = vpop.f32.mrf.mxu0
    %v4391 = vadd.f32 %v4274, %v4390
    %v4392 = vpop.f32.mrf.mxu0
    %v4393 = vadd.f32 %v4274, %v4392
    %4394 = vdwg.mxu0
    %v4397 = vrot.slane %v4202, 2
    %v4398 = vrot.slane %v4202, 4
    %v4399 = vrot.slane %v4202, 6
    %v4400 = vrot.slane %v4204, 2
    %v4401 = vrot.slane %v4204, 4
    %v4402 = vrot.slane %v4204, 6
    %v4413 = vrot.slane %v4367, 2
    %v4414 = vrot.slane %v4367, 4
    %v4415 = vrot.slane %v4367, 6
    %v4416 = vrot.slane %v4369, 2
    %v4417 = vrot.slane %v4369, 4
    %v4418 = vrot.slane %v4369, 6
    %v4419 = vrot.slane %v4372, 2
    %v4420 = vrot.slane %v4372, 4
    %v4421 = vrot.slane %v4372, 6
    %v4422 = vrot.slane %v4374, 2
    %v4423 = vrot.slane %v4374, 4
    %v4424 = vrot.slane %v4374, 6
    %v4441 = vrot.slane %v4386, 2
    %v4442 = vrot.slane %v4386, 4
    %v4443 = vrot.slane %v4386, 6
    %v4444 = vrot.slane %v4388, 2
    %v4445 = vrot.slane %v4388, 4
    %v4446 = vrot.slane %v4388, 6
    %v4447 = vrot.slane %v4391, 2
    %v4448 = vrot.slane %v4391, 4
    %v4449 = vrot.slane %v4391, 6
    %v4450 = vrot.slane %v4393, 2
    %v4451 = vrot.slane %v4393, 4
    %v4452 = vrot.slane %v4393, 6
    %4465 = vrot.lane.b32.xlu0 %v4202, 96
    %v4466 = vpop.permute.xlu0 %4465
    %4467 = vrot.lane.b32.xlu0 %v4397, 96
    %v4468 = vpop.permute.xlu0 %4467
    %4469 = vrot.lane.b32.xlu0 %v4398, 96
    %v4470 = vpop.permute.xlu0 %4469
    %4471 = vrot.lane.b32.xlu0 %v4399, 96
    %v4472 = vpop.permute.xlu0 %4471
    %4473 = vrot.lane.b32.xlu0 %v4204, 96
    %v4474 = vpop.permute.xlu0 %4473
    %4475 = vrot.lane.b32.xlu0 %v4400, 96
    %v4476 = vpop.permute.xlu0 %4475
    %4477 = vrot.lane.b32.xlu0 %v4401, 96
    %v4478 = vpop.permute.xlu0 %4477
    %4479 = vrot.lane.b32.xlu0 %v4402, 96
    %v4480 = vpop.permute.xlu0 %4479
    %4489 = vrot.lane.b32.xlu0 %v4202, 64
    %v4490 = vpop.permute.xlu0 %4489
    %4491 = vrot.lane.b32.xlu0 %v4397, 64
    %v4492 = vpop.permute.xlu0 %4491
    %4493 = vrot.lane.b32.xlu0 %v4398, 64
    %v4494 = vpop.permute.xlu0 %4493
    %4495 = vrot.lane.b32.xlu0 %v4399, 64
    %v4496 = vpop.permute.xlu0 %4495
    %4497 = vrot.lane.b32.xlu0 %v4204, 64
    %v4498 = vpop.permute.xlu0 %4497
    %4499 = vrot.lane.b32.xlu0 %v4400, 64
    %v4500 = vpop.permute.xlu0 %4499
    %4501 = vrot.lane.b32.xlu0 %v4401, 64
    %v4502 = vpop.permute.xlu0 %4501
    %4503 = vrot.lane.b32.xlu0 %v4402, 64
    %v4504 = vpop.permute.xlu0 %4503
    %4513 = vrot.lane.b32.xlu0 %v4202, 32
    %v4514 = vpop.permute.xlu0 %4513
    %4515 = vrot.lane.b32.xlu0 %v4397, 32
    %v4516 = vpop.permute.xlu0 %4515
    %4517 = vrot.lane.b32.xlu0 %v4398, 32
    %v4518 = vpop.permute.xlu0 %4517
    %4519 = vrot.lane.b32.xlu0 %v4399, 32
    %v4520 = vpop.permute.xlu0 %4519
    %4521 = vrot.lane.b32.xlu0 %v4204, 32
    %v4522 = vpop.permute.xlu0 %4521
    %4523 = vrot.lane.b32.xlu0 %v4400, 32
    %v4524 = vpop.permute.xlu0 %4523
    %4525 = vrot.lane.b32.xlu0 %v4401, 32
    %v4526 = vpop.permute.xlu0 %4525
    %4527 = vrot.lane.b32.xlu0 %v4402, 32
    %v4528 = vpop.permute.xlu0 %4527
    %v4537 = vrot.slane %v4466, 4
    %v4538 = vsel %vm944, %v4537, %v4202
    %v4540 = vunpack.c.l.s4 1934713408
    %v4541 = vunpack.c.0.s8 %v4540
    %v4542 = vperm.slane %v4538, %v4541
    %v4543 = vrot.slane %v4514, 4
    %v4544 = vsel %vm944, %v4543, %v4490
    %v4546 = vunpack.c.l.s4 1934713408
    %v4547 = vunpack.c.0.s8 %v4546
    %v4548 = vperm.slane %v4544, %v4547
    %v4549 = vrot.slane %v4468, 4
    %v4550 = vsel %vm944, %v4549, %v4397
    %v4552 = vunpack.c.l.s4 1934713408
    %v4553 = vunpack.c.0.s8 %v4552
    %v4554 = vperm.slane %v4550, %v4553
    %v4555 = vrot.slane %v4516, 4
    %v4556 = vsel %vm944, %v4555, %v4492
    %v4558 = vunpack.c.l.s4 1934713408
    %v4559 = vunpack.c.0.s8 %v4558
    %v4560 = vperm.slane %v4556, %v4559
    %v4561 = vrot.slane %v4470, 4
    %v4562 = vsel %vm944, %v4561, %v4398
    %v4564 = vunpack.c.l.s4 1934713408
    %v4565 = vunpack.c.0.s8 %v4564
    %v4566 = vperm.slane %v4562, %v4565
    %v4567 = vrot.slane %v4518, 4
    %v4568 = vsel %vm944, %v4567, %v4494
    %v4570 = vunpack.c.l.s4 1934713408
    %v4571 = vunpack.c.0.s8 %v4570
    %v4572 = vperm.slane %v4568, %v4571
    %v4573 = vrot.slane %v4472, 4
    %v4574 = vsel %vm944, %v4573, %v4399
    %v4576 = vunpack.c.l.s4 1934713408
    %v4577 = vunpack.c.0.s8 %v4576
    %v4578 = vperm.slane %v4574, %v4577
    %v4579 = vrot.slane %v4520, 4
    %v4580 = vsel %vm944, %v4579, %v4496
    %v4582 = vunpack.c.l.s4 1934713408
    %v4583 = vunpack.c.0.s8 %v4582
    %v4584 = vperm.slane %v4580, %v4583
    %v4585 = vrot.slane %v4474, 4
    %v4586 = vsel %vm944, %v4585, %v4204
    %v4588 = vunpack.c.l.s4 1934713408
    %v4589 = vunpack.c.0.s8 %v4588
    %v4590 = vperm.slane %v4586, %v4589
    %v4591 = vrot.slane %v4522, 4
    %v4592 = vsel %vm944, %v4591, %v4498
    %v4594 = vunpack.c.l.s4 1934713408
    %v4595 = vunpack.c.0.s8 %v4594
    %v4596 = vperm.slane %v4592, %v4595
    %v4597 = vrot.slane %v4476, 4
    %v4598 = vsel %vm944, %v4597, %v4400
    %v4600 = vunpack.c.l.s4 1934713408
    %v4601 = vunpack.c.0.s8 %v4600
    %v4602 = vperm.slane %v4598, %v4601
    %v4603 = vrot.slane %v4524, 4
    %v4604 = vsel %vm944, %v4603, %v4500
    %v4606 = vunpack.c.l.s4 1934713408
    %v4607 = vunpack.c.0.s8 %v4606
    %v4608 = vperm.slane %v4604, %v4607
    %v4609 = vrot.slane %v4478, 4
    %v4610 = vsel %vm944, %v4609, %v4401
    %v4612 = vunpack.c.l.s4 1934713408
    %v4613 = vunpack.c.0.s8 %v4612
    %v4614 = vperm.slane %v4610, %v4613
    %v4615 = vrot.slane %v4526, 4
    %v4616 = vsel %vm944, %v4615, %v4502
    %v4618 = vunpack.c.l.s4 1934713408
    %v4619 = vunpack.c.0.s8 %v4618
    %v4620 = vperm.slane %v4616, %v4619
    %v4621 = vrot.slane %v4480, 4
    %v4622 = vsel %vm944, %v4621, %v4402
    %v4624 = vunpack.c.l.s4 1934713408
    %v4625 = vunpack.c.0.s8 %v4624
    %v4626 = vperm.slane %v4622, %v4625
    %v4627 = vrot.slane %v4528, 4
    %v4628 = vsel %vm944, %v4627, %v4504
    %v4630 = vunpack.c.l.s4 1934713408
    %v4631 = vunpack.c.0.s8 %v4630
    %v4632 = vperm.slane %v4628, %v4631
    %v4633 = vrot.slane %v4554, 4
    %v4634 = vsel %vm944, %v4633, %v4542
    %v4636 = vunpack.c.l.s4 1934713408
    %v4637 = vunpack.c.0.s8 %v4636
    %v4638 = vperm.slane %v4634, %v4637
    %v4639 = vrot.slane %v4638, 4
    %v4640 = vsel %vm944, 0.0, %v4639
    %v4641 = vrot.slane %v4578, 4
    %v4642 = vsel %vm944, %v4641, %v4566
    %v4644 = vunpack.c.l.s4 1934713408
    %v4645 = vunpack.c.0.s8 %v4644
    %v4646 = vperm.slane %v4642, %v4645
    %v4647 = vrot.slane %v4646, 4
    %v4648 = vsel %vm944, 0.0, %v4647
    %v4649 = vrot.slane %v4602, 4
    %v4650 = vsel %vm944, %v4649, %v4590
    %v4652 = vunpack.c.l.s4 1934713408
    %v4653 = vunpack.c.0.s8 %v4652
    %v4654 = vperm.slane %v4650, %v4653
    %v4655 = vrot.slane %v4654, 4
    %v4656 = vsel %vm944, 0.0, %v4655
    %v4657 = vrot.slane %v4626, 4
    %v4658 = vsel %vm944, %v4657, %v4614
    %v4660 = vunpack.c.l.s4 1934713408
    %v4661 = vunpack.c.0.s8 %v4660
    %v4662 = vperm.slane %v4658, %v4661
    %v4663 = vrot.slane %v4662, 4
    %v4664 = vsel %vm944, 0.0, %v4663
    %v4665 = vrot.slane %v4560, 4
    %v4666 = vsel %vm944, %v4665, %v4548
    %v4668 = vunpack.c.l.s4 1934713408
    %v4669 = vunpack.c.0.s8 %v4668
    %v4670 = vperm.slane %v4666, %v4669
    %v4671 = vrot.slane %v4670, 4
    %v4672 = vsel %vm944, 0.0, %v4671
    %v4673 = vrot.slane %v4584, 4
    %v4674 = vsel %vm944, %v4673, %v4572
    %v4676 = vunpack.c.l.s4 1934713408
    %v4677 = vunpack.c.0.s8 %v4676
    %v4678 = vperm.slane %v4674, %v4677
    %v4679 = vrot.slane %v4678, 4
    %v4680 = vsel %vm944, 0.0, %v4679
    %v4681 = vrot.slane %v4608, 4
    %v4682 = vsel %vm944, %v4681, %v4596
    %v4684 = vunpack.c.l.s4 1934713408
    %v4685 = vunpack.c.0.s8 %v4684
    %v4686 = vperm.slane %v4682, %v4685
    %v4687 = vrot.slane %v4686, 4
    %v4688 = vsel %vm944, 0.0, %v4687
    %v4689 = vrot.slane %v4632, 4
    %v4690 = vsel %vm944, %v4689, %v4620
    %v4692 = vunpack.c.l.s4 1934713408
    %v4693 = vunpack.c.0.s8 %v4692
    %v4694 = vperm.slane %v4690, %v4693
    %v4695 = vrot.slane %v4694, 4
    %v4696 = vsel %vm944, 0.0, %v4695
    %4697 = vrot.lane.b32.xlu0 %v4367, 96
    %v4698 = vpop.permute.xlu0 %4697
    %4699 = vrot.lane.b32.xlu0 %v4413, 96
    %v4700 = vpop.permute.xlu0 %4699
    %4701 = vrot.lane.b32.xlu0 %v4414, 96
    %v4702 = vpop.permute.xlu0 %4701
    %4703 = vrot.lane.b32.xlu0 %v4415, 96
    %v4704 = vpop.permute.xlu0 %4703
    %4705 = vrot.lane.b32.xlu0 %v4369, 96
    %v4706 = vpop.permute.xlu0 %4705
    %4707 = vrot.lane.b32.xlu0 %v4416, 96
    %v4708 = vpop.permute.xlu0 %4707
    %4709 = vrot.lane.b32.xlu0 %v4417, 96
    %v4710 = vpop.permute.xlu0 %4709
    %4711 = vrot.lane.b32.xlu0 %v4418, 96
    %v4712 = vpop.permute.xlu0 %4711
    %4713 = vrot.lane.b32.xlu0 %v4372, 96
    %v4714 = vpop.permute.xlu0 %4713
    %4715 = vrot.lane.b32.xlu0 %v4419, 96
    %v4716 = vpop.permute.xlu0 %4715
    %4717 = vrot.lane.b32.xlu0 %v4420, 96
    %v4718 = vpop.permute.xlu0 %4717
    %4719 = vrot.lane.b32.xlu0 %v4421, 96
    %v4720 = vpop.permute.xlu0 %4719
    %4721 = vrot.lane.b32.xlu0 %v4374, 96
    %v4722 = vpop.permute.xlu0 %4721
    %4723 = vrot.lane.b32.xlu0 %v4422, 96
    %v4724 = vpop.permute.xlu0 %4723
    %4725 = vrot.lane.b32.xlu0 %v4423, 96
    %v4726 = vpop.permute.xlu0 %4725
    %4727 = vrot.lane.b32.xlu0 %v4424, 96
    %v4728 = vpop.permute.xlu0 %4727
    %4745 = vrot.lane.b32.xlu0 %v4367, 64
    %v4746 = vpop.permute.xlu0 %4745
    %4747 = vrot.lane.b32.xlu0 %v4413, 64
    %v4748 = vpop.permute.xlu0 %4747
    %4749 = vrot.lane.b32.xlu0 %v4414, 64
    %v4750 = vpop.permute.xlu0 %4749
    %4751 = vrot.lane.b32.xlu0 %v4415, 64
    %v4752 = vpop.permute.xlu0 %4751
    %4753 = vrot.lane.b32.xlu0 %v4369, 64
    %v4754 = vpop.permute.xlu0 %4753
    %4755 = vrot.lane.b32.xlu0 %v4416, 64
    %v4756 = vpop.permute.xlu0 %4755
    %4757 = vrot.lane.b32.xlu0 %v4417, 64
    %v4758 = vpop.permute.xlu0 %4757
    %4759 = vrot.lane.b32.xlu0 %v4418, 64
    %v4760 = vpop.permute.xlu0 %4759
    %4761 = vrot.lane.b32.xlu0 %v4372, 64
    %v4762 = vpop.permute.xlu0 %4761
    %4763 = vrot.lane.b32.xlu0 %v4419, 64
    %v4764 = vpop.permute.xlu0 %4763
    %4765 = vrot.lane.b32.xlu0 %v4420, 64
    %v4766 = vpop.permute.xlu0 %4765
    %4767 = vrot.lane.b32.xlu0 %v4421, 64
    %v4768 = vpop.permute.xlu0 %4767
    %4769 = vrot.lane.b32.xlu0 %v4374, 64
    %v4770 = vpop.permute.xlu0 %4769
    %4771 = vrot.lane.b32.xlu0 %v4422, 64
    %v4772 = vpop.permute.xlu0 %4771
    %4773 = vrot.lane.b32.xlu0 %v4423, 64
    %v4774 = vpop.permute.xlu0 %4773
    %4775 = vrot.lane.b32.xlu0 %v4424, 64
    %v4776 = vpop.permute.xlu0 %4775
    %4793 = vrot.lane.b32.xlu0 %v4367, 32
    %v4794 = vpop.permute.xlu0 %4793
    %4795 = vrot.lane.b32.xlu0 %v4413, 32
    %v4796 = vpop.permute.xlu0 %4795
    %4797 = vrot.lane.b32.xlu0 %v4414, 32
    %v4798 = vpop.permute.xlu0 %4797
    %4799 = vrot.lane.b32.xlu0 %v4415, 32
    %v4800 = vpop.permute.xlu0 %4799
    %4801 = vrot.lane.b32.xlu0 %v4369, 32
    %v4802 = vpop.permute.xlu0 %4801
    %4803 = vrot.lane.b32.xlu0 %v4416, 32
    %v4804 = vpop.permute.xlu0 %4803
    %4805 = vrot.lane.b32.xlu0 %v4417, 32
    %v4806 = vpop.permute.xlu0 %4805
    %4807 = vrot.lane.b32.xlu0 %v4418, 32
    %v4808 = vpop.permute.xlu0 %4807
    %4809 = vrot.lane.b32.xlu0 %v4372, 32
    %v4810 = vpop.permute.xlu0 %4809
    %4811 = vrot.lane.b32.xlu0 %v4419, 32
    %v4812 = vpop.permute.xlu0 %4811
    %4813 = vrot.lane.b32.xlu0 %v4420, 32
    %v4814 = vpop.permute.xlu0 %4813
    %4815 = vrot.lane.b32.xlu0 %v4421, 32
    %v4816 = vpop.permute.xlu0 %4815
    %4817 = vrot.lane.b32.xlu0 %v4374, 32
    %v4818 = vpop.permute.xlu0 %4817
    %4819 = vrot.lane.b32.xlu0 %v4422, 32
    %v4820 = vpop.permute.xlu0 %4819
    %4821 = vrot.lane.b32.xlu0 %v4423, 32
    %v4822 = vpop.permute.xlu0 %4821
    %4823 = vrot.lane.b32.xlu0 %v4424, 32
    %v4824 = vpop.permute.xlu0 %4823
    %v4841 = vrot.slane %v4698, 4
    %v4842 = vsel %vm944, %v4841, %v4367
    %v4844 = vunpack.c.l.s4 1934713408
    %v4845 = vunpack.c.0.s8 %v4844
    %v4846 = vperm.slane %v4842, %v4845
    %v4847 = vrot.slane %v4794, 4
    %v4848 = vsel %vm944, %v4847, %v4746
    %v4850 = vunpack.c.l.s4 1934713408
    %v4851 = vunpack.c.0.s8 %v4850
    %v4852 = vperm.slane %v4848, %v4851
    %v4853 = vrot.slane %v4700, 4
    %v4854 = vsel %vm944, %v4853, %v4413
    %v4856 = vunpack.c.l.s4 1934713408
    %v4857 = vunpack.c.0.s8 %v4856
    %v4858 = vperm.slane %v4854, %v4857
    %v4859 = vrot.slane %v4796, 4
    %v4860 = vsel %vm944, %v4859, %v4748
    %v4862 = vunpack.c.l.s4 1934713408
    %v4863 = vunpack.c.0.s8 %v4862
    %v4864 = vperm.slane %v4860, %v4863
    %v4865 = vrot.slane %v4702, 4
    %v4866 = vsel %vm944, %v4865, %v4414
    %v4868 = vunpack.c.l.s4 1934713408
    %v4869 = vunpack.c.0.s8 %v4868
    %v4870 = vperm.slane %v4866, %v4869
    %v4871 = vrot.slane %v4798, 4
    %v4872 = vsel %vm944, %v4871, %v4750
    %v4874 = vunpack.c.l.s4 1934713408
    %v4875 = vunpack.c.0.s8 %v4874
    %v4876 = vperm.slane %v4872, %v4875
    %v4877 = vrot.slane %v4704, 4
    %v4878 = vsel %vm944, %v4877, %v4415
    %v4880 = vunpack.c.l.s4 1934713408
    %v4881 = vunpack.c.0.s8 %v4880
    %v4882 = vperm.slane %v4878, %v4881
    %v4883 = vrot.slane %v4800, 4
    %v4884 = vsel %vm944, %v4883, %v4752
    %v4886 = vunpack.c.l.s4 1934713408
    %v4887 = vunpack.c.0.s8 %v4886
    %v4888 = vperm.slane %v4884, %v4887
    %v4889 = vrot.slane %v4706, 4
    %v4890 = vsel %vm944, %v4889, %v4369
    %v4892 = vunpack.c.l.s4 1934713408
    %v4893 = vunpack.c.0.s8 %v4892
    %v4894 = vperm.slane %v4890, %v4893
    %v4895 = vrot.slane %v4802, 4
    %v4896 = vsel %vm944, %v4895, %v4754
    %v4898 = vunpack.c.l.s4 1934713408
    %v4899 = vunpack.c.0.s8 %v4898
    %v4900 = vperm.slane %v4896, %v4899
    %v4901 = vrot.slane %v4708, 4
    %v4902 = vsel %vm944, %v4901, %v4416
    %v4904 = vunpack.c.l.s4 1934713408
    %v4905 = vunpack.c.0.s8 %v4904
    %v4906 = vperm.slane %v4902, %v4905
    %v4907 = vrot.slane %v4804, 4
    %v4908 = vsel %vm944, %v4907, %v4756
    %v4910 = vunpack.c.l.s4 1934713408
    %v4911 = vunpack.c.0.s8 %v4910
    %v4912 = vperm.slane %v4908, %v4911
    %v4913 = vrot.slane %v4710, 4
    %v4914 = vsel %vm944, %v4913, %v4417
    %v4916 = vunpack.c.l.s4 1934713408
    %v4917 = vunpack.c.0.s8 %v4916
    %v4918 = vperm.slane %v4914, %v4917
    %v4919 = vrot.slane %v4806, 4
    %v4920 = vsel %vm944, %v4919, %v4758
    %v4922 = vunpack.c.l.s4 1934713408
    %v4923 = vunpack.c.0.s8 %v4922
    %v4924 = vperm.slane %v4920, %v4923
    %v4925 = vrot.slane %v4712, 4
    %v4926 = vsel %vm944, %v4925, %v4418
    %v4928 = vunpack.c.l.s4 1934713408
    %v4929 = vunpack.c.0.s8 %v4928
    %v4930 = vperm.slane %v4926, %v4929
    %v4931 = vrot.slane %v4808, 4
    %v4932 = vsel %vm944, %v4931, %v4760
    %v4934 = vunpack.c.l.s4 1934713408
    %v4935 = vunpack.c.0.s8 %v4934
    %v4936 = vperm.slane %v4932, %v4935
    %v4937 = vrot.slane %v4714, 4
    %v4938 = vsel %vm944, %v4937, %v4372
    %v4940 = vunpack.c.l.s4 1934713408
    %v4941 = vunpack.c.0.s8 %v4940
    %v4942 = vperm.slane %v4938, %v4941
    %v4943 = vrot.slane %v4810, 4
    %v4944 = vsel %vm944, %v4943, %v4762
    %v4946 = vunpack.c.l.s4 1934713408
    %v4947 = vunpack.c.0.s8 %v4946
    %v4948 = vperm.slane %v4944, %v4947
    %v4949 = vrot.slane %v4716, 4
    %v4950 = vsel %vm944, %v4949, %v4419
    %v4952 = vunpack.c.l.s4 1934713408
    %v4953 = vunpack.c.0.s8 %v4952
    %v4954 = vperm.slane %v4950, %v4953
    %v4955 = vrot.slane %v4812, 4
    %v4956 = vsel %vm944, %v4955, %v4764
    %v4958 = vunpack.c.l.s4 1934713408
    %v4959 = vunpack.c.0.s8 %v4958
    %v4960 = vperm.slane %v4956, %v4959
    %v4961 = vrot.slane %v4718, 4
    %v4962 = vsel %vm944, %v4961, %v4420
    %v4964 = vunpack.c.l.s4 1934713408
    %v4965 = vunpack.c.0.s8 %v4964
    %v4966 = vperm.slane %v4962, %v4965
    %v4967 = vrot.slane %v4814, 4
    %v4968 = vsel %vm944, %v4967, %v4766
    %v4970 = vunpack.c.l.s4 1934713408
    %v4971 = vunpack.c.0.s8 %v4970
    %v4972 = vperm.slane %v4968, %v4971
    %v4973 = vrot.slane %v4720, 4
    %v4974 = vsel %vm944, %v4973, %v4421
    %v4976 = vunpack.c.l.s4 1934713408
    %v4977 = vunpack.c.0.s8 %v4976
    %v4978 = vperm.slane %v4974, %v4977
    %v4979 = vrot.slane %v4816, 4
    %v4980 = vsel %vm944, %v4979, %v4768
    %v4982 = vunpack.c.l.s4 1934713408
    %v4983 = vunpack.c.0.s8 %v4982
    %v4984 = vperm.slane %v4980, %v4983
    %v4985 = vrot.slane %v4722, 4
    %v4986 = vsel %vm944, %v4985, %v4374
    %v4988 = vunpack.c.l.s4 1934713408
    %v4989 = vunpack.c.0.s8 %v4988
    %v4990 = vperm.slane %v4986, %v4989
    %v4991 = vrot.slane %v4818, 4
    %v4992 = vsel %vm944, %v4991, %v4770
    %v4994 = vunpack.c.l.s4 1934713408
    %v4995 = vunpack.c.0.s8 %v4994
    %v4996 = vperm.slane %v4992, %v4995
    %v4997 = vrot.slane %v4724, 4
    %v4998 = vsel %vm944, %v4997, %v4422
    %v5000 = vunpack.c.l.s4 1934713408
    %v5001 = vunpack.c.0.s8 %v5000
    %v5002 = vperm.slane %v4998, %v5001
    %v5003 = vrot.slane %v4820, 4
    %v5004 = vsel %vm944, %v5003, %v4772
    %v5006 = vunpack.c.l.s4 1934713408
    %v5007 = vunpack.c.0.s8 %v5006
    %v5008 = vperm.slane %v5004, %v5007
    %v5009 = vrot.slane %v4726, 4
    %v5010 = vsel %vm944, %v5009, %v4423
    %v5012 = vunpack.c.l.s4 1934713408
    %v5013 = vunpack.c.0.s8 %v5012
    %v5014 = vperm.slane %v5010, %v5013
    %v5015 = vrot.slane %v4822, 4
    %v5016 = vsel %vm944, %v5015, %v4774
    %v5018 = vunpack.c.l.s4 1934713408
    %v5019 = vunpack.c.0.s8 %v5018
    %v5020 = vperm.slane %v5016, %v5019
    %v5021 = vrot.slane %v4728, 4
    %v5022 = vsel %vm944, %v5021, %v4424
    %v5024 = vunpack.c.l.s4 1934713408
    %v5025 = vunpack.c.0.s8 %v5024
    %v5026 = vperm.slane %v5022, %v5025
    %v5027 = vrot.slane %v4824, 4
    %v5028 = vsel %vm944, %v5027, %v4776
    %v5030 = vunpack.c.l.s4 1934713408
    %v5031 = vunpack.c.0.s8 %v5030
    %v5032 = vperm.slane %v5028, %v5031
    %v5033 = vrot.slane %v4858, 4
    %v5034 = vsel %vm944, %v5033, %v4846
    %v5036 = vunpack.c.l.s4 1934713408
    %v5037 = vunpack.c.0.s8 %v5036
    %v5038 = vperm.slane %v5034, %v5037
    %v5039 = vrot.slane %v5038, 4
    %v5040 = vsel %vm944, 0.0, %v5039
    %v5041 = vrot.slane %v4882, 4
    %v5042 = vsel %vm944, %v5041, %v4870
    %v5044 = vunpack.c.l.s4 1934713408
    %v5045 = vunpack.c.0.s8 %v5044
    %v5046 = vperm.slane %v5042, %v5045
    %v5047 = vrot.slane %v5046, 4
    %v5048 = vsel %vm944, 0.0, %v5047
    %v5049 = vrot.slane %v4906, 4
    %v5050 = vsel %vm944, %v5049, %v4894
    %v5052 = vunpack.c.l.s4 1934713408
    %v5053 = vunpack.c.0.s8 %v5052
    %v5054 = vperm.slane %v5050, %v5053
    %v5055 = vrot.slane %v5054, 4
    %v5056 = vsel %vm944, 0.0, %v5055
    %v5057 = vrot.slane %v4930, 4
    %v5058 = vsel %vm944, %v5057, %v4918
    %v5060 = vunpack.c.l.s4 1934713408
    %v5061 = vunpack.c.0.s8 %v5060
    %v5062 = vperm.slane %v5058, %v5061
    %v5063 = vrot.slane %v5062, 4
    %v5064 = vsel %vm944, 0.0, %v5063
    %v5065 = vrot.slane %v4954, 4
    %v5066 = vsel %vm944, %v5065, %v4942
    %v5068 = vunpack.c.l.s4 1934713408
    %v5069 = vunpack.c.0.s8 %v5068
    %v5070 = vperm.slane %v5066, %v5069
    %v5071 = vrot.slane %v5070, 4
    %v5072 = vsel %vm944, 0.0, %v5071
    %v5073 = vrot.slane %v4978, 4
    %v5074 = vsel %vm944, %v5073, %v4966
    %v5076 = vunpack.c.l.s4 1934713408
    %v5077 = vunpack.c.0.s8 %v5076
    %v5078 = vperm.slane %v5074, %v5077
    %v5079 = vrot.slane %v5078, 4
    %v5080 = vsel %vm944, 0.0, %v5079
    %v5081 = vrot.slane %v5002, 4
    %v5082 = vsel %vm944, %v5081, %v4990
    %v5084 = vunpack.c.l.s4 1934713408
    %v5085 = vunpack.c.0.s8 %v5084
    %v5086 = vperm.slane %v5082, %v5085
    %v5087 = vrot.slane %v5086, 4
    %v5088 = vsel %vm944, 0.0, %v5087
    %v5089 = vrot.slane %v5026, 4
    %v5090 = vsel %vm944, %v5089, %v5014
    %v5092 = vunpack.c.l.s4 1934713408
    %v5093 = vunpack.c.0.s8 %v5092
    %v5094 = vperm.slane %v5090, %v5093
    %v5095 = vrot.slane %v5094, 4
    %v5096 = vsel %vm944, 0.0, %v5095
    %v5097 = vrot.slane %v4864, 4
    %v5098 = vsel %vm944, %v5097, %v4852
    %v5100 = vunpack.c.l.s4 1934713408
    %v5101 = vunpack.c.0.s8 %v5100
    %v5102 = vperm.slane %v5098, %v5101
    %v5103 = vrot.slane %v5102, 4
    %v5104 = vsel %vm944, 0.0, %v5103
    %v5105 = vrot.slane %v4888, 4
    %v5106 = vsel %vm944, %v5105, %v4876
    %v5108 = vunpack.c.l.s4 1934713408
    %v5109 = vunpack.c.0.s8 %v5108
    %v5110 = vperm.slane %v5106, %v5109
    %v5111 = vrot.slane %v5110, 4
    %v5112 = vsel %vm944, 0.0, %v5111
    %v5113 = vrot.slane %v4912, 4
    %v5114 = vsel %vm944, %v5113, %v4900
    %v5116 = vunpack.c.l.s4 1934713408
    %v5117 = vunpack.c.0.s8 %v5116
    %v5118 = vperm.slane %v5114, %v5117
    %v5119 = vrot.slane %v5118, 4
    %v5120 = vsel %vm944, 0.0, %v5119
    %v5121 = vrot.slane %v4936, 4
    %v5122 = vsel %vm944, %v5121, %v4924
    %v5124 = vunpack.c.l.s4 1934713408
    %v5125 = vunpack.c.0.s8 %v5124
    %v5126 = vperm.slane %v5122, %v5125
    %v5127 = vrot.slane %v5126, 4
    %v5128 = vsel %vm944, 0.0, %v5127
    %v5129 = vrot.slane %v4960, 4
    %v5130 = vsel %vm944, %v5129, %v4948
    %v5132 = vunpack.c.l.s4 1934713408
    %v5133 = vunpack.c.0.s8 %v5132
    %v5134 = vperm.slane %v5130, %v5133
    %v5135 = vrot.slane %v5134, 4
    %v5136 = vsel %vm944, 0.0, %v5135
    %v5137 = vrot.slane %v4984, 4
    %v5138 = vsel %vm944, %v5137, %v4972
    %v5140 = vunpack.c.l.s4 1934713408
    %v5141 = vunpack.c.0.s8 %v5140
    %v5142 = vperm.slane %v5138, %v5141
    %v5143 = vrot.slane %v5142, 4
    %v5144 = vsel %vm944, 0.0, %v5143
    %v5145 = vrot.slane %v5008, 4
    %v5146 = vsel %vm944, %v5145, %v4996
    %v5148 = vunpack.c.l.s4 1934713408
    %v5149 = vunpack.c.0.s8 %v5148
    %v5150 = vperm.slane %v5146, %v5149
    %v5151 = vrot.slane %v5150, 4
    %v5152 = vsel %vm944, 0.0, %v5151
    %v5153 = vrot.slane %v5032, 4
    %v5154 = vsel %vm944, %v5153, %v5020
    %v5156 = vunpack.c.l.s4 1934713408
    %v5157 = vunpack.c.0.s8 %v5156
    %v5158 = vperm.slane %v5154, %v5157
    %v5159 = vrot.slane %v5158, 4
    %v5160 = vsel %vm944, 0.0, %v5159
    %5161 = vrot.lane.b32.xlu0 %v4386, 96
    %v5162 = vpop.permute.xlu0 %5161
    %5163 = vrot.lane.b32.xlu0 %v4441, 96
    %v5164 = vpop.permute.xlu0 %5163
    %5165 = vrot.lane.b32.xlu0 %v4442, 96
    %v5166 = vpop.permute.xlu0 %5165
    %5167 = vrot.lane.b32.xlu0 %v4443, 96
    %v5168 = vpop.permute.xlu0 %5167
    %5169 = vrot.lane.b32.xlu0 %v4388, 96
    %v5170 = vpop.permute.xlu0 %5169
    %5171 = vrot.lane.b32.xlu0 %v4444, 96
    %v5172 = vpop.permute.xlu0 %5171
    %5173 = vrot.lane.b32.xlu0 %v4445, 96
    %v5174 = vpop.permute.xlu0 %5173
    %5175 = vrot.lane.b32.xlu0 %v4446, 96
    %v5176 = vpop.permute.xlu0 %5175
    %5177 = vrot.lane.b32.xlu0 %v4391, 96
    %v5178 = vpop.permute.xlu0 %5177
    %5179 = vrot.lane.b32.xlu0 %v4447, 96
    %v5180 = vpop.permute.xlu0 %5179
    %5181 = vrot.lane.b32.xlu0 %v4448, 96
    %v5182 = vpop.permute.xlu0 %5181
    %5183 = vrot.lane.b32.xlu0 %v4449, 96
    %v5184 = vpop.permute.xlu0 %5183
    %5185 = vrot.lane.b32.xlu0 %v4393, 96
    %v5186 = vpop.permute.xlu0 %5185
    %5187 = vrot.lane.b32.xlu0 %v4450, 96
    %v5188 = vpop.permute.xlu0 %5187
    %5189 = vrot.lane.b32.xlu0 %v4451, 96
    %v5190 = vpop.permute.xlu0 %5189
    %5191 = vrot.lane.b32.xlu0 %v4452, 96
    %v5192 = vpop.permute.xlu0 %5191
    %5209 = vrot.lane.b32.xlu0 %v4386, 64
    %v5210 = vpop.permute.xlu0 %5209
    %5211 = vrot.lane.b32.xlu0 %v4441, 64
    %v5212 = vpop.permute.xlu0 %5211
    %5213 = vrot.lane.b32.xlu0 %v4442, 64
    %v5214 = vpop.permute.xlu0 %5213
    %5215 = vrot.lane.b32.xlu0 %v4443, 64
    %v5216 = vpop.permute.xlu0 %5215
    %5217 = vrot.lane.b32.xlu0 %v4388, 64
    %v5218 = vpop.permute.xlu0 %5217
    %5219 = vrot.lane.b32.xlu0 %v4444, 64
    %v5220 = vpop.permute.xlu0 %5219
    %5221 = vrot.lane.b32.xlu0 %v4445, 64
    %v5222 = vpop.permute.xlu0 %5221
    %5223 = vrot.lane.b32.xlu0 %v4446, 64
    %v5224 = vpop.permute.xlu0 %5223
    %5225 = vrot.lane.b32.xlu0 %v4391, 64
    %v5226 = vpop.permute.xlu0 %5225
    %5227 = vrot.lane.b32.xlu0 %v4447, 64
    %v5228 = vpop.permute.xlu0 %5227
    %5229 = vrot.lane.b32.xlu0 %v4448, 64
    %v5230 = vpop.permute.xlu0 %5229
    %5231 = vrot.lane.b32.xlu0 %v4449, 64
    %v5232 = vpop.permute.xlu0 %5231
    %5233 = vrot.lane.b32.xlu0 %v4393, 64
    %v5234 = vpop.permute.xlu0 %5233
    %5235 = vrot.lane.b32.xlu0 %v4450, 64
    %v5236 = vpop.permute.xlu0 %5235
    %5237 = vrot.lane.b32.xlu0 %v4451, 64
    %v5238 = vpop.permute.xlu0 %5237
    %5239 = vrot.lane.b32.xlu0 %v4452, 64
    %v5240 = vpop.permute.xlu0 %5239
    %5257 = vrot.lane.b32.xlu0 %v4386, 32
    %v5258 = vpop.permute.xlu0 %5257
    %5259 = vrot.lane.b32.xlu0 %v4441, 32
    %v5260 = vpop.permute.xlu0 %5259
    %5261 = vrot.lane.b32.xlu0 %v4442, 32
    %v5262 = vpop.permute.xlu0 %5261
    %5263 = vrot.lane.b32.xlu0 %v4443, 32
    %v5264 = vpop.permute.xlu0 %5263
    %5265 = vrot.lane.b32.xlu0 %v4388, 32
    %v5266 = vpop.permute.xlu0 %5265
    %5267 = vrot.lane.b32.xlu0 %v4444, 32
    %v5268 = vpop.permute.xlu0 %5267
    %5269 = vrot.lane.b32.xlu0 %v4445, 32
    %v5270 = vpop.permute.xlu0 %5269
    %5271 = vrot.lane.b32.xlu0 %v4446, 32
    %v5272 = vpop.permute.xlu0 %5271
    %5273 = vrot.lane.b32.xlu0 %v4391, 32
    %v5274 = vpop.permute.xlu0 %5273
    %5275 = vrot.lane.b32.xlu0 %v4447, 32
    %v5276 = vpop.permute.xlu0 %5275
    %5277 = vrot.lane.b32.xlu0 %v4448, 32
    %v5278 = vpop.permute.xlu0 %5277
    %5279 = vrot.lane.b32.xlu0 %v4449, 32
    %v5280 = vpop.permute.xlu0 %5279
    %5281 = vrot.lane.b32.xlu0 %v4393, 32
    %v5282 = vpop.permute.xlu0 %5281
    %5283 = vrot.lane.b32.xlu0 %v4450, 32
    %v5284 = vpop.permute.xlu0 %5283
    %5285 = vrot.lane.b32.xlu0 %v4451, 32
    %v5286 = vpop.permute.xlu0 %5285
    %5287 = vrot.lane.b32.xlu0 %v4452, 32
    %v5288 = vpop.permute.xlu0 %5287
    %v5305 = vrot.slane %v5162, 4
    %v5306 = vsel %vm944, %v5305, %v4386
    %v5308 = vunpack.c.l.s4 1934713408
    %v5309 = vunpack.c.0.s8 %v5308
    %v5310 = vperm.slane %v5306, %v5309
    %v5311 = vrot.slane %v5258, 4
    %v5312 = vsel %vm944, %v5311, %v5210
    %v5314 = vunpack.c.l.s4 1934713408
    %v5315 = vunpack.c.0.s8 %v5314
    %v5316 = vperm.slane %v5312, %v5315
    %v5317 = vrot.slane %v5164, 4
    %v5318 = vsel %vm944, %v5317, %v4441
    %v5320 = vunpack.c.l.s4 1934713408
    %v5321 = vunpack.c.0.s8 %v5320
    %v5322 = vperm.slane %v5318, %v5321
    %v5323 = vrot.slane %v5260, 4
    %v5324 = vsel %vm944, %v5323, %v5212
    %v5326 = vunpack.c.l.s4 1934713408
    %v5327 = vunpack.c.0.s8 %v5326
    %v5328 = vperm.slane %v5324, %v5327
    %v5329 = vrot.slane %v5166, 4
    %v5330 = vsel %vm944, %v5329, %v4442
    %v5332 = vunpack.c.l.s4 1934713408
    %v5333 = vunpack.c.0.s8 %v5332
    %v5334 = vperm.slane %v5330, %v5333
    %v5335 = vrot.slane %v5262, 4
    %v5336 = vsel %vm944, %v5335, %v5214
    %v5338 = vunpack.c.l.s4 1934713408
    %v5339 = vunpack.c.0.s8 %v5338
    %v5340 = vperm.slane %v5336, %v5339
    %v5341 = vrot.slane %v5168, 4
    %v5342 = vsel %vm944, %v5341, %v4443
    %v5344 = vunpack.c.l.s4 1934713408
    %v5345 = vunpack.c.0.s8 %v5344
    %v5346 = vperm.slane %v5342, %v5345
    %v5347 = vrot.slane %v5264, 4
    %v5348 = vsel %vm944, %v5347, %v5216
    %v5350 = vunpack.c.l.s4 1934713408
    %v5351 = vunpack.c.0.s8 %v5350
    %v5352 = vperm.slane %v5348, %v5351
    %v5353 = vrot.slane %v5170, 4
    %v5354 = vsel %vm944, %v5353, %v4388
    %v5356 = vunpack.c.l.s4 1934713408
    %v5357 = vunpack.c.0.s8 %v5356
    %v5358 = vperm.slane %v5354, %v5357
    %v5359 = vrot.slane %v5266, 4
    %v5360 = vsel %vm944, %v5359, %v5218
    %v5362 = vunpack.c.l.s4 1934713408
    %v5363 = vunpack.c.0.s8 %v5362
    %v5364 = vperm.slane %v5360, %v5363
    %v5365 = vrot.slane %v5172, 4
    %v5366 = vsel %vm944, %v5365, %v4444
    %v5368 = vunpack.c.l.s4 1934713408
    %v5369 = vunpack.c.0.s8 %v5368
    %v5370 = vperm.slane %v5366, %v5369
    %v5371 = vrot.slane %v5268, 4
    %v5372 = vsel %vm944, %v5371, %v5220
    %v5374 = vunpack.c.l.s4 1934713408
    %v5375 = vunpack.c.0.s8 %v5374
    %v5376 = vperm.slane %v5372, %v5375
    %v5377 = vrot.slane %v5174, 4
    %v5378 = vsel %vm944, %v5377, %v4445
    %v5380 = vunpack.c.l.s4 1934713408
    %v5381 = vunpack.c.0.s8 %v5380
    %v5382 = vperm.slane %v5378, %v5381
    %v5383 = vrot.slane %v5270, 4
    %v5384 = vsel %vm944, %v5383, %v5222
    %v5386 = vunpack.c.l.s4 1934713408
    %v5387 = vunpack.c.0.s8 %v5386
    %v5388 = vperm.slane %v5384, %v5387
    %v5389 = vrot.slane %v5176, 4
    %v5390 = vsel %vm944, %v5389, %v4446
    %v5392 = vunpack.c.l.s4 1934713408
    %v5393 = vunpack.c.0.s8 %v5392
    %v5394 = vperm.slane %v5390, %v5393
    %v5395 = vrot.slane %v5272, 4
    %v5396 = vsel %vm944, %v5395, %v5224
    %v5398 = vunpack.c.l.s4 1934713408
    %v5399 = vunpack.c.0.s8 %v5398
    %v5400 = vperm.slane %v5396, %v5399
    %v5401 = vrot.slane %v5178, 4
    %v5402 = vsel %vm944, %v5401, %v4391
    %v5404 = vunpack.c.l.s4 1934713408
    %v5405 = vunpack.c.0.s8 %v5404
    %v5406 = vperm.slane %v5402, %v5405
    %v5407 = vrot.slane %v5274, 4
    %v5408 = vsel %vm944, %v5407, %v5226
    %v5410 = vunpack.c.l.s4 1934713408
    %v5411 = vunpack.c.0.s8 %v5410
    %v5412 = vperm.slane %v5408, %v5411
    %v5413 = vrot.slane %v5180, 4
    %v5414 = vsel %vm944, %v5413, %v4447
    %v5416 = vunpack.c.l.s4 1934713408
    %v5417 = vunpack.c.0.s8 %v5416
    %v5418 = vperm.slane %v5414, %v5417
    %v5419 = vrot.slane %v5276, 4
    %v5420 = vsel %vm944, %v5419, %v5228
    %v5422 = vunpack.c.l.s4 1934713408
    %v5423 = vunpack.c.0.s8 %v5422
    %v5424 = vperm.slane %v5420, %v5423
    %v5425 = vrot.slane %v5182, 4
    %v5426 = vsel %vm944, %v5425, %v4448
    %v5428 = vunpack.c.l.s4 1934713408
    %v5429 = vunpack.c.0.s8 %v5428
    %v5430 = vperm.slane %v5426, %v5429
    %v5431 = vrot.slane %v5278, 4
    %v5432 = vsel %vm944, %v5431, %v5230
    %v5434 = vunpack.c.l.s4 1934713408
    %v5435 = vunpack.c.0.s8 %v5434
    %v5436 = vperm.slane %v5432, %v5435
    %v5437 = vrot.slane %v5184, 4
    %v5438 = vsel %vm944, %v5437, %v4449
    %v5440 = vunpack.c.l.s4 1934713408
    %v5441 = vunpack.c.0.s8 %v5440
    %v5442 = vperm.slane %v5438, %v5441
    %v5443 = vrot.slane %v5280, 4
    %v5444 = vsel %vm944, %v5443, %v5232
    %v5446 = vunpack.c.l.s4 1934713408
    %v5447 = vunpack.c.0.s8 %v5446
    %v5448 = vperm.slane %v5444, %v5447
    %v5449 = vrot.slane %v5186, 4
    %v5450 = vsel %vm944, %v5449, %v4393
    %v5452 = vunpack.c.l.s4 1934713408
    %v5453 = vunpack.c.0.s8 %v5452
    %v5454 = vperm.slane %v5450, %v5453
    %v5455 = vrot.slane %v5282, 4
    %v5456 = vsel %vm944, %v5455, %v5234
    %v5458 = vunpack.c.l.s4 1934713408
    %v5459 = vunpack.c.0.s8 %v5458
    %v5460 = vperm.slane %v5456, %v5459
    %v5461 = vrot.slane %v5188, 4
    %v5462 = vsel %vm944, %v5461, %v4450
    %v5464 = vunpack.c.l.s4 1934713408
    %v5465 = vunpack.c.0.s8 %v5464
    %v5466 = vperm.slane %v5462, %v5465
    %v5467 = vrot.slane %v5284, 4
    %v5468 = vsel %vm944, %v5467, %v5236
    %v5470 = vunpack.c.l.s4 1934713408
    %v5471 = vunpack.c.0.s8 %v5470
    %v5472 = vperm.slane %v5468, %v5471
    %v5473 = vrot.slane %v5190, 4
    %v5474 = vsel %vm944, %v5473, %v4451
    %v5476 = vunpack.c.l.s4 1934713408
    %v5477 = vunpack.c.0.s8 %v5476
    %v5478 = vperm.slane %v5474, %v5477
    %v5479 = vrot.slane %v5286, 4
    %v5480 = vsel %vm944, %v5479, %v5238
    %v5482 = vunpack.c.l.s4 1934713408
    %v5483 = vunpack.c.0.s8 %v5482
    %v5484 = vperm.slane %v5480, %v5483
    %v5485 = vrot.slane %v5192, 4
    %v5486 = vsel %vm944, %v5485, %v4452
    %v5488 = vunpack.c.l.s4 1934713408
    %v5489 = vunpack.c.0.s8 %v5488
    %v5490 = vperm.slane %v5486, %v5489
    %v5491 = vrot.slane %v5288, 4
    %v5492 = vsel %vm944, %v5491, %v5240
    %v5494 = vunpack.c.l.s4 1934713408
    %v5495 = vunpack.c.0.s8 %v5494
    %v5496 = vperm.slane %v5492, %v5495
    %v5497 = vrot.slane %v5322, 4
    %v5498 = vsel %vm944, %v5497, %v5310
    %v5500 = vunpack.c.l.s4 1934713408
    %v5501 = vunpack.c.0.s8 %v5500
    %v5502 = vperm.slane %v5498, %v5501
    %v5503 = vrot.slane %v5502, 4
    %v5504 = vsel %vm944, 0.0, %v5503
    %v5505 = vrot.slane %v5346, 4
    %v5506 = vsel %vm944, %v5505, %v5334
    %v5508 = vunpack.c.l.s4 1934713408
    %v5509 = vunpack.c.0.s8 %v5508
    %v5510 = vperm.slane %v5506, %v5509
    %v5511 = vrot.slane %v5510, 4
    %v5512 = vsel %vm944, 0.0, %v5511
    %v5513 = vrot.slane %v5370, 4
    %v5514 = vsel %vm944, %v5513, %v5358
    %v5516 = vunpack.c.l.s4 1934713408
    %v5517 = vunpack.c.0.s8 %v5516
    %v5518 = vperm.slane %v5514, %v5517
    %v5519 = vrot.slane %v5518, 4
    %v5520 = vsel %vm944, 0.0, %v5519
    %v5521 = vrot.slane %v5394, 4
    %v5522 = vsel %vm944, %v5521, %v5382
    %v5524 = vunpack.c.l.s4 1934713408
    %v5525 = vunpack.c.0.s8 %v5524
    %v5526 = vperm.slane %v5522, %v5525
    %v5527 = vrot.slane %v5526, 4
    %v5528 = vsel %vm944, 0.0, %v5527
    %v5529 = vrot.slane %v5418, 4
    %v5530 = vsel %vm944, %v5529, %v5406
    %v5532 = vunpack.c.l.s4 1934713408
    %v5533 = vunpack.c.0.s8 %v5532
    %v5534 = vperm.slane %v5530, %v5533
    %v5535 = vrot.slane %v5534, 4
    %v5536 = vsel %vm944, 0.0, %v5535
    %v5537 = vrot.slane %v5442, 4
    %v5538 = vsel %vm944, %v5537, %v5430
    %v5540 = vunpack.c.l.s4 1934713408
    %v5541 = vunpack.c.0.s8 %v5540
    %v5542 = vperm.slane %v5538, %v5541
    %v5543 = vrot.slane %v5542, 4
    %v5544 = vsel %vm944, 0.0, %v5543
    %v5545 = vrot.slane %v5466, 4
    %v5546 = vsel %vm944, %v5545, %v5454
    %v5548 = vunpack.c.l.s4 1934713408
    %v5549 = vunpack.c.0.s8 %v5548
    %v5550 = vperm.slane %v5546, %v5549
    %v5551 = vrot.slane %v5550, 4
    %v5552 = vsel %vm944, 0.0, %v5551
    %v5553 = vrot.slane %v5490, 4
    %v5554 = vsel %vm944, %v5553, %v5478
    %v5556 = vunpack.c.l.s4 1934713408
    %v5557 = vunpack.c.0.s8 %v5556
    %v5558 = vperm.slane %v5554, %v5557
    %v5559 = vrot.slane %v5558, 4
    %v5560 = vsel %vm944, 0.0, %v5559
    %v5561 = vrot.slane %v5328, 4
    %v5562 = vsel %vm944, %v5561, %v5316
    %v5564 = vunpack.c.l.s4 1934713408
    %v5565 = vunpack.c.0.s8 %v5564
    %v5566 = vperm.slane %v5562, %v5565
    %v5567 = vrot.slane %v5566, 4
    %v5568 = vsel %vm944, 0.0, %v5567
    %v5569 = vrot.slane %v5352, 4
    %v5570 = vsel %vm944, %v5569, %v5340
    %v5572 = vunpack.c.l.s4 1934713408
    %v5573 = vunpack.c.0.s8 %v5572
    %v5574 = vperm.slane %v5570, %v5573
    %v5575 = vrot.slane %v5574, 4
    %v5576 = vsel %vm944, 0.0, %v5575
    %v5577 = vrot.slane %v5376, 4
    %v5578 = vsel %vm944, %v5577, %v5364
    %v5580 = vunpack.c.l.s4 1934713408
    %v5581 = vunpack.c.0.s8 %v5580
    %v5582 = vperm.slane %v5578, %v5581
    %v5583 = vrot.slane %v5582, 4
    %v5584 = vsel %vm944, 0.0, %v5583
    %v5585 = vrot.slane %v5400, 4
    %v5586 = vsel %vm944, %v5585, %v5388
    %v5588 = vunpack.c.l.s4 1934713408
    %v5589 = vunpack.c.0.s8 %v5588
    %v5590 = vperm.slane %v5586, %v5589
    %v5591 = vrot.slane %v5590, 4
    %v5592 = vsel %vm944, 0.0, %v5591
    %v5593 = vrot.slane %v5424, 4
    %v5594 = vsel %vm944, %v5593, %v5412
    %v5596 = vunpack.c.l.s4 1934713408
    %v5597 = vunpack.c.0.s8 %v5596
    %v5598 = vperm.slane %v5594, %v5597
    %v5599 = vrot.slane %v5598, 4
    %v5600 = vsel %vm944, 0.0, %v5599
    %v5601 = vrot.slane %v5448, 4
    %v5602 = vsel %vm944, %v5601, %v5436
    %v5604 = vunpack.c.l.s4 1934713408
    %v5605 = vunpack.c.0.s8 %v5604
    %v5606 = vperm.slane %v5602, %v5605
    %v5607 = vrot.slane %v5606, 4
    %v5608 = vsel %vm944, 0.0, %v5607
    %v5609 = vrot.slane %v5472, 4
    %v5610 = vsel %vm944, %v5609, %v5460
    %v5612 = vunpack.c.l.s4 1934713408
    %v5613 = vunpack.c.0.s8 %v5612
    %v5614 = vperm.slane %v5610, %v5613
    %v5615 = vrot.slane %v5614, 4
    %v5616 = vsel %vm944, 0.0, %v5615
    %v5617 = vrot.slane %v5496, 4
    %v5618 = vsel %vm944, %v5617, %v5484
    %v5620 = vunpack.c.l.s4 1934713408
    %v5621 = vunpack.c.0.s8 %v5620
    %v5622 = vperm.slane %v5618, %v5621
    %v5623 = vrot.slane %v5622, 4
    %v5624 = vsel %vm944, 0.0, %v5623
    %5641 = vst [vmem:[#allocation1] ss:$4 sm:$0xff] %v4638
    %s5642 = scalar_lea.vmem [#allocation1], 1
    %5643 = vst [vmem:[%s5642] ss:$4 sm:$0xff] %v4646
    %s5644 = scalar_lea.vmem [#allocation1], 2
    %5645 = vst [vmem:[%s5644] ss:$4 sm:$0xff] %v4654
    %s5646 = scalar_lea.vmem [#allocation1], 3
    %5647 = vst [vmem:[%s5646] ss:$4 sm:$0xff] %v4662
    %v5648 = vld.sshfl [vmem:[#allocation1] sm:$0xff pattern:$0x73625140]
    %s5649 = scalar_lea.vmem [#allocation1], 32
    %5650 = vst [vmem:[%s5649] ss:$4 sm:$0xff] %v4640
    %s5651 = scalar_lea.vmem [#allocation1], 33
    %5652 = vst [vmem:[%s5651] ss:$4 sm:$0xff] %v4648
    %s5653 = scalar_lea.vmem [#allocation1], 34
    %5654 = vst [vmem:[%s5653] ss:$4 sm:$0xff] %v4656
    %s5655 = scalar_lea.vmem [#allocation1], 35
    %5656 = vst [vmem:[%s5655] ss:$4 sm:$0xff] %v4664
    %v5657 = vld.sshfl [vmem:[#allocation1 + $0x20] sm:$0xff pattern:$0x73625140]
    %5658 = vst [vmem:[#allocation1] ss:$4 sm:$0xff] %v4670
    %5659 = vst [vmem:[%s5642] ss:$4 sm:$0xff] %v4678
    %5660 = vst [vmem:[%s5644] ss:$4 sm:$0xff] %v4686
    %5661 = vst [vmem:[%s5646] ss:$4 sm:$0xff] %v4694
    %v5662 = vld.sshfl [vmem:[#allocation1] sm:$0xff pattern:$0x73625140]
    %5663 = vst [vmem:[%s5649] ss:$4 sm:$0xff] %v4672
    %5664 = vst [vmem:[%s5651] ss:$4 sm:$0xff] %v4680
    %5665 = vst [vmem:[%s5653] ss:$4 sm:$0xff] %v4688
    %5666 = vst [vmem:[%s5655] ss:$4 sm:$0xff] %v4696
    %v5667 = vld.sshfl [vmem:[#allocation1 + $0x20] sm:$0xff pattern:$0x73625140]
    %v5672 = vpack.c.bf16 %v5648, %v5648
    %v5673 = vpack.c.bf16 %v5657, %v5657
    %v5674 = vpack.c.bf16 %v5662, %v5662
    %v5675 = vpack.c.bf16 %v5667, %v5667
    %5708 = vst [vmem:[#allocation1] ss:$4 sm:$0xff] %v5038
    %s5709 = scalar_lea.vmem [#allocation1], 1
    %5710 = vst [vmem:[%s5709] ss:$4 sm:$0xff] %v5046
    %s5711 = scalar_lea.vmem [#allocation1], 2
    %5712 = vst [vmem:[%s5711] ss:$4 sm:$0xff] %v5054
    %s5713 = scalar_lea.vmem [#allocation1], 3
    %5714 = vst [vmem:[%s5713] ss:$4 sm:$0xff] %v5062
    %s5715 = scalar_lea.vmem [#allocation1], 32
    %5716 = vst [vmem:[%s5715] ss:$4 sm:$0xff] %v5070
    %s5717 = scalar_lea.vmem [#allocation1], 33
    %5718 = vst [vmem:[%s5717] ss:$4 sm:$0xff] %v5078
    %s5719 = scalar_lea.vmem [#allocation1], 34
    %5720 = vst [vmem:[%s5719] ss:$4 sm:$0xff] %v5086
    %s5721 = scalar_lea.vmem [#allocation1], 35
    %5722 = vst [vmem:[%s5721] ss:$4 sm:$0xff] %v5094
    %v5723 = vld.sshfl [vmem:[#allocation1] sm:$0xff pattern:$0x73625140]
    %v5724 = vld.sshfl [vmem:[#allocation1 + $0x20] sm:$0xff pattern:$0x73625140]
    %5725 = vst [vmem:[#allocation1] ss:$4 sm:$0xff] %v5040
    %5726 = vst [vmem:[%s5709] ss:$4 sm:$0xff] %v5048
    %5727 = vst [vmem:[%s5711] ss:$4 sm:$0xff] %v5056
    %5728 = vst [vmem:[%s5713] ss:$4 sm:$0xff] %v5064
    %5729 = vst [vmem:[%s5715] ss:$4 sm:$0xff] %v5072
    %5730 = vst [vmem:[%s5717] ss:$4 sm:$0xff] %v5080
    %5731 = vst [vmem:[%s5719] ss:$4 sm:$0xff] %v5088
    %5732 = vst [vmem:[%s5721] ss:$4 sm:$0xff] %v5096
    %v5733 = vld.sshfl [vmem:[#allocation1] sm:$0xff pattern:$0x73625140]
    %v5734 = vld.sshfl [vmem:[#allocation1 + $0x20] sm:$0xff pattern:$0x73625140]
    %5735 = vst [vmem:[#allocation1] ss:$4 sm:$0xff] %v5102
    %5736 = vst [vmem:[%s5709] ss:$4 sm:$0xff] %v5110
    %5737 = vst [vmem:[%s5711] ss:$4 sm:$0xff] %v5118
    %5738 = vst [vmem:[%s5713] ss:$4 sm:$0xff] %v5126
    %5739 = vst [vmem:[%s5715] ss:$4 sm:$0xff] %v5134
    %5740 = vst [vmem:[%s5717] ss:$4 sm:$0xff] %v5142
    %5741 = vst [vmem:[%s5719] ss:$4 sm:$0xff] %v5150
    %5742 = vst [vmem:[%s5721] ss:$4 sm:$0xff] %v5158
    %v5743 = vld.sshfl [vmem:[#allocation1] sm:$0xff pattern:$0x73625140]
    %v5744 = vld.sshfl [vmem:[#allocation1 + $0x20] sm:$0xff pattern:$0x73625140]
    %5745 = vst [vmem:[#allocation1] ss:$4 sm:$0xff] %v5104
    %5746 = vst [vmem:[%s5709] ss:$4 sm:$0xff] %v5112
    %5747 = vst [vmem:[%s5711] ss:$4 sm:$0xff] %v5120
    %5748 = vst [vmem:[%s5713] ss:$4 sm:$0xff] %v5128
    %5749 = vst [vmem:[%s5715] ss:$4 sm:$0xff] %v5136
    %5750 = vst [vmem:[%s5717] ss:$4 sm:$0xff] %v5144
    %5751 = vst [vmem:[%s5719] ss:$4 sm:$0xff] %v5152
    %5752 = vst [vmem:[%s5721] ss:$4 sm:$0xff] %v5160
    %v5753 = vld.sshfl [vmem:[#allocation1] sm:$0xff pattern:$0x73625140]
    %v5754 = vld.sshfl [vmem:[#allocation1 + $0x20] sm:$0xff pattern:$0x73625140]
    %v5763 = vpack.c.bf16 %v5723, %v5723
    %v5764 = vpack.c.bf16 %v5724, %v5724
    %v5765 = vpack.c.bf16 %v5733, %v5733
    %v5766 = vpack.c.bf16 %v5734, %v5734
    %v5767 = vpack.c.bf16 %v5743, %v5743
    %v5768 = vpack.c.bf16 %v5744, %v5744
    %v5769 = vpack.c.bf16 %v5753, %v5753
    %v5770 = vpack.c.bf16 %v5754, %v5754
    %v5773 = vunpack.c.l.b16 %v5763
    %v5774 = vunpack.c.l.b16 %v5764
    %v5775 = vpack.c.b16 %v5774, %v5773
    %v5777 = vsel %vm1670, %v5672, 0
    %v5780 = vsel %vm1670, %v5775, 0
    %5782 = vmatpush.bf16.xpose.msra.mxu0 0
    %5783 = vmatpush.bf16.xpose.msra.mxu0 0
    %5784 = vmatpush.bf16.xpose.msra.mxu0 0
    %5785 = vmatpush.bf16.xpose.msra.mxu0 0
    %5786 = vmatpush.bf16.xpose.msra.mxu0 0
    %5787 = vmatpush.bf16.xpose.msra.mxu0 0
    %5788 = vmatpush.bf16.xpose.msra.mxu0 0
    %5789 = vmatpush.bf16.xpose.msra.mxu0 %v5780
    %5790 = vmatmul.bf16.gmra.mxu0 %v5777
    %v5791 = vpop.f32.mrf.mxu0
    %v5792 = vadd.f32 %v327, %v5791
    %v5793 = vpop.f32.mrf.mxu0
    %5794 = vdwg.mxu0
    %v5797 = vunpack.c.l.b16 %v5765
    %v5798 = vunpack.c.l.b16 %v5766
    %v5799 = vpack.c.b16 %v5798, %v5797
    %v5801 = vsel %vm1670, %v5673, 0
    %v5804 = vsel %vm1670, %v5799, 0
    %5806 = vmatpush.bf16.xpose.msra.mxu0 0
    %5807 = vmatpush.bf16.xpose.msra.mxu0 0
    %5808 = vmatpush.bf16.xpose.msra.mxu0 0
    %5809 = vmatpush.bf16.xpose.msra.mxu0 0
    %5810 = vmatpush.bf16.xpose.msra.mxu0 0
    %5811 = vmatpush.bf16.xpose.msra.mxu0 0
    %5812 = vmatpush.bf16.xpose.msra.mxu0 0
    %5813 = vmatpush.bf16.xpose.msra.mxu0 %v5804
    %5814 = vmatmul.bf16.gmra.mxu0 %v5801
    %v5815 = vpop.f32.mrf.mxu0
    %v5816 = vadd.f32 %v327, %v5815
    %v5817 = vpop.f32.mrf.mxu0
    %5818 = vdwg.mxu0
    %v5821 = vunpack.c.l.b16 %v5767
    %v5822 = vunpack.c.l.b16 %v5768
    %v5823 = vpack.c.b16 %v5822, %v5821
    %v5825 = vsel %vm1670, %v5674, 0
    %v5828 = vsel %vm1670, %v5823, 0
    %5830 = vmatpush.bf16.xpose.msra.mxu0 0
    %5831 = vmatpush.bf16.xpose.msra.mxu0 0
    %5832 = vmatpush.bf16.xpose.msra.mxu0 0
    %5833 = vmatpush.bf16.xpose.msra.mxu0 0
    %5834 = vmatpush.bf16.xpose.msra.mxu0 0
    %5835 = vmatpush.bf16.xpose.msra.mxu0 0
    %5836 = vmatpush.bf16.xpose.msra.mxu0 0
    %5837 = vmatpush.bf16.xpose.msra.mxu0 %v5828
    %5838 = vmatmul.bf16.gmra.mxu0 %v5825
    %v5839 = vpop.f32.mrf.mxu0
    %v5840 = vadd.f32 %v327, %v5839
    %v5841 = vpop.f32.mrf.mxu0
    %5842 = vdwg.mxu0
    %v5845 = vunpack.c.l.b16 %v5769
    %v5846 = vunpack.c.l.b16 %v5770
    %v5847 = vpack.c.b16 %v5846, %v5845
    %v5849 = vsel %vm1670, %v5675, 0
    %v5852 = vsel %vm1670, %v5847, 0
    %5854 = vmatpush.bf16.xpose.msra.mxu0 0
    %5855 = vmatpush.bf16.xpose.msra.mxu0 0
    %5856 = vmatpush.bf16.xpose.msra.mxu0 0
    %5857 = vmatpush.bf16.xpose.msra.mxu0 0
    %5858 = vmatpush.bf16.xpose.msra.mxu0 0
    %5859 = vmatpush.bf16.xpose.msra.mxu0 0
    %5860 = vmatpush.bf16.xpose.msra.mxu0 0
    %5861 = vmatpush.bf16.xpose.msra.mxu0 %v5852
    %5862 = vmatmul.bf16.gmra.mxu0 %v5849
    %v5863 = vpop.f32.mrf.mxu0
    %v5864 = vadd.f32 %v327, %v5863
    %v5865 = vpop.f32.mrf.mxu0
    %5866 = vdwg.mxu0
    %vm5867 = vcmask 130048
    %v5868 = vsel %vm5867, %v5792, -inf
    %5869 = vmax.xlane.f32.xlu0 %v5868
    %v5870 = vpop.xlane.xlu0 %5869
    %v5871 = vsel %vm5867, %v5816, -inf
    %5872 = vmax.xlane.f32.xlu0 %v5871
    %v5873 = vpop.xlane.xlu0 %5872
    %v5874 = vsel %vm5867, %v5840, -inf
    %5875 = vmax.xlane.f32.xlu0 %v5874
    %v5876 = vpop.xlane.xlu0 %5875
    %v5877 = vsel %vm5867, %v5864, -inf
    %5878 = vmax.xlane.f32.xlu0 %v5877
    %v5879 = vpop.xlane.xlu0 %5878
    %v5880 = vsub.f32 %v5792, %v5870
    %v5881 = vsub.f32 %v5816, %v5873
    %v5882 = vsub.f32 %v5840, %v5876
    %v5883 = vsub.f32 %v5864, %v5879
    %v5884 = vmul.f32 %v5880, 1.442695
    %v5885 = vpow.pop %v5884
    %v5886 = vmul.f32 %v5881, 1.442695
    %v5887 = vpow.pop %v5886
    %v5888 = vmul.f32 %v5882, 1.442695
    %v5889 = vpow.pop %v5888
    %v5890 = vmul.f32 %v5883, 1.442695
    %v5891 = vpow.pop %v5890
    %v5892 = vsel %vm5867, %v5885, 0.0
    %5893 = vadd.xlane.f32.xlu0 %v5892
    %v5894 = vpop.xlane.xlu0 %5893
    %v5895 = vsel %vm5867, %v5887, 0.0
    %5896 = vadd.xlane.f32.xlu0 %v5895
    %v5897 = vpop.xlane.xlu0 %5896
    %v5898 = vsel %vm5867, %v5889, 0.0
    %5899 = vadd.xlane.f32.xlu0 %v5898
    %v5900 = vpop.xlane.xlu0 %5899
    %v5901 = vsel %vm5867, %v5891, 0.0
    %5902 = vadd.xlane.f32.xlu0 %v5901
    %v5903 = vpop.xlane.xlu0 %5902
    %v5904 = vrcp.pop %v5894
    %v5905 = vrcp.pop %v5897
    %v5906 = vrcp.pop %v5900
    %v5907 = vrcp.pop %v5903
    %v5908 = vmul.f32 %v5885, %v5904
    %v5909 = vmul.f32 %v5887, %v5905
    %v5910 = vmul.f32 %v5889, %v5906
    %v5911 = vmul.f32 %v5891, %v5907
    %v5912 = vpack.c.bf16 %v5908, %v5908
    %v5913 = vpack.c.bf16 %v5909, %v5909
    %v5914 = vpack.c.bf16 %v5910, %v5910
    %v5915 = vpack.c.bf16 %v5911, %v5911
    %5948 = vst [vmem:[#allocation1] ss:$4 sm:$0xff] %v5502
    %s5949 = scalar_lea.vmem [#allocation1], 1
    %5950 = vst [vmem:[%s5949] ss:$4 sm:$0xff] %v5510
    %s5951 = scalar_lea.vmem [#allocation1], 2
    %5952 = vst [vmem:[%s5951] ss:$4 sm:$0xff] %v5518
    %s5953 = scalar_lea.vmem [#allocation1], 3
    %5954 = vst [vmem:[%s5953] ss:$4 sm:$0xff] %v5526
    %s5955 = scalar_lea.vmem [#allocation1], 32
    %5956 = vst [vmem:[%s5955] ss:$4 sm:$0xff] %v5534
    %s5957 = scalar_lea.vmem [#allocation1], 33
    %5958 = vst [vmem:[%s5957] ss:$4 sm:$0xff] %v5542
    %s5959 = scalar_lea.vmem [#allocation1], 34
    %5960 = vst [vmem:[%s5959] ss:$4 sm:$0xff] %v5550
    %s5961 = scalar_lea.vmem [#allocation1], 35
    %5962 = vst [vmem:[%s5961] ss:$4 sm:$0xff] %v5558
    %v5963 = vld.sshfl [vmem:[#allocation1] sm:$0xff pattern:$0x73625140]
    %v5964 = vld.sshfl [vmem:[#allocation1 + $0x20] sm:$0xff pattern:$0x73625140]
    %5965 = vst [vmem:[#allocation1] ss:$4 sm:$0xff] %v5504
    %5966 = vst [vmem:[%s5949] ss:$4 sm:$0xff] %v5512
    %5967 = vst [vmem:[%s5951] ss:$4 sm:$0xff] %v5520
    %5968 = vst [vmem:[%s5953] ss:$4 sm:$0xff] %v5528
    %5969 = vst [vmem:[%s5955] ss:$4 sm:$0xff] %v5536
    %5970 = vst [vmem:[%s5957] ss:$4 sm:$0xff] %v5544
    %5971 = vst [vmem:[%s5959] ss:$4 sm:$0xff] %v5552
    %5972 = vst [vmem:[%s5961] ss:$4 sm:$0xff] %v5560
    %v5973 = vld.sshfl [vmem:[#allocation1] sm:$0xff pattern:$0x73625140]
    %v5974 = vld.sshfl [vmem:[#allocation1 + $0x20] sm:$0xff pattern:$0x73625140]
    %5975 = vst [vmem:[#allocation1] ss:$4 sm:$0xff] %v5566
    %5976 = vst [vmem:[%s5949] ss:$4 sm:$0xff] %v5574
    %5977 = vst [vmem:[%s5951] ss:$4 sm:$0xff] %v5582
    %5978 = vst [vmem:[%s5953] ss:$4 sm:$0xff] %v5590
    %5979 = vst [vmem:[%s5955] ss:$4 sm:$0xff] %v5598
    %5980 = vst [vmem:[%s5957] ss:$4 sm:$0xff] %v5606
    %5981 = vst [vmem:[%s5959] ss:$4 sm:$0xff] %v5614
    %5982 = vst [vmem:[%s5961] ss:$4 sm:$0xff] %v5622
    %v5983 = vld.sshfl [vmem:[#allocation1] sm:$0xff pattern:$0x73625140]
    %v5984 = vld.sshfl [vmem:[#allocation1 + $0x20] sm:$0xff pattern:$0x73625140]
    %5985 = vst [vmem:[#allocation1] ss:$4 sm:$0xff] %v5568
    %5986 = vst [vmem:[%s5949] ss:$4 sm:$0xff] %v5576
    %5987 = vst [vmem:[%s5951] ss:$4 sm:$0xff] %v5584
    %5988 = vst [vmem:[%s5953] ss:$4 sm:$0xff] %v5592
    %5989 = vst [vmem:[%s5955] ss:$4 sm:$0xff] %v5600
    %5990 = vst [vmem:[%s5957] ss:$4 sm:$0xff] %v5608
    %5991 = vst [vmem:[%s5959] ss:$4 sm:$0xff] %v5616
    %5992 = vst [vmem:[%s5961] ss:$4 sm:$0xff] %v5624
    %v5993 = vld.sshfl [vmem:[#allocation1] sm:$0xff pattern:$0x73625140]
    %v5994 = vld.sshfl [vmem:[#allocation1 + $0x20] sm:$0xff pattern:$0x73625140]
    %v6003 = vpack.c.bf16 %v5963, %v5963
    %v6004 = vpack.c.bf16 %v5964, %v5964
    %v6005 = vpack.c.bf16 %v5973, %v5973
    %v6006 = vpack.c.bf16 %v5974, %v5974
    %v6007 = vpack.c.bf16 %v5983, %v5983
    %v6008 = vpack.c.bf16 %v5984, %v5984
    %v6009 = vpack.c.bf16 %v5993, %v5993
    %v6010 = vpack.c.bf16 %v5994, %v5994
    %v6013 = vunpack.c.l.b16 %v6003
    %v6014 = vunpack.c.l.b16 %v6004
    %v6015 = vpack.c.b16 %v6014, %v6013
    %v6018 = vsel %vm5867, %v5912, 0
    %6020 = vmatpush.bf16.msra.mxu0 0
    %6021 = vmatpush.bf16.msra.mxu0 0
    %6022 = vmatpush.bf16.msra.mxu0 0
    %6023 = vmatpush.bf16.msra.mxu0 0
    %6024 = vmatpush.bf16.msra.mxu0 0
    %6025 = vmatpush.bf16.msra.mxu0 0
    %6026 = vmatpush.bf16.msra.mxu0 0
    %6027 = vmatpush.bf16.msra.mxu0 %v6015
    %6028 = vmatmul.bf16.gmra.mxu0 %v6018
    %v6029 = vpop.f32.mrf.mxu0
    %v6030 = vadd.f32 0.0, %v6029
    %v6031 = vpop.f32.mrf.mxu0
    %6032 = vdwg.mxu0
    %v6035 = vunpack.c.l.b16 %v6005
    %v6036 = vunpack.c.l.b16 %v6006
    %v6037 = vpack.c.b16 %v6036, %v6035
    %v6040 = vsel %vm5867, %v5913, 0
    %6042 = vmatpush.bf16.msra.mxu0 0
    %6043 = vmatpush.bf16.msra.mxu0 0
    %6044 = vmatpush.bf16.msra.mxu0 0
    %6045 = vmatpush.bf16.msra.mxu0 0
    %6046 = vmatpush.bf16.msra.mxu0 0
    %6047 = vmatpush.bf16.msra.mxu0 0
    %6048 = vmatpush.bf16.msra.mxu0 0
    %6049 = vmatpush.bf16.msra.mxu0 %v6037
    %6050 = vmatmul.bf16.gmra.mxu0 %v6040
    %v6051 = vpop.f32.mrf.mxu0
    %v6052 = vadd.f32 0.0, %v6051
    %v6053 = vpop.f32.mrf.mxu0
    %6054 = vdwg.mxu0
    %v6057 = vunpack.c.l.b16 %v6007
    %v6058 = vunpack.c.l.b16 %v6008
    %v6059 = vpack.c.b16 %v6058, %v6057
    %v6062 = vsel %vm5867, %v5914, 0
    %6064 = vmatpush.bf16.msra.mxu0 0
    %6065 = vmatpush.bf16.msra.mxu0 0
    %6066 = vmatpush.bf16.msra.mxu0 0
    %6067 = vmatpush.bf16.msra.mxu0 0
    %6068 = vmatpush.bf16.msra.mxu0 0
    %6069 = vmatpush.bf16.msra.mxu0 0
    %6070 = vmatpush.bf16.msra.mxu0 0
    %6071 = vmatpush.bf16.msra.mxu0 %v6059
    %6072 = vmatmul.bf16.gmra.mxu0 %v6062
    %v6073 = vpop.f32.mrf.mxu0
    %v6074 = vadd.f32 0.0, %v6073
    %v6075 = vpop.f32.mrf.mxu0
    %6076 = vdwg.mxu0
    %v6079 = vunpack.c.l.b16 %v6009
    %v6080 = vunpack.c.l.b16 %v6010
    %v6081 = vpack.c.b16 %v6080, %v6079
    %v6084 = vsel %vm5867, %v5915, 0
    %6086 = vmatpush.bf16.msra.mxu0 0
    %6087 = vmatpush.bf16.msra.mxu0 0
    %6088 = vmatpush.bf16.msra.mxu0 0
    %6089 = vmatpush.bf16.msra.mxu0 0
    %6090 = vmatpush.bf16.msra.mxu0 0
    %6091 = vmatpush.bf16.msra.mxu0 0
    %6092 = vmatpush.bf16.msra.mxu0 0
    %6093 = vmatpush.bf16.msra.mxu0 %v6081
    %6094 = vmatmul.bf16.gmra.mxu0 %v6084
    %v6095 = vpop.f32.mrf.mxu0
    %v6096 = vadd.f32 0.0, %v6095
    %v6097 = vpop.f32.mrf.mxu0
    %6098 = vdwg.mxu0
    %v6099 = vrot.slane %v6074, 4
    %v6100 = vsel %vm944, %v6099, %v6030
    %v6101 = vrot.slane %v6030, 4
    %v6102 = vsel %vm944, %v6074, %v6101
    %v6104 = vunpack.c.l.s4 1983009808
    %v6105 = vunpack.c.0.s8 %v6104
    %v6106 = vperm.slane %v6100, %v6105
    %v6108 = vunpack.c.l.s4 1983009808
    %v6109 = vunpack.c.0.s8 %v6108
    %v6110 = vperm.slane %v6102, %v6109
    %v6111 = vrot.slane %v6096, 4
    %v6112 = vsel %vm944, %v6111, %v6052
    %v6113 = vrot.slane %v6052, 4
    %v6114 = vsel %vm944, %v6096, %v6113
    %v6116 = vunpack.c.l.s4 1983009808
    %v6117 = vunpack.c.0.s8 %v6116
    %v6118 = vperm.slane %v6112, %v6117
    %v6120 = vunpack.c.l.s4 1983009808
    %v6121 = vunpack.c.0.s8 %v6120
    %v6122 = vperm.slane %v6114, %v6121
    %v6123 = vrot.slane %v6118, 4
    %v6124 = vsel %vm944, %v6123, %v6106
    %v6125 = vrot.slane %v6106, 4
    %v6126 = vsel %vm944, %v6118, %v6125
    %v6128 = vunpack.c.l.s4 1934713408
    %v6129 = vunpack.c.0.s8 %v6128
    %v6130 = vperm.slane %v6124, %v6129
    %v6132 = vunpack.c.l.s4 1934713408
    %v6133 = vunpack.c.0.s8 %v6132
    %v6134 = vperm.slane %v6126, %v6133
    %v6135 = vrot.slane %v6122, 4
    %v6136 = vsel %vm944, %v6135, %v6110
    %v6137 = vrot.slane %v6110, 4
    %v6138 = vsel %vm944, %v6122, %v6137
    %v6140 = vunpack.c.l.s4 1934713408
    %v6141 = vunpack.c.0.s8 %v6140
    %v6142 = vperm.slane %v6136, %v6141
    %v6144 = vunpack.c.l.s4 1934713408
    %v6145 = vunpack.c.0.s8 %v6144
    %v6146 = vperm.slane %v6138, %v6145
    %v6147 = vrot.slane %v4202, 7
    %v6148 = vrot.slane %v6147, 2
    %v6149 = vrot.slane %v4466, 7
    %v6150 = vrot.slane %v6149, 2
    %v6151 = vrot.slane %v4490, 7
    %v6152 = vrot.slane %v6151, 2
    %v6153 = vrot.slane %v4514, 7
    %v6154 = vrot.slane %v6153, 2
    %v6155 = vrot.slane %v4397, 7
    %v6156 = vrot.slane %v6155, 2
    %v6157 = vrot.slane %v4468, 7
    %v6158 = vrot.slane %v6157, 2
    %v6159 = vrot.slane %v4492, 7
    %v6160 = vrot.slane %v6159, 2
    %v6161 = vrot.slane %v4516, 7
    %v6162 = vrot.slane %v6161, 2
    %v6163 = vrot.slane %v4398, 7
    %v6164 = vrot.slane %v6163, 2
    %v6165 = vrot.slane %v4470, 7
    %v6166 = vrot.slane %v6165, 2
    %v6167 = vrot.slane %v4494, 7
    %v6168 = vrot.slane %v6167, 2
    %v6169 = vrot.slane %v4518, 7
    %v6170 = vrot.slane %v6169, 2
    %v6171 = vrot.slane %v4399, 7
    %v6172 = vrot.slane %v6171, 2
    %v6173 = vrot.slane %v4472, 7
    %v6174 = vrot.slane %v6173, 2
    %v6175 = vrot.slane %v4496, 7
    %v6176 = vrot.slane %v6175, 2
    %v6177 = vrot.slane %v4520, 7
    %v6178 = vrot.slane %v6177, 2
    %v6179 = vrot.slane %v4204, 7
    %v6180 = vrot.slane %v6179, 2
    %v6181 = vrot.slane %v4474, 7
    %v6182 = vrot.slane %v6181, 2
    %v6183 = vrot.slane %v4498, 7
    %v6184 = vrot.slane %v6183, 2
    %v6185 = vrot.slane %v4522, 7
    %v6186 = vrot.slane %v6185, 2
    %v6187 = vrot.slane %v4400, 7
    %v6188 = vrot.slane %v6187, 2
    %v6189 = vrot.slane %v4476, 7
    %v6190 = vrot.slane %v6189, 2
    %v6191 = vrot.slane %v4500, 7
    %v6192 = vrot.slane %v6191, 2
    %v6193 = vrot.slane %v4524, 7
    %v6194 = vrot.slane %v6193, 2
    %v6195 = vrot.slane %v4401, 7
    %v6196 = vrot.slane %v6195, 2
    %v6197 = vrot.slane %v4478, 7
    %v6198 = vrot.slane %v6197, 2
    %v6199 = vrot.slane %v4502, 7
    %v6200 = vrot.slane %v6199, 2
    %v6201 = vrot.slane %v4526, 7
    %v6202 = vrot.slane %v6201, 2
    %v6203 = vrot.slane %v4402, 7
    %v6204 = vrot.slane %v6203, 2
    %v6205 = vrot.slane %v4480, 7
    %v6206 = vrot.slane %v6205, 2
    %v6207 = vrot.slane %v4504, 7
    %v6208 = vrot.slane %v6207, 2
    %v6209 = vrot.slane %v4528, 7
    %v6210 = vrot.slane %v6209, 2
    %v6243 = vrot.slane %v6150, 4
    %v6244 = vsel %vm944, %v6243, %v6148
    %v6246 = vunpack.c.l.s4 1934713408
    %v6247 = vunpack.c.0.s8 %v6246
    %v6248 = vperm.slane %v6244, %v6247
    %v6249 = vrot.slane %v6154, 4
    %v6250 = vsel %vm944, %v6249, %v6152
    %v6252 = vunpack.c.l.s4 1934713408
    %v6253 = vunpack.c.0.s8 %v6252
    %v6254 = vperm.slane %v6250, %v6253
    %v6255 = vrot.slane %v6158, 4
    %v6256 = vsel %vm944, %v6255, %v6156
    %v6258 = vunpack.c.l.s4 1934713408
    %v6259 = vunpack.c.0.s8 %v6258
    %v6260 = vperm.slane %v6256, %v6259
    %v6261 = vrot.slane %v6162, 4
    %v6262 = vsel %vm944, %v6261, %v6160
    %v6264 = vunpack.c.l.s4 1934713408
    %v6265 = vunpack.c.0.s8 %v6264
    %v6266 = vperm.slane %v6262, %v6265
    %v6267 = vrot.slane %v6166, 4
    %v6268 = vsel %vm944, %v6267, %v6164
    %v6270 = vunpack.c.l.s4 1934713408
    %v6271 = vunpack.c.0.s8 %v6270
    %v6272 = vperm.slane %v6268, %v6271
    %v6273 = vrot.slane %v6170, 4
    %v6274 = vsel %vm944, %v6273, %v6168
    %v6276 = vunpack.c.l.s4 1934713408
    %v6277 = vunpack.c.0.s8 %v6276
    %v6278 = vperm.slane %v6274, %v6277
    %v6279 = vrot.slane %v6174, 4
    %v6280 = vsel %vm944, %v6279, %v6172
    %v6282 = vunpack.c.l.s4 1934713408
    %v6283 = vunpack.c.0.s8 %v6282
    %v6284 = vperm.slane %v6280, %v6283
    %v6285 = vrot.slane %v6178, 4
    %v6286 = vsel %vm944, %v6285, %v6176
    %v6288 = vunpack.c.l.s4 1934713408
    %v6289 = vunpack.c.0.s8 %v6288
    %v6290 = vperm.slane %v6286, %v6289
    %v6291 = vrot.slane %v6182, 4
    %v6292 = vsel %vm944, %v6291, %v6180
    %v6294 = vunpack.c.l.s4 1934713408
    %v6295 = vunpack.c.0.s8 %v6294
    %v6296 = vperm.slane %v6292, %v6295
    %v6297 = vrot.slane %v6186, 4
    %v6298 = vsel %vm944, %v6297, %v6184
    %v6300 = vunpack.c.l.s4 1934713408
    %v6301 = vunpack.c.0.s8 %v6300
    %v6302 = vperm.slane %v6298, %v6301
    %v6303 = vrot.slane %v6190, 4
    %v6304 = vsel %vm944, %v6303, %v6188
    %v6306 = vunpack.c.l.s4 1934713408
    %v6307 = vunpack.c.0.s8 %v6306
    %v6308 = vperm.slane %v6304, %v6307
    %v6309 = vrot.slane %v6194, 4
    %v6310 = vsel %vm944, %v6309, %v6192
    %v6312 = vunpack.c.l.s4 1934713408
    %v6313 = vunpack.c.0.s8 %v6312
    %v6314 = vperm.slane %v6310, %v6313
    %v6315 = vrot.slane %v6198, 4
    %v6316 = vsel %vm944, %v6315, %v6196
    %v6318 = vunpack.c.l.s4 1934713408
    %v6319 = vunpack.c.0.s8 %v6318
    %v6320 = vperm.slane %v6316, %v6319
    %v6321 = vrot.slane %v6202, 4
    %v6322 = vsel %vm944, %v6321, %v6200
    %v6324 = vunpack.c.l.s4 1934713408
    %v6325 = vunpack.c.0.s8 %v6324
    %v6326 = vperm.slane %v6322, %v6325
    %v6327 = vrot.slane %v6206, 4
    %v6328 = vsel %vm944, %v6327, %v6204
    %v6330 = vunpack.c.l.s4 1934713408
    %v6331 = vunpack.c.0.s8 %v6330
    %v6332 = vperm.slane %v6328, %v6331
    %v6333 = vrot.slane %v6210, 4
    %v6334 = vsel %vm944, %v6333, %v6208
    %v6336 = vunpack.c.l.s4 1934713408
    %v6337 = vunpack.c.0.s8 %v6336
    %v6338 = vperm.slane %v6334, %v6337
    %v6339 = vrot.slane %v6260, 4
    %v6340 = vsel %vm944, %v6339, %v6248
    %v6342 = vunpack.c.l.s4 1934713408
    %v6343 = vunpack.c.0.s8 %v6342
    %v6344 = vperm.slane %v6340, %v6343
    %v6345 = vrot.slane %v6344, 4
    %v6346 = vsel %vm944, 0.0, %v6345
    %v6347 = vrot.slane %v6284, 4
    %v6348 = vsel %vm944, %v6347, %v6272
    %v6350 = vunpack.c.l.s4 1934713408
    %v6351 = vunpack.c.0.s8 %v6350
    %v6352 = vperm.slane %v6348, %v6351
    %v6353 = vrot.slane %v6352, 4
    %v6354 = vsel %vm944, 0.0, %v6353
    %v6355 = vrot.slane %v6308, 4
    %v6356 = vsel %vm944, %v6355, %v6296
    %v6358 = vunpack.c.l.s4 1934713408
    %v6359 = vunpack.c.0.s8 %v6358
    %v6360 = vperm.slane %v6356, %v6359
    %v6361 = vrot.slane %v6360, 4
    %v6362 = vsel %vm944, 0.0, %v6361
    %v6363 = vrot.slane %v6332, 4
    %v6364 = vsel %vm944, %v6363, %v6320
    %v6366 = vunpack.c.l.s4 1934713408
    %v6367 = vunpack.c.0.s8 %v6366
    %v6368 = vperm.slane %v6364, %v6367
    %v6369 = vrot.slane %v6368, 4
    %v6370 = vsel %vm944, 0.0, %v6369
    %v6371 = vrot.slane %v6266, 4
    %v6372 = vsel %vm944, %v6371, %v6254
    %v6374 = vunpack.c.l.s4 1934713408
    %v6375 = vunpack.c.0.s8 %v6374
    %v6376 = vperm.slane %v6372, %v6375
    %v6377 = vrot.slane %v6376, 4
    %v6378 = vsel %vm944, 0.0, %v6377
    %v6379 = vrot.slane %v6290, 4
    %v6380 = vsel %vm944, %v6379, %v6278
    %v6382 = vunpack.c.l.s4 1934713408
    %v6383 = vunpack.c.0.s8 %v6382
    %v6384 = vperm.slane %v6380, %v6383
    %v6385 = vrot.slane %v6384, 4
    %v6386 = vsel %vm944, 0.0, %v6385
    %v6387 = vrot.slane %v6314, 4
    %v6388 = vsel %vm944, %v6387, %v6302
    %v6390 = vunpack.c.l.s4 1934713408
    %v6391 = vunpack.c.0.s8 %v6390
    %v6392 = vperm.slane %v6388, %v6391
    %v6393 = vrot.slane %v6392, 4
    %v6394 = vsel %vm944, 0.0, %v6393
    %v6395 = vrot.slane %v6338, 4
    %v6396 = vsel %vm944, %v6395, %v6326
    %v6398 = vunpack.c.l.s4 1934713408
    %v6399 = vunpack.c.0.s8 %v6398
    %v6400 = vperm.slane %v6396, %v6399
    %v6401 = vrot.slane %v6400, 4
    %v6402 = vsel %vm944, 0.0, %v6401
    %v6403 = vrot.slane %v4367, 7
    %v6404 = vrot.slane %v6403, 2
    %v6405 = vrot.slane %v4698, 7
    %v6406 = vrot.slane %v6405, 2
    %v6407 = vrot.slane %v4746, 7
    %v6408 = vrot.slane %v6407, 2
    %v6409 = vrot.slane %v4794, 7
    %v6410 = vrot.slane %v6409, 2
    %v6411 = vrot.slane %v4413, 7
    %v6412 = vrot.slane %v6411, 2
    %v6413 = vrot.slane %v4700, 7
    %v6414 = vrot.slane %v6413, 2
    %v6415 = vrot.slane %v4748, 7
    %v6416 = vrot.slane %v6415, 2
    %v6417 = vrot.slane %v4796, 7
    %v6418 = vrot.slane %v6417, 2
    %v6419 = vrot.slane %v4414, 7
    %v6420 = vrot.slane %v6419, 2
    %v6421 = vrot.slane %v4702, 7
    %v6422 = vrot.slane %v6421, 2
    %v6423 = vrot.slane %v4750, 7
    %v6424 = vrot.slane %v6423, 2
    %v6425 = vrot.slane %v4798, 7
    %v6426 = vrot.slane %v6425, 2
    %v6427 = vrot.slane %v4415, 7
    %v6428 = vrot.slane %v6427, 2
    %v6429 = vrot.slane %v4704, 7
    %v6430 = vrot.slane %v6429, 2
    %v6431 = vrot.slane %v4752, 7
    %v6432 = vrot.slane %v6431, 2
    %v6433 = vrot.slane %v4800, 7
    %v6434 = vrot.slane %v6433, 2
    %v6435 = vrot.slane %v4369, 7
    %v6436 = vrot.slane %v6435, 2
    %v6437 = vrot.slane %v4706, 7
    %v6438 = vrot.slane %v6437, 2
    %v6439 = vrot.slane %v4754, 7
    %v6440 = vrot.slane %v6439, 2
    %v6441 = vrot.slane %v4802, 7
    %v6442 = vrot.slane %v6441, 2
    %v6443 = vrot.slane %v4416, 7
    %v6444 = vrot.slane %v6443, 2
    %v6445 = vrot.slane %v4708, 7
    %v6446 = vrot.slane %v6445, 2
    %v6447 = vrot.slane %v4756, 7
    %v6448 = vrot.slane %v6447, 2
    %v6449 = vrot.slane %v4804, 7
    %v6450 = vrot.slane %v6449, 2
    %v6451 = vrot.slane %v4417, 7
    %v6452 = vrot.slane %v6451, 2
    %v6453 = vrot.slane %v4710, 7
    %v6454 = vrot.slane %v6453, 2
    %v6455 = vrot.slane %v4758, 7
    %v6456 = vrot.slane %v6455, 2
    %v6457 = vrot.slane %v4806, 7
    %v6458 = vrot.slane %v6457, 2
    %v6459 = vrot.slane %v4418, 7
    %v6460 = vrot.slane %v6459, 2
    %v6461 = vrot.slane %v4712, 7
    %v6462 = vrot.slane %v6461, 2
    %v6463 = vrot.slane %v4760, 7
    %v6464 = vrot.slane %v6463, 2
    %v6465 = vrot.slane %v4808, 7
    %v6466 = vrot.slane %v6465, 2
    %v6467 = vrot.slane %v4372, 7
    %v6468 = vrot.slane %v6467, 2
    %v6469 = vrot.slane %v4714, 7
    %v6470 = vrot.slane %v6469, 2
    %v6471 = vrot.slane %v4762, 7
    %v6472 = vrot.slane %v6471, 2
    %v6473 = vrot.slane %v4810, 7
    %v6474 = vrot.slane %v6473, 2
    %v6475 = vrot.slane %v4419, 7
    %v6476 = vrot.slane %v6475, 2
    %v6477 = vrot.slane %v4716, 7
    %v6478 = vrot.slane %v6477, 2
    %v6479 = vrot.slane %v4764, 7
    %v6480 = vrot.slane %v6479, 2
    %v6481 = vrot.slane %v4812, 7
    %v6482 = vrot.slane %v6481, 2
    %v6483 = vrot.slane %v4420, 7
    %v6484 = vrot.slane %v6483, 2
    %v6485 = vrot.slane %v4718, 7
    %v6486 = vrot.slane %v6485, 2
    %v6487 = vrot.slane %v4766, 7
    %v6488 = vrot.slane %v6487, 2
    %v6489 = vrot.slane %v4814, 7
    %v6490 = vrot.slane %v6489, 2
    %v6491 = vrot.slane %v4421, 7
    %v6492 = vrot.slane %v6491, 2
    %v6493 = vrot.slane %v4720, 7
    %v6494 = vrot.slane %v6493, 2
    %v6495 = vrot.slane %v4768, 7
    %v6496 = vrot.slane %v6495, 2
    %v6497 = vrot.slane %v4816, 7
    %v6498 = vrot.slane %v6497, 2
    %v6499 = vrot.slane %v4374, 7
    %v6500 = vrot.slane %v6499, 2
    %v6501 = vrot.slane %v4722, 7
    %v6502 = vrot.slane %v6501, 2
    %v6503 = vrot.slane %v4770, 7
    %v6504 = vrot.slane %v6503, 2
    %v6505 = vrot.slane %v4818, 7
    %v6506 = vrot.slane %v6505, 2
    %v6507 = vrot.slane %v4422, 7
    %v6508 = vrot.slane %v6507, 2
    %v6509 = vrot.slane %v4724, 7
    %v6510 = vrot.slane %v6509, 2
    %v6511 = vrot.slane %v4772, 7
    %v6512 = vrot.slane %v6511, 2
    %v6513 = vrot.slane %v4820, 7
    %v6514 = vrot.slane %v6513, 2
    %v6515 = vrot.slane %v4423, 7
    %v6516 = vrot.slane %v6515, 2
    %v6517 = vrot.slane %v4726, 7
    %v6518 = vrot.slane %v6517, 2
    %v6519 = vrot.slane %v4774, 7
    %v6520 = vrot.slane %v6519, 2
    %v6521 = vrot.slane %v4822, 7
    %v6522 = vrot.slane %v6521, 2
    %v6523 = vrot.slane %v4424, 7
    %v6524 = vrot.slane %v6523, 2
    %v6525 = vrot.slane %v4728, 7
    %v6526 = vrot.slane %v6525, 2
    %v6527 = vrot.slane %v4776, 7
    %v6528 = vrot.slane %v6527, 2
    %v6529 = vrot.slane %v4824, 7
    %v6530 = vrot.slane %v6529, 2
    %v6595 = vrot.slane %v6406, 4
    %v6596 = vsel %vm944, %v6595, %v6404
    %v6598 = vunpack.c.l.s4 1934713408
    %v6599 = vunpack.c.0.s8 %v6598
    %v6600 = vperm.slane %v6596, %v6599
    %v6601 = vrot.slane %v6410, 4
    %v6602 = vsel %vm944, %v6601, %v6408
    %v6604 = vunpack.c.l.s4 1934713408
    %v6605 = vunpack.c.0.s8 %v6604
    %v6606 = vperm.slane %v6602, %v6605
    %v6607 = vrot.slane %v6414, 4
    %v6608 = vsel %vm944, %v6607, %v6412
    %v6610 = vunpack.c.l.s4 1934713408
    %v6611 = vunpack.c.0.s8 %v6610
    %v6612 = vperm.slane %v6608, %v6611
    %v6613 = vrot.slane %v6418, 4
    %v6614 = vsel %vm944, %v6613, %v6416
    %v6616 = vunpack.c.l.s4 1934713408
    %v6617 = vunpack.c.0.s8 %v6616
    %v6618 = vperm.slane %v6614, %v6617
    %v6619 = vrot.slane %v6422, 4
    %v6620 = vsel %vm944, %v6619, %v6420
    %v6622 = vunpack.c.l.s4 1934713408
    %v6623 = vunpack.c.0.s8 %v6622
    %v6624 = vperm.slane %v6620, %v6623
    %v6625 = vrot.slane %v6426, 4
    %v6626 = vsel %vm944, %v6625, %v6424
    %v6628 = vunpack.c.l.s4 1934713408
    %v6629 = vunpack.c.0.s8 %v6628
    %v6630 = vperm.slane %v6626, %v6629
    %v6631 = vrot.slane %v6430, 4
    %v6632 = vsel %vm944, %v6631, %v6428
    %v6634 = vunpack.c.l.s4 1934713408
    %v6635 = vunpack.c.0.s8 %v6634
    %v6636 = vperm.slane %v6632, %v6635
    %v6637 = vrot.slane %v6434, 4
    %v6638 = vsel %vm944, %v6637, %v6432
    %v6640 = vunpack.c.l.s4 1934713408
    %v6641 = vunpack.c.0.s8 %v6640
    %v6642 = vperm.slane %v6638, %v6641
    %v6643 = vrot.slane %v6438, 4
    %v6644 = vsel %vm944, %v6643, %v6436
    %v6646 = vunpack.c.l.s4 1934713408
    %v6647 = vunpack.c.0.s8 %v6646
    %v6648 = vperm.slane %v6644, %v6647
    %v6649 = vrot.slane %v6442, 4
    %v6650 = vsel %vm944, %v6649, %v6440
    %v6652 = vunpack.c.l.s4 1934713408
    %v6653 = vunpack.c.0.s8 %v6652
    %v6654 = vperm.slane %v6650, %v6653
    %v6655 = vrot.slane %v6446, 4
    %v6656 = vsel %vm944, %v6655, %v6444
    %v6658 = vunpack.c.l.s4 1934713408
    %v6659 = vunpack.c.0.s8 %v6658
    %v6660 = vperm.slane %v6656, %v6659
    %v6661 = vrot.slane %v6450, 4
    %v6662 = vsel %vm944, %v6661, %v6448
    %v6664 = vunpack.c.l.s4 1934713408
    %v6665 = vunpack.c.0.s8 %v6664
    %v6666 = vperm.slane %v6662, %v6665
    %v6667 = vrot.slane %v6454, 4
    %v6668 = vsel %vm944, %v6667, %v6452
    %v6670 = vunpack.c.l.s4 1934713408
    %v6671 = vunpack.c.0.s8 %v6670
    %v6672 = vperm.slane %v6668, %v6671
    %v6673 = vrot.slane %v6458, 4
    %v6674 = vsel %vm944, %v6673, %v6456
    %v6676 = vunpack.c.l.s4 1934713408
    %v6677 = vunpack.c.0.s8 %v6676
    %v6678 = vperm.slane %v6674, %v6677
    %v6679 = vrot.slane %v6462, 4
    %v6680 = vsel %vm944, %v6679, %v6460
    %v6682 = vunpack.c.l.s4 1934713408
    %v6683 = vunpack.c.0.s8 %v6682
    %v6684 = vperm.slane %v6680, %v6683
    %v6685 = vrot.slane %v6466, 4
    %v6686 = vsel %vm944, %v6685, %v6464
    %v6688 = vunpack.c.l.s4 1934713408
    %v6689 = vunpack.c.0.s8 %v6688
    %v6690 = vperm.slane %v6686, %v6689
    %v6691 = vrot.slane %v6470, 4
    %v6692 = vsel %vm944, %v6691, %v6468
    %v6694 = vunpack.c.l.s4 1934713408
    %v6695 = vunpack.c.0.s8 %v6694
    %v6696 = vperm.slane %v6692, %v6695
    %v6697 = vrot.slane %v6474, 4
    %v6698 = vsel %vm944, %v6697, %v6472
    %v6700 = vunpack.c.l.s4 1934713408
    %v6701 = vunpack.c.0.s8 %v6700
    %v6702 = vperm.slane %v6698, %v6701
    %v6703 = vrot.slane %v6478, 4
    %v6704 = vsel %vm944, %v6703, %v6476
    %v6706 = vunpack.c.l.s4 1934713408
    %v6707 = vunpack.c.0.s8 %v6706
    %v6708 = vperm.slane %v6704, %v6707
    %v6709 = vrot.slane %v6482, 4
    %v6710 = vsel %vm944, %v6709, %v6480
    %v6712 = vunpack.c.l.s4 1934713408
    %v6713 = vunpack.c.0.s8 %v6712
    %v6714 = vperm.slane %v6710, %v6713
    %v6715 = vrot.slane %v6486, 4
    %v6716 = vsel %vm944, %v6715, %v6484
    %v6718 = vunpack.c.l.s4 1934713408
    %v6719 = vunpack.c.0.s8 %v6718
    %v6720 = vperm.slane %v6716, %v6719
    %v6721 = vrot.slane %v6490, 4
    %v6722 = vsel %vm944, %v6721, %v6488
    %v6724 = vunpack.c.l.s4 1934713408
    %v6725 = vunpack.c.0.s8 %v6724
    %v6726 = vperm.slane %v6722, %v6725
    %v6727 = vrot.slane %v6494, 4
    %v6728 = vsel %vm944, %v6727, %v6492
    %v6730 = vunpack.c.l.s4 1934713408
    %v6731 = vunpack.c.0.s8 %v6730
    %v6732 = vperm.slane %v6728, %v6731
    %v6733 = vrot.slane %v6498, 4
    %v6734 = vsel %vm944, %v6733, %v6496
    %v6736 = vunpack.c.l.s4 1934713408
    %v6737 = vunpack.c.0.s8 %v6736
    %v6738 = vperm.slane %v6734, %v6737
    %v6739 = vrot.slane %v6502, 4
    %v6740 = vsel %vm944, %v6739, %v6500
    %v6742 = vunpack.c.l.s4 1934713408
    %v6743 = vunpack.c.0.s8 %v6742
    %v6744 = vperm.slane %v6740, %v6743
    %v6745 = vrot.slane %v6506, 4
    %v6746 = vsel %vm944, %v6745, %v6504
    %v6748 = vunpack.c.l.s4 1934713408
    %v6749 = vunpack.c.0.s8 %v6748
    %v6750 = vperm.slane %v6746, %v6749
    %v6751 = vrot.slane %v6510, 4
    %v6752 = vsel %vm944, %v6751, %v6508
    %v6754 = vunpack.c.l.s4 1934713408
    %v6755 = vunpack.c.0.s8 %v6754
    %v6756 = vperm.slane %v6752, %v6755
    %v6757 = vrot.slane %v6514, 4
    %v6758 = vsel %vm944, %v6757, %v6512
    %v6760 = vunpack.c.l.s4 1934713408
    %v6761 = vunpack.c.0.s8 %v6760
    %v6762 = vperm.slane %v6758, %v6761
    %v6763 = vrot.slane %v6518, 4
    %v6764 = vsel %vm944, %v6763, %v6516
    %v6766 = vunpack.c.l.s4 1934713408
    %v6767 = vunpack.c.0.s8 %v6766
    %v6768 = vperm.slane %v6764, %v6767
    %v6769 = vrot.slane %v6522, 4
    %v6770 = vsel %vm944, %v6769, %v6520
    %v6772 = vunpack.c.l.s4 1934713408
    %v6773 = vunpack.c.0.s8 %v6772
    %v6774 = vperm.slane %v6770, %v6773
    %v6775 = vrot.slane %v6526, 4
    %v6776 = vsel %vm944, %v6775, %v6524
    %v6778 = vunpack.c.l.s4 1934713408
    %v6779 = vunpack.c.0.s8 %v6778
    %v6780 = vperm.slane %v6776, %v6779
    %v6781 = vrot.slane %v6530, 4
    %v6782 = vsel %vm944, %v6781, %v6528
    %v6784 = vunpack.c.l.s4 1934713408
    %v6785 = vunpack.c.0.s8 %v6784
    %v6786 = vperm.slane %v6782, %v6785
    %v6787 = vrot.slane %v6612, 4
    %v6788 = vsel %vm944, %v6787, %v6600
    %v6790 = vunpack.c.l.s4 1934713408
    %v6791 = vunpack.c.0.s8 %v6790
    %v6792 = vperm.slane %v6788, %v6791
    %v6793 = vrot.slane %v6792, 4
    %v6794 = vsel %vm944, 0.0, %v6793
    %v6795 = vrot.slane %v6636, 4
    %v6796 = vsel %vm944, %v6795, %v6624
    %v6798 = vunpack.c.l.s4 1934713408
    %v6799 = vunpack.c.0.s8 %v6798
    %v6800 = vperm.slane %v6796, %v6799
    %v6801 = vrot.slane %v6800, 4
    %v6802 = vsel %vm944, 0.0, %v6801
    %v6803 = vrot.slane %v6660, 4
    %v6804 = vsel %vm944, %v6803, %v6648
    %v6806 = vunpack.c.l.s4 1934713408
    %v6807 = vunpack.c.0.s8 %v6806
    %v6808 = vperm.slane %v6804, %v6807
    %v6809 = vrot.slane %v6808, 4
    %v6810 = vsel %vm944, 0.0, %v6809
    %v6811 = vrot.slane %v6684, 4
    %v6812 = vsel %vm944, %v6811, %v6672
    %v6814 = vunpack.c.l.s4 1934713408
    %v6815 = vunpack.c.0.s8 %v6814
    %v6816 = vperm.slane %v6812, %v6815
    %v6817 = vrot.slane %v6816, 4
    %v6818 = vsel %vm944, 0.0, %v6817
    %v6819 = vrot.slane %v6708, 4
    %v6820 = vsel %vm944, %v6819, %v6696
    %v6822 = vunpack.c.l.s4 1934713408
    %v6823 = vunpack.c.0.s8 %v6822
    %v6824 = vperm.slane %v6820, %v6823
    %v6825 = vrot.slane %v6824, 4
    %v6826 = vsel %vm944, 0.0, %v6825
    %v6827 = vrot.slane %v6732, 4
    %v6828 = vsel %vm944, %v6827, %v6720
    %v6830 = vunpack.c.l.s4 1934713408
    %v6831 = vunpack.c.0.s8 %v6830
    %v6832 = vperm.slane %v6828, %v6831
    %v6833 = vrot.slane %v6832, 4
    %v6834 = vsel %vm944, 0.0, %v6833
    %v6835 = vrot.slane %v6756, 4
    %v6836 = vsel %vm944, %v6835, %v6744
    %v6838 = vunpack.c.l.s4 1934713408
    %v6839 = vunpack.c.0.s8 %v6838
    %v6840 = vperm.slane %v6836, %v6839
    %v6841 = vrot.slane %v6840, 4
    %v6842 = vsel %vm944, 0.0, %v6841
    %v6843 = vrot.slane %v6780, 4
    %v6844 = vsel %vm944, %v6843, %v6768
    %v6846 = vunpack.c.l.s4 1934713408
    %v6847 = vunpack.c.0.s8 %v6846
    %v6848 = vperm.slane %v6844, %v6847
    %v6849 = vrot.slane %v6848, 4
    %v6850 = vsel %vm944, 0.0, %v6849
    %v6851 = vrot.slane %v6618, 4
    %v6852 = vsel %vm944, %v6851, %v6606
    %v6854 = vunpack.c.l.s4 1934713408
    %v6855 = vunpack.c.0.s8 %v6854
    %v6856 = vperm.slane %v6852, %v6855
    %v6857 = vrot.slane %v6856, 4
    %v6858 = vsel %vm944, 0.0, %v6857
    %v6859 = vrot.slane %v6642, 4
    %v6860 = vsel %vm944, %v6859, %v6630
    %v6862 = vunpack.c.l.s4 1934713408
    %v6863 = vunpack.c.0.s8 %v6862
    %v6864 = vperm.slane %v6860, %v6863
    %v6865 = vrot.slane %v6864, 4
    %v6866 = vsel %vm944, 0.0, %v6865
    %v6867 = vrot.slane %v6666, 4
    %v6868 = vsel %vm944, %v6867, %v6654
    %v6870 = vunpack.c.l.s4 1934713408
    %v6871 = vunpack.c.0.s8 %v6870
    %v6872 = vperm.slane %v6868, %v6871
    %v6873 = vrot.slane %v6872, 4
    %v6874 = vsel %vm944, 0.0, %v6873
    %v6875 = vrot.slane %v6690, 4
    %v6876 = vsel %vm944, %v6875, %v6678
    %v6878 = vunpack.c.l.s4 1934713408
    %v6879 = vunpack.c.0.s8 %v6878
    %v6880 = vperm.slane %v6876, %v6879
    %v6881 = vrot.slane %v6880, 4
    %v6882 = vsel %vm944, 0.0, %v6881
    %v6883 = vrot.slane %v6714, 4
    %v6884 = vsel %vm944, %v6883, %v6702
    %v6886 = vunpack.c.l.s4 1934713408
    %v6887 = vunpack.c.0.s8 %v6886
    %v6888 = vperm.slane %v6884, %v6887
    %v6889 = vrot.slane %v6888, 4
    %v6890 = vsel %vm944, 0.0, %v6889
    %v6891 = vrot.slane %v6738, 4
    %v6892 = vsel %vm944, %v6891, %v6726
    %v6894 = vunpack.c.l.s4 1934713408
    %v6895 = vunpack.c.0.s8 %v6894
    %v6896 = vperm.slane %v6892, %v6895
    %v6897 = vrot.slane %v6896, 4
    %v6898 = vsel %vm944, 0.0, %v6897
    %v6899 = vrot.slane %v6762, 4
    %v6900 = vsel %vm944, %v6899, %v6750
    %v6902 = vunpack.c.l.s4 1934713408
    %v6903 = vunpack.c.0.s8 %v6902
    %v6904 = vperm.slane %v6900, %v6903
    %v6905 = vrot.slane %v6904, 4
    %v6906 = vsel %vm944, 0.0, %v6905
    %v6907 = vrot.slane %v6786, 4
    %v6908 = vsel %vm944, %v6907, %v6774
    %v6910 = vunpack.c.l.s4 1934713408
    %v6911 = vunpack.c.0.s8 %v6910
    %v6912 = vperm.slane %v6908, %v6911
    %v6913 = vrot.slane %v6912, 4
    %v6914 = vsel %vm944, 0.0, %v6913
    %v6915 = vrot.slane %v4386, 7
    %v6916 = vrot.slane %v6915, 2
    %v6917 = vrot.slane %v5162, 7
    %v6918 = vrot.slane %v6917, 2
    %v6919 = vrot.slane %v5210, 7
    %v6920 = vrot.slane %v6919, 2
    %v6921 = vrot.slane %v5258, 7
    %v6922 = vrot.slane %v6921, 2
    %v6923 = vrot.slane %v4441, 7
    %v6924 = vrot.slane %v6923, 2
    %v6925 = vrot.slane %v5164, 7
    %v6926 = vrot.slane %v6925, 2
    %v6927 = vrot.slane %v5212, 7
    %v6928 = vrot.slane %v6927, 2
    %v6929 = vrot.slane %v5260, 7
    %v6930 = vrot.slane %v6929, 2
    %v6931 = vrot.slane %v4442, 7
    %v6932 = vrot.slane %v6931, 2
    %v6933 = vrot.slane %v5166, 7
    %v6934 = vrot.slane %v6933, 2
    %v6935 = vrot.slane %v5214, 7
    %v6936 = vrot.slane %v6935, 2
    %v6937 = vrot.slane %v5262, 7
    %v6938 = vrot.slane %v6937, 2
    %v6939 = vrot.slane %v4443, 7
    %v6940 = vrot.slane %v6939, 2
    %v6941 = vrot.slane %v5168, 7
    %v6942 = vrot.slane %v6941, 2
    %v6943 = vrot.slane %v5216, 7
    %v6944 = vrot.slane %v6943, 2
    %v6945 = vrot.slane %v5264, 7
    %v6946 = vrot.slane %v6945, 2
    %v6947 = vrot.slane %v4388, 7
    %v6948 = vrot.slane %v6947, 2
    %v6949 = vrot.slane %v5170, 7
    %v6950 = vrot.slane %v6949, 2
    %v6951 = vrot.slane %v5218, 7
    %v6952 = vrot.slane %v6951, 2
    %v6953 = vrot.slane %v5266, 7
    %v6954 = vrot.slane %v6953, 2
    %v6955 = vrot.slane %v4444, 7
    %v6956 = vrot.slane %v6955, 2
    %v6957 = vrot.slane %v5172, 7
    %v6958 = vrot.slane %v6957, 2
    %v6959 = vrot.slane %v5220, 7
    %v6960 = vrot.slane %v6959, 2
    %v6961 = vrot.slane %v5268, 7
    %v6962 = vrot.slane %v6961, 2
    %v6963 = vrot.slane %v4445, 7
    %v6964 = vrot.slane %v6963, 2
    %v6965 = vrot.slane %v5174, 7
    %v6966 = vrot.slane %v6965, 2
    %v6967 = vrot.slane %v5222, 7
    %v6968 = vrot.slane %v6967, 2
    %v6969 = vrot.slane %v5270, 7
    %v6970 = vrot.slane %v6969, 2
    %v6971 = vrot.slane %v4446, 7
    %v6972 = vrot.slane %v6971, 2
    %v6973 = vrot.slane %v5176, 7
    %v6974 = vrot.slane %v6973, 2
    %v6975 = vrot.slane %v5224, 7
    %v6976 = vrot.slane %v6975, 2
    %v6977 = vrot.slane %v5272, 7
    %v6978 = vrot.slane %v6977, 2
    %v6979 = vrot.slane %v4391, 7
    %v6980 = vrot.slane %v6979, 2
    %v6981 = vrot.slane %v5178, 7
    %v6982 = vrot.slane %v6981, 2
    %v6983 = vrot.slane %v5226, 7
    %v6984 = vrot.slane %v6983, 2
    %v6985 = vrot.slane %v5274, 7
    %v6986 = vrot.slane %v6985, 2
    %v6987 = vrot.slane %v4447, 7
    %v6988 = vrot.slane %v6987, 2
    %v6989 = vrot.slane %v5180, 7
    %v6990 = vrot.slane %v6989, 2
    %v6991 = vrot.slane %v5228, 7
    %v6992 = vrot.slane %v6991, 2
    %v6993 = vrot.slane %v5276, 7
    %v6994 = vrot.slane %v6993, 2
    %v6995 = vrot.slane %v4448, 7
    %v6996 = vrot.slane %v6995, 2
    %v6997 = vrot.slane %v5182, 7
    %v6998 = vrot.slane %v6997, 2
    %v6999 = vrot.slane %v5230, 7
    %v7000 = vrot.slane %v6999, 2
    %v7001 = vrot.slane %v5278, 7
    %v7002 = vrot.slane %v7001, 2
    %v7003 = vrot.slane %v4449, 7
    %v7004 = vrot.slane %v7003, 2
    %v7005 = vrot.slane %v5184, 7
    %v7006 = vrot.slane %v7005, 2
    %v7007 = vrot.slane %v5232, 7
    %v7008 = vrot.slane %v7007, 2
    %v7009 = vrot.slane %v5280, 7
    %v7010 = vrot.slane %v7009, 2
    %v7011 = vrot.slane %v4393, 7
    %v7012 = vrot.slane %v7011, 2
    %v7013 = vrot.slane %v5186, 7
    %v7014 = vrot.slane %v7013, 2
    %v7015 = vrot.slane %v5234, 7
    %v7016 = vrot.slane %v7015, 2
    %v7017 = vrot.slane %v5282, 7
    %v7018 = vrot.slane %v7017, 2
    %v7019 = vrot.slane %v4450, 7
    %v7020 = vrot.slane %v7019, 2
    %v7021 = vrot.slane %v5188, 7
    %v7022 = vrot.slane %v7021, 2
    %v7023 = vrot.slane %v5236, 7
    %v7024 = vrot.slane %v7023, 2
    %v7025 = vrot.slane %v5284, 7
    %v7026 = vrot.slane %v7025, 2
    %v7027 = vrot.slane %v4451, 7
    %v7028 = vrot.slane %v7027, 2
    %v7029 = vrot.slane %v5190, 7
    %v7030 = vrot.slane %v7029, 2
    %v7031 = vrot.slane %v5238, 7
    %v7032 = vrot.slane %v7031, 2
    %v7033 = vrot.slane %v5286, 7
    %v7034 = vrot.slane %v7033, 2
    %v7035 = vrot.slane %v4452, 7
    %v7036 = vrot.slane %v7035, 2
    %v7037 = vrot.slane %v5192, 7
    %v7038 = vrot.slane %v7037, 2
    %v7039 = vrot.slane %v5240, 7
    %v7040 = vrot.slane %v7039, 2
    %v7041 = vrot.slane %v5288, 7
    %v7042 = vrot.slane %v7041, 2
    %v7107 = vrot.slane %v6918, 4
    %v7108 = vsel %vm944, %v7107, %v6916
    %v7110 = vunpack.c.l.s4 1934713408
    %v7111 = vunpack.c.0.s8 %v7110
    %v7112 = vperm.slane %v7108, %v7111
    %v7113 = vrot.slane %v6922, 4
    %v7114 = vsel %vm944, %v7113, %v6920
    %v7116 = vunpack.c.l.s4 1934713408
    %v7117 = vunpack.c.0.s8 %v7116
    %v7118 = vperm.slane %v7114, %v7117
    %v7119 = vrot.slane %v6926, 4
    %v7120 = vsel %vm944, %v7119, %v6924
    %v7122 = vunpack.c.l.s4 1934713408
    %v7123 = vunpack.c.0.s8 %v7122
    %v7124 = vperm.slane %v7120, %v7123
    %v7125 = vrot.slane %v6930, 4
    %v7126 = vsel %vm944, %v7125, %v6928
    %v7128 = vunpack.c.l.s4 1934713408
    %v7129 = vunpack.c.0.s8 %v7128
    %v7130 = vperm.slane %v7126, %v7129
    %v7131 = vrot.slane %v6934, 4
    %v7132 = vsel %vm944, %v7131, %v6932
    %v7134 = vunpack.c.l.s4 1934713408
    %v7135 = vunpack.c.0.s8 %v7134
    %v7136 = vperm.slane %v7132, %v7135
    %v7137 = vrot.slane %v6938, 4
    %v7138 = vsel %vm944, %v7137, %v6936
    %v7140 = vunpack.c.l.s4 1934713408
    %v7141 = vunpack.c.0.s8 %v7140
    %v7142 = vperm.slane %v7138, %v7141
    %v7143 = vrot.slane %v6942, 4
    %v7144 = vsel %vm944, %v7143, %v6940
    %v7146 = vunpack.c.l.s4 1934713408
    %v7147 = vunpack.c.0.s8 %v7146
    %v7148 = vperm.slane %v7144, %v7147
    %v7149 = vrot.slane %v6946, 4
    %v7150 = vsel %vm944, %v7149, %v6944
    %v7152 = vunpack.c.l.s4 1934713408
    %v7153 = vunpack.c.0.s8 %v7152
    %v7154 = vperm.slane %v7150, %v7153
    %v7155 = vrot.slane %v6950, 4
    %v7156 = vsel %vm944, %v7155, %v6948
    %v7158 = vunpack.c.l.s4 1934713408
    %v7159 = vunpack.c.0.s8 %v7158
    %v7160 = vperm.slane %v7156, %v7159
    %v7161 = vrot.slane %v6954, 4
    %v7162 = vsel %vm944, %v7161, %v6952
    %v7164 = vunpack.c.l.s4 1934713408
    %v7165 = vunpack.c.0.s8 %v7164
    %v7166 = vperm.slane %v7162, %v7165
    %v7167 = vrot.slane %v6958, 4
    %v7168 = vsel %vm944, %v7167, %v6956
    %v7170 = vunpack.c.l.s4 1934713408
    %v7171 = vunpack.c.0.s8 %v7170
    %v7172 = vperm.slane %v7168, %v7171
    %v7173 = vrot.slane %v6962, 4
    %v7174 = vsel %vm944, %v7173, %v6960
    %v7176 = vunpack.c.l.s4 1934713408
    %v7177 = vunpack.c.0.s8 %v7176
    %v7178 = vperm.slane %v7174, %v7177
    %v7179 = vrot.slane %v6966, 4
    %v7180 = vsel %vm944, %v7179, %v6964
    %v7182 = vunpack.c.l.s4 1934713408
    %v7183 = vunpack.c.0.s8 %v7182
    %v7184 = vperm.slane %v7180, %v7183
    %v7185 = vrot.slane %v6970, 4
    %v7186 = vsel %vm944, %v7185, %v6968
    %v7188 = vunpack.c.l.s4 1934713408
    %v7189 = vunpack.c.0.s8 %v7188
    %v7190 = vperm.slane %v7186, %v7189
    %v7191 = vrot.slane %v6974, 4
    %v7192 = vsel %vm944, %v7191, %v6972
    %v7194 = vunpack.c.l.s4 1934713408
    %v7195 = vunpack.c.0.s8 %v7194
    %v7196 = vperm.slane %v7192, %v7195
    %v7197 = vrot.slane %v6978, 4
    %v7198 = vsel %vm944, %v7197, %v6976
    %v7200 = vunpack.c.l.s4 1934713408
    %v7201 = vunpack.c.0.s8 %v7200
    %v7202 = vperm.slane %v7198, %v7201
    %v7203 = vrot.slane %v6982, 4
    %v7204 = vsel %vm944, %v7203, %v6980
    %v7206 = vunpack.c.l.s4 1934713408
    %v7207 = vunpack.c.0.s8 %v7206
    %v7208 = vperm.slane %v7204, %v7207
    %v7209 = vrot.slane %v6986, 4
    %v7210 = vsel %vm944, %v7209, %v6984
    %v7212 = vunpack.c.l.s4 1934713408
    %v7213 = vunpack.c.0.s8 %v7212
    %v7214 = vperm.slane %v7210, %v7213
    %v7215 = vrot.slane %v6990, 4
    %v7216 = vsel %vm944, %v7215, %v6988
    %v7218 = vunpack.c.l.s4 1934713408
    %v7219 = vunpack.c.0.s8 %v7218
    %v7220 = vperm.slane %v7216, %v7219
    %v7221 = vrot.slane %v6994, 4
    %v7222 = vsel %vm944, %v7221, %v6992
    %v7224 = vunpack.c.l.s4 1934713408
    %v7225 = vunpack.c.0.s8 %v7224
    %v7226 = vperm.slane %v7222, %v7225
    %v7227 = vrot.slane %v6998, 4
    %v7228 = vsel %vm944, %v7227, %v6996
    %v7230 = vunpack.c.l.s4 1934713408
    %v7231 = vunpack.c.0.s8 %v7230
    %v7232 = vperm.slane %v7228, %v7231
    %v7233 = vrot.slane %v7002, 4
    %v7234 = vsel %vm944, %v7233, %v7000
    %v7236 = vunpack.c.l.s4 1934713408
    %v7237 = vunpack.c.0.s8 %v7236
    %v7238 = vperm.slane %v7234, %v7237
    %v7239 = vrot.slane %v7006, 4
    %v7240 = vsel %vm944, %v7239, %v7004
    %v7242 = vunpack.c.l.s4 1934713408
    %v7243 = vunpack.c.0.s8 %v7242
    %v7244 = vperm.slane %v7240, %v7243
    %v7245 = vrot.slane %v7010, 4
    %v7246 = vsel %vm944, %v7245, %v7008
    %v7248 = vunpack.c.l.s4 1934713408
    %v7249 = vunpack.c.0.s8 %v7248
    %v7250 = vperm.slane %v7246, %v7249
    %v7251 = vrot.slane %v7014, 4
    %v7252 = vsel %vm944, %v7251, %v7012
    %v7254 = vunpack.c.l.s4 1934713408
    %v7255 = vunpack.c.0.s8 %v7254
    %v7256 = vperm.slane %v7252, %v7255
    %v7257 = vrot.slane %v7018, 4
    %v7258 = vsel %vm944, %v7257, %v7016
    %v7260 = vunpack.c.l.s4 1934713408
    %v7261 = vunpack.c.0.s8 %v7260
    %v7262 = vperm.slane %v7258, %v7261
    %v7263 = vrot.slane %v7022, 4
    %v7264 = vsel %vm944, %v7263, %v7020
    %v7266 = vunpack.c.l.s4 1934713408
    %v7267 = vunpack.c.0.s8 %v7266
    %v7268 = vperm.slane %v7264, %v7267
    %v7269 = vrot.slane %v7026, 4
    %v7270 = vsel %vm944, %v7269, %v7024
    %v7272 = vunpack.c.l.s4 1934713408
    %v7273 = vunpack.c.0.s8 %v7272
    %v7274 = vperm.slane %v7270, %v7273
    %v7275 = vrot.slane %v7030, 4
    %v7276 = vsel %vm944, %v7275, %v7028
    %v7278 = vunpack.c.l.s4 1934713408
    %v7279 = vunpack.c.0.s8 %v7278
    %v7280 = vperm.slane %v7276, %v7279
    %v7281 = vrot.slane %v7034, 4
    %v7282 = vsel %vm944, %v7281, %v7032
    %v7284 = vunpack.c.l.s4 1934713408
    %v7285 = vunpack.c.0.s8 %v7284
    %v7286 = vperm.slane %v7282, %v7285
    %v7287 = vrot.slane %v7038, 4
    %v7288 = vsel %vm944, %v7287, %v7036
    %v7290 = vunpack.c.l.s4 1934713408
    %v7291 = vunpack.c.0.s8 %v7290
    %v7292 = vperm.slane %v7288, %v7291
    %v7293 = vrot.slane %v7042, 4
    %v7294 = vsel %vm944, %v7293, %v7040
    %v7296 = vunpack.c.l.s4 1934713408
    %v7297 = vunpack.c.0.s8 %v7296
    %v7298 = vperm.slane %v7294, %v7297
    %v7299 = vrot.slane %v7124, 4
    %v7300 = vsel %vm944, %v7299, %v7112
    %v7302 = vunpack.c.l.s4 1934713408
    %v7303 = vunpack.c.0.s8 %v7302
    %v7304 = vperm.slane %v7300, %v7303
    %v7305 = vrot.slane %v7304, 4
    %v7306 = vsel %vm944, 0.0, %v7305
    %v7307 = vrot.slane %v7148, 4
    %v7308 = vsel %vm944, %v7307, %v7136
    %v7310 = vunpack.c.l.s4 1934713408
    %v7311 = vunpack.c.0.s8 %v7310
    %v7312 = vperm.slane %v7308, %v7311
    %v7313 = vrot.slane %v7312, 4
    %v7314 = vsel %vm944, 0.0, %v7313
    %v7315 = vrot.slane %v7172, 4
    %v7316 = vsel %vm944, %v7315, %v7160
    %v7318 = vunpack.c.l.s4 1934713408
    %v7319 = vunpack.c.0.s8 %v7318
    %v7320 = vperm.slane %v7316, %v7319
    %v7321 = vrot.slane %v7320, 4
    %v7322 = vsel %vm944, 0.0, %v7321
    %v7323 = vrot.slane %v7196, 4
    %v7324 = vsel %vm944, %v7323, %v7184
    %v7326 = vunpack.c.l.s4 1934713408
    %v7327 = vunpack.c.0.s8 %v7326
    %v7328 = vperm.slane %v7324, %v7327
    %v7329 = vrot.slane %v7328, 4
    %v7330 = vsel %vm944, 0.0, %v7329
    %v7331 = vrot.slane %v7220, 4
    %v7332 = vsel %vm944, %v7331, %v7208
    %v7334 = vunpack.c.l.s4 1934713408
    %v7335 = vunpack.c.0.s8 %v7334
    %v7336 = vperm.slane %v7332, %v7335
    %v7337 = vrot.slane %v7336, 4
    %v7338 = vsel %vm944, 0.0, %v7337
    %v7339 = vrot.slane %v7244, 4
    %v7340 = vsel %vm944, %v7339, %v7232
    %v7342 = vunpack.c.l.s4 1934713408
    %v7343 = vunpack.c.0.s8 %v7342
    %v7344 = vperm.slane %v7340, %v7343
    %v7345 = vrot.slane %v7344, 4
    %v7346 = vsel %vm944, 0.0, %v7345
    %v7347 = vrot.slane %v7268, 4
    %v7348 = vsel %vm944, %v7347, %v7256
    %v7350 = vunpack.c.l.s4 1934713408
    %v7351 = vunpack.c.0.s8 %v7350
    %v7352 = vperm.slane %v7348, %v7351
    %v7353 = vrot.slane %v7352, 4
    %v7354 = vsel %vm944, 0.0, %v7353
    %v7355 = vrot.slane %v7292, 4
    %v7356 = vsel %vm944, %v7355, %v7280
    %v7358 = vunpack.c.l.s4 1934713408
    %v7359 = vunpack.c.0.s8 %v7358
    %v7360 = vperm.slane %v7356, %v7359
    %v7361 = vrot.slane %v7360, 4
    %v7362 = vsel %vm944, 0.0, %v7361
    %v7363 = vrot.slane %v7130, 4
    %v7364 = vsel %vm944, %v7363, %v7118
    %v7366 = vunpack.c.l.s4 1934713408
    %v7367 = vunpack.c.0.s8 %v7366
    %v7368 = vperm.slane %v7364, %v7367
    %v7369 = vrot.slane %v7368, 4
    %v7370 = vsel %vm944, 0.0, %v7369
    %v7371 = vrot.slane %v7154, 4
    %v7372 = vsel %vm944, %v7371, %v7142
    %v7374 = vunpack.c.l.s4 1934713408
    %v7375 = vunpack.c.0.s8 %v7374
    %v7376 = vperm.slane %v7372, %v7375
    %v7377 = vrot.slane %v7376, 4
    %v7378 = vsel %vm944, 0.0, %v7377
    %v7379 = vrot.slane %v7178, 4
    %v7380 = vsel %vm944, %v7379, %v7166
    %v7382 = vunpack.c.l.s4 1934713408
    %v7383 = vunpack.c.0.s8 %v7382
    %v7384 = vperm.slane %v7380, %v7383
    %v7385 = vrot.slane %v7384, 4
    %v7386 = vsel %vm944, 0.0, %v7385
    %v7387 = vrot.slane %v7202, 4
    %v7388 = vsel %vm944, %v7387, %v7190
    %v7390 = vunpack.c.l.s4 1934713408
    %v7391 = vunpack.c.0.s8 %v7390
    %v7392 = vperm.slane %v7388, %v7391
    %v7393 = vrot.slane %v7392, 4
    %v7394 = vsel %vm944, 0.0, %v7393
    %v7395 = vrot.slane %v7226, 4
    %v7396 = vsel %vm944, %v7395, %v7214
    %v7398 = vunpack.c.l.s4 1934713408
    %v7399 = vunpack.c.0.s8 %v7398
    %v7400 = vperm.slane %v7396, %v7399
    %v7401 = vrot.slane %v7400, 4
    %v7402 = vsel %vm944, 0.0, %v7401
    %v7403 = vrot.slane %v7250, 4
    %v7404 = vsel %vm944, %v7403, %v7238
    %v7406 = vunpack.c.l.s4 1934713408
    %v7407 = vunpack.c.0.s8 %v7406
    %v7408 = vperm.slane %v7404, %v7407
    %v7409 = vrot.slane %v7408, 4
    %v7410 = vsel %vm944, 0.0, %v7409
    %v7411 = vrot.slane %v7274, 4
    %v7412 = vsel %vm944, %v7411, %v7262
    %v7414 = vunpack.c.l.s4 1934713408
    %v7415 = vunpack.c.0.s8 %v7414
    %v7416 = vperm.slane %v7412, %v7415
    %v7417 = vrot.slane %v7416, 4
    %v7418 = vsel %vm944, 0.0, %v7417
    %v7419 = vrot.slane %v7298, 4
    %v7420 = vsel %vm944, %v7419, %v7286
    %v7422 = vunpack.c.l.s4 1934713408
    %v7423 = vunpack.c.0.s8 %v7422
    %v7424 = vperm.slane %v7420, %v7423
    %v7425 = vrot.slane %v7424, 4
    %v7426 = vsel %vm944, 0.0, %v7425
    %7443 = vst [vmem:[#allocation1] ss:$4 sm:$0xff] %v6344
    %s7444 = scalar_lea.vmem [#allocation1], 1
    %7445 = vst [vmem:[%s7444] ss:$4 sm:$0xff] %v6352
    %s7446 = scalar_lea.vmem [#allocation1], 2
    %7447 = vst [vmem:[%s7446] ss:$4 sm:$0xff] %v6360
    %s7448 = scalar_lea.vmem [#allocation1], 3
    %7449 = vst [vmem:[%s7448] ss:$4 sm:$0xff] %v6368
    %v7450 = vld.sshfl [vmem:[#allocation1] sm:$0xff pattern:$0x73625140]
    %s7451 = scalar_lea.vmem [#allocation1], 32
    %7452 = vst [vmem:[%s7451] ss:$4 sm:$0xff] %v6346
    %s7453 = scalar_lea.vmem [#allocation1], 33
    %7454 = vst [vmem:[%s7453] ss:$4 sm:$0xff] %v6354
    %s7455 = scalar_lea.vmem [#allocation1], 34
    %7456 = vst [vmem:[%s7455] ss:$4 sm:$0xff] %v6362
    %s7457 = scalar_lea.vmem [#allocation1], 35
    %7458 = vst [vmem:[%s7457] ss:$4 sm:$0xff] %v6370
    %v7459 = vld.sshfl [vmem:[#allocation1 + $0x20] sm:$0xff pattern:$0x73625140]
    %7460 = vst [vmem:[#allocation1] ss:$4 sm:$0xff] %v6376
    %7461 = vst [vmem:[%s7444] ss:$4 sm:$0xff] %v6384
    %7462 = vst [vmem:[%s7446] ss:$4 sm:$0xff] %v6392
    %7463 = vst [vmem:[%s7448] ss:$4 sm:$0xff] %v6400
    %v7464 = vld.sshfl [vmem:[#allocation1] sm:$0xff pattern:$0x73625140]
    %7465 = vst [vmem:[%s7451] ss:$4 sm:$0xff] %v6378
    %7466 = vst [vmem:[%s7453] ss:$4 sm:$0xff] %v6386
    %7467 = vst [vmem:[%s7455] ss:$4 sm:$0xff] %v6394
    %7468 = vst [vmem:[%s7457] ss:$4 sm:$0xff] %v6402
    %v7469 = vld.sshfl [vmem:[#allocation1 + $0x20] sm:$0xff pattern:$0x73625140]
    %v7474 = vpack.c.bf16 %v7450, %v7450
    %v7475 = vpack.c.bf16 %v7459, %v7459
    %v7476 = vpack.c.bf16 %v7464, %v7464
    %v7477 = vpack.c.bf16 %v7469, %v7469
    %7510 = vst [vmem:[#allocation1] ss:$4 sm:$0xff] %v6792
    %s7511 = scalar_lea.vmem [#allocation1], 1
    %7512 = vst [vmem:[%s7511] ss:$4 sm:$0xff] %v6800
    %s7513 = scalar_lea.vmem [#allocation1], 2
    %7514 = vst [vmem:[%s7513] ss:$4 sm:$0xff] %v6808
    %s7515 = scalar_lea.vmem [#allocation1], 3
    %7516 = vst [vmem:[%s7515] ss:$4 sm:$0xff] %v6816
    %s7517 = scalar_lea.vmem [#allocation1], 32
    %7518 = vst [vmem:[%s7517] ss:$4 sm:$0xff] %v6824
    %s7519 = scalar_lea.vmem [#allocation1], 33
    %7520 = vst [vmem:[%s7519] ss:$4 sm:$0xff] %v6832
    %s7521 = scalar_lea.vmem [#allocation1], 34
    %7522 = vst [vmem:[%s7521] ss:$4 sm:$0xff] %v6840
    %s7523 = scalar_lea.vmem [#allocation1], 35
    %7524 = vst [vmem:[%s7523] ss:$4 sm:$0xff] %v6848
    %v7525 = vld.sshfl [vmem:[#allocation1] sm:$0xff pattern:$0x73625140]
    %v7526 = vld.sshfl [vmem:[#allocation1 + $0x20] sm:$0xff pattern:$0x73625140]
    %7527 = vst [vmem:[#allocation1] ss:$4 sm:$0xff] %v6794
    %7528 = vst [vmem:[%s7511] ss:$4 sm:$0xff] %v6802
    %7529 = vst [vmem:[%s7513] ss:$4 sm:$0xff] %v6810
    %7530 = vst [vmem:[%s7515] ss:$4 sm:$0xff] %v6818
    %7531 = vst [vmem:[%s7517] ss:$4 sm:$0xff] %v6826
    %7532 = vst [vmem:[%s7519] ss:$4 sm:$0xff] %v6834
    %7533 = vst [vmem:[%s7521] ss:$4 sm:$0xff] %v6842
    %7534 = vst [vmem:[%s7523] ss:$4 sm:$0xff] %v6850
    %v7535 = vld.sshfl [vmem:[#allocation1] sm:$0xff pattern:$0x73625140]
    %v7536 = vld.sshfl [vmem:[#allocation1 + $0x20] sm:$0xff pattern:$0x73625140]
    %7537 = vst [vmem:[#allocation1] ss:$4 sm:$0xff] %v6856
    %7538 = vst [vmem:[%s7511] ss:$4 sm:$0xff] %v6864
    %7539 = vst [vmem:[%s7513] ss:$4 sm:$0xff] %v6872
    %7540 = vst [vmem:[%s7515] ss:$4 sm:$0xff] %v6880
    %7541 = vst [vmem:[%s7517] ss:$4 sm:$0xff] %v6888
    %7542 = vst [vmem:[%s7519] ss:$4 sm:$0xff] %v6896
    %7543 = vst [vmem:[%s7521] ss:$4 sm:$0xff] %v6904
    %7544 = vst [vmem:[%s7523] ss:$4 sm:$0xff] %v6912
    %v7545 = vld.sshfl [vmem:[#allocation1] sm:$0xff pattern:$0x73625140]
    %v7546 = vld.sshfl [vmem:[#allocation1 + $0x20] sm:$0xff pattern:$0x73625140]
    %7547 = vst [vmem:[#allocation1] ss:$4 sm:$0xff] %v6858
    %7548 = vst [vmem:[%s7511] ss:$4 sm:$0xff] %v6866
    %7549 = vst [vmem:[%s7513] ss:$4 sm:$0xff] %v6874
    %7550 = vst [vmem:[%s7515] ss:$4 sm:$0xff] %v6882
    %7551 = vst [vmem:[%s7517] ss:$4 sm:$0xff] %v6890
    %7552 = vst [vmem:[%s7519] ss:$4 sm:$0xff] %v6898
    %7553 = vst [vmem:[%s7521] ss:$4 sm:$0xff] %v6906
    %7554 = vst [vmem:[%s7523] ss:$4 sm:$0xff] %v6914
    %v7555 = vld.sshfl [vmem:[#allocation1] sm:$0xff pattern:$0x73625140]
    %v7556 = vld.sshfl [vmem:[#allocation1 + $0x20] sm:$0xff pattern:$0x73625140]
    %v7565 = vpack.c.bf16 %v7525, %v7525
    %v7566 = vpack.c.bf16 %v7526, %v7526
    %v7567 = vpack.c.bf16 %v7535, %v7535
    %v7568 = vpack.c.bf16 %v7536, %v7536
    %v7569 = vpack.c.bf16 %v7545, %v7545
    %v7570 = vpack.c.bf16 %v7546, %v7546
    %v7571 = vpack.c.bf16 %v7555, %v7555
    %v7572 = vpack.c.bf16 %v7556, %v7556
    %v7575 = vunpack.c.l.b16 %v7565
    %v7576 = vunpack.c.l.b16 %v7566
    %v7577 = vpack.c.b16 %v7576, %v7575
    %v7579 = vsel %vm1670, %v7474, 0
    %v7582 = vsel %vm1670, %v7577, 0
    %7584 = vmatpush.bf16.xpose.msra.mxu0 0
    %7585 = vmatpush.bf16.xpose.msra.mxu0 0
    %7586 = vmatpush.bf16.xpose.msra.mxu0 0
    %7587 = vmatpush.bf16.xpose.msra.mxu0 0
    %7588 = vmatpush.bf16.xpose.msra.mxu0 0
    %7589 = vmatpush.bf16.xpose.msra.mxu0 0
    %7590 = vmatpush.bf16.xpose.msra.mxu0 0
    %7591 = vmatpush.bf16.xpose.msra.mxu0 %v7582
    %7592 = vmatmul.bf16.gmra.mxu0 %v7579
    %v7593 = vpop.f32.mrf.mxu0
    %v7594 = vadd.f32 %v327, %v7593
    %v7595 = vpop.f32.mrf.mxu0
    %7596 = vdwg.mxu0
    %v7599 = vunpack.c.l.b16 %v7567
    %v7600 = vunpack.c.l.b16 %v7568
    %v7601 = vpack.c.b16 %v7600, %v7599
    %v7603 = vsel %vm1670, %v7475, 0
    %v7606 = vsel %vm1670, %v7601, 0
    %7608 = vmatpush.bf16.xpose.msra.mxu0 0
    %7609 = vmatpush.bf16.xpose.msra.mxu0 0
    %7610 = vmatpush.bf16.xpose.msra.mxu0 0
    %7611 = vmatpush.bf16.xpose.msra.mxu0 0
    %7612 = vmatpush.bf16.xpose.msra.mxu0 0
    %7613 = vmatpush.bf16.xpose.msra.mxu0 0
    %7614 = vmatpush.bf16.xpose.msra.mxu0 0
    %7615 = vmatpush.bf16.xpose.msra.mxu0 %v7606
    %7616 = vmatmul.bf16.gmra.mxu0 %v7603
    %v7617 = vpop.f32.mrf.mxu0
    %v7618 = vadd.f32 %v327, %v7617
    %v7619 = vpop.f32.mrf.mxu0
    %7620 = vdwg.mxu0
    %v7623 = vunpack.c.l.b16 %v7569
    %v7624 = vunpack.c.l.b16 %v7570
    %v7625 = vpack.c.b16 %v7624, %v7623
    %v7627 = vsel %vm1670, %v7476, 0
    %v7630 = vsel %vm1670, %v7625, 0
    %7632 = vmatpush.bf16.xpose.msra.mxu0 0
    %7633 = vmatpush.bf16.xpose.msra.mxu0 0
    %7634 = vmatpush.bf16.xpose.msra.mxu0 0
    %7635 = vmatpush.bf16.xpose.msra.mxu0 0
    %7636 = vmatpush.bf16.xpose.msra.mxu0 0
    %7637 = vmatpush.bf16.xpose.msra.mxu0 0
    %7638 = vmatpush.bf16.xpose.msra.mxu0 0
    %7639 = vmatpush.bf16.xpose.msra.mxu0 %v7630
    %7640 = vmatmul.bf16.gmra.mxu0 %v7627
    %v7641 = vpop.f32.mrf.mxu0
    %v7642 = vadd.f32 %v327, %v7641
    %v7643 = vpop.f32.mrf.mxu0
    %7644 = vdwg.mxu0
    %v7647 = vunpack.c.l.b16 %v7571
    %v7648 = vunpack.c.l.b16 %v7572
    %v7649 = vpack.c.b16 %v7648, %v7647
    %v7651 = vsel %vm1670, %v7477, 0
    %v7654 = vsel %vm1670, %v7649, 0
    %7656 = vmatpush.bf16.xpose.msra.mxu0 0
    %7657 = vmatpush.bf16.xpose.msra.mxu0 0
    %7658 = vmatpush.bf16.xpose.msra.mxu0 0
    %7659 = vmatpush.bf16.xpose.msra.mxu0 0
    %7660 = vmatpush.bf16.xpose.msra.mxu0 0
    %7661 = vmatpush.bf16.xpose.msra.mxu0 0
    %7662 = vmatpush.bf16.xpose.msra.mxu0 0
    %7663 = vmatpush.bf16.xpose.msra.mxu0 %v7654
    %7664 = vmatmul.bf16.gmra.mxu0 %v7651
    %v7665 = vpop.f32.mrf.mxu0
    %v7666 = vadd.f32 %v327, %v7665
    %v7667 = vpop.f32.mrf.mxu0
    %7668 = vdwg.mxu0
    %v7669 = vsel %vm5867, %v7594, -inf
    %7670 = vmax.xlane.f32.xlu0 %v7669
    %v7671 = vpop.xlane.xlu0 %7670
    %v7672 = vsel %vm5867, %v7618, -inf
    %7673 = vmax.xlane.f32.xlu0 %v7672
    %v7674 = vpop.xlane.xlu0 %7673
    %v7675 = vsel %vm5867, %v7642, -inf
    %7676 = vmax.xlane.f32.xlu0 %v7675
    %v7677 = vpop.xlane.xlu0 %7676
    %v7678 = vsel %vm5867, %v7666, -inf
    %7679 = vmax.xlane.f32.xlu0 %v7678
    %v7680 = vpop.xlane.xlu0 %7679
    %v7681 = vsub.f32 %v7594, %v7671
    %v7682 = vsub.f32 %v7618, %v7674
    %v7683 = vsub.f32 %v7642, %v7677
    %v7684 = vsub.f32 %v7666, %v7680
    %v7685 = vmul.f32 %v7681, 1.442695
    %v7686 = vpow.pop %v7685
    %v7687 = vmul.f32 %v7682, 1.442695
    %v7688 = vpow.pop %v7687
    %v7689 = vmul.f32 %v7683, 1.442695
    %v7690 = vpow.pop %v7689
    %v7691 = vmul.f32 %v7684, 1.442695
    %v7692 = vpow.pop %v7691
    %v7693 = vsel %vm5867, %v7686, 0.0
    %7694 = vadd.xlane.f32.xlu0 %v7693
    %v7695 = vpop.xlane.xlu0 %7694
    %v7696 = vsel %vm5867, %v7688, 0.0
    %7697 = vadd.xlane.f32.xlu0 %v7696
    %v7698 = vpop.xlane.xlu0 %7697
    %v7699 = vsel %vm5867, %v7690, 0.0
    %7700 = vadd.xlane.f32.xlu0 %v7699
    %v7701 = vpop.xlane.xlu0 %7700
    %v7702 = vsel %vm5867, %v7692, 0.0
    %7703 = vadd.xlane.f32.xlu0 %v7702
    %v7704 = vpop.xlane.xlu0 %7703
    %v7705 = vrcp.pop %v7695
    %v7706 = vrcp.pop %v7698
    %v7707 = vrcp.pop %v7701
    %v7708 = vrcp.pop %v7704
    %v7709 = vmul.f32 %v7686, %v7705
    %v7710 = vmul.f32 %v7688, %v7706
    %v7711 = vmul.f32 %v7690, %v7707
    %v7712 = vmul.f32 %v7692, %v7708
    %v7713 = vpack.c.bf16 %v7709, %v7709
    %v7714 = vpack.c.bf16 %v7710, %v7710
    %v7715 = vpack.c.bf16 %v7711, %v7711
    %v7716 = vpack.c.bf16 %v7712, %v7712
    %7749 = vst [vmem:[#allocation1] ss:$4 sm:$0xff] %v7304
    %s7750 = scalar_lea.vmem [#allocation1], 1
    %7751 = vst [vmem:[%s7750] ss:$4 sm:$0xff] %v7312
    %s7752 = scalar_lea.vmem [#allocation1], 2
    %7753 = vst [vmem:[%s7752] ss:$4 sm:$0xff] %v7320
    %s7754 = scalar_lea.vmem [#allocation1], 3
    %7755 = vst [vmem:[%s7754] ss:$4 sm:$0xff] %v7328
    %s7756 = scalar_lea.vmem [#allocation1], 32
    %7757 = vst [vmem:[%s7756] ss:$4 sm:$0xff] %v7336
    %s7758 = scalar_lea.vmem [#allocation1], 33
    %7759 = vst [vmem:[%s7758] ss:$4 sm:$0xff] %v7344
    %s7760 = scalar_lea.vmem [#allocation1], 34
    %7761 = vst [vmem:[%s7760] ss:$4 sm:$0xff] %v7352
    %s7762 = scalar_lea.vmem [#allocation1], 35
    %7763 = vst [vmem:[%s7762] ss:$4 sm:$0xff] %v7360
    %v7764 = vld.sshfl [vmem:[#allocation1] sm:$0xff pattern:$0x73625140]
    %v7765 = vld.sshfl [vmem:[#allocation1 + $0x20] sm:$0xff pattern:$0x73625140]
    %7766 = vst [vmem:[#allocation1] ss:$4 sm:$0xff] %v7306
    %7767 = vst [vmem:[%s7750] ss:$4 sm:$0xff] %v7314
    %7768 = vst [vmem:[%s7752] ss:$4 sm:$0xff] %v7322
    %7769 = vst [vmem:[%s7754] ss:$4 sm:$0xff] %v7330
    %7770 = vst [vmem:[%s7756] ss:$4 sm:$0xff] %v7338
    %7771 = vst [vmem:[%s7758] ss:$4 sm:$0xff] %v7346
    %7772 = vst [vmem:[%s7760] ss:$4 sm:$0xff] %v7354
    %7773 = vst [vmem:[%s7762] ss:$4 sm:$0xff] %v7362
    %v7774 = vld.sshfl [vmem:[#allocation1] sm:$0xff pattern:$0x73625140]
    %v7775 = vld.sshfl [vmem:[#allocation1 + $0x20] sm:$0xff pattern:$0x73625140]
    %7776 = vst [vmem:[#allocation1] ss:$4 sm:$0xff] %v7368
    %7777 = vst [vmem:[%s7750] ss:$4 sm:$0xff] %v7376
    %7778 = vst [vmem:[%s7752] ss:$4 sm:$0xff] %v7384
    %7779 = vst [vmem:[%s7754] ss:$4 sm:$0xff] %v7392
    %7780 = vst [vmem:[%s7756] ss:$4 sm:$0xff] %v7400
    %7781 = vst [vmem:[%s7758] ss:$4 sm:$0xff] %v7408
    %7782 = vst [vmem:[%s7760] ss:$4 sm:$0xff] %v7416
    %7783 = vst [vmem:[%s7762] ss:$4 sm:$0xff] %v7424
    %v7784 = vld.sshfl [vmem:[#allocation1] sm:$0xff pattern:$0x73625140]
    %v7785 = vld.sshfl [vmem:[#allocation1 + $0x20] sm:$0xff pattern:$0x73625140]
    %7786 = vst [vmem:[#allocation1] ss:$4 sm:$0xff] %v7370
    %7787 = vst [vmem:[%s7750] ss:$4 sm:$0xff] %v7378
    %7788 = vst [vmem:[%s7752] ss:$4 sm:$0xff] %v7386
    %7789 = vst [vmem:[%s7754] ss:$4 sm:$0xff] %v7394
    %7790 = vst [vmem:[%s7756] ss:$4 sm:$0xff] %v7402
    %7791 = vst [vmem:[%s7758] ss:$4 sm:$0xff] %v7410
    %7792 = vst [vmem:[%s7760] ss:$4 sm:$0xff] %v7418
    %7793 = vst [vmem:[%s7762] ss:$4 sm:$0xff] %v7426
    %v7794 = vld.sshfl [vmem:[#allocation1] sm:$0xff pattern:$0x73625140]
    %v7795 = vld.sshfl [vmem:[#allocation1 + $0x20] sm:$0xff pattern:$0x73625140]
    %v7804 = vpack.c.bf16 %v7764, %v7764
    %v7805 = vpack.c.bf16 %v7765, %v7765
    %v7806 = vpack.c.bf16 %v7774, %v7774
    %v7807 = vpack.c.bf16 %v7775, %v7775
    %v7808 = vpack.c.bf16 %v7784, %v7784
    %v7809 = vpack.c.bf16 %v7785, %v7785
    %v7810 = vpack.c.bf16 %v7794, %v7794
    %v7811 = vpack.c.bf16 %v7795, %v7795
    %v7814 = vunpack.c.l.b16 %v7804
    %v7815 = vunpack.c.l.b16 %v7805
    %v7816 = vpack.c.b16 %v7815, %v7814
    %v7819 = vsel %vm5867, %v7713, 0
    %7821 = vmatpush.bf16.msra.mxu0 0
    %7822 = vmatpush.bf16.msra.mxu0 0
    %7823 = vmatpush.bf16.msra.mxu0 0
    %7824 = vmatpush.bf16.msra.mxu0 0
    %7825 = vmatpush.bf16.msra.mxu0 0
    %7826 = vmatpush.bf16.msra.mxu0 0
    %7827 = vmatpush.bf16.msra.mxu0 0
    %7828 = vmatpush.bf16.msra.mxu0 %v7816
    %7829 = vmatmul.bf16.gmra.mxu0 %v7819
    %v7830 = vpop.f32.mrf.mxu0
    %v7831 = vadd.f32 0.0, %v7830
    %v7832 = vpop.f32.mrf.mxu0
    %7833 = vdwg.mxu0
    %v7836 = vunpack.c.l.b16 %v7806
    %v7837 = vunpack.c.l.b16 %v7807
    %v7838 = vpack.c.b16 %v7837, %v7836
    %v7841 = vsel %vm5867, %v7714, 0
    %7843 = vmatpush.bf16.msra.mxu0 0
    %7844 = vmatpush.bf16.msra.mxu0 0
    %7845 = vmatpush.bf16.msra.mxu0 0
    %7846 = vmatpush.bf16.msra.mxu0 0
    %7847 = vmatpush.bf16.msra.mxu0 0
    %7848 = vmatpush.bf16.msra.mxu0 0
    %7849 = vmatpush.bf16.msra.mxu0 0
    %7850 = vmatpush.bf16.msra.mxu0 %v7838
    %7851 = vmatmul.bf16.gmra.mxu0 %v7841
    %v7852 = vpop.f32.mrf.mxu0
    %v7853 = vadd.f32 0.0, %v7852
    %v7854 = vpop.f32.mrf.mxu0
    %7855 = vdwg.mxu0
    %v7858 = vunpack.c.l.b16 %v7808
    %v7859 = vunpack.c.l.b16 %v7809
    %v7860 = vpack.c.b16 %v7859, %v7858
    %v7863 = vsel %vm5867, %v7715, 0
    %7865 = vmatpush.bf16.msra.mxu0 0
    %7866 = vmatpush.bf16.msra.mxu0 0
    %7867 = vmatpush.bf16.msra.mxu0 0
    %7868 = vmatpush.bf16.msra.mxu0 0
    %7869 = vmatpush.bf16.msra.mxu0 0
    %7870 = vmatpush.bf16.msra.mxu0 0
    %7871 = vmatpush.bf16.msra.mxu0 0
    %7872 = vmatpush.bf16.msra.mxu0 %v7860
    %7873 = vmatmul.bf16.gmra.mxu0 %v7863
    %v7874 = vpop.f32.mrf.mxu0
    %v7875 = vadd.f32 0.0, %v7874
    %v7876 = vpop.f32.mrf.mxu0
    %7877 = vdwg.mxu0
    %v7880 = vunpack.c.l.b16 %v7810
    %v7881 = vunpack.c.l.b16 %v7811
    %v7882 = vpack.c.b16 %v7881, %v7880
    %v7885 = vsel %vm5867, %v7716, 0
    %7887 = vmatpush.bf16.msra.mxu0 0
    %7888 = vmatpush.bf16.msra.mxu0 0
    %7889 = vmatpush.bf16.msra.mxu0 0
    %7890 = vmatpush.bf16.msra.mxu0 0
    %7891 = vmatpush.bf16.msra.mxu0 0
    %7892 = vmatpush.bf16.msra.mxu0 0
    %7893 = vmatpush.bf16.msra.mxu0 0
    %7894 = vmatpush.bf16.msra.mxu0 %v7882
    %7895 = vmatmul.bf16.gmra.mxu0 %v7885
    %v7896 = vpop.f32.mrf.mxu0
    %v7897 = vadd.f32 0.0, %v7896
    %v7898 = vpop.f32.mrf.mxu0
    %7899 = vdwg.mxu0
    %v7900 = vrot.slane %v7875, 4
    %v7901 = vsel %vm944, %v7900, %v7831
    %v7902 = vrot.slane %v7831, 4
    %v7903 = vsel %vm944, %v7875, %v7902
    %v7905 = vunpack.c.l.s4 1983009808
    %v7906 = vunpack.c.0.s8 %v7905
    %v7907 = vperm.slane %v7901, %v7906
    %v7909 = vunpack.c.l.s4 1983009808
    %v7910 = vunpack.c.0.s8 %v7909
    %v7911 = vperm.slane %v7903, %v7910
    %v7912 = vrot.slane %v7897, 4
    %v7913 = vsel %vm944, %v7912, %v7853
    %v7914 = vrot.slane %v7853, 4
    %v7915 = vsel %vm944, %v7897, %v7914
    %v7917 = vunpack.c.l.s4 1983009808
    %v7918 = vunpack.c.0.s8 %v7917
    %v7919 = vperm.slane %v7913, %v7918
    %v7921 = vunpack.c.l.s4 1983009808
    %v7922 = vunpack.c.0.s8 %v7921
    %v7923 = vperm.slane %v7915, %v7922
    %v7924 = vrot.slane %v7919, 4
    %v7925 = vsel %vm944, %v7924, %v7907
    %v7926 = vrot.slane %v7907, 4
    %v7927 = vsel %vm944, %v7919, %v7926
    %v7929 = vunpack.c.l.s4 1934713408
    %v7930 = vunpack.c.0.s8 %v7929
    %v7931 = vperm.slane %v7925, %v7930
    %v7933 = vunpack.c.l.s4 1934713408
    %v7934 = vunpack.c.0.s8 %v7933
    %v7935 = vperm.slane %v7927, %v7934
    %v7936 = vrot.slane %v7923, 4
    %v7937 = vsel %vm944, %v7936, %v7911
    %v7938 = vrot.slane %v7911, 4
    %v7939 = vsel %vm944, %v7923, %v7938
    %v7941 = vunpack.c.l.s4 1934713408
    %v7942 = vunpack.c.0.s8 %v7941
    %v7943 = vperm.slane %v7937, %v7942
    %v7945 = vunpack.c.l.s4 1934713408
    %v7946 = vunpack.c.0.s8 %v7945
    %v7947 = vperm.slane %v7939, %v7946
    %v7949 = vunpack.c.l.s4 1983009808
    %v7950 = vunpack.c.0.s8 %v7949
    %v7951 = vperm.slane %v6130, %v7950
    %v7952 = vrot.slane %v7951, 4
    %v7953 = vsel %vm944, 0.0, %v7952
    %v7955 = vunpack.c.l.s4 1934713408
    %v7956 = vunpack.c.0.s8 %v7955
    %v7957 = vperm.slane %v7951, %v7956
    %v7959 = vunpack.c.l.s4 1934713408
    %v7960 = vunpack.c.0.s8 %v7959
    %v7961 = vperm.slane %v7953, %v7960
    %v7962 = vrot.slane %v7957, 4
    %v7963 = vsel %vm944, 0.0, %v7962
    %v7964 = vrot.slane %v7961, 4
    %v7965 = vsel %vm944, 0.0, %v7964
    %v7966 = vrot.slane %v6130, 4
    %v7967 = vsel %vm944, 0.0, %v7966
    %v7969 = vunpack.c.l.s4 1983009808
    %v7970 = vunpack.c.0.s8 %v7969
    %v7971 = vperm.slane %v7967, %v7970
    %v7972 = vrot.slane %v7971, 4
    %v7973 = vsel %vm944, 0.0, %v7972
    %v7975 = vunpack.c.l.s4 1934713408
    %v7976 = vunpack.c.0.s8 %v7975
    %v7977 = vperm.slane %v7971, %v7976
    %v7979 = vunpack.c.l.s4 1934713408
    %v7980 = vunpack.c.0.s8 %v7979
    %v7981 = vperm.slane %v7973, %v7980
    %v7982 = vrot.slane %v7977, 4
    %v7983 = vsel %vm944, 0.0, %v7982
    %v7984 = vrot.slane %v7981, 4
    %v7985 = vsel %vm944, 0.0, %v7984
    %v7987 = vunpack.c.l.s4 1983009808
    %v7988 = vunpack.c.0.s8 %v7987
    %v7989 = vperm.slane %v6134, %v7988
    %v7990 = vrot.slane %v7989, 4
    %v7991 = vsel %vm944, 0.0, %v7990
    %v7993 = vunpack.c.l.s4 1934713408
    %v7994 = vunpack.c.0.s8 %v7993
    %v7995 = vperm.slane %v7989, %v7994
    %v7997 = vunpack.c.l.s4 1934713408
    %v7998 = vunpack.c.0.s8 %v7997
    %v7999 = vperm.slane %v7991, %v7998
    %v8000 = vrot.slane %v7995, 4
    %v8001 = vsel %vm944, 0.0, %v8000
    %v8002 = vrot.slane %v7999, 4
    %v8003 = vsel %vm944, 0.0, %v8002
    %v8004 = vrot.slane %v6134, 4
    %v8005 = vsel %vm944, 0.0, %v8004
    %v8007 = vunpack.c.l.s4 1983009808
    %v8008 = vunpack.c.0.s8 %v8007
    %v8009 = vperm.slane %v8005, %v8008
    %v8010 = vrot.slane %v8009, 4
    %v8011 = vsel %vm944, 0.0, %v8010
    %v8013 = vunpack.c.l.s4 1934713408
    %v8014 = vunpack.c.0.s8 %v8013
    %v8015 = vperm.slane %v8009, %v8014
    %v8017 = vunpack.c.l.s4 1934713408
    %v8018 = vunpack.c.0.s8 %v8017
    %v8019 = vperm.slane %v8011, %v8018
    %v8020 = vrot.slane %v8015, 4
    %v8021 = vsel %vm944, 0.0, %v8020
    %v8022 = vrot.slane %v8019, 4
    %v8023 = vsel %vm944, 0.0, %v8022
    %v8025 = vunpack.c.l.s4 1983009808
    %v8026 = vunpack.c.0.s8 %v8025
    %v8027 = vperm.slane %v6142, %v8026
    %v8028 = vrot.slane %v8027, 4
    %v8029 = vsel %vm944, 0.0, %v8028
    %v8031 = vunpack.c.l.s4 1934713408
    %v8032 = vunpack.c.0.s8 %v8031
    %v8033 = vperm.slane %v8027, %v8032
    %v8035 = vunpack.c.l.s4 1934713408
    %v8036 = vunpack.c.0.s8 %v8035
    %v8037 = vperm.slane %v8029, %v8036
    %v8038 = vrot.slane %v8033, 4
    %v8039 = vsel %vm944, 0.0, %v8038
    %v8040 = vrot.slane %v8037, 4
    %v8041 = vsel %vm944, 0.0, %v8040
    %v8042 = vrot.slane %v6142, 4
    %v8043 = vsel %vm944, 0.0, %v8042
    %v8045 = vunpack.c.l.s4 1983009808
    %v8046 = vunpack.c.0.s8 %v8045
    %v8047 = vperm.slane %v8043, %v8046
    %v8048 = vrot.slane %v8047, 4
    %v8049 = vsel %vm944, 0.0, %v8048
    %v8051 = vunpack.c.l.s4 1934713408
    %v8052 = vunpack.c.0.s8 %v8051
    %v8053 = vperm.slane %v8047, %v8052
    %v8055 = vunpack.c.l.s4 1934713408
    %v8056 = vunpack.c.0.s8 %v8055
    %v8057 = vperm.slane %v8049, %v8056
    %v8058 = vrot.slane %v8053, 4
    %v8059 = vsel %vm944, 0.0, %v8058
    %v8060 = vrot.slane %v8057, 4
    %v8061 = vsel %vm944, 0.0, %v8060
    %v8063 = vunpack.c.l.s4 1983009808
    %v8064 = vunpack.c.0.s8 %v8063
    %v8065 = vperm.slane %v6146, %v8064
    %v8066 = vrot.slane %v8065, 4
    %v8067 = vsel %vm944, 0.0, %v8066
    %v8069 = vunpack.c.l.s4 1934713408
    %v8070 = vunpack.c.0.s8 %v8069
    %v8071 = vperm.slane %v8065, %v8070
    %v8073 = vunpack.c.l.s4 1934713408
    %v8074 = vunpack.c.0.s8 %v8073
    %v8075 = vperm.slane %v8067, %v8074
    %v8076 = vrot.slane %v8071, 4
    %v8077 = vsel %vm944, 0.0, %v8076
    %v8078 = vrot.slane %v8075, 4
    %v8079 = vsel %vm944, 0.0, %v8078
    %v8080 = vrot.slane %v6146, 4
    %v8081 = vsel %vm944, 0.0, %v8080
    %v8083 = vunpack.c.l.s4 1983009808
    %v8084 = vunpack.c.0.s8 %v8083
    %v8085 = vperm.slane %v8081, %v8084
    %v8086 = vrot.slane %v8085, 4
    %v8087 = vsel %vm944, 0.0, %v8086
    %v8089 = vunpack.c.l.s4 1934713408
    %v8090 = vunpack.c.0.s8 %v8089
    %v8091 = vperm.slane %v8085, %v8090
    %v8093 = vunpack.c.l.s4 1934713408
    %v8094 = vunpack.c.0.s8 %v8093
    %v8095 = vperm.slane %v8087, %v8094
    %v8096 = vrot.slane %v8091, 4
    %v8097 = vsel %vm944, 0.0, %v8096
    %v8098 = vrot.slane %v8095, 4
    %v8099 = vsel %vm944, 0.0, %v8098
    %8108 = vrot.lane.b32.xlu0 %v7963, 32
    %v8109 = vpop.permute.xlu0 %8108
    %8110 = vrot.lane.b32.xlu0 %v7983, 32
    %v8111 = vpop.permute.xlu0 %8110
    %8112 = vrot.lane.b32.xlu0 %v8001, 32
    %v8113 = vpop.permute.xlu0 %8112
    %8114 = vrot.lane.b32.xlu0 %v8021, 32
    %v8115 = vpop.permute.xlu0 %8114
    %8116 = vrot.lane.b32.xlu0 %v8039, 32
    %v8117 = vpop.permute.xlu0 %8116
    %8118 = vrot.lane.b32.xlu0 %v8059, 32
    %v8119 = vpop.permute.xlu0 %8118
    %8120 = vrot.lane.b32.xlu0 %v8077, 32
    %v8121 = vpop.permute.xlu0 %8120
    %8122 = vrot.lane.b32.xlu0 %v8097, 32
    %v8123 = vpop.permute.xlu0 %8122
    %8140 = vrot.lane.b32.xlu0 %v7961, 64
    %v8141 = vpop.permute.xlu0 %8140
    %8142 = vrot.lane.b32.xlu0 %v7981, 64
    %v8143 = vpop.permute.xlu0 %8142
    %8144 = vrot.lane.b32.xlu0 %v7999, 64
    %v8145 = vpop.permute.xlu0 %8144
    %8146 = vrot.lane.b32.xlu0 %v8019, 64
    %v8147 = vpop.permute.xlu0 %8146
    %8148 = vrot.lane.b32.xlu0 %v8037, 64
    %v8149 = vpop.permute.xlu0 %8148
    %8150 = vrot.lane.b32.xlu0 %v8057, 64
    %v8151 = vpop.permute.xlu0 %8150
    %8152 = vrot.lane.b32.xlu0 %v8075, 64
    %v8153 = vpop.permute.xlu0 %8152
    %8154 = vrot.lane.b32.xlu0 %v8095, 64
    %v8155 = vpop.permute.xlu0 %8154
    %8172 = vrot.lane.b32.xlu0 %v7965, 96
    %v8173 = vpop.permute.xlu0 %8172
    %8174 = vrot.lane.b32.xlu0 %v7985, 96
    %v8175 = vpop.permute.xlu0 %8174
    %8176 = vrot.lane.b32.xlu0 %v8003, 96
    %v8177 = vpop.permute.xlu0 %8176
    %8178 = vrot.lane.b32.xlu0 %v8023, 96
    %v8179 = vpop.permute.xlu0 %8178
    %8180 = vrot.lane.b32.xlu0 %v8041, 96
    %v8181 = vpop.permute.xlu0 %8180
    %8182 = vrot.lane.b32.xlu0 %v8061, 96
    %v8183 = vpop.permute.xlu0 %8182
    %8184 = vrot.lane.b32.xlu0 %v8079, 96
    %v8185 = vpop.permute.xlu0 %8184
    %8186 = vrot.lane.b32.xlu0 %v8099, 96
    %v8187 = vpop.permute.xlu0 %8186
    %v8196 = vsel %vm1670, %v7957, %v8109
    %v8197 = vsel %vm1670, %v7977, %v8111
    %v8198 = vsel %vm1670, %v7995, %v8113
    %v8199 = vsel %vm1670, %v8015, %v8115
    %v8200 = vsel %vm1670, %v8033, %v8117
    %v8201 = vsel %vm1670, %v8053, %v8119
    %v8202 = vsel %vm1670, %v8071, %v8121
    %v8203 = vsel %vm1670, %v8091, %v8123
    %v8204 = vsel %vm3397, %v8196, %v8141
    %v8205 = vsel %vm3397, %v8197, %v8143
    %v8206 = vsel %vm3397, %v8198, %v8145
    %v8207 = vsel %vm3397, %v8199, %v8147
    %v8208 = vsel %vm3397, %v8200, %v8149
    %v8209 = vsel %vm3397, %v8201, %v8151
    %v8210 = vsel %vm3397, %v8202, %v8153
    %v8211 = vsel %vm3397, %v8203, %v8155
    %v8212 = vsel %vm3406, %v8204, %v8173
    %v8213 = vsel %vm3406, %v8205, %v8175
    %v8214 = vsel %vm3406, %v8206, %v8177
    %v8215 = vsel %vm3406, %v8207, %v8179
    %v8216 = vsel %vm3406, %v8208, %v8181
    %v8217 = vsel %vm3406, %v8209, %v8183
    %v8218 = vsel %vm3406, %v8210, %v8185
    %v8219 = vsel %vm3406, %v8211, %v8187
    %v8221 = vunpack.c.l.s4 1983009808
    %v8222 = vunpack.c.0.s8 %v8221
    %v8223 = vperm.slane %v7931, %v8222
    %v8224 = vrot.slane %v8223, 4
    %v8225 = vsel %vm944, 0.0, %v8224
    %v8227 = vunpack.c.l.s4 1934713408
    %v8228 = vunpack.c.0.s8 %v8227
    %v8229 = vperm.slane %v8223, %v8228
    %v8231 = vunpack.c.l.s4 1934713408
    %v8232 = vunpack.c.0.s8 %v8231
    %v8233 = vperm.slane %v8225, %v8232
    %v8234 = vrot.slane %v8229, 4
    %v8235 = vsel %vm944, 0.0, %v8234
    %v8236 = vrot.slane %v8233, 4
    %v8237 = vsel %vm944, 0.0, %v8236
    %v8238 = vrot.slane %v7931, 4
    %v8239 = vsel %vm944, 0.0, %v8238
    %v8241 = vunpack.c.l.s4 1983009808
    %v8242 = vunpack.c.0.s8 %v8241
    %v8243 = vperm.slane %v8239, %v8242
    %v8244 = vrot.slane %v8243, 4
    %v8245 = vsel %vm944, 0.0, %v8244
    %v8247 = vunpack.c.l.s4 1934713408
    %v8248 = vunpack.c.0.s8 %v8247
    %v8249 = vperm.slane %v8243, %v8248
    %v8251 = vunpack.c.l.s4 1934713408
    %v8252 = vunpack.c.0.s8 %v8251
    %v8253 = vperm.slane %v8245, %v8252
    %v8254 = vrot.slane %v8249, 4
    %v8255 = vsel %vm944, 0.0, %v8254
    %v8256 = vrot.slane %v8253, 4
    %v8257 = vsel %vm944, 0.0, %v8256
    %v8259 = vunpack.c.l.s4 1983009808
    %v8260 = vunpack.c.0.s8 %v8259
    %v8261 = vperm.slane %v7935, %v8260
    %v8262 = vrot.slane %v8261, 4
    %v8263 = vsel %vm944, 0.0, %v8262
    %v8265 = vunpack.c.l.s4 1934713408
    %v8266 = vunpack.c.0.s8 %v8265
    %v8267 = vperm.slane %v8261, %v8266
    %v8269 = vunpack.c.l.s4 1934713408
    %v8270 = vunpack.c.0.s8 %v8269
    %v8271 = vperm.slane %v8263, %v8270
    %v8272 = vrot.slane %v8267, 4
    %v8273 = vsel %vm944, 0.0, %v8272
    %v8274 = vrot.slane %v8271, 4
    %v8275 = vsel %vm944, 0.0, %v8274
    %v8276 = vrot.slane %v7935, 4
    %v8277 = vsel %vm944, 0.0, %v8276
    %v8279 = vunpack.c.l.s4 1983009808
    %v8280 = vunpack.c.0.s8 %v8279
    %v8281 = vperm.slane %v8277, %v8280
    %v8282 = vrot.slane %v8281, 4
    %v8283 = vsel %vm944, 0.0, %v8282
    %v8285 = vunpack.c.l.s4 1934713408
    %v8286 = vunpack.c.0.s8 %v8285
    %v8287 = vperm.slane %v8281, %v8286
    %v8289 = vunpack.c.l.s4 1934713408
    %v8290 = vunpack.c.0.s8 %v8289
    %v8291 = vperm.slane %v8283, %v8290
    %v8292 = vrot.slane %v8287, 4
    %v8293 = vsel %vm944, 0.0, %v8292
    %v8294 = vrot.slane %v8291, 4
    %v8295 = vsel %vm944, 0.0, %v8294
    %v8297 = vunpack.c.l.s4 1983009808
    %v8298 = vunpack.c.0.s8 %v8297
    %v8299 = vperm.slane %v7943, %v8298
    %v8300 = vrot.slane %v8299, 4
    %v8301 = vsel %vm944, 0.0, %v8300
    %v8303 = vunpack.c.l.s4 1934713408
    %v8304 = vunpack.c.0.s8 %v8303
    %v8305 = vperm.slane %v8299, %v8304
    %v8307 = vunpack.c.l.s4 1934713408
    %v8308 = vunpack.c.0.s8 %v8307
    %v8309 = vperm.slane %v8301, %v8308
    %v8310 = vrot.slane %v8305, 4
    %v8311 = vsel %vm944, 0.0, %v8310
    %v8312 = vrot.slane %v8309, 4
    %v8313 = vsel %vm944, 0.0, %v8312
    %v8314 = vrot.slane %v7943, 4
    %v8315 = vsel %vm944, 0.0, %v8314
    %v8317 = vunpack.c.l.s4 1983009808
    %v8318 = vunpack.c.0.s8 %v8317
    %v8319 = vperm.slane %v8315, %v8318
    %v8320 = vrot.slane %v8319, 4
    %v8321 = vsel %vm944, 0.0, %v8320
    %v8323 = vunpack.c.l.s4 1934713408
    %v8324 = vunpack.c.0.s8 %v8323
    %v8325 = vperm.slane %v8319, %v8324
    %v8327 = vunpack.c.l.s4 1934713408
    %v8328 = vunpack.c.0.s8 %v8327
    %v8329 = vperm.slane %v8321, %v8328
    %v8330 = vrot.slane %v8325, 4
    %v8331 = vsel %vm944, 0.0, %v8330
    %v8332 = vrot.slane %v8329, 4
    %v8333 = vsel %vm944, 0.0, %v8332
    %v8335 = vunpack.c.l.s4 1983009808
    %v8336 = vunpack.c.0.s8 %v8335
    %v8337 = vperm.slane %v7947, %v8336
    %v8338 = vrot.slane %v8337, 4
    %v8339 = vsel %vm944, 0.0, %v8338
    %v8341 = vunpack.c.l.s4 1934713408
    %v8342 = vunpack.c.0.s8 %v8341
    %v8343 = vperm.slane %v8337, %v8342
    %v8345 = vunpack.c.l.s4 1934713408
    %v8346 = vunpack.c.0.s8 %v8345
    %v8347 = vperm.slane %v8339, %v8346
    %v8348 = vrot.slane %v8343, 4
    %v8349 = vsel %vm944, 0.0, %v8348
    %v8350 = vrot.slane %v8347, 4
    %v8351 = vsel %vm944, 0.0, %v8350
    %v8352 = vrot.slane %v7947, 4
    %v8353 = vsel %vm944, 0.0, %v8352
    %v8355 = vunpack.c.l.s4 1983009808
    %v8356 = vunpack.c.0.s8 %v8355
    %v8357 = vperm.slane %v8353, %v8356
    %v8358 = vrot.slane %v8357, 4
    %v8359 = vsel %vm944, 0.0, %v8358
    %v8361 = vunpack.c.l.s4 1934713408
    %v8362 = vunpack.c.0.s8 %v8361
    %v8363 = vperm.slane %v8357, %v8362
    %v8365 = vunpack.c.l.s4 1934713408
    %v8366 = vunpack.c.0.s8 %v8365
    %v8367 = vperm.slane %v8359, %v8366
    %v8368 = vrot.slane %v8363, 4
    %v8369 = vsel %vm944, 0.0, %v8368
    %v8370 = vrot.slane %v8367, 4
    %v8371 = vsel %vm944, 0.0, %v8370
    %8380 = vrot.lane.b32.xlu0 %v8235, 32
    %v8381 = vpop.permute.xlu0 %8380
    %8382 = vrot.lane.b32.xlu0 %v8255, 32
    %v8383 = vpop.permute.xlu0 %8382
    %8384 = vrot.lane.b32.xlu0 %v8273, 32
    %v8385 = vpop.permute.xlu0 %8384
    %8386 = vrot.lane.b32.xlu0 %v8293, 32
    %v8387 = vpop.permute.xlu0 %8386
    %8388 = vrot.lane.b32.xlu0 %v8311, 32
    %v8389 = vpop.permute.xlu0 %8388
    %8390 = vrot.lane.b32.xlu0 %v8331, 32
    %v8391 = vpop.permute.xlu0 %8390
    %8392 = vrot.lane.b32.xlu0 %v8349, 32
    %v8393 = vpop.permute.xlu0 %8392
    %8394 = vrot.lane.b32.xlu0 %v8369, 32
    %v8395 = vpop.permute.xlu0 %8394
    %8412 = vrot.lane.b32.xlu0 %v8233, 64
    %v8413 = vpop.permute.xlu0 %8412
    %8414 = vrot.lane.b32.xlu0 %v8253, 64
    %v8415 = vpop.permute.xlu0 %8414
    %8416 = vrot.lane.b32.xlu0 %v8271, 64
    %v8417 = vpop.permute.xlu0 %8416
    %8418 = vrot.lane.b32.xlu0 %v8291, 64
    %v8419 = vpop.permute.xlu0 %8418
    %8420 = vrot.lane.b32.xlu0 %v8309, 64
    %v8421 = vpop.permute.xlu0 %8420
    %8422 = vrot.lane.b32.xlu0 %v8329, 64
    %v8423 = vpop.permute.xlu0 %8422
    %8424 = vrot.lane.b32.xlu0 %v8347, 64
    %v8425 = vpop.permute.xlu0 %8424
    %8426 = vrot.lane.b32.xlu0 %v8367, 64
    %v8427 = vpop.permute.xlu0 %8426
    %8444 = vrot.lane.b32.xlu0 %v8237, 96
    %v8445 = vpop.permute.xlu0 %8444
    %8446 = vrot.lane.b32.xlu0 %v8257, 96
    %v8447 = vpop.permute.xlu0 %8446
    %8448 = vrot.lane.b32.xlu0 %v8275, 96
    %v8449 = vpop.permute.xlu0 %8448
    %8450 = vrot.lane.b32.xlu0 %v8295, 96
    %v8451 = vpop.permute.xlu0 %8450
    %8452 = vrot.lane.b32.xlu0 %v8313, 96
    %v8453 = vpop.permute.xlu0 %8452
    %8454 = vrot.lane.b32.xlu0 %v8333, 96
    %v8455 = vpop.permute.xlu0 %8454
    %8456 = vrot.lane.b32.xlu0 %v8351, 96
    %v8457 = vpop.permute.xlu0 %8456
    %8458 = vrot.lane.b32.xlu0 %v8371, 96
    %v8459 = vpop.permute.xlu0 %8458
    %v8468 = vsel %vm1670, %v8229, %v8381
    %v8469 = vsel %vm1670, %v8249, %v8383
    %v8470 = vsel %vm1670, %v8267, %v8385
    %v8471 = vsel %vm1670, %v8287, %v8387
    %v8472 = vsel %vm1670, %v8305, %v8389
    %v8473 = vsel %vm1670, %v8325, %v8391
    %v8474 = vsel %vm1670, %v8343, %v8393
    %v8475 = vsel %vm1670, %v8363, %v8395
    %v8476 = vsel %vm3397, %v8468, %v8413
    %v8477 = vsel %vm3397, %v8469, %v8415
    %v8478 = vsel %vm3397, %v8470, %v8417
    %v8479 = vsel %vm3397, %v8471, %v8419
    %v8480 = vsel %vm3397, %v8472, %v8421
    %v8481 = vsel %vm3397, %v8473, %v8423
    %v8482 = vsel %vm3397, %v8474, %v8425
    %v8483 = vsel %vm3397, %v8475, %v8427
    %v8484 = vsel %vm3406, %v8476, %v8445
    %v8485 = vsel %vm3406, %v8477, %v8447
    %v8486 = vsel %vm3406, %v8478, %v8449
    %v8487 = vsel %vm3406, %v8479, %v8451
    %v8488 = vsel %vm3406, %v8480, %v8453
    %v8489 = vsel %vm3406, %v8481, %v8455
    %v8490 = vsel %vm3406, %v8482, %v8457
    %v8491 = vsel %vm3406, %v8483, %v8459
    %v8500 = vrot.slane %v8484, 7
    %v8501 = vrot.slane %v8485, 7
    %v8502 = vrot.slane %v8486, 7
    %v8503 = vrot.slane %v8487, 7
    %v8504 = vrot.slane %v8488, 7
    %v8505 = vrot.slane %v8489, 7
    %v8506 = vrot.slane %v8490, 7
    %v8507 = vrot.slane %v8491, 7
    %v8516 = vsel %vm3711, %v8212, %v8500
    %v8517 = vsel %vm3711, %v8213, %v8501
    %v8518 = vsel %vm3711, %v8214, %v8502
    %v8519 = vsel %vm3711, %v8215, %v8503
    %v8520 = vsel %vm3711, %v8216, %v8504
    %v8521 = vsel %vm3711, %v8217, %v8505
    %v8522 = vsel %vm3711, %v8218, %v8506
    %v8523 = vsel %vm3711, %v8219, %v8507
    %8532 = vst [vmem:[#allocation1] ss:$4 sm:$0xff] %v8516
    %s8533 = scalar_lea.vmem [#allocation1], 1
    %8534 = vst [vmem:[%s8533] ss:$4 sm:$0xff] %v8517
    %s8535 = scalar_lea.vmem [#allocation1], 2
    %8536 = vst [vmem:[%s8535] ss:$4 sm:$0xff] %v8518
    %s8537 = scalar_lea.vmem [#allocation1], 3
    %8538 = vst [vmem:[%s8537] ss:$4 sm:$0xff] %v8519
    %s8539 = scalar_lea.vmem [#allocation1], 32
    %8540 = vst [vmem:[%s8539] ss:$4 sm:$0xff] %v8520
    %s8541 = scalar_lea.vmem [#allocation1], 33
    %8542 = vst [vmem:[%s8541] ss:$4 sm:$0xff] %v8521
    %s8543 = scalar_lea.vmem [#allocation1], 34
    %8544 = vst [vmem:[%s8543] ss:$4 sm:$0xff] %v8522
    %s8545 = scalar_lea.vmem [#allocation1], 35
    %8546 = vst [vmem:[%s8545] ss:$4 sm:$0xff] %v8523
    %v8547 = vld.sshfl [vmem:[#allocation1] sm:$0xff pattern:$0x73625140]
    %v8548 = vld.sshfl [vmem:[#allocation1 + $0x20] sm:$0xff pattern:$0x73625140]
    %v8551 = vpack.c.bf16 %v8548, %v8547
    %v8552 = vld [vmem:[#allocation22] sm:$0xf]
    %v8553 = vld [vmem:[#allocation22 + $0x4] sm:$0xf]
    %v8554 = vld [vmem:[#allocation22 + $0x8] sm:$0xf]
    %v8555 = vld [vmem:[#allocation22 + $0xc] sm:$0xf]
    %v8556 = vld [vmem:[#allocation22 + $0x10] sm:$0xf]
    %v8557 = vld [vmem:[#allocation22 + $0x14] sm:$0xf]
    %v8558 = vld [vmem:[#allocation22 + $0x18] sm:$0xf]
    %v8559 = vld [vmem:[#allocation22 + $0x1c] sm:$0xf]
    %v8560 = vld [vmem:[#allocation22 + $0x20] sm:$0xf]
    %v8561 = vld [vmem:[#allocation22 + $0x24] sm:$0xf]
    %v8562 = vld [vmem:[#allocation22 + $0x28] sm:$0xf]
    %v8563 = vld [vmem:[#allocation22 + $0x2c] sm:$0xf]
    %v8564 = vld [vmem:[#allocation22 + $0x30] sm:$0xf]
    %v8565 = vld [vmem:[#allocation22 + $0x34] sm:$0xf]
    %v8566 = vld [vmem:[#allocation22 + $0x38] sm:$0xf]
    %v8567 = vld [vmem:[#allocation22 + $0x3c] sm:$0xf]
    %v8584 = vunpack.c.l.b16 %v8552
    %v8585 = vunpack.c.l.b16 %v8553
    %v8586 = vunpack.c.l.b16 %v8554
    %v8587 = vunpack.c.l.b16 %v8555
    %v8588 = vunpack.c.l.b16 %v8556
    %v8589 = vunpack.c.l.b16 %v8557
    %v8590 = vunpack.c.l.b16 %v8558
    %v8591 = vunpack.c.l.b16 %v8559
    %v8592 = vunpack.c.l.b16 %v8560
    %v8593 = vunpack.c.l.b16 %v8561
    %v8594 = vunpack.c.l.b16 %v8562
    %v8595 = vunpack.c.l.b16 %v8563
    %v8596 = vunpack.c.l.b16 %v8564
    %v8597 = vunpack.c.l.b16 %v8565
    %v8598 = vunpack.c.l.b16 %v8566
    %v8599 = vunpack.c.l.b16 %v8567
    %v8600 = vpack.c.b16 %v8585, %v8584
    %v8601 = vpack.c.b16 %v8587, %v8586
    %v8602 = vpack.c.b16 %v8589, %v8588
    %v8603 = vpack.c.b16 %v8591, %v8590
    %v8604 = vpack.c.b16 %v8593, %v8592
    %v8605 = vpack.c.b16 %v8595, %v8594
    %v8606 = vpack.c.b16 %v8597, %v8596
    %v8607 = vpack.c.b16 %v8599, %v8598
    %8616 = vmatpush.bf16.msra.mxu0 %v8607
    %8617 = vmatpush.bf16.msra.mxu0 %v8606
    %8618 = vmatpush.bf16.msra.mxu0 %v8605
    %8619 = vmatpush.bf16.msra.mxu0 %v8604
    %8620 = vmatpush.bf16.msra.mxu0 %v8603
    %8621 = vmatpush.bf16.msra.mxu0 %v8602
    %8622 = vmatpush.bf16.msra.mxu0 %v8601
    %8623 = vmatpush.bf16.msra.mxu0 %v8600
    %8624 = vmatmul.bf16.gmra.mxu0 %v8551
    %v8625 = vpop.f32.mrf.mxu0
    %v8626 = vadd.f32 0.0, %v8625
    %v8627 = vpop.f32.mrf.mxu0
    %v8628 = vadd.f32 0.0, %v8627
    %8629 = vdwg.mxu0
    %v8632 = vrot.slane %v8626, 2
    %v8633 = vrot.slane %v8626, 4
    %v8634 = vrot.slane %v8626, 6
    %v8635 = vrot.slane %v8628, 2
    %v8636 = vrot.slane %v8628, 4
    %v8637 = vrot.slane %v8628, 6
    %v8644 = vadd.f32 %v3858, %v8626
    %v8645 = vadd.f32 %v3859, %v8632
    %v8646 = vadd.f32 %v3860, %v8633
    %v8647 = vadd.f32 %v3861, %v8634
    %v8648 = vadd.f32 %v3862, %v8628
    %v8649 = vadd.f32 %v3863, %v8635
    %v8650 = vadd.f32 %v3864, %v8636
    %v8651 = vadd.f32 %v3865, %v8637
    %v8652 = vld [vmem:[%s19] sm:$0x1]
    %v8654 = vperm.slane %v8652, 0
    %v8656 = vrot.slane %v8654, 2
    %v8657 = vrot.slane %v8654, 4
    %v8658 = vrot.slane %v8654, 6
    %v8662 = vadd.f32 %v8644, %v8654
    %v8663 = vadd.f32 %v8645, %v8656
    %v8664 = vadd.f32 %v8646, %v8657
    %v8665 = vadd.f32 %v8647, %v8658
    %v8666 = vadd.f32 %v8648, %v8654
    %v8667 = vadd.f32 %v8649, %v8656
    %v8668 = vadd.f32 %v8650, %v8657
    %v8669 = vadd.f32 %v8651, %v8658
    %8678 = vst [vmem:[#allocation1] ss:$4 sm:$0xff] %v8662
    %s8679 = scalar_lea.vmem [#allocation1], 1
    %8680 = vst [vmem:[%s8679] ss:$4 sm:$0xff] %v8663
    %s8681 = scalar_lea.vmem [#allocation1], 2
    %8682 = vst [vmem:[%s8681] ss:$4 sm:$0xff] %v8664
    %s8683 = scalar_lea.vmem [#allocation1], 3
    %8684 = vst [vmem:[%s8683] ss:$4 sm:$0xff] %v8665
    %s8685 = scalar_lea.vmem [#allocation1], 32
    %8686 = vst [vmem:[%s8685] ss:$4 sm:$0xff] %v8666
    %s8687 = scalar_lea.vmem [#allocation1], 33
    %8688 = vst [vmem:[%s8687] ss:$4 sm:$0xff] %v8667
    %s8689 = scalar_lea.vmem [#allocation1], 34
    %8690 = vst [vmem:[%s8689] ss:$4 sm:$0xff] %v8668
    %s8691 = scalar_lea.vmem [#allocation1], 35
    %8692 = vst [vmem:[%s8691] ss:$4 sm:$0xff] %v8669
    %v8693 = vld.sshfl [vmem:[#allocation1] sm:$0xff pattern:$0x73625140]
    %v8694 = vld.sshfl [vmem:[#allocation1 + $0x20] sm:$0xff pattern:$0x73625140]
    %8697 = vadd.xlane.f32.xlu0 %v8693
    %v8698 = vpop.xlane.xlu0 %8697
    %8699 = vadd.xlane.f32.xlu0 %v8694
    %v8700 = vpop.xlane.xlu0 %8699
    %v8701 = vmul.f32 %v8698, %v369
    %v8702 = vmul.f32 %v8700, %v369
    %v8706 = vunpack.c.l.s4 269488144
    %v8707 = vunpack.c.0.s8 %v8706
    %v8708 = vperm.slane %v8701, %v8707
    %v8710 = vunpack.c.l.s4 842150450
    %v8711 = vunpack.c.0.s8 %v8710
    %v8712 = vperm.slane %v8701, %v8711
    %v8714 = vunpack.c.l.s4 1414812756
    %v8715 = vunpack.c.0.s8 %v8714
    %v8716 = vperm.slane %v8701, %v8715
    %v8718 = vunpack.c.l.s4 1987475062
    %v8719 = vunpack.c.0.s8 %v8718
    %v8720 = vperm.slane %v8701, %v8719
    %v8722 = vunpack.c.l.s4 269488144
    %v8723 = vunpack.c.0.s8 %v8722
    %v8724 = vperm.slane %v8702, %v8723
    %v8726 = vunpack.c.l.s4 842150450
    %v8727 = vunpack.c.0.s8 %v8726
    %v8728 = vperm.slane %v8702, %v8727
    %v8730 = vunpack.c.l.s4 1414812756
    %v8731 = vunpack.c.0.s8 %v8730
    %v8732 = vperm.slane %v8702, %v8731
    %v8734 = vunpack.c.l.s4 1987475062
    %v8735 = vunpack.c.0.s8 %v8734
    %v8736 = vperm.slane %v8702, %v8735
    %v8745 = vsub.f32 %v8662, %v8708
    %v8746 = vsub.f32 %v8663, %v8712
    %v8747 = vsub.f32 %v8664, %v8716
    %v8748 = vsub.f32 %v8665, %v8720
    %v8749 = vsub.f32 %v8666, %v8724
    %v8750 = vsub.f32 %v8667, %v8728
    %v8751 = vsub.f32 %v8668, %v8732
    %v8752 = vsub.f32 %v8669, %v8736
    %v8753 = vmul.f32 %v8745, %v8745
    %v8754 = vmul.f32 %v8746, %v8746
    %v8755 = vmul.f32 %v8747, %v8747
    %v8756 = vmul.f32 %v8748, %v8748
    %v8757 = vmul.f32 %v8749, %v8749
    %v8758 = vmul.f32 %v8750, %v8750
    %v8759 = vmul.f32 %v8751, %v8751
    %v8760 = vmul.f32 %v8752, %v8752
    %8769 = vst [vmem:[#allocation1] ss:$4 sm:$0xff] %v8753
    %s8770 = scalar_lea.vmem [#allocation1], 1
    %8771 = vst [vmem:[%s8770] ss:$4 sm:$0xff] %v8754
    %s8772 = scalar_lea.vmem [#allocation1], 2
    %8773 = vst [vmem:[%s8772] ss:$4 sm:$0xff] %v8755
    %s8774 = scalar_lea.vmem [#allocation1], 3
    %8775 = vst [vmem:[%s8774] ss:$4 sm:$0xff] %v8756
    %s8776 = scalar_lea.vmem [#allocation1], 32
    %8777 = vst [vmem:[%s8776] ss:$4 sm:$0xff] %v8757
    %s8778 = scalar_lea.vmem [#allocation1], 33
    %8779 = vst [vmem:[%s8778] ss:$4 sm:$0xff] %v8758
    %s8780 = scalar_lea.vmem [#allocation1], 34
    %8781 = vst [vmem:[%s8780] ss:$4 sm:$0xff] %v8759
    %s8782 = scalar_lea.vmem [#allocation1], 35
    %8783 = vst [vmem:[%s8782] ss:$4 sm:$0xff] %v8760
    %v8784 = vld.sshfl [vmem:[#allocation1] sm:$0xff pattern:$0x73625140]
    %v8785 = vld.sshfl [vmem:[#allocation1 + $0x20] sm:$0xff pattern:$0x73625140]
    %8788 = vadd.xlane.f32.xlu0 %v8784
    %v8789 = vpop.xlane.xlu0 %8788
    %8790 = vadd.xlane.f32.xlu0 %v8785
    %v8791 = vpop.xlane.xlu0 %8790
    %v8792 = vmul.f32 %v8789, %v369
    %v8793 = vmul.f32 %v8791, %v369
    %v8794 = vadd.f32 %v8792, 1e-05
    %v8795 = vadd.f32 %v8793, 1e-05
    %v8796 = vrsqrt.pop %v8794
    %v8797 = vmul.f32 %v8796, %v8794
    %v8798 = vmul.f32 %v8797, %v8796
    %v8799 = vmul.f32 0.5, %v8798
    %v8800 = vsub.f32 1.5, %v8799
    %v8801 = vmul.f32 %v8796, %v8800
    %vm8802 = vweird.f32 %v8794
    %vm8803 = vweird.f32 %v8796
    %vm8804 = vmor %vm8802, %vm8803
    %v8805 = vsel %vm8804, %v8796, %v8801
    %v8806 = vrsqrt.pop %v8795
    %v8807 = vmul.f32 %v8806, %v8795
    %v8808 = vmul.f32 %v8807, %v8806
    %v8809 = vmul.f32 0.5, %v8808
    %v8810 = vsub.f32 1.5, %v8809
    %v8811 = vmul.f32 %v8806, %v8810
    %vm8812 = vweird.f32 %v8795
    %vm8813 = vweird.f32 %v8806
    %vm8814 = vmor %vm8812, %vm8813
    %v8815 = vsel %vm8814, %v8806, %v8811
    %v8819 = vunpack.c.l.s4 269488144
    %v8820 = vunpack.c.0.s8 %v8819
    %v8821 = vperm.slane %v8805, %v8820
    %v8823 = vunpack.c.l.s4 842150450
    %v8824 = vunpack.c.0.s8 %v8823
    %v8825 = vperm.slane %v8805, %v8824
    %v8827 = vunpack.c.l.s4 1414812756
    %v8828 = vunpack.c.0.s8 %v8827
    %v8829 = vperm.slane %v8805, %v8828
    %v8831 = vunpack.c.l.s4 1987475062
    %v8832 = vunpack.c.0.s8 %v8831
    %v8833 = vperm.slane %v8805, %v8832
    %v8835 = vunpack.c.l.s4 269488144
    %v8836 = vunpack.c.0.s8 %v8835
    %v8837 = vperm.slane %v8815, %v8836
    %v8839 = vunpack.c.l.s4 842150450
    %v8840 = vunpack.c.0.s8 %v8839
    %v8841 = vperm.slane %v8815, %v8840
    %v8843 = vunpack.c.l.s4 1414812756
    %v8844 = vunpack.c.0.s8 %v8843
    %v8845 = vperm.slane %v8815, %v8844
    %v8847 = vunpack.c.l.s4 1987475062
    %v8848 = vunpack.c.0.s8 %v8847
    %v8849 = vperm.slane %v8815, %v8848
    %v8858 = vmul.f32 %v8745, %v8821
    %v8859 = vmul.f32 %v8746, %v8825
    %v8860 = vmul.f32 %v8747, %v8829
    %v8861 = vmul.f32 %v8748, %v8833
    %v8862 = vmul.f32 %v8749, %v8837
    %v8863 = vmul.f32 %v8750, %v8841
    %v8864 = vmul.f32 %v8751, %v8845
    %v8865 = vmul.f32 %v8752, %v8849
    %v8866 = vmul.f32 %v8858, %v4063
    %v8867 = vmul.f32 %v8859, %v4065
    %v8868 = vmul.f32 %v8860, %v4066
    %v8869 = vmul.f32 %v8861, %v4067
    %v8870 = vmul.f32 %v8862, %v4063
    %v8871 = vmul.f32 %v8863, %v4065
    %v8872 = vmul.f32 %v8864, %v4066
    %v8873 = vmul.f32 %v8865, %v4067
    %v8874 = vadd.f32 %v8866, %v4080
    %v8875 = vadd.f32 %v8867, %v4082
    %v8876 = vadd.f32 %v8868, %v4083
    %v8877 = vadd.f32 %v8869, %v4084
    %v8878 = vadd.f32 %v8870, %v4080
    %v8879 = vadd.f32 %v8871, %v4082
    %v8880 = vadd.f32 %v8872, %v4083
    %v8881 = vadd.f32 %v8873, %v4084
    %8890 = vst [vmem:[#allocation1] ss:$4 sm:$0xff] %v8874
    %s8891 = scalar_lea.vmem [#allocation1], 1
    %8892 = vst [vmem:[%s8891] ss:$4 sm:$0xff] %v8875
    %s8893 = scalar_lea.vmem [#allocation1], 2
    %8894 = vst [vmem:[%s8893] ss:$4 sm:$0xff] %v8876
    %s8895 = scalar_lea.vmem [#allocation1], 3
    %8896 = vst [vmem:[%s8895] ss:$4 sm:$0xff] %v8877
    %s8897 = scalar_lea.vmem [#allocation1], 32
    %8898 = vst [vmem:[%s8897] ss:$4 sm:$0xff] %v8878
    %s8899 = scalar_lea.vmem [#allocation1], 33
    %8900 = vst [vmem:[%s8899] ss:$4 sm:$0xff] %v8879
    %s8901 = scalar_lea.vmem [#allocation1], 34
    %8902 = vst [vmem:[%s8901] ss:$4 sm:$0xff] %v8880
    %s8903 = scalar_lea.vmem [#allocation1], 35
    %8904 = vst [vmem:[%s8903] ss:$4 sm:$0xff] %v8881
    %v8905 = vld.sshfl [vmem:[#allocation1] sm:$0xff pattern:$0x73625140]
    %v8906 = vld.sshfl [vmem:[#allocation1 + $0x20] sm:$0xff pattern:$0x73625140]
    %v8909 = vpack.c.bf16 %v8906, %v8905
    %v8910 = vld [vmem:[#allocation23] sm:$0xff]
    %v8911 = vld [vmem:[#allocation23 + $0x8] sm:$0xff]
    %v8912 = vld [vmem:[#allocation23 + $0x10] sm:$0xff]
    %v8913 = vld [vmem:[#allocation23 + $0x18] sm:$0xff]
    %v8914 = vld [vmem:[#allocation23 + $0x20] sm:$0xff]
    %v8915 = vld [vmem:[#allocation23 + $0x28] sm:$0xff]
    %v8916 = vld [vmem:[#allocation23 + $0x30] sm:$0xff]
    %v8917 = vld [vmem:[#allocation23 + $0x38] sm:$0xff]
    %v8918 = vld [vmem:[#allocation23 + $0x40] sm:$0xff]
    %v8919 = vld [vmem:[#allocation23 + $0x48] sm:$0xff]
    %v8920 = vld [vmem:[#allocation23 + $0x50] sm:$0xff]
    %v8921 = vld [vmem:[#allocation23 + $0x58] sm:$0xff]
    %v8922 = vld [vmem:[#allocation23 + $0x60] sm:$0xff]
    %v8923 = vld [vmem:[#allocation23 + $0x68] sm:$0xff]
    %v8924 = vld [vmem:[#allocation23 + $0x70] sm:$0xff]
    %v8925 = vld [vmem:[#allocation23 + $0x78] sm:$0xff]
    %v8926 = vld [vmem:[#allocation23 + $0x80] sm:$0xff]
    %v8927 = vld [vmem:[#allocation23 + $0x88] sm:$0xff]
    %v8928 = vld [vmem:[#allocation23 + $0x90] sm:$0xff]
    %v8929 = vld [vmem:[#allocation23 + $0x98] sm:$0xff]
    %v8930 = vld [vmem:[#allocation23 + $0xa0] sm:$0xff]
    %v8931 = vld [vmem:[#allocation23 + $0xa8] sm:$0xff]
    %v8932 = vld [vmem:[#allocation23 + $0xb0] sm:$0xff]
    %v8933 = vld [vmem:[#allocation23 + $0xb8] sm:$0xff]
    %v8934 = vld [vmem:[#allocation23 + $0xc0] sm:$0xff]
    %v8935 = vld [vmem:[#allocation23 + $0xc8] sm:$0xff]
    %v8936 = vld [vmem:[#allocation23 + $0xd0] sm:$0xff]
    %v8937 = vld [vmem:[#allocation23 + $0xd8] sm:$0xff]
    %v8938 = vld [vmem:[#allocation23 + $0xe0] sm:$0xff]
    %v8939 = vld [vmem:[#allocation23 + $0xe8] sm:$0xff]
    %v8940 = vld [vmem:[#allocation23 + $0xf0] sm:$0xff]
    %v8941 = vld [vmem:[#allocation23 + $0xf8] sm:$0xff]
    %v8942 = vld [vmem:[%s21] sm:$0xf]
    %v8944 = vperm.slane %v8942, 0
    %v8945 = vperm.slane %v8942, 1
    %v8946 = vperm.slane %v8942, 2
    %v8947 = vperm.slane %v8942, 3
    %v8984 = vunpack.c.l.b16 %v8910
    %v8985 = vunpack.c.h.b16 %v8910
    %v8986 = vunpack.c.l.b16 %v8911
    %v8987 = vunpack.c.h.b16 %v8911
    %v8988 = vunpack.c.l.b16 %v8912
    %v8989 = vunpack.c.h.b16 %v8912
    %v8990 = vunpack.c.l.b16 %v8913
    %v8991 = vunpack.c.h.b16 %v8913
    %v8992 = vunpack.c.l.b16 %v8914
    %v8993 = vunpack.c.h.b16 %v8914
    %v8994 = vunpack.c.l.b16 %v8915
    %v8995 = vunpack.c.h.b16 %v8915
    %v8996 = vunpack.c.l.b16 %v8916
    %v8997 = vunpack.c.h.b16 %v8916
    %v8998 = vunpack.c.l.b16 %v8917
    %v8999 = vunpack.c.h.b16 %v8917
    %v9000 = vunpack.c.l.b16 %v8918
    %v9001 = vunpack.c.h.b16 %v8918
    %v9002 = vunpack.c.l.b16 %v8919
    %v9003 = vunpack.c.h.b16 %v8919
    %v9004 = vunpack.c.l.b16 %v8920
    %v9005 = vunpack.c.h.b16 %v8920
    %v9006 = vunpack.c.l.b16 %v8921
    %v9007 = vunpack.c.h.b16 %v8921
    %v9008 = vunpack.c.l.b16 %v8922
    %v9009 = vunpack.c.h.b16 %v8922
    %v9010 = vunpack.c.l.b16 %v8923
    %v9011 = vunpack.c.h.b16 %v8923
    %v9012 = vunpack.c.l.b16 %v8924
    %v9013 = vunpack.c.h.b16 %v8924
    %v9014 = vunpack.c.l.b16 %v8925
    %v9015 = vunpack.c.h.b16 %v8925
    %v9016 = vunpack.c.l.b16 %v8926
    %v9017 = vunpack.c.h.b16 %v8926
    %v9018 = vunpack.c.l.b16 %v8927
    %v9019 = vunpack.c.h.b16 %v8927
    %v9020 = vunpack.c.l.b16 %v8928
    %v9021 = vunpack.c.h.b16 %v8928
    %v9022 = vunpack.c.l.b16 %v8929
    %v9023 = vunpack.c.h.b16 %v8929
    %v9024 = vunpack.c.l.b16 %v8930
    %v9025 = vunpack.c.h.b16 %v8930
    %v9026 = vunpack.c.l.b16 %v8931
    %v9027 = vunpack.c.h.b16 %v8931
    %v9028 = vunpack.c.l.b16 %v8932
    %v9029 = vunpack.c.h.b16 %v8932
    %v9030 = vunpack.c.l.b16 %v8933
    %v9031 = vunpack.c.h.b16 %v8933
    %v9032 = vunpack.c.l.b16 %v8934
    %v9033 = vunpack.c.h.b16 %v8934
    %v9034 = vunpack.c.l.b16 %v8935
    %v9035 = vunpack.c.h.b16 %v8935
    %v9036 = vunpack.c.l.b16 %v8936
    %v9037 = vunpack.c.h.b16 %v8936
    %v9038 = vunpack.c.l.b16 %v8937
    %v9039 = vunpack.c.h.b16 %v8937
    %v9040 = vunpack.c.l.b16 %v8938
    %v9041 = vunpack.c.h.b16 %v8938
    %v9042 = vunpack.c.l.b16 %v8939
    %v9043 = vunpack.c.h.b16 %v8939
    %v9044 = vunpack.c.l.b16 %v8940
    %v9045 = vunpack.c.h.b16 %v8940
    %v9046 = vunpack.c.l.b16 %v8941
    %v9047 = vunpack.c.h.b16 %v8941
    %v9048 = vpack.c.b16 %v8988, %v8984
    %v9049 = vpack.c.b16 %v8989, %v8985
    %v9050 = vpack.c.b16 %v8990, %v8986
    %v9051 = vpack.c.b16 %v8991, %v8987
    %v9052 = vpack.c.b16 %v8996, %v8992
    %v9053 = vpack.c.b16 %v8997, %v8993
    %v9054 = vpack.c.b16 %v8998, %v8994
    %v9055 = vpack.c.b16 %v8999, %v8995
    %v9056 = vpack.c.b16 %v9004, %v9000
    %v9057 = vpack.c.b16 %v9005, %v9001
    %v9058 = vpack.c.b16 %v9006, %v9002
    %v9059 = vpack.c.b16 %v9007, %v9003
    %v9060 = vpack.c.b16 %v9012, %v9008
    %v9061 = vpack.c.b16 %v9013, %v9009
    %v9062 = vpack.c.b16 %v9014, %v9010
    %v9063 = vpack.c.b16 %v9015, %v9011
    %v9064 = vpack.c.b16 %v9020, %v9016
    %v9065 = vpack.c.b16 %v9021, %v9017
    %v9066 = vpack.c.b16 %v9022, %v9018
    %v9067 = vpack.c.b16 %v9023, %v9019
    %v9068 = vpack.c.b16 %v9028, %v9024
    %v9069 = vpack.c.b16 %v9029, %v9025
    %v9070 = vpack.c.b16 %v9030, %v9026
    %v9071 = vpack.c.b16 %v9031, %v9027
    %v9072 = vpack.c.b16 %v9036, %v9032
    %v9073 = vpack.c.b16 %v9037, %v9033
    %v9074 = vpack.c.b16 %v9038, %v9034
    %v9075 = vpack.c.b16 %v9039, %v9035
    %v9076 = vpack.c.b16 %v9044, %v9040
    %v9077 = vpack.c.b16 %v9045, %v9041
    %v9078 = vpack.c.b16 %v9046, %v9042
    %v9079 = vpack.c.b16 %v9047, %v9043
    %9112 = vmatpush.bf16.msra.mxu0 %v9076
    %9113 = vmatpush.bf16.msra.mxu0 %v9072
    %9114 = vmatpush.bf16.msra.mxu0 %v9068
    %9115 = vmatpush.bf16.msra.mxu0 %v9064
    %9116 = vmatpush.bf16.msra.mxu0 %v9060
    %9117 = vmatpush.bf16.msra.mxu0 %v9056
    %9118 = vmatpush.bf16.msra.mxu0 %v9052
    %9119 = vmatpush.bf16.msra.mxu0 %v9048
    %9120 = vmatmul.bf16.gmra.mxu0 %v8909
    %v9121 = vpop.f32.mrf.mxu0
    %v9122 = vadd.f32 %v8944, %v9121
    %v9123 = vpop.f32.mrf.mxu0
    %v9124 = vadd.f32 %v8944, %v9123
    %9125 = vdwg.mxu0
    %9126 = vmatpush.bf16.msra.mxu0 %v9077
    %9127 = vmatpush.bf16.msra.mxu0 %v9073
    %9128 = vmatpush.bf16.msra.mxu0 %v9069
    %9129 = vmatpush.bf16.msra.mxu0 %v9065
    %9130 = vmatpush.bf16.msra.mxu0 %v9061
    %9131 = vmatpush.bf16.msra.mxu0 %v9057
    %9132 = vmatpush.bf16.msra.mxu0 %v9053
    %9133 = vmatpush.bf16.msra.mxu0 %v9049
    %9134 = vmatmul.bf16.gmra.mxu0 %v8909
    %v9135 = vpop.f32.mrf.mxu0
    %v9136 = vadd.f32 %v8945, %v9135
    %v9137 = vpop.f32.mrf.mxu0
    %v9138 = vadd.f32 %v8945, %v9137
    %9139 = vdwg.mxu0
    %9140 = vmatpush.bf16.msra.mxu0 %v9078
    %9141 = vmatpush.bf16.msra.mxu0 %v9074
    %9142 = vmatpush.bf16.msra.mxu0 %v9070
    %9143 = vmatpush.bf16.msra.mxu0 %v9066
    %9144 = vmatpush.bf16.msra.mxu0 %v9062
    %9145 = vmatpush.bf16.msra.mxu0 %v9058
    %9146 = vmatpush.bf16.msra.mxu0 %v9054
    %9147 = vmatpush.bf16.msra.mxu0 %v9050
    %9148 = vmatmul.bf16.gmra.mxu0 %v8909
    %v9149 = vpop.f32.mrf.mxu0
    %v9150 = vadd.f32 %v8946, %v9149
    %v9151 = vpop.f32.mrf.mxu0
    %v9152 = vadd.f32 %v8946, %v9151
    %9153 = vdwg.mxu0
    %9154 = vmatpush.bf16.msra.mxu0 %v9079
    %9155 = vmatpush.bf16.msra.mxu0 %v9075
    %9156 = vmatpush.bf16.msra.mxu0 %v9071
    %9157 = vmatpush.bf16.msra.mxu0 %v9067
    %9158 = vmatpush.bf16.msra.mxu0 %v9063
    %9159 = vmatpush.bf16.msra.mxu0 %v9059
    %9160 = vmatpush.bf16.msra.mxu0 %v9055
    %9161 = vmatpush.bf16.msra.mxu0 %v9051
    %9162 = vmatmul.bf16.gmra.mxu0 %v8909
    %v9163 = vpop.f32.mrf.mxu0
    %v9164 = vadd.f32 %v8947, %v9163
    %v9165 = vpop.f32.mrf.mxu0
    %v9166 = vadd.f32 %v8947, %v9165
    %9167 = vdwg.mxu0
    %v9168 = vmul.f32 %v9122, 1.702
    %v9169 = vmul.f32 %v9136, 1.702
    %v9170 = vmul.f32 %v9150, 1.702
    %v9171 = vmul.f32 %v9164, 1.702
    %v9172 = vmul.f32 %v9124, 1.702
    %v9173 = vmul.f32 %v9138, 1.702
    %v9174 = vmul.f32 %v9152, 1.702
    %v9175 = vmul.f32 %v9166, 1.702
    %v9176 = vxor.u32 %v9168, 2147483648
    %v9177 = vxor.u32 %v9169, 2147483648
    %v9178 = vxor.u32 %v9170, 2147483648
    %v9179 = vxor.u32 %v9171, 2147483648
    %v9180 = vxor.u32 %v9172, 2147483648
    %v9181 = vxor.u32 %v9173, 2147483648
    %v9182 = vxor.u32 %v9174, 2147483648
    %v9183 = vxor.u32 %v9175, 2147483648
    %v9184 = vmul.f32 %v9176, 1.442695
    %v9185 = vpow.pop %v9184
    %v9186 = vmul.f32 %v9177, 1.442695
    %v9187 = vpow.pop %v9186
    %v9188 = vmul.f32 %v9178, 1.442695
    %v9189 = vpow.pop %v9188
    %v9190 = vmul.f32 %v9179, 1.442695
    %v9191 = vpow.pop %v9190
    %v9192 = vmul.f32 %v9180, 1.442695
    %v9193 = vpow.pop %v9192
    %v9194 = vmul.f32 %v9181, 1.442695
    %v9195 = vpow.pop %v9194
    %v9196 = vmul.f32 %v9182, 1.442695
    %v9197 = vpow.pop %v9196
    %v9198 = vmul.f32 %v9183, 1.442695
    %v9199 = vpow.pop %v9198
    %v9200 = vadd.f32 %v9185, 1.0
    %v9201 = vadd.f32 %v9187, 1.0
    %v9202 = vadd.f32 %v9189, 1.0
    %v9203 = vadd.f32 %v9191, 1.0
    %v9204 = vadd.f32 %v9193, 1.0
    %v9205 = vadd.f32 %v9195, 1.0
    %v9206 = vadd.f32 %v9197, 1.0
    %v9207 = vadd.f32 %v9199, 1.0
    %v9208 = vrcp.pop %v9200
    %v9209 = vmul.f32 %v9200, %v9208
    %v9210 = vsub.f32 1.0, %v9209
    %v9211 = vmul.f32 %v9208, %v9210
    %v9212 = vadd.f32 %v9208, %v9211
    %vm9213 = vweird.f32 %v9200
    %vm9214 = vweird.f32 %v9208
    %vm9215 = vmor %vm9213, %vm9214
    %v9216 = vsel %vm9215, %v9208, %v9212
    %v9217 = vand.u32 2147483647, %v9200
    %vm9218 = vcmp.eq.f32.partialorder %v9217, 8.507059e+37
    %v9219 = vand.u32 %v9200, 2147483648
    %v9220 = vor.u32 1.1754944e-38, %v9219
    %v9221 = vsel %vm9218, %v9220, %v9216
    %v9222 = vmul.f32 1.0, %v9221
    %v9223 = vrcp.pop %v9201
    %v9224 = vmul.f32 %v9201, %v9223
    %v9225 = vsub.f32 1.0, %v9224
    %v9226 = vmul.f32 %v9223, %v9225
    %v9227 = vadd.f32 %v9223, %v9226
    %vm9228 = vweird.f32 %v9201
    %vm9229 = vweird.f32 %v9223
    %vm9230 = vmor %vm9228, %vm9229
    %v9231 = vsel %vm9230, %v9223, %v9227
    %v9232 = vand.u32 2147483647, %v9201
    %vm9233 = vcmp.eq.f32.partialorder %v9232, 8.507059e+37
    %v9234 = vand.u32 %v9201, 2147483648
    %v9235 = vor.u32 1.1754944e-38, %v9234
    %v9236 = vsel %vm9233, %v9235, %v9231
    %v9237 = vmul.f32 1.0, %v9236
    %v9238 = vrcp.pop %v9202
    %v9239 = vmul.f32 %v9202, %v9238
    %v9240 = vsub.f32 1.0, %v9239
    %v9241 = vmul.f32 %v9238, %v9240
    %v9242 = vadd.f32 %v9238, %v9241
    %vm9243 = vweird.f32 %v9202
    %vm9244 = vweird.f32 %v9238
    %vm9245 = vmor %vm9243, %vm9244
    %v9246 = vsel %vm9245, %v9238, %v9242
    %v9247 = vand.u32 2147483647, %v9202
    %vm9248 = vcmp.eq.f32.partialorder %v9247, 8.507059e+37
    %v9249 = vand.u32 %v9202, 2147483648
    %v9250 = vor.u32 1.1754944e-38, %v9249
    %v9251 = vsel %vm9248, %v9250, %v9246
    %v9252 = vmul.f32 1.0, %v9251
    %v9253 = vrcp.pop %v9203
    %v9254 = vmul.f32 %v9203, %v9253
    %v9255 = vsub.f32 1.0, %v9254
    %v9256 = vmul.f32 %v9253, %v9255
    %v9257 = vadd.f32 %v9253, %v9256
    %vm9258 = vweird.f32 %v9203
    %vm9259 = vweird.f32 %v9253
    %vm9260 = vmor %vm9258, %vm9259
    %v9261 = vsel %vm9260, %v9253, %v9257
    %v9262 = vand.u32 2147483647, %v9203
    %vm9263 = vcmp.eq.f32.partialorder %v9262, 8.507059e+37
    %v9264 = vand.u32 %v9203, 2147483648
    %v9265 = vor.u32 1.1754944e-38, %v9264
    %v9266 = vsel %vm9263, %v9265, %v9261
    %v9267 = vmul.f32 1.0, %v9266
    %v9268 = vrcp.pop %v9204
    %v9269 = vmul.f32 %v9204, %v9268
    %v9270 = vsub.f32 1.0, %v9269
    %v9271 = vmul.f32 %v9268, %v9270
    %v9272 = vadd.f32 %v9268, %v9271
    %vm9273 = vweird.f32 %v9204
    %vm9274 = vweird.f32 %v9268
    %vm9275 = vmor %vm9273, %vm9274
    %v9276 = vsel %vm9275, %v9268, %v9272
    %v9277 = vand.u32 2147483647, %v9204
    %vm9278 = vcmp.eq.f32.partialorder %v9277, 8.507059e+37
    %v9279 = vand.u32 %v9204, 2147483648
    %v9280 = vor.u32 1.1754944e-38, %v9279
    %v9281 = vsel %vm9278, %v9280, %v9276
    %v9282 = vmul.f32 1.0, %v9281
    %v9283 = vrcp.pop %v9205
    %v9284 = vmul.f32 %v9205, %v9283
    %v9285 = vsub.f32 1.0, %v9284
    %v9286 = vmul.f32 %v9283, %v9285
    %v9287 = vadd.f32 %v9283, %v9286
    %vm9288 = vweird.f32 %v9205
    %vm9289 = vweird.f32 %v9283
    %vm9290 = vmor %vm9288, %vm9289
    %v9291 = vsel %vm9290, %v9283, %v9287
    %v9292 = vand.u32 2147483647, %v9205
    %vm9293 = vcmp.eq.f32.partialorder %v9292, 8.507059e+37
    %v9294 = vand.u32 %v9205, 2147483648
    %v9295 = vor.u32 1.1754944e-38, %v9294
    %v9296 = vsel %vm9293, %v9295, %v9291
    %v9297 = vmul.f32 1.0, %v9296
    %v9298 = vrcp.pop %v9206
    %v9299 = vmul.f32 %v9206, %v9298
    %v9300 = vsub.f32 1.0, %v9299
    %v9301 = vmul.f32 %v9298, %v9300
    %v9302 = vadd.f32 %v9298, %v9301
    %vm9303 = vweird.f32 %v9206
    %vm9304 = vweird.f32 %v9298
    %vm9305 = vmor %vm9303, %vm9304
    %v9306 = vsel %vm9305, %v9298, %v9302
    %v9307 = vand.u32 2147483647, %v9206
    %vm9308 = vcmp.eq.f32.partialorder %v9307, 8.507059e+37
    %v9309 = vand.u32 %v9206, 2147483648
    %v9310 = vor.u32 1.1754944e-38, %v9309
    %v9311 = vsel %vm9308, %v9310, %v9306
    %v9312 = vmul.f32 1.0, %v9311
    %v9313 = vrcp.pop %v9207
    %v9314 = vmul.f32 %v9207, %v9313
    %v9315 = vsub.f32 1.0, %v9314
    %v9316 = vmul.f32 %v9313, %v9315
    %v9317 = vadd.f32 %v9313, %v9316
    %vm9318 = vweird.f32 %v9207
    %vm9319 = vweird.f32 %v9313
    %vm9320 = vmor %vm9318, %vm9319
    %v9321 = vsel %vm9320, %v9313, %v9317
    %v9322 = vand.u32 2147483647, %v9207
    %vm9323 = vcmp.eq.f32.partialorder %v9322, 8.507059e+37
    %v9324 = vand.u32 %v9207, 2147483648
    %v9325 = vor.u32 1.1754944e-38, %v9324
    %v9326 = vsel %vm9323, %v9325, %v9321
    %v9327 = vmul.f32 1.0, %v9326
    %v9328 = vmul.f32 %v9122, %v9222
    %v9329 = vmul.f32 %v9136, %v9237
    %v9330 = vmul.f32 %v9150, %v9252
    %v9331 = vmul.f32 %v9164, %v9267
    %v9332 = vmul.f32 %v9124, %v9282
    %v9333 = vmul.f32 %v9138, %v9297
    %v9334 = vmul.f32 %v9152, %v9312
    %v9335 = vmul.f32 %v9166, %v9327
    %v9336 = vpack.c.bf16 %v9332, %v9328
    %v9337 = vpack.c.bf16 %v9333, %v9329
    %v9338 = vpack.c.bf16 %v9334, %v9330
    %v9339 = vpack.c.bf16 %v9335, %v9331
    %v9340 = vld [vmem:[#allocation25] sm:$0xf]
    %v9341 = vld [vmem:[#allocation25 + $0x4] sm:$0xf]
    %v9342 = vld [vmem:[#allocation25 + $0x8] sm:$0xf]
    %v9343 = vld [vmem:[#allocation25 + $0xc] sm:$0xf]
    %v9344 = vld [vmem:[#allocation25 + $0x10] sm:$0xf]
    %v9345 = vld [vmem:[#allocation25 + $0x14] sm:$0xf]
    %v9346 = vld [vmem:[#allocation25 + $0x18] sm:$0xf]
    %v9347 = vld [vmem:[#allocation25 + $0x1c] sm:$0xf]
    %v9348 = vld [vmem:[#allocation25 + $0x20] sm:$0xf]
    %v9349 = vld [vmem:[#allocation25 + $0x24] sm:$0xf]
    %v9350 = vld [vmem:[#allocation25 + $0x28] sm:$0xf]
    %v9351 = vld [vmem:[#allocation25 + $0x2c] sm:$0xf]
    %v9352 = vld [vmem:[#allocation25 + $0x30] sm:$0xf]
    %v9353 = vld [vmem:[#allocation25 + $0x34] sm:$0xf]
    %v9354 = vld [vmem:[#allocation25 + $0x38] sm:$0xf]
    %v9355 = vld [vmem:[#allocation25 + $0x3c] sm:$0xf]
    %v9356 = vld [vmem:[#allocation25 + $0x40] sm:$0xf]
    %v9357 = vld [vmem:[#allocation25 + $0x44] sm:$0xf]
    %v9358 = vld [vmem:[#allocation25 + $0x48] sm:$0xf]
    %v9359 = vld [vmem:[#allocation25 + $0x4c] sm:$0xf]
    %v9360 = vld [vmem:[#allocation25 + $0x50] sm:$0xf]
    %v9361 = vld [vmem:[#allocation25 + $0x54] sm:$0xf]
    %v9362 = vld [vmem:[#allocation25 + $0x58] sm:$0xf]
    %v9363 = vld [vmem:[#allocation25 + $0x5c] sm:$0xf]
    %v9364 = vld [vmem:[#allocation25 + $0x60] sm:$0xf]
    %v9365 = vld [vmem:[#allocation25 + $0x64] sm:$0xf]
    %v9366 = vld [vmem:[#allocation25 + $0x68] sm:$0xf]
    %v9367 = vld [vmem:[#allocation25 + $0x6c] sm:$0xf]
    %v9368 = vld [vmem:[#allocation25 + $0x70] sm:$0xf]
    %v9369 = vld [vmem:[#allocation25 + $0x74] sm:$0xf]
    %v9370 = vld [vmem:[#allocation25 + $0x78] sm:$0xf]
    %v9371 = vld [vmem:[#allocation25 + $0x7c] sm:$0xf]
    %v9372 = vld [vmem:[#allocation25 + $0x80] sm:$0xf]
    %v9373 = vld [vmem:[#allocation25 + $0x84] sm:$0xf]
    %v9374 = vld [vmem:[#allocation25 + $0x88] sm:$0xf]
    %v9375 = vld [vmem:[#allocation25 + $0x8c] sm:$0xf]
    %v9376 = vld [vmem:[#allocation25 + $0x90] sm:$0xf]
    %v9377 = vld [vmem:[#allocation25 + $0x94] sm:$0xf]
    %v9378 = vld [vmem:[#allocation25 + $0x98] sm:$0xf]
    %v9379 = vld [vmem:[#allocation25 + $0x9c] sm:$0xf]
    %v9380 = vld [vmem:[#allocation25 + $0xa0] sm:$0xf]
    %v9381 = vld [vmem:[#allocation25 + $0xa4] sm:$0xf]
    %v9382 = vld [vmem:[#allocation25 + $0xa8] sm:$0xf]
    %v9383 = vld [vmem:[#allocation25 + $0xac] sm:$0xf]
    %v9384 = vld [vmem:[#allocation25 + $0xb0] sm:$0xf]
    %v9385 = vld [vmem:[#allocation25 + $0xb4] sm:$0xf]
    %v9386 = vld [vmem:[#allocation25 + $0xb8] sm:$0xf]
    %v9387 = vld [vmem:[#allocation25 + $0xbc] sm:$0xf]
    %v9388 = vld [vmem:[#allocation25 + $0xc0] sm:$0xf]
    %v9389 = vld [vmem:[#allocation25 + $0xc4] sm:$0xf]
    %v9390 = vld [vmem:[#allocation25 + $0xc8] sm:$0xf]
    %v9391 = vld [vmem:[#allocation25 + $0xcc] sm:$0xf]
    %v9392 = vld [vmem:[#allocation25 + $0xd0] sm:$0xf]
    %v9393 = vld [vmem:[#allocation25 + $0xd4] sm:$0xf]
    %v9394 = vld [vmem:[#allocation25 + $0xd8] sm:$0xf]
    %v9395 = vld [vmem:[#allocation25 + $0xdc] sm:$0xf]
    %v9396 = vld [vmem:[#allocation25 + $0xe0] sm:$0xf]
    %v9397 = vld [vmem:[#allocation25 + $0xe4] sm:$0xf]
    %v9398 = vld [vmem:[#allocation25 + $0xe8] sm:$0xf]
    %v9399 = vld [vmem:[#allocation25 + $0xec] sm:$0xf]
    %v9400 = vld [vmem:[#allocation25 + $0xf0] sm:$0xf]
    %v9401 = vld [vmem:[#allocation25 + $0xf4] sm:$0xf]
    %v9402 = vld [vmem:[#allocation25 + $0xf8] sm:$0xf]
    %v9403 = vld [vmem:[#allocation25 + $0xfc] sm:$0xf]
    %v9468 = vunpack.c.l.b16 %v9340
    %v9469 = vunpack.c.l.b16 %v9341
    %v9470 = vunpack.c.l.b16 %v9342
    %v9471 = vunpack.c.l.b16 %v9343
    %v9472 = vunpack.c.l.b16 %v9344
    %v9473 = vunpack.c.l.b16 %v9345
    %v9474 = vunpack.c.l.b16 %v9346
    %v9475 = vunpack.c.l.b16 %v9347
    %v9476 = vunpack.c.l.b16 %v9348
    %v9477 = vunpack.c.l.b16 %v9349
    %v9478 = vunpack.c.l.b16 %v9350
    %v9479 = vunpack.c.l.b16 %v9351
    %v9480 = vunpack.c.l.b16 %v9352
    %v9481 = vunpack.c.l.b16 %v9353
    %v9482 = vunpack.c.l.b16 %v9354
    %v9483 = vunpack.c.l.b16 %v9355
    %v9484 = vunpack.c.l.b16 %v9356
    %v9485 = vunpack.c.l.b16 %v9357
    %v9486 = vunpack.c.l.b16 %v9358
    %v9487 = vunpack.c.l.b16 %v9359
    %v9488 = vunpack.c.l.b16 %v9360
    %v9489 = vunpack.c.l.b16 %v9361
    %v9490 = vunpack.c.l.b16 %v9362
    %v9491 = vunpack.c.l.b16 %v9363
    %v9492 = vunpack.c.l.b16 %v9364
    %v9493 = vunpack.c.l.b16 %v9365
    %v9494 = vunpack.c.l.b16 %v9366
    %v9495 = vunpack.c.l.b16 %v9367
    %v9496 = vunpack.c.l.b16 %v9368
    %v9497 = vunpack.c.l.b16 %v9369
    %v9498 = vunpack.c.l.b16 %v9370
    %v9499 = vunpack.c.l.b16 %v9371
    %v9500 = vunpack.c.l.b16 %v9372
    %v9501 = vunpack.c.l.b16 %v9373
    %v9502 = vunpack.c.l.b16 %v9374
    %v9503 = vunpack.c.l.b16 %v9375
    %v9504 = vunpack.c.l.b16 %v9376
    %v9505 = vunpack.c.l.b16 %v9377
    %v9506 = vunpack.c.l.b16 %v9378
    %v9507 = vunpack.c.l.b16 %v9379
    %v9508 = vunpack.c.l.b16 %v9380
    %v9509 = vunpack.c.l.b16 %v9381
    %v9510 = vunpack.c.l.b16 %v9382
    %v9511 = vunpack.c.l.b16 %v9383
    %v9512 = vunpack.c.l.b16 %v9384
    %v9513 = vunpack.c.l.b16 %v9385
    %v9514 = vunpack.c.l.b16 %v9386
    %v9515 = vunpack.c.l.b16 %v9387
    %v9516 = vunpack.c.l.b16 %v9388
    %v9517 = vunpack.c.l.b16 %v9389
    %v9518 = vunpack.c.l.b16 %v9390
    %v9519 = vunpack.c.l.b16 %v9391
    %v9520 = vunpack.c.l.b16 %v9392
    %v9521 = vunpack.c.l.b16 %v9393
    %v9522 = vunpack.c.l.b16 %v9394
    %v9523 = vunpack.c.l.b16 %v9395
    %v9524 = vunpack.c.l.b16 %v9396
    %v9525 = vunpack.c.l.b16 %v9397
    %v9526 = vunpack.c.l.b16 %v9398
    %v9527 = vunpack.c.l.b16 %v9399
    %v9528 = vunpack.c.l.b16 %v9400
    %v9529 = vunpack.c.l.b16 %v9401
    %v9530 = vunpack.c.l.b16 %v9402
    %v9531 = vunpack.c.l.b16 %v9403
    %v9532 = vpack.c.b16 %v9469, %v9468
    %v9533 = vpack.c.b16 %v9471, %v9470
    %v9534 = vpack.c.b16 %v9473, %v9472
    %v9535 = vpack.c.b16 %v9475, %v9474
    %v9536 = vpack.c.b16 %v9477, %v9476
    %v9537 = vpack.c.b16 %v9479, %v9478
    %v9538 = vpack.c.b16 %v9481, %v9480
    %v9539 = vpack.c.b16 %v9483, %v9482
    %v9540 = vpack.c.b16 %v9485, %v9484
    %v9541 = vpack.c.b16 %v9487, %v9486
    %v9542 = vpack.c.b16 %v9489, %v9488
    %v9543 = vpack.c.b16 %v9491, %v9490
    %v9544 = vpack.c.b16 %v9493, %v9492
    %v9545 = vpack.c.b16 %v9495, %v9494
    %v9546 = vpack.c.b16 %v9497, %v9496
    %v9547 = vpack.c.b16 %v9499, %v9498
    %v9548 = vpack.c.b16 %v9501, %v9500
    %v9549 = vpack.c.b16 %v9503, %v9502
    %v9550 = vpack.c.b16 %v9505, %v9504
    %v9551 = vpack.c.b16 %v9507, %v9506
    %v9552 = vpack.c.b16 %v9509, %v9508
    %v9553 = vpack.c.b16 %v9511, %v9510
    %v9554 = vpack.c.b16 %v9513, %v9512
    %v9555 = vpack.c.b16 %v9515, %v9514
    %v9556 = vpack.c.b16 %v9517, %v9516
    %v9557 = vpack.c.b16 %v9519, %v9518
    %v9558 = vpack.c.b16 %v9521, %v9520
    %v9559 = vpack.c.b16 %v9523, %v9522
    %v9560 = vpack.c.b16 %v9525, %v9524
    %v9561 = vpack.c.b16 %v9527, %v9526
    %v9562 = vpack.c.b16 %v9529, %v9528
    %v9563 = vpack.c.b16 %v9531, %v9530
    %9596 = vmatpush.bf16.msra.mxu0 %v9539
    %9597 = vmatpush.bf16.msra.mxu0 %v9538
    %9598 = vmatpush.bf16.msra.mxu0 %v9537
    %9599 = vmatpush.bf16.msra.mxu0 %v9536
    %9600 = vmatpush.bf16.msra.mxu0 %v9535
    %9601 = vmatpush.bf16.msra.mxu0 %v9534
    %9602 = vmatpush.bf16.msra.mxu0 %v9533
    %9603 = vmatpush.bf16.msra.mxu0 %v9532
    %9604 = vmatmul.bf16.gmra.mxu0 %v9336
    %v9605 = vpop.f32.mrf.mxu0
    %v9606 = vadd.f32 0.0, %v9605
    %v9607 = vpop.f32.mrf.mxu0
    %v9608 = vadd.f32 0.0, %v9607
    %9609 = vdwg.mxu0
    %9610 = vmatpush.bf16.msra.mxu0 %v9547
    %9611 = vmatpush.bf16.msra.mxu0 %v9546
    %9612 = vmatpush.bf16.msra.mxu0 %v9545
    %9613 = vmatpush.bf16.msra.mxu0 %v9544
    %9614 = vmatpush.bf16.msra.mxu0 %v9543
    %9615 = vmatpush.bf16.msra.mxu0 %v9542
    %9616 = vmatpush.bf16.msra.mxu0 %v9541
    %9617 = vmatpush.bf16.msra.mxu0 %v9540
    %9618 = vmatmul.bf16.gmra.mxu0 %v9337
    %v9619 = vpop.f32.mrf.mxu0
    %v9620 = vadd.f32 %v9606, %v9619
    %v9621 = vpop.f32.mrf.mxu0
    %v9622 = vadd.f32 %v9608, %v9621
    %9623 = vdwg.mxu0
    %9624 = vmatpush.bf16.msra.mxu0 %v9555
    %9625 = vmatpush.bf16.msra.mxu0 %v9554
    %9626 = vmatpush.bf16.msra.mxu0 %v9553
    %9627 = vmatpush.bf16.msra.mxu0 %v9552
    %9628 = vmatpush.bf16.msra.mxu0 %v9551
    %9629 = vmatpush.bf16.msra.mxu0 %v9550
    %9630 = vmatpush.bf16.msra.mxu0 %v9549
    %9631 = vmatpush.bf16.msra.mxu0 %v9548
    %9632 = vmatmul.bf16.gmra.mxu0 %v9338
    %v9633 = vpop.f32.mrf.mxu0
    %v9634 = vadd.f32 %v9620, %v9633
    %v9635 = vpop.f32.mrf.mxu0
    %v9636 = vadd.f32 %v9622, %v9635
    %9637 = vdwg.mxu0
    %9638 = vmatpush.bf16.msra.mxu0 %v9563
    %9639 = vmatpush.bf16.msra.mxu0 %v9562
    %9640 = vmatpush.bf16.msra.mxu0 %v9561
    %9641 = vmatpush.bf16.msra.mxu0 %v9560
    %9642 = vmatpush.bf16.msra.mxu0 %v9559
    %9643 = vmatpush.bf16.msra.mxu0 %v9558
    %9644 = vmatpush.bf16.msra.mxu0 %v9557
    %9645 = vmatpush.bf16.msra.mxu0 %v9556
    %9646 = vmatmul.bf16.gmra.mxu0 %v9339
    %v9647 = vpop.f32.mrf.mxu0
    %v9648 = vadd.f32 %v9634, %v9647
    %v9649 = vpop.f32.mrf.mxu0
    %v9650 = vadd.f32 %v9636, %v9649
    %9651 = vdwg.mxu0
    %v9654 = vrot.slane %v9648, 2
    %v9655 = vrot.slane %v9648, 4
    %v9656 = vrot.slane %v9648, 6
    %v9657 = vrot.slane %v9650, 2
    %v9658 = vrot.slane %v9650, 4
    %v9659 = vrot.slane %v9650, 6
    %v9666 = vadd.f32 %v8662, %v9648
    %v9667 = vadd.f32 %v8663, %v9654
    %v9668 = vadd.f32 %v8664, %v9655
    %v9669 = vadd.f32 %v8665, %v9656
    %v9670 = vadd.f32 %v8666, %v9650
    %v9671 = vadd.f32 %v8667, %v9657
    %v9672 = vadd.f32 %v8668, %v9658
    %v9673 = vadd.f32 %v8669, %v9659
    %v9674 = vld [vmem:[%s23] sm:$0x1]
    %v9676 = vperm.slane %v9674, 0
    %v9678 = vrot.slane %v9676, 2
    %v9679 = vrot.slane %v9676, 4
    %v9680 = vrot.slane %v9676, 6
    %v9684 = vadd.f32 %v9666, %v9676
    %v9685 = vadd.f32 %v9667, %v9678
    %v9686 = vadd.f32 %v9668, %v9679
    %v9687 = vadd.f32 %v9669, %v9680
    %v9688 = vadd.f32 %v9670, %v9676
    %v9689 = vadd.f32 %v9671, %v9678
    %v9690 = vadd.f32 %v9672, %v9679
    %v9691 = vadd.f32 %v9673, %v9680
    %9692 = vst [vmem:[#allocation26] sm:$0x3] %v9684
    %9693 = vst [vmem:[#allocation26 + $0x2] sm:$0x3] %v9685
    %9694 = vst [vmem:[#allocation26 + $0x4] sm:$0x3] %v9686
    %9695 = vst [vmem:[#allocation26 + $0x6] sm:$0x3] %v9687
    %9696 = vst [vmem:[#allocation26 + $0x8] sm:$0x3] %v9688
    %9697 = vst [vmem:[#allocation26 + $0xa] sm:$0x3] %v9689
    %9698 = vst [vmem:[#allocation26 + $0xc] sm:$0x3] %v9690
    %9699 = vst [vmem:[#allocation26 + $0xe] sm:$0x3] %v9691
    // Predicated region
    $region158: #{tpu_custom_call.1} parent=1 // pred_check
      _
    $region159: #{tpu_custom_call.1} parent=1 // pred_check_branch
      %9701 = sbr.rel (0) target = $region161
    $region160: #{tpu_custom_call.1} parent=1 // pred_region
      %9703 = vsyncadd [#allocation4], 0
      %s9704 = sshll.u32 [#allocation26], 4
      %s9705 = int_to_ptr.vmem [resolvable:$true] %s9704
      %s9706 = sshll.u32 %s24, 4
      %s9707 = int_to_ptr.hbm [resolvable:$true] %s9706
      %9712 = dma.vmem_to_hbm [thread:$0]  %s9705, 256, %s9707, [#allocation4], 32, 32, 2
    $region161: #{tpu_custom_call.1} parent=1 // pred_fallthru
      _
    // Predicated region
    $region162: #{tpu_custom_call.1} parent=1 // pred_check
      _
    $region163: #{tpu_custom_call.1} parent=1 // pred_check_branch
      %9714 = sbr.rel (0) target = $region165
    $region164: #{tpu_custom_call.1} parent=1 // pred_region
      %9716 = dma.done [#allocation4], 256
    $region165: #{tpu_custom_call.1} parent=1 // pred_fallthru
      _
    %9717 = vsyncpa [#allocation3], 1
    %9718 = vsyncpa [#allocation6], 1
    %9719 = vsyncpa [#allocation9], 1
    %9720 = vsyncpa [#allocation12], 1
    %9721 = vsyncpa [#allocation15], 1
    %9722 = vsyncpa [#allocation18], 1
    %9723 = vsyncpa [#allocation21], 1
    %9724 = vsyncpa [#allocation24], 1
    %9725 = vsyncpa [#allocation4], 1

</llo_original>
